<compile_context>
chip_gen: v7x
topology: tpu7x:2x2x1
jax: 0.10.0
libtpu: 0.0.40
codegen_flags: <defaults>
</compile_context>

<pallas_src>
import functools

import jax
import jax.numpy as jnp
from jax import lax
from jax.experimental import pallas as pl
from jax.experimental.pallas import tpu as pltpu

NEG_SLOPE = 0.01        # F.leaky_relu default negative slope
BN_EPS = 1e-5


def _ru(a, m):
    return ((a + m - 1) // m) * m


def _leaky(x):
    return jnp.where(x >= 0, x, NEG_SLOPE * x)


def _shift_masks(H, W):
    """(9, H*W) {0,1} masks: mask[ky*3+kx, n] == 1 iff the 3x3 tap (ky, kx)
    applied at flattened position n = y*W + x stays inside the image
    (i.e. the zero padding of the padding=1 conv is NOT hit)."""
    N = H * W
    ys = jnp.arange(N, dtype=jnp.int32) // W
    xs = jnp.arange(N, dtype=jnp.int32) % W
    rows = []
    for ky in range(3):
        for kx in range(3):
            dy, dx = ky - 1, kx - 1
            ok = ((ys + dy >= 0) & (ys + dy < H) &
                  (xs + dx >= 0) & (xs + dx < W))
            rows.append(ok.astype(jnp.float32))
    return jnp.stack(rows, axis=0)


def _pad_rows(mat, Cq, C, QB, VB):
    """(P, X) stacked rows [q;k;k1;k2;v] -> (P_pad, X), each chunk 8-aligned."""
    tail = mat.shape[1:]
    chunks, off = [], 0
    for size, pad in ((Cq, QB), (Cq, QB), (Cq, QB), (Cq, QB), (C, VB)):
        blk = mat[off:off + size]
        if pad > size:
            blk = jnp.concatenate(
                [blk, jnp.zeros((pad - size,) + tail, mat.dtype)], axis=0)
        chunks.append(blk)
        off += size
    return jnp.concatenate(chunks, axis=0)


def _pack_wc(w1, b1, w2, b2, C, Cq):
    """Pack both conv branches + biases into one (2*P_pad, 9*CB+8) matrix.

    Column layout matches the in-kernel im2col buffer: columns [t*CB, t*CB+C)
    hold tap t = ky*3+kx, column 9*CB is the bias "ones" row.  Rows [0, P_pad)
    are the 1x1 branch (non-zero only in the centre-tap block), rows
    [P_pad, 2*P_pad) are the 3x3 branch.  gamma is assumed pre-folded into the
    value rows of w1/b1/w2/b2 (exact: SpatAttn_ has no internal residual).
    """
    QB, VB, CB = _ru(Cq, 8), _ru(C, 8), _ru(C, 8)
    P_pad = 4 * QB + VB

    w1p = _pad_rows(w1, Cq, C, QB, VB)                         # (P_pad, C)
    b1p = _pad_rows(b1, Cq, C, QB, VB)                         # (P_pad, 1)
    w2p = [_pad_rows(w2[t], Cq, C, QB, VB) for t in range(9)]
    b2p = _pad_rows(b2, Cq, C, QB, VB)

    zero_tap = jnp.zeros((P_pad, C), jnp.float32)

    def to_cols(taps, bias):
        cols = []
        for t in range(9):
            blk = taps[t]
            if CB > C:
                blk = jnp.concatenate(
                    [blk, jnp.zeros((P_pad, CB - C), jnp.float32)], axis=1)
            cols.append(blk)
        cols.append(jnp.concatenate(
            [bias, jnp.zeros((P_pad, 7), jnp.float32)], axis=1))
        return jnp.concatenate(cols, axis=1)                   # (P_pad, 9*CB+8)

    wc1 = to_cols([w1p if t == 4 else zero_tap for t in range(9)], b1p)
    wc2 = to_cols(w2p, b2p)
    return jnp.concatenate([wc1, wc2], axis=0)                 # (2*P_pad, KP)


def _make_sares_kernel(*, C, Cq, W, N, tq):
    CB = _ru(C, 8)
    QB = _ru(Cq, 8)
    VB = _ru(C, 8)
    P_pad = 4 * QB + VB
    KP = 9 * CB + 8
    n_tiles = N // tq

    def kernel(x_ref, masks_ref, wc_ref, bn1_ref, bn2_ref, o_ref,
               im_ref, proj_ref, e1_ref, y1_ref):
        # im2col scratch: zero the pad rows and plant the bias "ones" row once.
        im_ref[...] = jnp.zeros_like(im_ref)
        im_ref[9 * CB:9 * CB + 1, :] = jnp.ones((1, N), jnp.float32)

        def layer(li, feat, store_tile):
            # ---- in-kernel im2col: 9 XLU rolls + masked writes, 8-aligned rows
            for t in range(9):
                ky, kx = divmod(t, 3)
                d = (ky - 1) * W + (kx - 1)
                if d == 0:
                    im_ref[t * CB:t * CB + C, :] = feat
                else:
                    rolled = pltpu.roll(feat, shift=(-d) % N, axis=1)
                    im_ref[t * CB:t * CB + C, :] = rolled * masks_ref[t]

            # ---- ONE stacked projection matmul (both branches, bias folded)
            proj_ref[...] = jnp.dot(wc_ref[li], im_ref[...],
                                    preferred_element_type=jnp.float32)

            # ---- query-independent energy1 + value row-sums per branch
            vsums = []
            for br in range(2):
                base = br * P_pad
                ka = proj_ref[base + 2 * QB:base + 2 * QB + Cq, :]   # key1 (Cq,N)
                kb = proj_ref[base + 3 * QB:base + 3 * QB + Cq, :]   # key2 (Cq,N)
                e1_ref[br] = lax.dot_general(
                    ka, kb, (((0,), (0,)), ((), ())),
                    preferred_element_type=jnp.float32)              # (N, N)
                v = proj_ref[base + 4 * QB:base + 4 * QB + C, :]
                vsums.append(jnp.sum(v, axis=1, keepdims=True))      # (C, 1)

            bn2_s = bn2_ref[li * 2 * C:li * 2 * C + C, :]            # (C, 1)
            bn2_t = bn2_ref[li * 2 * C + C:li * 2 * C + 2 * C, :]

            def tile_body(i0):
                sl = pl.ds(i0, tq)
                s1 = bn1_ref[2 * li:2 * li + 1, sl]                  # (1, tq)
                t1 = bn1_ref[2 * li + 1:2 * li + 2, sl]

                def branch(br):
                    base = br * P_pad
                    q = proj_ref[base:base + Cq, sl]                 # (Cq, tq)
                    k = proj_ref[base + QB:base + QB + Cq, :]        # (Cq, N)
                    e0 = lax.dot_general(
                        q, k, (((0,), (0,)), ((), ())),
                        preferred_element_type=jnp.float32)          # (tq, N)
                    e2 = jnp.dot(e0, e1_ref[br],
                                 preferred_element_type=jnp.float32)  # (tq, N)
                    att = jnp.floor(e2 / 120.0)                      # energy2 // 120
                    v = proj_ref[base + 4 * QB:base + 4 * QB + C, :]
                    raw = lax.dot_general(
                        v, att, (((1,), (1,)), ((), ())),
                        preferred_element_type=jnp.float32)          # (C, tq)
                    # BatchNorm1d(N) (eval) hoisted off the (N, N) map:
                    # out = s[i]*(v @ F^T) + t[i]*sum_j v  (gamma pre-folded).
                    return raw * s1 + vsums[br] * t1

                o1 = branch(0)                    # 1x1 branch
                o2 = branch(1)                    # 3x3 branch
                y = _leaky(o2 * o1)               # torch.mul + leaky_relu
                y = y * bn2_s + bn2_t             # BatchNorm2d (eval, folded)
                store_tile(sl, y)

            if n_tiles == 1:
                tile_body(0)
            else:
                @pl.loop(0, n_tiles)
                def _(ti):
                    tile_body(pl.multiple_of(ti * tq, tq))

        def store_y1(sl, y):
            y1_ref[:, sl] = y

        def store_out(sl, y):
            # SARes: leaky_relu(sa2(sa1(x)) + x), fused per tile, lane-dense.
            o_ref[:, sl] = _leaky(y + x_ref[:, sl])

        x = x_ref[...]                            # (C, N)
        layer(0, x, store_y1)
        layer(1, y1_ref[...], store_out)

    return kernel


def _pick_tq(N, tq):
    if tq is not None and N % int(tq) == 0:
        return int(tq)
    for cand in (256, 128):    # 256: v6e/v7x MXU native; 128: v5e native
        if N % cand == 0:
            return cand
    return N


_LAYER_KEYS = ("w1", "b1", "w2", "b2", "bn1_s", "bn1_t", "bn2_s", "bn2_t")


def sares_pallas(x, params1, params2, *, tq=None):
    B, C, H, W = x.shape
    N = H * W
    P = params1["w1"].shape[0]
    Cq = (P - C) // 4
    tq = _pick_tq(N, tq)

    CB = _ru(C, 8)
    QB = _ru(Cq, 8)
    VB = _ru(C, 8)
    P_pad = 4 * QB + VB
    P2 = 2 * P_pad
    KP = 9 * CB + 8

    x_flat = x.reshape(B, C, N).astype(jnp.float32)
    # masks pre-broadcast to (9, C, N) so the kernel does plain elementwise
    # multiplies (no per-tap sublane broadcast).
    masks_b = jnp.broadcast_to(_shift_masks(H, W)[:, None, :], (9, C, N))

    # ---- consolidated, aligned parameter packing (4 streams instead of 16) --
    wc_all = jnp.stack(
        [_pack_wc(p["w1"], p["b1"], p["w2"], p["b2"], C, Cq)
         for p in (params1, params2)])                                # (2,P2,KP)
    bn1_all = jnp.concatenate(
        [jnp.concatenate([p["bn1_s"], p["bn1_t"]], axis=0)
         for p in (params1, params2)], axis=0).astype(jnp.float32)    # (4, N)
    bn2_all = jnp.concatenate(
        [jnp.concatenate([p["bn2_s"], p["bn2_t"]], axis=0)
         for p in (params1, params2)], axis=0).astype(jnp.float32)    # (4C, 1)

    def _const_spec(arr):
        nd = arr.ndim
        return pl.BlockSpec(arr.shape, lambda b, _nd=nd: (0,) * _nd)

    args = [x_flat, masks_b, wc_all, bn1_all, bn2_all]
    in_specs = [pl.BlockSpec((None, C, N), lambda b: (b, 0, 0))]
    in_specs += [_const_spec(a) for a in args[1:]]

    scratch_shapes = [
        pltpu.VMEM((KP, N), jnp.float32),       # im2col buffer
        pltpu.VMEM((P2, N), jnp.float32),       # stacked projections
        pltpu.VMEM((2, N, N), jnp.float32),     # energy1 per branch (VMEM cliff)
        pltpu.VMEM((C, N), jnp.float32),        # y1 = sa1(x)
    ]

    # Advisory cost: dominated by the two O(N^3) energy2 matmuls per layer.
    flops_layer = 4 * N**3 + (8 * Cq + 4 * C) * N * N + 2 * P2 * KP * N
    cost = pl.CostEstimate(
        flops=int(2 * B * flops_layer),
        transcendentals=0,
        bytes_accessed=int(4 * (2 * B * C * N + 9 * C * N
                                + 2 * (P2 * KP + 4 * N + 4 * C))),
    )

    scratch_bytes = 4 * (KP * N + P2 * N + 2 * N * N + C * N)
    vmem_limit = int(min(64 << 20, max(32 << 20, scratch_bytes + (8 << 20))))

    out = pl.pallas_call(
        _make_sares_kernel(C=C, Cq=Cq, W=W, N=N, tq=tq),
        out_shape=jax.ShapeDtypeStruct((B, C, N), jnp.float32),
        grid_spec=pltpu.PrefetchScalarGridSpec(
            num_scalar_prefetch=0,
            grid=(B,),
            in_specs=in_specs,
            out_specs=pl.BlockSpec((None, C, N), lambda b: (b, 0, 0)),
            scratch_shapes=scratch_shapes,
        ),
        compiler_params=pltpu.CompilerParams(
            dimension_semantics=("parallel",),   # batches independent
            vmem_limit_bytes=vmem_limit,
        ),
        cost_estimate=cost,
    )(*args)
    return out.reshape(B, C, H, W)


@functools.partial(jax.jit, static_argnames=("tq",))
def sares_forward(x, params1, params2, tq=None):
    """SARes: leaky_relu(sa2(sa1(x)) + x), fully fused in one Pallas kernel."""
    return sares_pallas(x, params1, params2, tq=tq)


def init_spat_attn_params(key, C, ratio, N, gamma=0.1):
    """Synthetic SpatAttn_ parameters in the "raw stacked" form the wrapper packs.

    To import PyTorch weights: stack the five conv weights along the output-row
    axis in the order [query, key, key1, key2, value] (-> P = 4*Cq + C rows);
    for the 3x3 convs use w2[ky*3 + kx] = stacked_weight[:, :, ky, kx]; scale
    the value rows by gamma; fold BN running stats as s = w/sqrt(rv+eps),
    t = b - rm*s.
    NOTE: PyTorch initialises gamma to 0, which zeroes the whole attention
    branch; we use a non-zero gamma so the kernel path is actually exercised.
    """
    Cq = C // ratio
    P = 4 * Cq + C
    keys = jax.random.split(key, 8)

    def rnd(k, shape, scale=0.1):
        return (scale * jax.random.normal(k, shape)).astype(jnp.float32)

    w1 = rnd(keys[0], (P, C))
    b1 = rnd(keys[1], (P, 1), 0.05)
    w2 = rnd(keys[2], (9, P, C))
    b2 = rnd(keys[3], (P, 1), 0.05)

    # Fold gamma into the value rows (out = gamma * value @ att^T is linear in value).
    vrow = 4 * Cq
    scale_rows = jnp.ones((P, 1), jnp.float32).at[vrow:].set(gamma)
    w1 = w1 * scale_rows
    b1 = b1 * scale_rows
    w2 = w2 * scale_rows[None, :, :]
    b2 = b2 * scale_rows

    p = dict(w1=w1, b1=b1, w2=w2, b2=b2)

    # BatchNorm1d(N), eval-mode fold, lane-dense (1, N).
    bn1_w = 1.0 + 0.01 * jax.random.normal(keys[4], (1, N))
    bn1_b = 0.01 * jax.random.normal(keys[5], (1, N))
    bn1_rm = jnp.zeros((1, N))
    bn1_rv = jnp.ones((1, N))
    s1 = bn1_w / jnp.sqrt(bn1_rv + BN_EPS)
    p["bn1_s"] = s1.astype(jnp.float32)
    p["bn1_t"] = (bn1_b - bn1_rm * s1).astype(jnp.float32)

    # BatchNorm2d(C), eval-mode fold ((C,1) column, broadcast over lanes).
    bn2_w = 1.0 + 0.01 * jax.random.normal(keys[6], (C, 1))
    bn2_b = 0.01 * jax.random.normal(keys[7], (C, 1))
    bn2_rm = jnp.zeros((C, 1))
    bn2_rv = jnp.ones((C, 1))
    s2 = bn2_w / jnp.sqrt(bn2_rv + BN_EPS)
    p["bn2_s"] = s2.astype(jnp.float32)
    p["bn2_t"] = (bn2_b - bn2_rm * s2).astype(jnp.float32)
    return p


if __name__ == "__main__":
    key = jax.random.PRNGKey(0)
    kx, kp1, kp2 = jax.random.split(key, 3)

    B, C, H, W = 2, 4, 16, 16     # in_dim=4, img_rows=img_cols=16
    ratio = 2                     # -> Cq = 2 query/key channels
    N = H * W

    x = jax.random.normal(kx, (B, C, H, W), jnp.float32)
    p1 = init_spat_attn_params(kp1, C, ratio, N)
    p2 = init_spat_attn_params(kp2, C, ratio, N)

    # Default tq -> 256 (single-tile fast path, v6e/v7x MXU native);
    # tq=128 exercises the pl.loop query-tiled path (v5e native width).
    out_a = jax.block_until_ready(sares_forward(x, p1, p2))
    out_b = jax.block_until_ready(sares_forward(x, p1, p2, tq=128))

    assert out_a.shape == (B, C, H, W), out_a.shape
    assert bool(jnp.all(jnp.isfinite(out_a)))
    assert bool(jnp.all(jnp.isfinite(out_b)))
    # Tile size must not change the math (same contraction order per element).
    assert bool(jnp.allclose(out_a, out_b, rtol=1e-4, atol=1e-4))
    print("KERNEL_OK")
</pallas_src>

<mosaic_0001>
module attributes {stable_mosaic.version = 11 : i64} {
  func.func @kernel(%arg0: i32, %arg1: memref<1x4x256xf32, #tpu.memory_space<vmem>>, %arg2: memref<9x4x256xf32, #tpu.memory_space<vmem>>, %arg3: memref<2x80x80xf32, #tpu.memory_space<vmem>>, %arg4: memref<4x256xf32, #tpu.memory_space<vmem>>, %arg5: memref<16x1xf32, #tpu.memory_space<vmem>>, %arg6: memref<1x4x256xf32, #tpu.memory_space<vmem>>, %arg7: memref<80x256xf32, #tpu.memory_space<vmem>>, %arg8: memref<80x256xf32, #tpu.memory_space<vmem>>, %arg9: memref<2x256x256xf32, #tpu.memory_space<vmem>>, %arg10: memref<4x256xf32, #tpu.memory_space<vmem>>) attributes {dimension_semantics = [#tpu.dimension_semantics<parallel>], iteration_bounds = array<i64: 2>, scalar_prefetch = 0 : i64, scratch_operands = 4 : i64, tpu.core_type = #tpu.core_type<tc>, window_params = [{transform_indices = @transform_0, window_bounds = array<i64: 1, 4, 256>}, {pipeline_mode = #tpu.pipeline_mode<synchronous>, transform_indices = @transform_1, window_bounds = array<i64: 9, 4, 256>}, {pipeline_mode = #tpu.pipeline_mode<synchronous>, transform_indices = @transform_2, window_bounds = array<i64: 2, 80, 80>}, {pipeline_mode = #tpu.pipeline_mode<synchronous>, transform_indices = @transform_3, window_bounds = array<i64: 4, 256>}, {pipeline_mode = #tpu.pipeline_mode<synchronous>, transform_indices = @transform_4, window_bounds = array<i64: 16, 1>}, {transform_indices = @transform_5, window_bounds = array<i64: 1, 4, 256>}]} {
    %cst = arith.constant 0.000000e+00 : f32
    %0 = vector.broadcast %cst : f32 to vector<80x256xf32>
    %c0 = arith.constant 0 : index
    %c0_0 = arith.constant 0 : index
    %1 = vector.load %arg7[%c0, %c0_0] : memref<80x256xf32, #tpu.memory_space<vmem>>, vector<80x256xf32>
    tpu.vector_store %arg7[%c0, %c0_0], %0 {strides = array<i32>} : memref<80x256xf32, #tpu.memory_space<vmem>>, vector<80x256xf32>,
    %cst_1 = arith.constant 1.000000e+00 : f32
    %2 = vector.broadcast %cst_1 : f32 to vector<1x256xf32>
    %c72 = arith.constant 72 : index
    %c0_2 = arith.constant 0 : index
    %3 = vector.load %arg7[%c72, %c0_2] : memref<80x256xf32, #tpu.memory_space<vmem>>, vector<1x256xf32>
    tpu.vector_store %arg7[%c72, %c0_2], %2 {strides = array<i32>} : memref<80x256xf32, #tpu.memory_space<vmem>>, vector<1x256xf32>,
    %c0_3 = arith.constant 0 : index
    %c0_4 = arith.constant 0 : index
    %c0_5 = arith.constant 0 : index
    %4 = vector.load %arg1[%c0_3, %c0_4, %c0_5] : memref<1x4x256xf32, #tpu.memory_space<vmem>>, vector<1x4x256xf32>
    %5 = vector.shape_cast %4 : vector<1x4x256xf32> to vector<4x256xf32>
    %c17_i32 = arith.constant 17 : i32
    %6 = tpu.dynamic_rotate %5 by %c17_i32 dim 1 : vector<4x256xf32>, i32 -> vector<4x256xf32>
    %c0_6 = arith.constant 0 : index
    %c0_7 = arith.constant 0 : index
    %c0_8 = arith.constant 0 : index
    %7 = vector.load %arg2[%c0_6, %c0_7, %c0_8] : memref<9x4x256xf32, #tpu.memory_space<vmem>>, vector<1x4x256xf32>
    %8 = vector.shape_cast %7 : vector<1x4x256xf32> to vector<4x256xf32>
    %9 = arith.mulf %6, %8 : vector<4x256xf32>
    %c0_9 = arith.constant 0 : index
    %c0_10 = arith.constant 0 : index
    %10 = vector.load %arg7[%c0_9, %c0_10] : memref<80x256xf32, #tpu.memory_space<vmem>>, vector<4x256xf32>
    tpu.vector_store %arg7[%c0_9, %c0_10], %9 {strides = array<i32>} : memref<80x256xf32, #tpu.memory_space<vmem>>, vector<4x256xf32>,
    %c16_i32 = arith.constant 16 : i32
    %11 = tpu.dynamic_rotate %5 by %c16_i32 dim 1 : vector<4x256xf32>, i32 -> vector<4x256xf32>
    %c1 = arith.constant 1 : index
    %c0_11 = arith.constant 0 : index
    %c0_12 = arith.constant 0 : index
    %12 = vector.load %arg2[%c1, %c0_11, %c0_12] : memref<9x4x256xf32, #tpu.memory_space<vmem>>, vector<1x4x256xf32>
    %13 = vector.shape_cast %12 : vector<1x4x256xf32> to vector<4x256xf32>
    %14 = arith.mulf %11, %13 : vector<4x256xf32>
    %c8 = arith.constant 8 : index
    %c0_13 = arith.constant 0 : index
    %15 = vector.load %arg7[%c8, %c0_13] : memref<80x256xf32, #tpu.memory_space<vmem>>, vector<4x256xf32>
    tpu.vector_store %arg7[%c8, %c0_13], %14 {strides = array<i32>} : memref<80x256xf32, #tpu.memory_space<vmem>>, vector<4x256xf32>,
    %c15_i32 = arith.constant 15 : i32
    %16 = tpu.dynamic_rotate %5 by %c15_i32 dim 1 : vector<4x256xf32>, i32 -> vector<4x256xf32>
    %c2 = arith.constant 2 : index
    %c0_14 = arith.constant 0 : index
    %c0_15 = arith.constant 0 : index
    %17 = vector.load %arg2[%c2, %c0_14, %c0_15] : memref<9x4x256xf32, #tpu.memory_space<vmem>>, vector<1x4x256xf32>
    %18 = vector.shape_cast %17 : vector<1x4x256xf32> to vector<4x256xf32>
    %19 = arith.mulf %16, %18 : vector<4x256xf32>
    %c16 = arith.constant 16 : index
    %c0_16 = arith.constant 0 : index
    %20 = vector.load %arg7[%c16, %c0_16] : memref<80x256xf32, #tpu.memory_space<vmem>>, vector<4x256xf32>
    tpu.vector_store %arg7[%c16, %c0_16], %19 {strides = array<i32>} : memref<80x256xf32, #tpu.memory_space<vmem>>, vector<4x256xf32>,
    %c1_i32 = arith.constant 1 : i32
    %21 = tpu.dynamic_rotate %5 by %c1_i32 dim 1 : vector<4x256xf32>, i32 -> vector<4x256xf32>
    %c3 = arith.constant 3 : index
    %c0_17 = arith.constant 0 : index
    %c0_18 = arith.constant 0 : index
    %22 = vector.load %arg2[%c3, %c0_17, %c0_18] : memref<9x4x256xf32, #tpu.memory_space<vmem>>, vector<1x4x256xf32>
    %23 = vector.shape_cast %22 : vector<1x4x256xf32> to vector<4x256xf32>
    %24 = arith.mulf %21, %23 : vector<4x256xf32>
    %c24 = arith.constant 24 : index
    %c0_19 = arith.constant 0 : index
    %25 = vector.load %arg7[%c24, %c0_19] : memref<80x256xf32, #tpu.memory_space<vmem>>, vector<4x256xf32>
    tpu.vector_store %arg7[%c24, %c0_19], %24 {strides = array<i32>} : memref<80x256xf32, #tpu.memory_space<vmem>>, vector<4x256xf32>,
    %c32 = arith.constant 32 : index
    %c0_20 = arith.constant 0 : index
    %26 = vector.load %arg7[%c32, %c0_20] : memref<80x256xf32, #tpu.memory_space<vmem>>, vector<4x256xf32>
    tpu.vector_store %arg7[%c32, %c0_20], %5 {strides = array<i32>} : memref<80x256xf32, #tpu.memory_space<vmem>>, vector<4x256xf32>,
    %c255_i32 = arith.constant 255 : i32
    %27 = tpu.dynamic_rotate %5 by %c255_i32 dim 1 : vector<4x256xf32>, i32 -> vector<4x256xf32>
    %c5 = arith.constant 5 : index
    %c0_21 = arith.constant 0 : index
    %c0_22 = arith.constant 0 : index
    %28 = vector.load %arg2[%c5, %c0_21, %c0_22] : memref<9x4x256xf32, #tpu.memory_space<vmem>>, vector<1x4x256xf32>
    %29 = vector.shape_cast %28 : vector<1x4x256xf32> to vector<4x256xf32>
    %30 = arith.mulf %27, %29 : vector<4x256xf32>
    %c40 = arith.constant 40 : index
    %c0_23 = arith.constant 0 : index
    %31 = vector.load %arg7[%c40, %c0_23] : memref<80x256xf32, #tpu.memory_space<vmem>>, vector<4x256xf32>
    tpu.vector_store %arg7[%c40, %c0_23], %30 {strides = array<i32>} : memref<80x256xf32, #tpu.memory_space<vmem>>, vector<4x256xf32>,
    %c241_i32 = arith.constant 241 : i32
    %32 = tpu.dynamic_rotate %5 by %c241_i32 dim 1 : vector<4x256xf32>, i32 -> vector<4x256xf32>
    %c6 = arith.constant 6 : index
    %c0_24 = arith.constant 0 : index
    %c0_25 = arith.constant 0 : index
    %33 = vector.load %arg2[%c6, %c0_24, %c0_25] : memref<9x4x256xf32, #tpu.memory_space<vmem>>, vector<1x4x256xf32>
    %34 = vector.shape_cast %33 : vector<1x4x256xf32> to vector<4x256xf32>
    %35 = arith.mulf %32, %34 : vector<4x256xf32>
    %c48 = arith.constant 48 : index
    %c0_26 = arith.constant 0 : index
    %36 = vector.load %arg7[%c48, %c0_26] : memref<80x256xf32, #tpu.memory_space<vmem>>, vector<4x256xf32>
    tpu.vector_store %arg7[%c48, %c0_26], %35 {strides = array<i32>} : memref<80x256xf32, #tpu.memory_space<vmem>>, vector<4x256xf32>,
    %c240_i32 = arith.constant 240 : i32
    %37 = tpu.dynamic_rotate %5 by %c240_i32 dim 1 : vector<4x256xf32>, i32 -> vector<4x256xf32>
    %c7 = arith.constant 7 : index
    %c0_27 = arith.constant 0 : index
    %c0_28 = arith.constant 0 : index
    %38 = vector.load %arg2[%c7, %c0_27, %c0_28] : memref<9x4x256xf32, #tpu.memory_space<vmem>>, vector<1x4x256xf32>
    %39 = vector.shape_cast %38 : vector<1x4x256xf32> to vector<4x256xf32>
    %40 = arith.mulf %37, %39 : vector<4x256xf32>
    %c56 = arith.constant 56 : index
    %c0_29 = arith.constant 0 : index
    %41 = vector.load %arg7[%c56, %c0_29] : memref<80x256xf32, #tpu.memory_space<vmem>>, vector<4x256xf32>
    tpu.vector_store %arg7[%c56, %c0_29], %40 {strides = array<i32>} : memref<80x256xf32, #tpu.memory_space<vmem>>, vector<4x256xf32>,
    %c239_i32 = arith.constant 239 : i32
    %42 = tpu.dynamic_rotate %5 by %c239_i32 dim 1 : vector<4x256xf32>, i32 -> vector<4x256xf32>
    %c8_30 = arith.constant 8 : index
    %c0_31 = arith.constant 0 : index
    %c0_32 = arith.constant 0 : index
    %43 = vector.load %arg2[%c8_30, %c0_31, %c0_32] : memref<9x4x256xf32, #tpu.memory_space<vmem>>, vector<1x4x256xf32>
    %44 = vector.shape_cast %43 : vector<1x4x256xf32> to vector<4x256xf32>
    %45 = arith.mulf %42, %44 : vector<4x256xf32>
    %c64 = arith.constant 64 : index
    %c0_33 = arith.constant 0 : index
    %46 = vector.load %arg7[%c64, %c0_33] : memref<80x256xf32, #tpu.memory_space<vmem>>, vector<4x256xf32>
    tpu.vector_store %arg7[%c64, %c0_33], %45 {strides = array<i32>} : memref<80x256xf32, #tpu.memory_space<vmem>>, vector<4x256xf32>,
    %c0_34 = arith.constant 0 : index
    %c0_35 = arith.constant 0 : index
    %c0_36 = arith.constant 0 : index
    %47 = vector.load %arg3[%c0_34, %c0_35, %c0_36] : memref<2x80x80xf32, #tpu.memory_space<vmem>>, vector<1x80x80xf32>
    %48 = vector.shape_cast %47 : vector<1x80x80xf32> to vector<80x80xf32>
    %c0_37 = arith.constant 0 : index
    %c0_38 = arith.constant 0 : index
    %49 = vector.load %arg7[%c0_37, %c0_38] : memref<80x256xf32, #tpu.memory_space<vmem>>, vector<80x256xf32>
    %cst_39 = arith.constant dense<0.000000e+00> : vector<80x256xf32>
    %50 = tpu.matmul %48, %49, %cst_39 {dimension_numbers = #tpu.dot_dimension_numbers<[1], [0], [0], [1], [0, 0, 1, 1], [], []>} : vector<80x80xf32>, vector<80x256xf32>, vector<80x256xf32> -> vector<80x256xf32>
    %c0_40 = arith.constant 0 : index
    %c0_41 = arith.constant 0 : index
    %51 = vector.load %arg8[%c0_40, %c0_41] : memref<80x256xf32, #tpu.memory_space<vmem>>, vector<80x256xf32>
    tpu.vector_store %arg8[%c0_40, %c0_41], %50 {strides = array<i32>} : memref<80x256xf32, #tpu.memory_space<vmem>>, vector<80x256xf32>,
    %c16_42 = arith.constant 16 : index
    %c0_43 = arith.constant 0 : index
    %52 = vector.load %arg8[%c16_42, %c0_43] : memref<80x256xf32, #tpu.memory_space<vmem>>, vector<2x256xf32>
    %c24_44 = arith.constant 24 : index
    %c0_45 = arith.constant 0 : index
    %53 = vector.load %arg8[%c24_44, %c0_45] : memref<80x256xf32, #tpu.memory_space<vmem>>, vector<2x256xf32>
    %cst_46 = arith.constant dense<0.000000e+00> : vector<256x256xf32>
    %54 = tpu.matmul %52, %53, %cst_46 {dimension_numbers = #tpu.dot_dimension_numbers<[0], [0], [1], [1], [0, 1, 1, 1], [], []>} : vector<2x256xf32>, vector<2x256xf32>, vector<256x256xf32> -> vector<256x256xf32>
    %c0_47 = arith.constant 0 : index
    %c0_48 = arith.constant 0 : index
    %c0_49 = arith.constant 0 : index
    %55 = vector.load %arg9[%c0_47, %c0_48, %c0_49] : memref<2x256x256xf32, #tpu.memory_space<vmem>>, vector<1x256x256xf32>
    %56 = vector.shape_cast %55 : vector<1x256x256xf32> to vector<256x256xf32>
    %57 = vector.shape_cast %54 : vector<256x256xf32> to vector<1x256x256xf32>
    tpu.vector_store %arg9[%c0_47, %c0_48, %c0_49], %57 {strides = array<i32>} : memref<2x256x256xf32, #tpu.memory_space<vmem>>, vector<1x256x256xf32>,
    %c32_50 = arith.constant 32 : index
    %c0_51 = arith.constant 0 : index
    %58 = vector.load %arg8[%c32_50, %c0_51] : memref<80x256xf32, #tpu.memory_space<vmem>>, vector<4x256xf32>
    %cst_52 = arith.constant dense<0.000000e+00> : vector<4xf32>
    %59 = vector.multi_reduction <add>, %58, %cst_52 [1] : vector<4x256xf32> to vector<4xf32>
    %60 = vector.shape_cast %59 : vector<4xf32> to vector<4x1xf32>
    %c56_53 = arith.constant 56 : index
    %c0_54 = arith.constant 0 : index
    %61 = vector.load %arg8[%c56_53, %c0_54] : memref<80x256xf32, #tpu.memory_space<vmem>>, vector<2x256xf32>
    %c64_55 = arith.constant 64 : index
    %c0_56 = arith.constant 0 : index
    %62 = vector.load %arg8[%c64_55, %c0_56] : memref<80x256xf32, #tpu.memory_space<vmem>>, vector<2x256xf32>
    %cst_57 = arith.constant dense<0.000000e+00> : vector<256x256xf32>
    %63 = tpu.matmul %61, %62, %cst_57 {dimension_numbers = #tpu.dot_dimension_numbers<[0], [0], [1], [1], [0, 1, 1, 1], [], []>} : vector<2x256xf32>, vector<2x256xf32>, vector<256x256xf32> -> vector<256x256xf32>
    %c1_58 = arith.constant 1 : index
    %c0_59 = arith.constant 0 : index
    %c0_60 = arith.constant 0 : index
    %64 = vector.load %arg9[%c1_58, %c0_59, %c0_60] : memref<2x256x256xf32, #tpu.memory_space<vmem>>, vector<1x256x256xf32>
    %65 = vector.shape_cast %64 : vector<1x256x256xf32> to vector<256x256xf32>
    %66 = vector.shape_cast %63 : vector<256x256xf32> to vector<1x256x256xf32>
    tpu.vector_store %arg9[%c1_58, %c0_59, %c0_60], %66 {strides = array<i32>} : memref<2x256x256xf32, #tpu.memory_space<vmem>>, vector<1x256x256xf32>,
    %c72_61 = arith.constant 72 : index
    %c0_62 = arith.constant 0 : index
    %67 = vector.load %arg8[%c72_61, %c0_62] : memref<80x256xf32, #tpu.memory_space<vmem>>, vector<4x256xf32>
    %cst_63 = arith.constant dense<0.000000e+00> : vector<4xf32>
    %68 = vector.multi_reduction <add>, %67, %cst_63 [1] : vector<4x256xf32> to vector<4xf32>
    %69 = vector.shape_cast %68 : vector<4xf32> to vector<4x1xf32>
    %c0_64 = arith.constant 0 : index
    %c0_65 = arith.constant 0 : index
    %70 = vector.load %arg5[%c0_64, %c0_65] : memref<16x1xf32, #tpu.memory_space<vmem>>, vector<4x1xf32>
    %c4 = arith.constant 4 : index
    %c0_66 = arith.constant 0 : index
    %71 = vector.load %arg5[%c4, %c0_66] : memref<16x1xf32, #tpu.memory_space<vmem>>, vector<4x1xf32>
    %c0_67 = arith.constant 0 : index
    %c0_68 = arith.constant 0 : index
    %72 = vector.load %arg4[%c0_67, %c0_68] : memref<4x256xf32, #tpu.memory_space<vmem>>, vector<1x256xf32>
    %c1_69 = arith.constant 1 : index
    %c0_70 = arith.constant 0 : index
    %73 = vector.load %arg4[%c1_69, %c0_70] : memref<4x256xf32, #tpu.memory_space<vmem>>, vector<1x256xf32>
    %c0_71 = arith.constant 0 : index
    %c0_72 = arith.constant 0 : index
    %74 = vector.load %arg8[%c0_71, %c0_72] : memref<80x256xf32, #tpu.memory_space<vmem>>, vector<2x256xf32>
    %c8_73 = arith.constant 8 : index
    %c0_74 = arith.constant 0 : index
    %75 = vector.load %arg8[%c8_73, %c0_74] : memref<80x256xf32, #tpu.memory_space<vmem>>, vector<2x256xf32>
    %cst_75 = arith.constant dense<0.000000e+00> : vector<256x256xf32>
    %76 = tpu.matmul %74, %75, %cst_75 {dimension_numbers = #tpu.dot_dimension_numbers<[0], [0], [1], [1], [0, 1, 1, 1], [], []>} : vector<2x256xf32>, vector<2x256xf32>, vector<256x256xf32> -> vector<256x256xf32>
    %c0_76 = arith.constant 0 : index
    %c0_77 = arith.constant 0 : index
    %c0_78 = arith.constant 0 : index
    %77 = vector.load %arg9[%c0_76, %c0_77, %c0_78] : memref<2x256x256xf32, #tpu.memory_space<vmem>>, vector<1x256x256xf32>
    %78 = vector.shape_cast %77 : vector<1x256x256xf32> to vector<256x256xf32>
    %cst_79 = arith.constant dense<0.000000e+00> : vector<256x256xf32>
    %79 = tpu.matmul %76, %78, %cst_79 {dimension_numbers = #tpu.dot_dimension_numbers<[1], [0], [0], [1], [0, 0, 1, 1], [], []>} : vector<256x256xf32>, vector<256x256xf32>, vector<256x256xf32> -> vector<256x256xf32>
    %cst_80 = arith.constant 1.200000e+02 : f32
    %80 = vector.broadcast %cst_80 : f32 to vector<256x256xf32>
    %81 = arith.divf %79, %80 : vector<256x256xf32>
    %82 = math.floor %81 : vector<256x256xf32>
    %c32_81 = arith.constant 32 : index
    %c0_82 = arith.constant 0 : index
    %83 = vector.load %arg8[%c32_81, %c0_82] : memref<80x256xf32, #tpu.memory_space<vmem>>, vector<4x256xf32>
    %cst_83 = arith.constant dense<0.000000e+00> : vector<4x256xf32>
    %84 = tpu.matmul %83, %82, %cst_83 {dimension_numbers = #tpu.dot_dimension_numbers<[1], [1], [0], [0], [0, 0, 1, 0], [], []>} : vector<4x256xf32>, vector<256x256xf32>, vector<4x256xf32> -> vector<4x256xf32>
    %85 = vector.broadcast %72 : vector<1x256xf32> to vector<4x256xf32>
    %86 = arith.mulf %84, %85 : vector<4x256xf32>
    %87 = vector.broadcast %60 : vector<4x1xf32> to vector<4x256xf32>
    %88 = vector.broadcast %73 : vector<1x256xf32> to vector<4x256xf32>
    %89 = arith.mulf %87, %88 : vector<4x256xf32>
    %90 = arith.addf %86, %89 : vector<4x256xf32>
    %c40_84 = arith.constant 40 : index
    %c0_85 = arith.constant 0 : index
    %91 = vector.load %arg8[%c40_84, %c0_85] : memref<80x256xf32, #tpu.memory_space<vmem>>, vector<2x256xf32>
    %c48_86 = arith.constant 48 : index
    %c0_87 = arith.constant 0 : index
    %92 = vector.load %arg8[%c48_86, %c0_87] : memref<80x256xf32, #tpu.memory_space<vmem>>, vector<2x256xf32>
    %cst_88 = arith.constant dense<0.000000e+00> : vector<256x256xf32>
    %93 = tpu.matmul %91, %92, %cst_88 {dimension_numbers = #tpu.dot_dimension_numbers<[0], [0], [1], [1], [0, 1, 1, 1], [], []>} : vector<2x256xf32>, vector<2x256xf32>, vector<256x256xf32> -> vector<256x256xf32>
    %c1_89 = arith.constant 1 : index
    %c0_90 = arith.constant 0 : index
    %c0_91 = arith.constant 0 : index
    %94 = vector.load %arg9[%c1_89, %c0_90, %c0_91] : memref<2x256x256xf32, #tpu.memory_space<vmem>>, vector<1x256x256xf32>
    %95 = vector.shape_cast %94 : vector<1x256x256xf32> to vector<256x256xf32>
    %cst_92 = arith.constant dense<0.000000e+00> : vector<256x256xf32>
    %96 = tpu.matmul %93, %95, %cst_92 {dimension_numbers = #tpu.dot_dimension_numbers<[1], [0], [0], [1], [0, 0, 1, 1], [], []>} : vector<256x256xf32>, vector<256x256xf32>, vector<256x256xf32> -> vector<256x256xf32>
    %cst_93 = arith.constant 1.200000e+02 : f32
    %97 = vector.broadcast %cst_93 : f32 to vector<256x256xf32>
    %98 = arith.divf %96, %97 : vector<256x256xf32>
    %99 = math.floor %98 : vector<256x256xf32>
    %c72_94 = arith.constant 72 : index
    %c0_95 = arith.constant 0 : index
    %100 = vector.load %arg8[%c72_94, %c0_95] : memref<80x256xf32, #tpu.memory_space<vmem>>, vector<4x256xf32>
    %cst_96 = arith.constant dense<0.000000e+00> : vector<4x256xf32>
    %101 = tpu.matmul %100, %99, %cst_96 {dimension_numbers = #tpu.dot_dimension_numbers<[1], [1], [0], [0], [0, 0, 1, 0], [], []>} : vector<4x256xf32>, vector<256x256xf32>, vector<4x256xf32> -> vector<4x256xf32>
    %102 = vector.broadcast %72 : vector<1x256xf32> to vector<4x256xf32>
    %103 = arith.mulf %101, %102 : vector<4x256xf32>
    %104 = vector.broadcast %69 : vector<4x1xf32> to vector<4x256xf32>
    %105 = vector.broadcast %73 : vector<1x256xf32> to vector<4x256xf32>
    %106 = arith.mulf %104, %105 : vector<4x256xf32>
    %107 = arith.addf %103, %106 : vector<4x256xf32>
    %108 = arith.mulf %107, %90 : vector<4x256xf32>
    %cst_97 = arith.constant 0.000000e+00 : f32
    %109 = vector.broadcast %cst_97 : f32 to vector<4x256xf32>
    %110 = arith.cmpf oge, %108, %109 : vector<4x256xf32>
    %cst_98 = arith.constant 0.00999999977 : f32
    %111 = vector.broadcast %cst_98 : f32 to vector<4x256xf32>
    %112 = arith.mulf %111, %108 : vector<4x256xf32>
    %113 = arith.select %110, %108, %112 : vector<4x256xi1>, vector<4x256xf32>
    %114 = vector.broadcast %70 : vector<4x1xf32> to vector<4x256xf32>
    %115 = arith.mulf %113, %114 : vector<4x256xf32>
    %116 = vector.broadcast %71 : vector<4x1xf32> to vector<4x256xf32>
    %117 = arith.addf %115, %116 : vector<4x256xf32>
    %c0_99 = arith.constant 0 : index
    %c0_100 = arith.constant 0 : index
    %118 = vector.load %arg10[%c0_99, %c0_100] : memref<4x256xf32, #tpu.memory_space<vmem>>, vector<4x256xf32>
    tpu.vector_store %arg10[%c0_99, %c0_100], %117 {strides = array<i32>} : memref<4x256xf32, #tpu.memory_space<vmem>>, vector<4x256xf32>,
    %c0_101 = arith.constant 0 : index
    %c0_102 = arith.constant 0 : index
    %119 = vector.load %arg10[%c0_101, %c0_102] : memref<4x256xf32, #tpu.memory_space<vmem>>, vector<4x256xf32>
    %c17_i32_103 = arith.constant 17 : i32
    %120 = tpu.dynamic_rotate %119 by %c17_i32_103 dim 1 : vector<4x256xf32>, i32 -> vector<4x256xf32>
    %c0_104 = arith.constant 0 : index
    %c0_105 = arith.constant 0 : index
    %c0_106 = arith.constant 0 : index
    %121 = vector.load %arg2[%c0_104, %c0_105, %c0_106] : memref<9x4x256xf32, #tpu.memory_space<vmem>>, vector<1x4x256xf32>
    %122 = vector.shape_cast %121 : vector<1x4x256xf32> to vector<4x256xf32>
    %123 = arith.mulf %120, %122 : vector<4x256xf32>
    %c0_107 = arith.constant 0 : index
    %c0_108 = arith.constant 0 : index
    %124 = vector.load %arg7[%c0_107, %c0_108] : memref<80x256xf32, #tpu.memory_space<vmem>>, vector<4x256xf32>
    tpu.vector_store %arg7[%c0_107, %c0_108], %123 {strides = array<i32>} : memref<80x256xf32, #tpu.memory_space<vmem>>, vector<4x256xf32>,
    %c16_i32_109 = arith.constant 16 : i32
    %125 = tpu.dynamic_rotate %119 by %c16_i32_109 dim 1 : vector<4x256xf32>, i32 -> vector<4x256xf32>
    %c1_110 = arith.constant 1 : index
    %c0_111 = arith.constant 0 : index
    %c0_112 = arith.constant 0 : index
    %126 = vector.load %arg2[%c1_110, %c0_111, %c0_112] : memref<9x4x256xf32, #tpu.memory_space<vmem>>, vector<1x4x256xf32>
    %127 = vector.shape_cast %126 : vector<1x4x256xf32> to vector<4x256xf32>
    %128 = arith.mulf %125, %127 : vector<4x256xf32>
    %c8_113 = arith.constant 8 : index
    %c0_114 = arith.constant 0 : index
    %129 = vector.load %arg7[%c8_113, %c0_114] : memref<80x256xf32, #tpu.memory_space<vmem>>, vector<4x256xf32>
    tpu.vector_store %arg7[%c8_113, %c0_114], %128 {strides = array<i32>} : memref<80x256xf32, #tpu.memory_space<vmem>>, vector<4x256xf32>,
    %c15_i32_115 = arith.constant 15 : i32
    %130 = tpu.dynamic_rotate %119 by %c15_i32_115 dim 1 : vector<4x256xf32>, i32 -> vector<4x256xf32>
    %c2_116 = arith.constant 2 : index
    %c0_117 = arith.constant 0 : index
    %c0_118 = arith.constant 0 : index
    %131 = vector.load %arg2[%c2_116, %c0_117, %c0_118] : memref<9x4x256xf32, #tpu.memory_space<vmem>>, vector<1x4x256xf32>
    %132 = vector.shape_cast %131 : vector<1x4x256xf32> to vector<4x256xf32>
    %133 = arith.mulf %130, %132 : vector<4x256xf32>
    %c16_119 = arith.constant 16 : index
    %c0_120 = arith.constant 0 : index
    %134 = vector.load %arg7[%c16_119, %c0_120] : memref<80x256xf32, #tpu.memory_space<vmem>>, vector<4x256xf32>
    tpu.vector_store %arg7[%c16_119, %c0_120], %133 {strides = array<i32>} : memref<80x256xf32, #tpu.memory_space<vmem>>, vector<4x256xf32>,
    %c1_i32_121 = arith.constant 1 : i32
    %135 = tpu.dynamic_rotate %119 by %c1_i32_121 dim 1 : vector<4x256xf32>, i32 -> vector<4x256xf32>
    %c3_122 = arith.constant 3 : index
    %c0_123 = arith.constant 0 : index
    %c0_124 = arith.constant 0 : index
    %136 = vector.load %arg2[%c3_122, %c0_123, %c0_124] : memref<9x4x256xf32, #tpu.memory_space<vmem>>, vector<1x4x256xf32>
    %137 = vector.shape_cast %136 : vector<1x4x256xf32> to vector<4x256xf32>
    %138 = arith.mulf %135, %137 : vector<4x256xf32>
    %c24_125 = arith.constant 24 : index
    %c0_126 = arith.constant 0 : index
    %139 = vector.load %arg7[%c24_125, %c0_126] : memref<80x256xf32, #tpu.memory_space<vmem>>, vector<4x256xf32>
    tpu.vector_store %arg7[%c24_125, %c0_126], %138 {strides = array<i32>} : memref<80x256xf32, #tpu.memory_space<vmem>>, vector<4x256xf32>,
    %c32_127 = arith.constant 32 : index
    %c0_128 = arith.constant 0 : index
    %140 = vector.load %arg7[%c32_127, %c0_128] : memref<80x256xf32, #tpu.memory_space<vmem>>, vector<4x256xf32>
    tpu.vector_store %arg7[%c32_127, %c0_128], %119 {strides = array<i32>} : memref<80x256xf32, #tpu.memory_space<vmem>>, vector<4x256xf32>,
    %c255_i32_129 = arith.constant 255 : i32
    %141 = tpu.dynamic_rotate %119 by %c255_i32_129 dim 1 : vector<4x256xf32>, i32 -> vector<4x256xf32>
    %c5_130 = arith.constant 5 : index
    %c0_131 = arith.constant 0 : index
    %c0_132 = arith.constant 0 : index
    %142 = vector.load %arg2[%c5_130, %c0_131, %c0_132] : memref<9x4x256xf32, #tpu.memory_space<vmem>>, vector<1x4x256xf32>
    %143 = vector.shape_cast %142 : vector<1x4x256xf32> to vector<4x256xf32>
    %144 = arith.mulf %141, %143 : vector<4x256xf32>
    %c40_133 = arith.constant 40 : index
    %c0_134 = arith.constant 0 : index
    %145 = vector.load %arg7[%c40_133, %c0_134] : memref<80x256xf32, #tpu.memory_space<vmem>>, vector<4x256xf32>
    tpu.vector_store %arg7[%c40_133, %c0_134], %144 {strides = array<i32>} : memref<80x256xf32, #tpu.memory_space<vmem>>, vector<4x256xf32>,
    %c241_i32_135 = arith.constant 241 : i32
    %146 = tpu.dynamic_rotate %119 by %c241_i32_135 dim 1 : vector<4x256xf32>, i32 -> vector<4x256xf32>
    %c6_136 = arith.constant 6 : index
    %c0_137 = arith.constant 0 : index
    %c0_138 = arith.constant 0 : index
    %147 = vector.load %arg2[%c6_136, %c0_137, %c0_138] : memref<9x4x256xf32, #tpu.memory_space<vmem>>, vector<1x4x256xf32>
    %148 = vector.shape_cast %147 : vector<1x4x256xf32> to vector<4x256xf32>
    %149 = arith.mulf %146, %148 : vector<4x256xf32>
    %c48_139 = arith.constant 48 : index
    %c0_140 = arith.constant 0 : index
    %150 = vector.load %arg7[%c48_139, %c0_140] : memref<80x256xf32, #tpu.memory_space<vmem>>, vector<4x256xf32>
    tpu.vector_store %arg7[%c48_139, %c0_140], %149 {strides = array<i32>} : memref<80x256xf32, #tpu.memory_space<vmem>>, vector<4x256xf32>,
    %c240_i32_141 = arith.constant 240 : i32
    %151 = tpu.dynamic_rotate %119 by %c240_i32_141 dim 1 : vector<4x256xf32>, i32 -> vector<4x256xf32>
    %c7_142 = arith.constant 7 : index
    %c0_143 = arith.constant 0 : index
    %c0_144 = arith.constant 0 : index
    %152 = vector.load %arg2[%c7_142, %c0_143, %c0_144] : memref<9x4x256xf32, #tpu.memory_space<vmem>>, vector<1x4x256xf32>
    %153 = vector.shape_cast %152 : vector<1x4x256xf32> to vector<4x256xf32>
    %154 = arith.mulf %151, %153 : vector<4x256xf32>
    %c56_145 = arith.constant 56 : index
    %c0_146 = arith.constant 0 : index
    %155 = vector.load %arg7[%c56_145, %c0_146] : memref<80x256xf32, #tpu.memory_space<vmem>>, vector<4x256xf32>
    tpu.vector_store %arg7[%c56_145, %c0_146], %154 {strides = array<i32>} : memref<80x256xf32, #tpu.memory_space<vmem>>, vector<4x256xf32>,
    %c239_i32_147 = arith.constant 239 : i32
    %156 = tpu.dynamic_rotate %119 by %c239_i32_147 dim 1 : vector<4x256xf32>, i32 -> vector<4x256xf32>
    %c8_148 = arith.constant 8 : index
    %c0_149 = arith.constant 0 : index
    %c0_150 = arith.constant 0 : index
    %157 = vector.load %arg2[%c8_148, %c0_149, %c0_150] : memref<9x4x256xf32, #tpu.memory_space<vmem>>, vector<1x4x256xf32>
    %158 = vector.shape_cast %157 : vector<1x4x256xf32> to vector<4x256xf32>
    %159 = arith.mulf %156, %158 : vector<4x256xf32>
    %c64_151 = arith.constant 64 : index
    %c0_152 = arith.constant 0 : index
    %160 = vector.load %arg7[%c64_151, %c0_152] : memref<80x256xf32, #tpu.memory_space<vmem>>, vector<4x256xf32>
    tpu.vector_store %arg7[%c64_151, %c0_152], %159 {strides = array<i32>} : memref<80x256xf32, #tpu.memory_space<vmem>>, vector<4x256xf32>,
    %c1_153 = arith.constant 1 : index
    %c0_154 = arith.constant 0 : index
    %c0_155 = arith.constant 0 : index
    %161 = vector.load %arg3[%c1_153, %c0_154, %c0_155] : memref<2x80x80xf32, #tpu.memory_space<vmem>>, vector<1x80x80xf32>
    %162 = vector.shape_cast %161 : vector<1x80x80xf32> to vector<80x80xf32>
    %c0_156 = arith.constant 0 : index
    %c0_157 = arith.constant 0 : index
    %163 = vector.load %arg7[%c0_156, %c0_157] : memref<80x256xf32, #tpu.memory_space<vmem>>, vector<80x256xf32>
    %cst_158 = arith.constant dense<0.000000e+00> : vector<80x256xf32>
    %164 = tpu.matmul %162, %163, %cst_158 {dimension_numbers = #tpu.dot_dimension_numbers<[1], [0], [0], [1], [0, 0, 1, 1], [], []>} : vector<80x80xf32>, vector<80x256xf32>, vector<80x256xf32> -> vector<80x256xf32>
    %c0_159 = arith.constant 0 : index
    %c0_160 = arith.constant 0 : index
    %165 = vector.load %arg8[%c0_159, %c0_160] : memref<80x256xf32, #tpu.memory_space<vmem>>, vector<80x256xf32>
    tpu.vector_store %arg8[%c0_159, %c0_160], %164 {strides = array<i32>} : memref<80x256xf32, #tpu.memory_space<vmem>>, vector<80x256xf32>,
    %c16_161 = arith.constant 16 : index
    %c0_162 = arith.constant 0 : index
    %166 = vector.load %arg8[%c16_161, %c0_162] : memref<80x256xf32, #tpu.memory_space<vmem>>, vector<2x256xf32>
    %c24_163 = arith.constant 24 : index
    %c0_164 = arith.constant 0 : index
    %167 = vector.load %arg8[%c24_163, %c0_164] : memref<80x256xf32, #tpu.memory_space<vmem>>, vector<2x256xf32>
    %cst_165 = arith.constant dense<0.000000e+00> : vector<256x256xf32>
    %168 = tpu.matmul %166, %167, %cst_165 {dimension_numbers = #tpu.dot_dimension_numbers<[0], [0], [1], [1], [0, 1, 1, 1], [], []>} : vector<2x256xf32>, vector<2x256xf32>, vector<256x256xf32> -> vector<256x256xf32>
    %c0_166 = arith.constant 0 : index
    %c0_167 = arith.constant 0 : index
    %c0_168 = arith.constant 0 : index
    %169 = vector.load %arg9[%c0_166, %c0_167, %c0_168] : memref<2x256x256xf32, #tpu.memory_space<vmem>>, vector<1x256x256xf32>
    %170 = vector.shape_cast %169 : vector<1x256x256xf32> to vector<256x256xf32>
    %171 = vector.shape_cast %168 : vector<256x256xf32> to vector<1x256x256xf32>
    tpu.vector_store %arg9[%c0_166, %c0_167, %c0_168], %171 {strides = array<i32>} : memref<2x256x256xf32, #tpu.memory_space<vmem>>, vector<1x256x256xf32>,
    %c32_169 = arith.constant 32 : index
    %c0_170 = arith.constant 0 : index
    %172 = vector.load %arg8[%c32_169, %c0_170] : memref<80x256xf32, #tpu.memory_space<vmem>>, vector<4x256xf32>
    %cst_171 = arith.constant dense<0.000000e+00> : vector<4xf32>
    %173 = vector.multi_reduction <add>, %172, %cst_171 [1] : vector<4x256xf32> to vector<4xf32>
    %174 = vector.shape_cast %173 : vector<4xf32> to vector<4x1xf32>
    %c56_172 = arith.constant 56 : index
    %c0_173 = arith.constant 0 : index
    %175 = vector.load %arg8[%c56_172, %c0_173] : memref<80x256xf32, #tpu.memory_space<vmem>>, vector<2x256xf32>
    %c64_174 = arith.constant 64 : index
    %c0_175 = arith.constant 0 : index
    %176 = vector.load %arg8[%c64_174, %c0_175] : memref<80x256xf32, #tpu.memory_space<vmem>>, vector<2x256xf32>
    %cst_176 = arith.constant dense<0.000000e+00> : vector<256x256xf32>
    %177 = tpu.matmul %175, %176, %cst_176 {dimension_numbers = #tpu.dot_dimension_numbers<[0], [0], [1], [1], [0, 1, 1, 1], [], []>} : vector<2x256xf32>, vector<2x256xf32>, vector<256x256xf32> -> vector<256x256xf32>
    %c1_177 = arith.constant 1 : index
    %c0_178 = arith.constant 0 : index
    %c0_179 = arith.constant 0 : index
    %178 = vector.load %arg9[%c1_177, %c0_178, %c0_179] : memref<2x256x256xf32, #tpu.memory_space<vmem>>, vector<1x256x256xf32>
    %179 = vector.shape_cast %178 : vector<1x256x256xf32> to vector<256x256xf32>
    %180 = vector.shape_cast %177 : vector<256x256xf32> to vector<1x256x256xf32>
    tpu.vector_store %arg9[%c1_177, %c0_178, %c0_179], %180 {strides = array<i32>} : memref<2x256x256xf32, #tpu.memory_space<vmem>>, vector<1x256x256xf32>,
    %c72_180 = arith.constant 72 : index
    %c0_181 = arith.constant 0 : index
    %181 = vector.load %arg8[%c72_180, %c0_181] : memref<80x256xf32, #tpu.memory_space<vmem>>, vector<4x256xf32>
    %cst_182 = arith.constant dense<0.000000e+00> : vector<4xf32>
    %182 = vector.multi_reduction <add>, %181, %cst_182 [1] : vector<4x256xf32> to vector<4xf32>
    %183 = vector.shape_cast %182 : vector<4xf32> to vector<4x1xf32>
    %c8_183 = arith.constant 8 : index
    %c0_184 = arith.constant 0 : index
    %184 = vector.load %arg5[%c8_183, %c0_184] : memref<16x1xf32, #tpu.memory_space<vmem>>, vector<4x1xf32>
    %c12 = arith.constant 12 : index
    %c0_185 = arith.constant 0 : index
    %185 = vector.load %arg5[%c12, %c0_185] : memref<16x1xf32, #tpu.memory_space<vmem>>, vector<4x1xf32>
    %c2_186 = arith.constant 2 : index
    %c0_187 = arith.constant 0 : index
    %186 = vector.load %arg4[%c2_186, %c0_187] : memref<4x256xf32, #tpu.memory_space<vmem>>, vector<1x256xf32>
    %c3_188 = arith.constant 3 : index
    %c0_189 = arith.constant 0 : index
    %187 = vector.load %arg4[%c3_188, %c0_189] : memref<4x256xf32, #tpu.memory_space<vmem>>, vector<1x256xf32>
    %c0_190 = arith.constant 0 : index
    %c0_191 = arith.constant 0 : index
    %188 = vector.load %arg8[%c0_190, %c0_191] : memref<80x256xf32, #tpu.memory_space<vmem>>, vector<2x256xf32>
    %c8_192 = arith.constant 8 : index
    %c0_193 = arith.constant 0 : index
    %189 = vector.load %arg8[%c8_192, %c0_193] : memref<80x256xf32, #tpu.memory_space<vmem>>, vector<2x256xf32>
    %cst_194 = arith.constant dense<0.000000e+00> : vector<256x256xf32>
    %190 = tpu.matmul %188, %189, %cst_194 {dimension_numbers = #tpu.dot_dimension_numbers<[0], [0], [1], [1], [0, 1, 1, 1], [], []>} : vector<2x256xf32>, vector<2x256xf32>, vector<256x256xf32> -> vector<256x256xf32>
    %c0_195 = arith.constant 0 : index
    %c0_196 = arith.constant 0 : index
    %c0_197 = arith.constant 0 : index
    %191 = vector.load %arg9[%c0_195, %c0_196, %c0_197] : memref<2x256x256xf32, #tpu.memory_space<vmem>>, vector<1x256x256xf32>
    %192 = vector.shape_cast %191 : vector<1x256x256xf32> to vector<256x256xf32>
    %cst_198 = arith.constant dense<0.000000e+00> : vector<256x256xf32>
    %193 = tpu.matmul %190, %192, %cst_198 {dimension_numbers = #tpu.dot_dimension_numbers<[1], [0], [0], [1], [0, 0, 1, 1], [], []>} : vector<256x256xf32>, vector<256x256xf32>, vector<256x256xf32> -> vector<256x256xf32>
    %cst_199 = arith.constant 1.200000e+02 : f32
    %194 = vector.broadcast %cst_199 : f32 to vector<256x256xf32>
    %195 = arith.divf %193, %194 : vector<256x256xf32>
    %196 = math.floor %195 : vector<256x256xf32>
    %c32_200 = arith.constant 32 : index
    %c0_201 = arith.constant 0 : index
    %197 = vector.load %arg8[%c32_200, %c0_201] : memref<80x256xf32, #tpu.memory_space<vmem>>, vector<4x256xf32>
    %cst_202 = arith.constant dense<0.000000e+00> : vector<4x256xf32>
    %198 = tpu.matmul %197, %196, %cst_202 {dimension_numbers = #tpu.dot_dimension_numbers<[1], [1], [0], [0], [0, 0, 1, 0], [], []>} : vector<4x256xf32>, vector<256x256xf32>, vector<4x256xf32> -> vector<4x256xf32>
    %199 = vector.broadcast %186 : vector<1x256xf32> to vector<4x256xf32>
    %200 = arith.mulf %198, %199 : vector<4x256xf32>
    %201 = vector.broadcast %174 : vector<4x1xf32> to vector<4x256xf32>
    %202 = vector.broadcast %187 : vector<1x256xf32> to vector<4x256xf32>
    %203 = arith.mulf %201, %202 : vector<4x256xf32>
    %204 = arith.addf %200, %203 : vector<4x256xf32>
    %c40_203 = arith.constant 40 : index
    %c0_204 = arith.constant 0 : index
    %205 = vector.load %arg8[%c40_203, %c0_204] : memref<80x256xf32, #tpu.memory_space<vmem>>, vector<2x256xf32>
    %c48_205 = arith.constant 48 : index
    %c0_206 = arith.constant 0 : index
    %206 = vector.load %arg8[%c48_205, %c0_206] : memref<80x256xf32, #tpu.memory_space<vmem>>, vector<2x256xf32>
    %cst_207 = arith.constant dense<0.000000e+00> : vector<256x256xf32>
    %207 = tpu.matmul %205, %206, %cst_207 {dimension_numbers = #tpu.dot_dimension_numbers<[0], [0], [1], [1], [0, 1, 1, 1], [], []>} : vector<2x256xf32>, vector<2x256xf32>, vector<256x256xf32> -> vector<256x256xf32>
    %c1_208 = arith.constant 1 : index
    %c0_209 = arith.constant 0 : index
    %c0_210 = arith.constant 0 : index
    %208 = vector.load %arg9[%c1_208, %c0_209, %c0_210] : memref<2x256x256xf32, #tpu.memory_space<vmem>>, vector<1x256x256xf32>
    %209 = vector.shape_cast %208 : vector<1x256x256xf32> to vector<256x256xf32>
    %cst_211 = arith.constant dense<0.000000e+00> : vector<256x256xf32>
    %210 = tpu.matmul %207, %209, %cst_211 {dimension_numbers = #tpu.dot_dimension_numbers<[1], [0], [0], [1], [0, 0, 1, 1], [], []>} : vector<256x256xf32>, vector<256x256xf32>, vector<256x256xf32> -> vector<256x256xf32>
    %cst_212 = arith.constant 1.200000e+02 : f32
    %211 = vector.broadcast %cst_212 : f32 to vector<256x256xf32>
    %212 = arith.divf %210, %211 : vector<256x256xf32>
    %213 = math.floor %212 : vector<256x256xf32>
    %c72_213 = arith.constant 72 : index
    %c0_214 = arith.constant 0 : index
    %214 = vector.load %arg8[%c72_213, %c0_214] : memref<80x256xf32, #tpu.memory_space<vmem>>, vector<4x256xf32>
    %cst_215 = arith.constant dense<0.000000e+00> : vector<4x256xf32>
    %215 = tpu.matmul %214, %213, %cst_215 {dimension_numbers = #tpu.dot_dimension_numbers<[1], [1], [0], [0], [0, 0, 1, 0], [], []>} : vector<4x256xf32>, vector<256x256xf32>, vector<4x256xf32> -> vector<4x256xf32>
    %216 = vector.broadcast %186 : vector<1x256xf32> to vector<4x256xf32>
    %217 = arith.mulf %215, %216 : vector<4x256xf32>
    %218 = vector.broadcast %183 : vector<4x1xf32> to vector<4x256xf32>
    %219 = vector.broadcast %187 : vector<1x256xf32> to vector<4x256xf32>
    %220 = arith.mulf %218, %219 : vector<4x256xf32>
    %221 = arith.addf %217, %220 : vector<4x256xf32>
    %222 = arith.mulf %221, %204 : vector<4x256xf32>
    %cst_216 = arith.constant 0.000000e+00 : f32
    %223 = vector.broadcast %cst_216 : f32 to vector<4x256xf32>
    %224 = arith.cmpf oge, %222, %223 : vector<4x256xf32>
    %cst_217 = arith.constant 0.00999999977 : f32
    %225 = vector.broadcast %cst_217 : f32 to vector<4x256xf32>
    %226 = arith.mulf %225, %222 : vector<4x256xf32>
    %227 = arith.select %224, %222, %226 : vector<4x256xi1>, vector<4x256xf32>
    %228 = vector.broadcast %184 : vector<4x1xf32> to vector<4x256xf32>
    %229 = arith.mulf %227, %228 : vector<4x256xf32>
    %230 = vector.broadcast %185 : vector<4x1xf32> to vector<4x256xf32>
    %231 = arith.addf %229, %230 : vector<4x256xf32>
    %c0_218 = arith.constant 0 : index
    %c0_219 = arith.constant 0 : index
    %c0_220 = arith.constant 0 : index
    %232 = vector.load %arg1[%c0_218, %c0_219, %c0_220] : memref<1x4x256xf32, #tpu.memory_space<vmem>>, vector<1x4x256xf32>
    %233 = vector.shape_cast %232 : vector<1x4x256xf32> to vector<4x256xf32>
    %234 = arith.addf %231, %233 : vector<4x256xf32>
    %cst_221 = arith.constant 0.000000e+00 : f32
    %235 = vector.broadcast %cst_221 : f32 to vector<4x256xf32>
    %236 = arith.cmpf oge, %234, %235 : vector<4x256xf32>
    %cst_222 = arith.constant 0.00999999977 : f32
    %237 = vector.broadcast %cst_222 : f32 to vector<4x256xf32>
    %238 = arith.mulf %237, %234 : vector<4x256xf32>
    %239 = arith.select %236, %234, %238 : vector<4x256xi1>, vector<4x256xf32>
    %c0_223 = arith.constant 0 : index
    %c0_224 = arith.constant 0 : index
    %c0_225 = arith.constant 0 : index
    %240 = vector.load %arg6[%c0_223, %c0_224, %c0_225] : memref<1x4x256xf32, #tpu.memory_space<vmem>>, vector<1x4x256xf32>
    %241 = vector.shape_cast %240 : vector<1x4x256xf32> to vector<4x256xf32>
    %242 = vector.shape_cast %239 : vector<4x256xf32> to vector<1x4x256xf32>
    tpu.vector_store %arg6[%c0_223, %c0_224, %c0_225], %242 {strides = array<i32>} : memref<1x4x256xf32, #tpu.memory_space<vmem>>, vector<1x4x256xf32>,
    return
  }
  func.func @transform_0(%arg0: i32) -> (i32, i32, i32) {
    %c0_i32 = arith.constant 0 : i32
    %c0_i32_0 = arith.constant 0 : i32
    %c0_i32_1 = arith.constant 0 : i32
    return %arg0, %c0_i32, %c0_i32_0 : i32, i32, i32
  }
  func.func @transform_1(%arg0: i32) -> (i32, i32, i32) {
    %c0_i32 = arith.constant 0 : i32
    %c0_i32_0 = arith.constant 0 : i32
    %c0_i32_1 = arith.constant 0 : i32
    %c0_i32_2 = arith.constant 0 : i32
    return %c0_i32, %c0_i32_0, %c0_i32_1 : i32, i32, i32
  }
  func.func @transform_2(%arg0: i32) -> (i32, i32, i32) {
    %c0_i32 = arith.constant 0 : i32
    %c0_i32_0 = arith.constant 0 : i32
    %c0_i32_1 = arith.constant 0 : i32
    %c0_i32_2 = arith.constant 0 : i32
    return %c0_i32, %c0_i32_0, %c0_i32_1 : i32, i32, i32
  }
  func.func @transform_3(%arg0: i32) -> (i32, i32) {
    %c0_i32 = arith.constant 0 : i32
    %c0_i32_0 = arith.constant 0 : i32
    %c0_i32_1 = arith.constant 0 : i32
    return %c0_i32, %c0_i32_0 : i32, i32
  }
  func.func @transform_4(%arg0: i32) -> (i32, i32) {
    %c0_i32 = arith.constant 0 : i32
    %c0_i32_0 = arith.constant 0 : i32
    %c0_i32_1 = arith.constant 0 : i32
    return %c0_i32, %c0_i32_0 : i32, i32
  }
  func.func @transform_5(%arg0: i32) -> (i32, i32, i32) {
    %c0_i32 = arith.constant 0 : i32
    %c0_i32_0 = arith.constant 0 : i32
    %c0_i32_1 = arith.constant 0 : i32
    return %arg0, %c0_i32, %c0_i32_0 : i32, i32, i32
  }
}

</mosaic_0001>

<llo_original>
// kernel: sares_forward.1
$region0: #{sares_forward.1}
  #allocation0 [shape = 'u32[]', space=smem, size = 0x4, offset = 0x4, fixed_abs, tag = 'smem constant byte address 0x4 - core index']
  #allocation1 [shape = 'u32[144,128]{1,0:T(1,128)}', space=vmem, size = 0x12000, scoped, tag = 'internal scratch']
  #allocation2 [shape = 'f32[80,256]{1,0:T(8,128)}', space=vmem, size = 0x14000, scoped, tag = 'scratch operand']
  #allocation3 [shape = 'f32[80,256]{1,0:T(8,128)}', space=vmem, size = 0x14000, scoped, tag = 'scratch operand']
  #allocation4 [shape = 'f32[2,256,256]{2,1,0:T(8,128)}', space=vmem, size = 0x80000, scoped, tag = 'scratch operand']
  #allocation5 [shape = 'f32[4,256]{1,0:T(4,128)}', space=vmem, size = 0x1000, scoped, tag = 'scratch operand']
  %s0 = inlined_call_operand.vmem [shape: f32[2,4,256], index: 0, kind: input, shape index: {}]
  %s1 = inlined_call_operand.vmem [shape: f32[9,4,256], index: 1, kind: input, shape index: {}]
  %s2 = inlined_call_operand.vmem [shape: f32[2,80,80], index: 2, kind: input, shape index: {}]
  %s3 = inlined_call_operand.vmem [shape: f32[4,256], index: 3, kind: input, shape index: {}]
  %s4 = inlined_call_operand.vmem [shape: f32[16,1], index: 4, kind: input, shape index: {}]
  %s5 = inlined_call_operand.vmem [shape: f32[2,4,256], index: 5, kind: output, shape index: {}]
  %s6 = sld [smem:[#allocation0]]
  $region53: #{sares_forward.1} parent=0
    _
  %s8 = ssub.s32 1, %s6
  %s9 = scalar_select 0, %s8, %s6
  loop: start=0, step=1, limit=4
  $region2: #{sares_forward.1} parent=0 // loop_pre_header
    _
  $region3: #{sares_forward.1} parent=0 // loop_header
    %s11 = sphi 0, %s15
    %p12 = scmp.ge.s32.totalorder %s11, 4
    %s21 = sphi 0, %s23
    %s24 = sphi 0, %s21
    %s25 = sphi 0, %s24
    %s41 = sphi 0, %s25
    %s45 = sphi 0, %s45
    %s47 = sphi 0, %s45
    %s48 = sphi 0, %s47
    %s62 = sphi 0, %s48
    %s66 = sphi 0, %s66
    %s68 = sphi 0, %s66
    %s69 = sphi 0, %s68
    %s83 = sphi 0, %s69
    %s87 = sphi 0, %s87
    %s89 = sphi 0, %s87
    %s90 = sphi 0, %s89
    %s104 = sphi 0, %s90
    %s108 = sphi 0, %s108
    %s110 = sphi 0, %s108
    %s111 = sphi 0, %s110
    %s125 = sphi 0, %s111
    %s131 = sphi 0, %s133
    %s134 = sphi 0, %s131
    %s135 = sphi 0, %s134
    %s151 = sphi 0, %s135
  $region4: #{sares_forward.1} parent=0 // loop_header_branch
    %14 = sbr.rel (%p12) target = $region8
  $region5: #{sares_forward.1} parent=0 // loop_body
    %s16 = ssub.s32 %s11, 1
    %s17 = ssub.s32 %s11, 2
    %s18 = sadd.s32 %s11, 1
    %s19 = ssub.s32 %s11, %s18
    %p20 = scmp.eq.s32.totalorder %s19, 0
    %s22 = sadd.s32 %s21, 1
    %s23 = scalar_select %p20, %s21, %s22
    %p26 = pneg %p20
    %p27 = scmp.eq.s32.totalorder %s11, 1
    %p28 = por %p26, %p27
    %p29 = scmp.ne.s32.totalorder %s21, %s24
    %p30 = scmp.eq.s32.totalorder %s11, 0
    %p31 = por %p29, %p30
    %p32 = scmp.ne.s32.totalorder %s21, %s24
    %p33 = scmp.eq.s32.totalorder %s16, 1
    %p34 = por %p32, %p33
    %p35 = scmp.ne.s32.totalorder %s24, %s25
    %p36 = scmp.eq.s32.totalorder %s16, 0
    %p37 = por %p35, %p36
    %p38 = scmp.ne.s32.totalorder %s24, %s25
    %p39 = scmp.eq.s32.totalorder %s17, 1
    %p40 = por %p38, %p39
    %p42 = scmp.ne.s32.totalorder %s25, %s41
    %p43 = scmp.eq.s32.totalorder %s17, 0
    %p44 = por %p42, %p43
    %s46 = sadd.s32 %s45, 1
    %p49 = scmp.eq.s32.totalorder %s11, 1
    %p50 = scmp.ne.s32.totalorder %s45, %s47
    %p51 = scmp.eq.s32.totalorder %s11, 0
    %p52 = por %p50, %p51
    %p53 = scmp.ne.s32.totalorder %s45, %s47
    %p54 = scmp.eq.s32.totalorder %s16, 1
    %p55 = por %p53, %p54
    %p56 = scmp.ne.s32.totalorder %s47, %s48
    %p57 = scmp.eq.s32.totalorder %s16, 0
    %p58 = por %p56, %p57
    %p59 = scmp.ne.s32.totalorder %s47, %s48
    %p60 = scmp.eq.s32.totalorder %s17, 1
    %p61 = por %p59, %p60
    %p63 = scmp.ne.s32.totalorder %s48, %s62
    %p64 = scmp.eq.s32.totalorder %s17, 0
    %p65 = por %p63, %p64
    %s67 = sadd.s32 %s66, 1
    %p70 = scmp.eq.s32.totalorder %s11, 1
    %p71 = scmp.ne.s32.totalorder %s66, %s68
    %p72 = scmp.eq.s32.totalorder %s11, 0
    %p73 = por %p71, %p72
    %p74 = scmp.ne.s32.totalorder %s66, %s68
    %p75 = scmp.eq.s32.totalorder %s16, 1
    %p76 = por %p74, %p75
    %p77 = scmp.ne.s32.totalorder %s68, %s69
    %p78 = scmp.eq.s32.totalorder %s16, 0
    %p79 = por %p77, %p78
    %p80 = scmp.ne.s32.totalorder %s68, %s69
    %p81 = scmp.eq.s32.totalorder %s17, 1
    %p82 = por %p80, %p81
    %p84 = scmp.ne.s32.totalorder %s69, %s83
    %p85 = scmp.eq.s32.totalorder %s17, 0
    %p86 = por %p84, %p85
    %s88 = sadd.s32 %s87, 1
    %p91 = scmp.eq.s32.totalorder %s11, 1
    %p92 = scmp.ne.s32.totalorder %s87, %s89
    %p93 = scmp.eq.s32.totalorder %s11, 0
    %p94 = por %p92, %p93
    %p95 = scmp.ne.s32.totalorder %s87, %s89
    %p96 = scmp.eq.s32.totalorder %s16, 1
    %p97 = por %p95, %p96
    %p98 = scmp.ne.s32.totalorder %s89, %s90
    %p99 = scmp.eq.s32.totalorder %s16, 0
    %p100 = por %p98, %p99
    %p101 = scmp.ne.s32.totalorder %s89, %s90
    %p102 = scmp.eq.s32.totalorder %s17, 1
    %p103 = por %p101, %p102
    %p105 = scmp.ne.s32.totalorder %s90, %s104
    %p106 = scmp.eq.s32.totalorder %s17, 0
    %p107 = por %p105, %p106
    %s109 = sadd.s32 %s108, 1
    %p112 = scmp.eq.s32.totalorder %s11, 1
    %p113 = scmp.ne.s32.totalorder %s108, %s110
    %p114 = scmp.eq.s32.totalorder %s11, 0
    %p115 = por %p113, %p114
    %p116 = scmp.ne.s32.totalorder %s108, %s110
    %p117 = scmp.eq.s32.totalorder %s16, 1
    %p118 = por %p116, %p117
    %p119 = scmp.ne.s32.totalorder %s110, %s111
    %p120 = scmp.eq.s32.totalorder %s16, 0
    %p121 = por %p119, %p120
    %p122 = scmp.ne.s32.totalorder %s110, %s111
    %p123 = scmp.eq.s32.totalorder %s17, 1
    %p124 = por %p122, %p123
    %p126 = scmp.ne.s32.totalorder %s111, %s125
    %p127 = scmp.eq.s32.totalorder %s17, 0
    %p128 = por %p126, %p127
    %s129 = ssub.s32 %s11, %s18
    %p130 = scmp.eq.s32.totalorder %s129, 0
    %s132 = sadd.s32 %s131, 1
    %s133 = scalar_select %p130, %s131, %s132
    %p136 = pneg %p130
    %p137 = scmp.eq.s32.totalorder %s11, 1
    %p138 = por %p136, %p137
    %p139 = scmp.ne.s32.totalorder %s131, %s134
    %p140 = scmp.eq.s32.totalorder %s11, 0
    %p141 = por %p139, %p140
    %p142 = scmp.ne.s32.totalorder %s131, %s134
    %p143 = scmp.eq.s32.totalorder %s16, 1
    %p144 = por %p142, %p143
    %p145 = scmp.ne.s32.totalorder %s134, %s135
    %p146 = scmp.eq.s32.totalorder %s16, 0
    %p147 = por %p145, %p146
    %p148 = scmp.ne.s32.totalorder %s134, %s135
    %p149 = scmp.eq.s32.totalorder %s17, 1
    %p150 = por %p148, %p149
    %p152 = scmp.ne.s32.totalorder %s135, %s151
    %p153 = scmp.eq.s32.totalorder %s17, 0
    %p154 = por %p152, %p153
    %p155 = scmp.le.s32.totalorder 1, %s11
    %p156 = scmp.lt.s32.totalorder %s11, 3
    %p157 = pnand %p155, %p156
    %p158 = pneg %p157
    // Predicated region
    $region9: #{sares_forward.1} parent=5 // pred_check
      _
    $region10: #{sares_forward.1} parent=5 // pred_check_branch
      %160 = sbr.rel (%p157) target = $region12
    $region11: #{sares_forward.1} parent=5 // pred_region
      %s161 = ssub.s32 %s11, 1
      // Predicated region
      $region13: #{sares_forward.1} parent=11 // pred_check
        %p162 = pneg %p58
      $region14: #{sares_forward.1} parent=11 // pred_check_branch
        %164 = sbr.rel (%p162) target = $region16
      $region15: #{sares_forward.1} parent=11 // pred_region
        _
      $region16: #{sares_forward.1} parent=11 // pred_fallthru
        _
      // Predicated region
      $region17: #{sares_forward.1} parent=11 // pred_check
        %p165 = pneg %p79
      $region18: #{sares_forward.1} parent=11 // pred_check_branch
        %167 = sbr.rel (%p165) target = $region20
      $region19: #{sares_forward.1} parent=11 // pred_region
        _
      $region20: #{sares_forward.1} parent=11 // pred_fallthru
        _
      // Predicated region
      $region21: #{sares_forward.1} parent=11 // pred_check
        %p168 = pneg %p100
      $region22: #{sares_forward.1} parent=11 // pred_check_branch
        %170 = sbr.rel (%p168) target = $region24
      $region23: #{sares_forward.1} parent=11 // pred_region
        _
      $region24: #{sares_forward.1} parent=11 // pred_fallthru
        _
      // Predicated region
      $region25: #{sares_forward.1} parent=11 // pred_check
        %p171 = pneg %p121
      $region26: #{sares_forward.1} parent=11 // pred_check_branch
        %173 = sbr.rel (%p171) target = $region28
      $region27: #{sares_forward.1} parent=11 // pred_region
        _
      $region28: #{sares_forward.1} parent=11 // pred_fallthru
        _
    $region12: #{sares_forward.1} parent=5 // pred_fallthru
      _
    %p174 = scmp.lt.s32.totalorder %s11, 2
    // Predicated region
    $region29: #{sares_forward.1} parent=5 // pred_check
      %p175 = pneg %p174
    $region30: #{sares_forward.1} parent=5 // pred_check_branch
      %177 = sbr.rel (%p175) target = $region32
    $region31: #{sares_forward.1} parent=5 // pred_region
      // Predicated region
      $region33: #{sares_forward.1} parent=31 // pred_check
        %p178 = pneg %p31
      $region34: #{sares_forward.1} parent=31 // pred_check_branch
        %180 = sbr.rel (%p178) target = $region36
      $region35: #{sares_forward.1} parent=31 // pred_region
        %p181 = scmp.lt.s32.totalorder %s11, 1
        %s182 = scalar_select %p181, %s11, 1
        %s183 = smul.addr %s182, 2
        %s184 = smul.addr %s183, 4
        %s185 = scalar_lea.vmem %s0, %s184
      $region36: #{sares_forward.1} parent=31 // pred_fallthru
        _
    $region32: #{sares_forward.1} parent=5 // pred_fallthru
      _
    %p186 = scmp.le.s32.totalorder 1, %s11
    %p187 = scmp.lt.s32.totalorder %s11, 3
    %p188 = pnand %p186, %p187
    %p189 = pneg %p188
    // Predicated region
    $region37: #{sares_forward.1} parent=5 // pred_check
      _
    $region38: #{sares_forward.1} parent=5 // pred_check_branch
      %191 = sbr.rel (%p188) target = $region40
    $region39: #{sares_forward.1} parent=5 // pred_region
      %s192 = ssub.s32 %s11, 1
      %p193 = scmp.lt.s32.totalorder %s16, 1
      %s194 = scalar_select %p193, %s16, 1
      %s195 = smul.addr %s194, 2
      %s196 = smul.addr %s195, 4
      %s197 = scalar_lea.vmem %s0, %s196
      %p198 = pneg %p37
      %p199 = pneg %p34
      %p200 = pneg %p58
      %p201 = pneg %p55
      %p202 = pneg %p79
      %p203 = pneg %p76
      %p204 = pneg %p100
      %p205 = pneg %p97
      %p206 = pneg %p121
      %p207 = pneg %p118
      %p208 = pneg %p147
      %p209 = pneg %p144
      %p210 = scmp.lt.s32.totalorder %s16, 1
      %s211 = scalar_select %p210, %s16, 1
      %s212 = smul.addr %s211, 2
      %s213 = smul.addr %s212, 4
      %s214 = scalar_lea.vmem %s5, %s213
      %p215 = scmp.lt.s32.totalorder %s16, 1
      %s216 = scalar_select %p215, %s16, 1
      %s217 = smul.addr %s216, 2
      %s218 = smul.addr %s217, 4
      %s219 = scalar_lea.vmem %s0, %s218
      %p220 = scmp.lt.s32.totalorder %s16, 1
      %s221 = scalar_select %p220, %s16, 1
      %s222 = smul.addr %s221, 2
      %s223 = smul.addr %s222, 4
      %s224 = scalar_lea.vmem %s5, %s223
      %225 = vst [vmem:[#allocation2] sm:$0xff] 0.0
      %226 = vst [vmem:[#allocation2 + $0x8] sm:$0xff] 0.0
      %227 = vst [vmem:[#allocation2 + $0x10] sm:$0xff] 0.0
      %228 = vst [vmem:[#allocation2 + $0x18] sm:$0xff] 0.0
      %229 = vst [vmem:[#allocation2 + $0x20] sm:$0xff] 0.0
      %230 = vst [vmem:[#allocation2 + $0x28] sm:$0xff] 0.0
      %231 = vst [vmem:[#allocation2 + $0x30] sm:$0xff] 0.0
      %232 = vst [vmem:[#allocation2 + $0x38] sm:$0xff] 0.0
      %233 = vst [vmem:[#allocation2 + $0x40] sm:$0xff] 0.0
      %234 = vst [vmem:[#allocation2 + $0x48] sm:$0xff] 0.0
      %235 = vst [vmem:[#allocation2 + $0x50] sm:$0xff] 0.0
      %236 = vst [vmem:[#allocation2 + $0x58] sm:$0xff] 0.0
      %237 = vst [vmem:[#allocation2 + $0x60] sm:$0xff] 0.0
      %238 = vst [vmem:[#allocation2 + $0x68] sm:$0xff] 0.0
      %239 = vst [vmem:[#allocation2 + $0x70] sm:$0xff] 0.0
      %240 = vst [vmem:[#allocation2 + $0x78] sm:$0xff] 0.0
      %241 = vst [vmem:[#allocation2 + $0x80] sm:$0xff] 0.0
      %242 = vst [vmem:[#allocation2 + $0x88] sm:$0xff] 0.0
      %243 = vst [vmem:[#allocation2 + $0x90] sm:$0xff] 0.0
      %244 = vst [vmem:[#allocation2 + $0x98] sm:$0xff] 0.0
      %v245 = vlaneseq
      %vm246 = vcmp.ge.s32.totalorder %v245, 0
      %vm247 = vcmp.lt.s32.totalorder %v245, 256
      %vm248 = vmand %vm246, %vm247
      %s249 = scalar_lea.vmem [#allocation2], 144
      %250 = vst.msk [vmem:[%s249] ss:$8 sm:$0x3] %vm248, 1.0
      %251 = vst.msk [vmem:[%s249] ss:$8 sm:$0x0] %vm248, 1.0
      %v252 = vld [vmem:[%s219] sm:$0xff]
      %v254 = vcombine.high %v252, %v252
      %256 = vrot.lane.b32.xlu0 %v252, 17
      %v257 = vpop.permute.xlu0 %256
      %258 = vrot.lane.b32.xlu0 %v254, 17
      %v259 = vpop.permute.xlu0 %258
      %v260 = vlaneseq
      %v261 = vand.u32 %v260, 127
      %vm262 = vcmp.lt.s32.totalorder %v261, 17
      %v263 = vsel %vm262, %v257, %v259
      %v264 = vsel %vm262, %v259, %v257
      %v265 = vld [vmem:[%s1] sm:$0xff]
      %v267 = vcombine.high %v265, %v265
      %v269 = vmul.f32 %v264, %v265
      %v270 = vmul.f32 %v263, %v267
      %271 = vst [vmem:[#allocation2] sm:$0xf] %v269
      %272 = vst [vmem:[#allocation2 + $0x8] sm:$0xf] %v270
      %273 = vrot.lane.b32.xlu0 %v252, 16
      %v274 = vpop.permute.xlu0 %273
      %275 = vrot.lane.b32.xlu0 %v254, 16
      %v276 = vpop.permute.xlu0 %275
      %vm277 = vcmp.lt.s32.totalorder %v261, 16
      %v278 = vsel %vm277, %v274, %v276
      %v279 = vsel %vm277, %v276, %v274
      %s280 = scalar_lea.vmem %s1, 8
      %v281 = vld [vmem:[%s280] sm:$0xff]
      %v283 = vcombine.high %v281, %v281
      %v285 = vmul.f32 %v279, %v281
      %v286 = vmul.f32 %v278, %v283
      %287 = vst [vmem:[#allocation2 + $0x10] sm:$0xf] %v285
      %288 = vst [vmem:[#allocation2 + $0x18] sm:$0xf] %v286
      %289 = vrot.lane.b32.xlu0 %v252, 15
      %v290 = vpop.permute.xlu0 %289
      %291 = vrot.lane.b32.xlu0 %v254, 15
      %v292 = vpop.permute.xlu0 %291
      %vm293 = vcmp.lt.s32.totalorder %v261, 15
      %v294 = vsel %vm293, %v290, %v292
      %v295 = vsel %vm293, %v292, %v290
      %s296 = scalar_lea.vmem %s1, 16
      %v297 = vld [vmem:[%s296] sm:$0xff]
      %v299 = vcombine.high %v297, %v297
      %v301 = vmul.f32 %v295, %v297
      %v302 = vmul.f32 %v294, %v299
      %303 = vst [vmem:[#allocation2 + $0x20] sm:$0xf] %v301
      %304 = vst [vmem:[#allocation2 + $0x28] sm:$0xf] %v302
      %305 = vrot.lane.b32.xlu0 %v252, 1
      %v306 = vpop.permute.xlu0 %305
      %307 = vrot.lane.b32.xlu0 %v254, 1
      %v308 = vpop.permute.xlu0 %307
      %vm309 = vcmp.lt.s32.totalorder %v261, 1
      %v310 = vsel %vm309, %v306, %v308
      %v311 = vsel %vm309, %v308, %v306
      %s312 = scalar_lea.vmem %s1, 24
      %v313 = vld [vmem:[%s312] sm:$0xff]
      %v315 = vcombine.high %v313, %v313
      %v317 = vmul.f32 %v311, %v313
      %v318 = vmul.f32 %v310, %v315
      %319 = vst [vmem:[#allocation2 + $0x30] sm:$0xf] %v317
      %320 = vst [vmem:[#allocation2 + $0x38] sm:$0xf] %v318
      %321 = vst [vmem:[#allocation2 + $0x40] sm:$0xf] %v252
      %322 = vst [vmem:[#allocation2 + $0x48] sm:$0xf] %v254
      %323 = vrot.lane.b32.xlu0 %v252, 127
      %v324 = vpop.permute.xlu0 %323
      %325 = vrot.lane.b32.xlu0 %v254, 127
      %v326 = vpop.permute.xlu0 %325
      %vm327 = vcmp.lt.s32.totalorder %v261, 127
      %v328 = vsel %vm327, %v324, %v326
      %v329 = vsel %vm327, %v326, %v324
      %s330 = scalar_lea.vmem %s1, 40
      %v331 = vld [vmem:[%s330] sm:$0xff]
      %v333 = vcombine.high %v331, %v331
      %v335 = vmul.f32 %v328, %v331
      %v336 = vmul.f32 %v329, %v333
      %337 = vst [vmem:[#allocation2 + $0x50] sm:$0xf] %v335
      %338 = vst [vmem:[#allocation2 + $0x58] sm:$0xf] %v336
      %339 = vrot.lane.b32.xlu0 %v252, 113
      %v340 = vpop.permute.xlu0 %339
      %341 = vrot.lane.b32.xlu0 %v254, 113
      %v342 = vpop.permute.xlu0 %341
      %vm343 = vcmp.lt.s32.totalorder %v261, 113
      %v344 = vsel %vm343, %v340, %v342
      %v345 = vsel %vm343, %v342, %v340
      %s346 = scalar_lea.vmem %s1, 48
      %v347 = vld [vmem:[%s346] sm:$0xff]
      %v349 = vcombine.high %v347, %v347
      %v351 = vmul.f32 %v344, %v347
      %v352 = vmul.f32 %v345, %v349
      %353 = vst [vmem:[#allocation2 + $0x60] sm:$0xf] %v351
      %354 = vst [vmem:[#allocation2 + $0x68] sm:$0xf] %v352
      %355 = vrot.lane.b32.xlu0 %v252, 112
      %v356 = vpop.permute.xlu0 %355
      %357 = vrot.lane.b32.xlu0 %v254, 112
      %v358 = vpop.permute.xlu0 %357
      %vm359 = vcmp.lt.s32.totalorder %v261, 112
      %v360 = vsel %vm359, %v356, %v358
      %v361 = vsel %vm359, %v358, %v356
      %s362 = scalar_lea.vmem %s1, 56
      %v363 = vld [vmem:[%s362] sm:$0xff]
      %v365 = vcombine.high %v363, %v363
      %v367 = vmul.f32 %v360, %v363
      %v368 = vmul.f32 %v361, %v365
      %369 = vst [vmem:[#allocation2 + $0x70] sm:$0xf] %v367
      %370 = vst [vmem:[#allocation2 + $0x78] sm:$0xf] %v368
      %371 = vrot.lane.b32.xlu0 %v252, 111
      %v372 = vpop.permute.xlu0 %371
      %373 = vrot.lane.b32.xlu0 %v254, 111
      %v374 = vpop.permute.xlu0 %373
      %vm375 = vcmp.lt.s32.totalorder %v261, 111
      %v376 = vsel %vm375, %v372, %v374
      %v377 = vsel %vm375, %v374, %v372
      %s378 = scalar_lea.vmem %s1, 64
      %v379 = vld [vmem:[%s378] sm:$0xff]
      %v381 = vcombine.high %v379, %v379
      %v383 = vmul.f32 %v376, %v379
      %v384 = vmul.f32 %v377, %v381
      %385 = vst [vmem:[#allocation2 + $0x80] sm:$0xf] %v383
      %386 = vst [vmem:[#allocation2 + $0x88] sm:$0xf] %v384
      %v387 = vld [vmem:[%s2] sm:$0xff]
      %v388 = vld [vmem:[%s2 + $0x8] sm:$0xff]
      %v389 = vld [vmem:[%s2 + $0x10] sm:$0xff]
      %v390 = vld [vmem:[%s2 + $0x18] sm:$0xff]
      %v391 = vld [vmem:[%s2 + $0x20] sm:$0xff]
      %v392 = vld [vmem:[%s2 + $0x28] sm:$0xff]
      %v393 = vld [vmem:[%s2 + $0x30] sm:$0xff]
      %v394 = vld [vmem:[%s2 + $0x38] sm:$0xff]
      %v395 = vld [vmem:[%s2 + $0x40] sm:$0xff]
      %v396 = vld [vmem:[%s2 + $0x48] sm:$0xff]
      %v397 = vld [vmem:[#allocation2] sm:$0xff]
      %v398 = vld [vmem:[#allocation2 + $0x8] sm:$0xff]
      %v399 = vld [vmem:[#allocation2 + $0x10] sm:$0xff]
      %v400 = vld [vmem:[#allocation2 + $0x18] sm:$0xff]
      %v401 = vld [vmem:[#allocation2 + $0x20] sm:$0xff]
      %v402 = vld [vmem:[#allocation2 + $0x28] sm:$0xff]
      %v403 = vld [vmem:[#allocation2 + $0x30] sm:$0xff]
      %v404 = vld [vmem:[#allocation2 + $0x38] sm:$0xff]
      %v405 = vld [vmem:[#allocation2 + $0x40] sm:$0xff]
      %v406 = vld [vmem:[#allocation2 + $0x48] sm:$0xff]
      %v407 = vld [vmem:[#allocation2 + $0x50] sm:$0xff]
      %v408 = vld [vmem:[#allocation2 + $0x58] sm:$0xff]
      %v409 = vld [vmem:[#allocation2 + $0x60] sm:$0xff]
      %v410 = vld [vmem:[#allocation2 + $0x68] sm:$0xff]
      %v411 = vld [vmem:[#allocation2 + $0x70] sm:$0xff]
      %v412 = vld [vmem:[#allocation2 + $0x78] sm:$0xff]
      %v413 = vld [vmem:[#allocation2 + $0x80] sm:$0xff]
      %v414 = vld [vmem:[#allocation2 + $0x88] sm:$0xff]
      %v415 = vld [vmem:[#allocation2 + $0x90] sm:$0xff]
      %v416 = vld [vmem:[#allocation2 + $0x98] sm:$0xff]
      %vm417 = vcmask 654336
      %v419 = vsel %vm417, %v387, 0
      %v422 = vsel %vm417, %v388, 0
      %v425 = vsel %vm417, %v389, 0
      %v428 = vsel %vm417, %v390, 0
      %v431 = vsel %vm417, %v391, 0
      %v434 = vsel %vm417, %v392, 0
      %v437 = vsel %vm417, %v393, 0
      %v440 = vsel %vm417, %v394, 0
      %v443 = vsel %vm417, %v395, 0
      %v446 = vsel %vm417, %v396, 0
      %448 = vmatprep.subr.mxu0 %v398
      %449 = vmatpush1.msra.mxu0 %v397
      %450 = vmatprep.subr.mxu0 %v400
      %451 = vmatpush1.msra.mxu0 %v399
      %452 = vmatprep.subr.mxu0 %v402
      %453 = vmatpush1.msra.mxu0 %v401
      %454 = vmatprep.subr.mxu0 %v404
      %455 = vmatpush1.msra.mxu0 %v403
      %456 = vmatprep.subr.mxu0 %v406
      %457 = vmatpush1.msra.mxu0 %v405
      %458 = vmatprep.subr.mxu0 %v408
      %459 = vmatpush1.msra.mxu0 %v407
      %460 = vmatprep.subr.mxu0 %v410
      %461 = vmatpush1.msra.mxu0 %v409
      %462 = vmatprep.subr.mxu0 %v412
      %463 = vmatpush1.msra.mxu0 %v411
      %464 = vmatprep.subr.mxu0 %v414
      %465 = vmatpush1.msra.mxu0 %v413
      %466 = vmatprep.subr.mxu0 %v416
      %467 = vmatpush1.msra.mxu0 %v415
      %468 = vmatprep.subr.mxu0 0.0
      %469 = vmatpush1.msra.mxu0 0.0
      %470 = vmatprep.subr.mxu0 0.0
      %471 = vmatpush1.msra.mxu0 0.0
      %472 = vmatprep.subr.mxu0 0.0
      %473 = vmatpush1.msra.mxu0 0.0
      %474 = vmatprep.subr.mxu0 0.0
      %475 = vmatpush1.msra.mxu0 0.0
      %476 = vmatprep.subr.mxu0 0.0
      %477 = vmatpush1.msra.mxu0 0.0
      %478 = vmatprep.subr.mxu0 0.0
      %479 = vmatpush1.msra.mxu0 0.0
      %480 = vmatprep.subr.mxu0 0.0
      %481 = vmatpush1.msra.mxu0 0.0
      %482 = vmatprep.subr.mxu0 0.0
      %483 = vmatpush1.msra.mxu0 0.0
      %484 = vmatprep.subr.mxu0 0.0
      %485 = vmatpush1.msra.mxu0 0.0
      %486 = vmatprep.subr.mxu0 0.0
      %487 = vmatpush1.msra.mxu0 0.0
      %488 = vmatprep.subr.mxu0 0.0
      %489 = vmatpush1.msra.mxu0 0.0
      %490 = vmatprep.subr.mxu0 0.0
      %491 = vmatpush1.msra.mxu0 0.0
      %492 = vmatprep.subr.mxu0 0.0
      %493 = vmatpush1.msra.mxu0 0.0
      %494 = vmatprep.subr.mxu0 0.0
      %495 = vmatpush1.msra.mxu0 0.0
      %496 = vmatprep.subr.mxu0 0.0
      %497 = vmatpush1.msra.mxu0 0.0
      %498 = vmatprep.subr.mxu0 0.0
      %499 = vmatpush1.msra.mxu0 0.0
      %500 = vmatprep.subr.mxu0 0.0
      %501 = vmatpush1.msra.mxu0 0.0
      %502 = vmatprep.subr.mxu0 0.0
      %503 = vmatpush1.msra.mxu0 0.0
      %504 = vmatprep.subr.mxu0 0.0
      %505 = vmatpush1.msra.mxu0 0.0
      %506 = vmatprep.subr.mxu0 0.0
      %507 = vmatpush1.msra.mxu0 0.0
      %508 = vmatprep.subr.mxu0 0.0
      %509 = vmatpush1.msra.mxu0 0.0
      %510 = vmatprep.subr.mxu0 0.0
      %511 = vmatpush1.msra.mxu0 0.0
      %512 = vmatprep.mubr.f32.mxu0 0.0
      %513 = vmatmul.mubr.f32.gmra.mrb[0].mxu0 %v419
      %v514 = vpop.f32.mrb[0].mxu0
      %v515 = vadd.f32 0.0, %v514
      %v516 = vpop.f32.mrb[0].mxu0
      %v517 = vadd.f32 0.0, %v516
      %518 = vmatprep.mubr.f32.mxu0 0.0
      %519 = vmatmul.mubr.f32.gmra.mrb[0].mxu0 %v422
      %v520 = vpop.f32.mrb[0].mxu0
      %v521 = vadd.f32 0.0, %v520
      %v522 = vpop.f32.mrb[0].mxu0
      %v523 = vadd.f32 0.0, %v522
      %524 = vmatprep.mubr.f32.mxu0 0.0
      %525 = vmatmul.mubr.f32.gmra.mrb[0].mxu0 %v425
      %v526 = vpop.f32.mrb[0].mxu0
      %v527 = vadd.f32 0.0, %v526
      %v528 = vpop.f32.mrb[0].mxu0
      %v529 = vadd.f32 0.0, %v528
      %530 = vmatprep.mubr.f32.mxu0 0.0
      %531 = vmatmul.mubr.f32.gmra.mrb[0].mxu0 %v428
      %v532 = vpop.f32.mrb[0].mxu0
      %v533 = vadd.f32 0.0, %v532
      %v534 = vpop.f32.mrb[0].mxu0
      %v535 = vadd.f32 0.0, %v534
      %536 = vmatprep.mubr.f32.mxu0 0.0
      %537 = vmatmul.mubr.f32.gmra.mrb[0].mxu0 %v431
      %v538 = vpop.f32.mrb[0].mxu0
      %v539 = vadd.f32 0.0, %v538
      %v540 = vpop.f32.mrb[0].mxu0
      %v541 = vadd.f32 0.0, %v540
      %542 = vmatprep.mubr.f32.mxu0 0.0
      %543 = vmatmul.mubr.f32.gmra.mrb[0].mxu0 %v434
      %v544 = vpop.f32.mrb[0].mxu0
      %v545 = vadd.f32 0.0, %v544
      %v546 = vpop.f32.mrb[0].mxu0
      %v547 = vadd.f32 0.0, %v546
      %548 = vmatprep.mubr.f32.mxu0 0.0
      %549 = vmatmul.mubr.f32.gmra.mrb[0].mxu0 %v437
      %v550 = vpop.f32.mrb[0].mxu0
      %v551 = vadd.f32 0.0, %v550
      %v552 = vpop.f32.mrb[0].mxu0
      %v553 = vadd.f32 0.0, %v552
      %554 = vmatprep.mubr.f32.mxu0 0.0
      %555 = vmatmul.mubr.f32.gmra.mrb[0].mxu0 %v440
      %v556 = vpop.f32.mrb[0].mxu0
      %v557 = vadd.f32 0.0, %v556
      %v558 = vpop.f32.mrb[0].mxu0
      %v559 = vadd.f32 0.0, %v558
      %560 = vmatprep.mubr.f32.mxu0 0.0
      %561 = vmatmul.mubr.f32.gmra.mrb[0].mxu0 %v443
      %v562 = vpop.f32.mrb[0].mxu0
      %v563 = vadd.f32 0.0, %v562
      %v564 = vpop.f32.mrb[0].mxu0
      %v565 = vadd.f32 0.0, %v564
      %566 = vmatprep.mubr.f32.mxu0 0.0
      %567 = vmatmul.mubr.f32.gmra.mrb[0].mxu0 %v446
      %v568 = vpop.f32.mrb[0].mxu0
      %v569 = vadd.f32 0.0, %v568
      %v570 = vpop.f32.mrb[0].mxu0
      %v571 = vadd.f32 0.0, %v570
      %572 = vdwg.mxu0
      %573 = vst [vmem:[#allocation3] sm:$0xff] %v515
      %574 = vst [vmem:[#allocation3 + $0x8] sm:$0xff] %v517
      %575 = vst [vmem:[#allocation3 + $0x10] sm:$0xff] %v521
      %576 = vst [vmem:[#allocation3 + $0x18] sm:$0xff] %v523
      %577 = vst [vmem:[#allocation3 + $0x20] sm:$0xff] %v527
      %578 = vst [vmem:[#allocation3 + $0x28] sm:$0xff] %v529
      %579 = vst [vmem:[#allocation3 + $0x30] sm:$0xff] %v533
      %580 = vst [vmem:[#allocation3 + $0x38] sm:$0xff] %v535
      %581 = vst [vmem:[#allocation3 + $0x40] sm:$0xff] %v539
      %582 = vst [vmem:[#allocation3 + $0x48] sm:$0xff] %v541
      %583 = vst [vmem:[#allocation3 + $0x50] sm:$0xff] %v545
      %584 = vst [vmem:[#allocation3 + $0x58] sm:$0xff] %v547
      %585 = vst [vmem:[#allocation3 + $0x60] sm:$0xff] %v551
      %586 = vst [vmem:[#allocation3 + $0x68] sm:$0xff] %v553
      %587 = vst [vmem:[#allocation3 + $0x70] sm:$0xff] %v557
      %588 = vst [vmem:[#allocation3 + $0x78] sm:$0xff] %v559
      %589 = vst [vmem:[#allocation3 + $0x80] sm:$0xff] %v563
      %590 = vst [vmem:[#allocation3 + $0x88] sm:$0xff] %v565
      %591 = vst [vmem:[#allocation3 + $0x90] sm:$0xff] %v569
      %592 = vst [vmem:[#allocation3 + $0x98] sm:$0xff] %v571
      %v593 = vld [vmem:[#allocation3 + $0x20] sm:$0x3]
      %v594 = vld [vmem:[#allocation3 + $0x28] sm:$0x3]
      %v595 = vld [vmem:[#allocation3 + $0x30] sm:$0x3]
      %v596 = vld [vmem:[#allocation3 + $0x38] sm:$0x3]
      %597 = vxpose.xlu0.b32.start [1/16] %v593, 128
      %598 = vxpose.xlu0.b32.cont [2/16] 0.0, 128
      %599 = vxpose.xlu0.b32.cont [3/16] 0.0, 128
      %600 = vxpose.xlu0.b32.cont [4/16] 0.0, 128
      %601 = vxpose.xlu0.b32.cont [5/16] 0.0, 128
      %602 = vxpose.xlu0.b32.cont [6/16] 0.0, 128
      %603 = vxpose.xlu0.b32.cont [7/16] 0.0, 128
      %604 = vxpose.xlu0.b32.cont [8/16] 0.0, 128
      %605 = vxpose.xlu0.b32.cont [9/16] 0.0, 128
      %606 = vxpose.xlu0.b32.cont [10/16] 0.0, 128
      %607 = vxpose.xlu0.b32.cont [11/16] 0.0, 128
      %608 = vxpose.xlu0.b32.cont [12/16] 0.0, 128
      %609 = vxpose.xlu0.b32.cont [13/16] 0.0, 128
      %610 = vxpose.xlu0.b32.cont [14/16] 0.0, 128
      %611 = vxpose.xlu0.b32.cont [15/16] 0.0, 128
      %612 = vxpose.xlu0.b32.end [16/16] 0.0, 128
      %v613 = vpop.trf.xlu0
      %v614 = vpop.trf.xlu0
      %v615 = vpop.trf.xlu0
      %v616 = vpop.trf.xlu0
      %v617 = vpop.trf.xlu0
      %v618 = vpop.trf.xlu0
      %v619 = vpop.trf.xlu0
      %v620 = vpop.trf.xlu0
      %v621 = vpop.trf.xlu0
      %v622 = vpop.trf.xlu0
      %v623 = vpop.trf.xlu0
      %v624 = vpop.trf.xlu0
      %v625 = vpop.trf.xlu0
      %v626 = vpop.trf.xlu0
      %v627 = vpop.trf.xlu0
      %v628 = vpop.trf.xlu0
      %629 = vxpose.xlu0.b32.start [1/16] %v594, 128
      %630 = vxpose.xlu0.b32.cont [2/16] 0.0, 128
      %631 = vxpose.xlu0.b32.cont [3/16] 0.0, 128
      %632 = vxpose.xlu0.b32.cont [4/16] 0.0, 128
      %633 = vxpose.xlu0.b32.cont [5/16] 0.0, 128
      %634 = vxpose.xlu0.b32.cont [6/16] 0.0, 128
      %635 = vxpose.xlu0.b32.cont [7/16] 0.0, 128
      %636 = vxpose.xlu0.b32.cont [8/16] 0.0, 128
      %637 = vxpose.xlu0.b32.cont [9/16] 0.0, 128
      %638 = vxpose.xlu0.b32.cont [10/16] 0.0, 128
      %639 = vxpose.xlu0.b32.cont [11/16] 0.0, 128
      %640 = vxpose.xlu0.b32.cont [12/16] 0.0, 128
      %641 = vxpose.xlu0.b32.cont [13/16] 0.0, 128
      %642 = vxpose.xlu0.b32.cont [14/16] 0.0, 128
      %643 = vxpose.xlu0.b32.cont [15/16] 0.0, 128
      %644 = vxpose.xlu0.b32.end [16/16] 0.0, 128
      %v645 = vpop.trf.xlu0
      %v646 = vpop.trf.xlu0
      %v647 = vpop.trf.xlu0
      %v648 = vpop.trf.xlu0
      %v649 = vpop.trf.xlu0
      %v650 = vpop.trf.xlu0
      %v651 = vpop.trf.xlu0
      %v652 = vpop.trf.xlu0
      %v653 = vpop.trf.xlu0
      %v654 = vpop.trf.xlu0
      %v655 = vpop.trf.xlu0
      %v656 = vpop.trf.xlu0
      %v657 = vpop.trf.xlu0
      %v658 = vpop.trf.xlu0
      %v659 = vpop.trf.xlu0
      %v660 = vpop.trf.xlu0
      %vm661 = vcmask 15360
      %v663 = vsel %vm661, %v613, 0
      %v666 = vsel %vm661, %v614, 0
      %v669 = vsel %vm661, %v615, 0
      %v672 = vsel %vm661, %v616, 0
      %v675 = vsel %vm661, %v617, 0
      %v678 = vsel %vm661, %v618, 0
      %v681 = vsel %vm661, %v619, 0
      %v684 = vsel %vm661, %v620, 0
      %v687 = vsel %vm661, %v621, 0
      %v690 = vsel %vm661, %v622, 0
      %v693 = vsel %vm661, %v623, 0
      %v696 = vsel %vm661, %v624, 0
      %v699 = vsel %vm661, %v625, 0
      %v702 = vsel %vm661, %v626, 0
      %v705 = vsel %vm661, %v627, 0
      %v708 = vsel %vm661, %v628, 0
      %v711 = vsel %vm661, %v645, 0
      %v714 = vsel %vm661, %v646, 0
      %v717 = vsel %vm661, %v647, 0
      %v720 = vsel %vm661, %v648, 0
      %v723 = vsel %vm661, %v649, 0
      %v726 = vsel %vm661, %v650, 0
      %v729 = vsel %vm661, %v651, 0
      %v732 = vsel %vm661, %v652, 0
      %v735 = vsel %vm661, %v653, 0
      %v738 = vsel %vm661, %v654, 0
      %v741 = vsel %vm661, %v655, 0
      %v744 = vsel %vm661, %v656, 0
      %v747 = vsel %vm661, %v657, 0
      %v750 = vsel %vm661, %v658, 0
      %v753 = vsel %vm661, %v659, 0
      %v756 = vsel %vm661, %v660, 0
      %vm758 = vcmask 1041408
      %v760 = vsel %vm758, %v595, 0
      %v763 = vsel %vm758, %v596, 0
      %765 = vmatprep.subr.mxu0 %v763
      %766 = vmatpush1.msra.mxu0 %v760
      %767 = vmatprep.subr.mxu0 0.0
      %768 = vmatpush1.msra.mxu0 0.0
      %769 = vmatprep.subr.mxu0 0.0
      %770 = vmatpush1.msra.mxu0 0.0
      %771 = vmatprep.subr.mxu0 0.0
      %772 = vmatpush1.msra.mxu0 0.0
      %773 = vmatprep.subr.mxu0 0.0
      %774 = vmatpush1.msra.mxu0 0.0
      %775 = vmatprep.subr.mxu0 0.0
      %776 = vmatpush1.msra.mxu0 0.0
      %777 = vmatprep.subr.mxu0 0.0
      %778 = vmatpush1.msra.mxu0 0.0
      %779 = vmatprep.subr.mxu0 0.0
      %780 = vmatpush1.msra.mxu0 0.0
      %781 = vmatprep.subr.mxu0 0.0
      %782 = vmatpush1.msra.mxu0 0.0
      %783 = vmatprep.subr.mxu0 0.0
      %784 = vmatpush1.msra.mxu0 0.0
      %785 = vmatprep.subr.mxu0 0.0
      %786 = vmatpush1.msra.mxu0 0.0
      %787 = vmatprep.subr.mxu0 0.0
      %788 = vmatpush1.msra.mxu0 0.0
      %789 = vmatprep.subr.mxu0 0.0
      %790 = vmatpush1.msra.mxu0 0.0
      %791 = vmatprep.subr.mxu0 0.0
      %792 = vmatpush1.msra.mxu0 0.0
      %793 = vmatprep.subr.mxu0 0.0
      %794 = vmatpush1.msra.mxu0 0.0
      %795 = vmatprep.subr.mxu0 0.0
      %796 = vmatpush1.msra.mxu0 0.0
      %797 = vmatprep.subr.mxu0 0.0
      %798 = vmatpush1.msra.mxu0 0.0
      %799 = vmatprep.subr.mxu0 0.0
      %800 = vmatpush1.msra.mxu0 0.0
      %801 = vmatprep.subr.mxu0 0.0
      %802 = vmatpush1.msra.mxu0 0.0
      %803 = vmatprep.subr.mxu0 0.0
      %804 = vmatpush1.msra.mxu0 0.0
      %805 = vmatprep.subr.mxu0 0.0
      %806 = vmatpush1.msra.mxu0 0.0
      %807 = vmatprep.subr.mxu0 0.0
      %808 = vmatpush1.msra.mxu0 0.0
      %809 = vmatprep.subr.mxu0 0.0
      %810 = vmatpush1.msra.mxu0 0.0
      %811 = vmatprep.subr.mxu0 0.0
      %812 = vmatpush1.msra.mxu0 0.0
      %813 = vmatprep.subr.mxu0 0.0
      %814 = vmatpush1.msra.mxu0 0.0
      %815 = vmatprep.subr.mxu0 0.0
      %816 = vmatpush1.msra.mxu0 0.0
      %817 = vmatprep.subr.mxu0 0.0
      %818 = vmatpush1.msra.mxu0 0.0
      %819 = vmatprep.subr.mxu0 0.0
      %820 = vmatpush1.msra.mxu0 0.0
      %821 = vmatprep.subr.mxu0 0.0
      %822 = vmatpush1.msra.mxu0 0.0
      %823 = vmatprep.subr.mxu0 0.0
      %824 = vmatpush1.msra.mxu0 0.0
      %825 = vmatprep.subr.mxu0 0.0
      %826 = vmatpush1.msra.mxu0 0.0
      %827 = vmatprep.subr.mxu0 0.0
      %828 = vmatpush1.msra.mxu0 0.0
      %829 = vmatprep.mubr.f32.mxu0 0.0
      %830 = vmatmul.mubr.f32.gmra.mrb[0].mxu0 %v663
      %v831 = vpop.f32.mrb[0].mxu0
      %v832 = vadd.f32 0.0, %v831
      %v833 = vpop.f32.mrb[0].mxu0
      %v834 = vadd.f32 0.0, %v833
      %835 = vmatprep.mubr.f32.mxu0 0.0
      %836 = vmatmul.mubr.f32.gmra.mrb[0].mxu0 %v666
      %v837 = vpop.f32.mrb[0].mxu0
      %v838 = vadd.f32 0.0, %v837
      %v839 = vpop.f32.mrb[0].mxu0
      %v840 = vadd.f32 0.0, %v839
      %841 = vmatprep.mubr.f32.mxu0 0.0
      %842 = vmatmul.mubr.f32.gmra.mrb[0].mxu0 %v669
      %v843 = vpop.f32.mrb[0].mxu0
      %v844 = vadd.f32 0.0, %v843
      %v845 = vpop.f32.mrb[0].mxu0
      %v846 = vadd.f32 0.0, %v845
      %847 = vmatprep.mubr.f32.mxu0 0.0
      %848 = vmatmul.mubr.f32.gmra.mrb[0].mxu0 %v672
      %v849 = vpop.f32.mrb[0].mxu0
      %v850 = vadd.f32 0.0, %v849
      %v851 = vpop.f32.mrb[0].mxu0
      %v852 = vadd.f32 0.0, %v851
      %853 = vmatprep.mubr.f32.mxu0 0.0
      %854 = vmatmul.mubr.f32.gmra.mrb[0].mxu0 %v675
      %v855 = vpop.f32.mrb[0].mxu0
      %v856 = vadd.f32 0.0, %v855
      %v857 = vpop.f32.mrb[0].mxu0
      %v858 = vadd.f32 0.0, %v857
      %859 = vmatprep.mubr.f32.mxu0 0.0
      %860 = vmatmul.mubr.f32.gmra.mrb[0].mxu0 %v678
      %v861 = vpop.f32.mrb[0].mxu0
      %v862 = vadd.f32 0.0, %v861
      %v863 = vpop.f32.mrb[0].mxu0
      %v864 = vadd.f32 0.0, %v863
      %865 = vmatprep.mubr.f32.mxu0 0.0
      %866 = vmatmul.mubr.f32.gmra.mrb[0].mxu0 %v681
      %v867 = vpop.f32.mrb[0].mxu0
      %v868 = vadd.f32 0.0, %v867
      %v869 = vpop.f32.mrb[0].mxu0
      %v870 = vadd.f32 0.0, %v869
      %871 = vmatprep.mubr.f32.mxu0 0.0
      %872 = vmatmul.mubr.f32.gmra.mrb[0].mxu0 %v684
      %v873 = vpop.f32.mrb[0].mxu0
      %v874 = vadd.f32 0.0, %v873
      %v875 = vpop.f32.mrb[0].mxu0
      %v876 = vadd.f32 0.0, %v875
      %877 = vmatprep.mubr.f32.mxu0 0.0
      %878 = vmatmul.mubr.f32.gmra.mrb[0].mxu0 %v687
      %v879 = vpop.f32.mrb[0].mxu0
      %v880 = vadd.f32 0.0, %v879
      %v881 = vpop.f32.mrb[0].mxu0
      %v882 = vadd.f32 0.0, %v881
      %883 = vmatprep.mubr.f32.mxu0 0.0
      %884 = vmatmul.mubr.f32.gmra.mrb[0].mxu0 %v690
      %v885 = vpop.f32.mrb[0].mxu0
      %v886 = vadd.f32 0.0, %v885
      %v887 = vpop.f32.mrb[0].mxu0
      %v888 = vadd.f32 0.0, %v887
      %889 = vmatprep.mubr.f32.mxu0 0.0
      %890 = vmatmul.mubr.f32.gmra.mrb[0].mxu0 %v693
      %v891 = vpop.f32.mrb[0].mxu0
      %v892 = vadd.f32 0.0, %v891
      %v893 = vpop.f32.mrb[0].mxu0
      %v894 = vadd.f32 0.0, %v893
      %895 = vmatprep.mubr.f32.mxu0 0.0
      %896 = vmatmul.mubr.f32.gmra.mrb[0].mxu0 %v696
      %v897 = vpop.f32.mrb[0].mxu0
      %v898 = vadd.f32 0.0, %v897
      %v899 = vpop.f32.mrb[0].mxu0
      %v900 = vadd.f32 0.0, %v899
      %901 = vmatprep.mubr.f32.mxu0 0.0
      %902 = vmatmul.mubr.f32.gmra.mrb[0].mxu0 %v699
      %v903 = vpop.f32.mrb[0].mxu0
      %v904 = vadd.f32 0.0, %v903
      %v905 = vpop.f32.mrb[0].mxu0
      %v906 = vadd.f32 0.0, %v905
      %907 = vmatprep.mubr.f32.mxu0 0.0
      %908 = vmatmul.mubr.f32.gmra.mrb[0].mxu0 %v702
      %v909 = vpop.f32.mrb[0].mxu0
      %v910 = vadd.f32 0.0, %v909
      %v911 = vpop.f32.mrb[0].mxu0
      %v912 = vadd.f32 0.0, %v911
      %913 = vmatprep.mubr.f32.mxu0 0.0
      %914 = vmatmul.mubr.f32.gmra.mrb[0].mxu0 %v705
      %v915 = vpop.f32.mrb[0].mxu0
      %v916 = vadd.f32 0.0, %v915
      %v917 = vpop.f32.mrb[0].mxu0
      %v918 = vadd.f32 0.0, %v917
      %919 = vmatprep.mubr.f32.mxu0 0.0
      %920 = vmatmul.mubr.f32.gmra.mrb[0].mxu0 %v708
      %v921 = vpop.f32.mrb[0].mxu0
      %v922 = vadd.f32 0.0, %v921
      %v923 = vpop.f32.mrb[0].mxu0
      %v924 = vadd.f32 0.0, %v923
      %925 = vmatprep.mubr.f32.mxu0 0.0
      %926 = vmatmul.mubr.f32.gmra.mrb[0].mxu0 %v711
      %v927 = vpop.f32.mrb[0].mxu0
      %v928 = vadd.f32 0.0, %v927
      %v929 = vpop.f32.mrb[0].mxu0
      %v930 = vadd.f32 0.0, %v929
      %931 = vmatprep.mubr.f32.mxu0 0.0
      %932 = vmatmul.mubr.f32.gmra.mrb[0].mxu0 %v714
      %v933 = vpop.f32.mrb[0].mxu0
      %v934 = vadd.f32 0.0, %v933
      %v935 = vpop.f32.mrb[0].mxu0
      %v936 = vadd.f32 0.0, %v935
      %937 = vmatprep.mubr.f32.mxu0 0.0
      %938 = vmatmul.mubr.f32.gmra.mrb[0].mxu0 %v717
      %v939 = vpop.f32.mrb[0].mxu0
      %v940 = vadd.f32 0.0, %v939
      %v941 = vpop.f32.mrb[0].mxu0
      %v942 = vadd.f32 0.0, %v941
      %943 = vmatprep.mubr.f32.mxu0 0.0
      %944 = vmatmul.mubr.f32.gmra.mrb[0].mxu0 %v720
      %v945 = vpop.f32.mrb[0].mxu0
      %v946 = vadd.f32 0.0, %v945
      %v947 = vpop.f32.mrb[0].mxu0
      %v948 = vadd.f32 0.0, %v947
      %949 = vmatprep.mubr.f32.mxu0 0.0
      %950 = vmatmul.mubr.f32.gmra.mrb[0].mxu0 %v723
      %v951 = vpop.f32.mrb[0].mxu0
      %v952 = vadd.f32 0.0, %v951
      %v953 = vpop.f32.mrb[0].mxu0
      %v954 = vadd.f32 0.0, %v953
      %955 = vmatprep.mubr.f32.mxu0 0.0
      %956 = vmatmul.mubr.f32.gmra.mrb[0].mxu0 %v726
      %v957 = vpop.f32.mrb[0].mxu0
      %v958 = vadd.f32 0.0, %v957
      %v959 = vpop.f32.mrb[0].mxu0
      %v960 = vadd.f32 0.0, %v959
      %961 = vmatprep.mubr.f32.mxu0 0.0
      %962 = vmatmul.mubr.f32.gmra.mrb[0].mxu0 %v729
      %v963 = vpop.f32.mrb[0].mxu0
      %v964 = vadd.f32 0.0, %v963
      %v965 = vpop.f32.mrb[0].mxu0
      %v966 = vadd.f32 0.0, %v965
      %967 = vmatprep.mubr.f32.mxu0 0.0
      %968 = vmatmul.mubr.f32.gmra.mrb[0].mxu0 %v732
      %v969 = vpop.f32.mrb[0].mxu0
      %v970 = vadd.f32 0.0, %v969
      %v971 = vpop.f32.mrb[0].mxu0
      %v972 = vadd.f32 0.0, %v971
      %973 = vmatprep.mubr.f32.mxu0 0.0
      %974 = vmatmul.mubr.f32.gmra.mrb[0].mxu0 %v735
      %v975 = vpop.f32.mrb[0].mxu0
      %v976 = vadd.f32 0.0, %v975
      %v977 = vpop.f32.mrb[0].mxu0
      %v978 = vadd.f32 0.0, %v977
      %979 = vmatprep.mubr.f32.mxu0 0.0
      %980 = vmatmul.mubr.f32.gmra.mrb[0].mxu0 %v738
      %v981 = vpop.f32.mrb[0].mxu0
      %v982 = vadd.f32 0.0, %v981
      %v983 = vpop.f32.mrb[0].mxu0
      %v984 = vadd.f32 0.0, %v983
      %985 = vmatprep.mubr.f32.mxu0 0.0
      %986 = vmatmul.mubr.f32.gmra.mrb[0].mxu0 %v741
      %v987 = vpop.f32.mrb[0].mxu0
      %v988 = vadd.f32 0.0, %v987
      %v989 = vpop.f32.mrb[0].mxu0
      %v990 = vadd.f32 0.0, %v989
      %991 = vmatprep.mubr.f32.mxu0 0.0
      %992 = vmatmul.mubr.f32.gmra.mrb[0].mxu0 %v744
      %v993 = vpop.f32.mrb[0].mxu0
      %v994 = vadd.f32 0.0, %v993
      %v995 = vpop.f32.mrb[0].mxu0
      %v996 = vadd.f32 0.0, %v995
      %997 = vmatprep.mubr.f32.mxu0 0.0
      %998 = vmatmul.mubr.f32.gmra.mrb[0].mxu0 %v747
      %v999 = vpop.f32.mrb[0].mxu0
      %v1000 = vadd.f32 0.0, %v999
      %v1001 = vpop.f32.mrb[0].mxu0
      %v1002 = vadd.f32 0.0, %v1001
      %1003 = vmatprep.mubr.f32.mxu0 0.0
      %1004 = vmatmul.mubr.f32.gmra.mrb[0].mxu0 %v750
      %v1005 = vpop.f32.mrb[0].mxu0
      %v1006 = vadd.f32 0.0, %v1005
      %v1007 = vpop.f32.mrb[0].mxu0
      %v1008 = vadd.f32 0.0, %v1007
      %1009 = vmatprep.mubr.f32.mxu0 0.0
      %1010 = vmatmul.mubr.f32.gmra.mrb[0].mxu0 %v753
      %v1011 = vpop.f32.mrb[0].mxu0
      %v1012 = vadd.f32 0.0, %v1011
      %v1013 = vpop.f32.mrb[0].mxu0
      %v1014 = vadd.f32 0.0, %v1013
      %1015 = vmatprep.mubr.f32.mxu0 0.0
      %1016 = vmatmul.mubr.f32.gmra.mrb[0].mxu0 %v756
      %v1017 = vpop.f32.mrb[0].mxu0
      %v1018 = vadd.f32 0.0, %v1017
      %v1019 = vpop.f32.mrb[0].mxu0
      %v1020 = vadd.f32 0.0, %v1019
      %1021 = vdwg.mxu0
      %1022 = vst [vmem:[#allocation4] sm:$0xff] %v832
      %1023 = vst [vmem:[#allocation4 + $0x8] sm:$0xff] %v834
      %1024 = vst [vmem:[#allocation4 + $0x10] sm:$0xff] %v838
      %1025 = vst [vmem:[#allocation4 + $0x18] sm:$0xff] %v840
      %1026 = vst [vmem:[#allocation4 + $0x20] sm:$0xff] %v844
      %1027 = vst [vmem:[#allocation4 + $0x28] sm:$0xff] %v846
      %1028 = vst [vmem:[#allocation4 + $0x30] sm:$0xff] %v850
      %1029 = vst [vmem:[#allocation4 + $0x38] sm:$0xff] %v852
      %1030 = vst [vmem:[#allocation4 + $0x40] sm:$0xff] %v856
      %1031 = vst [vmem:[#allocation4 + $0x48] sm:$0xff] %v858
      %1032 = vst [vmem:[#allocation4 + $0x50] sm:$0xff] %v862
      %1033 = vst [vmem:[#allocation4 + $0x58] sm:$0xff] %v864
      %1034 = vst [vmem:[#allocation4 + $0x60] sm:$0xff] %v868
      %1035 = vst [vmem:[#allocation4 + $0x68] sm:$0xff] %v870
      %1036 = vst [vmem:[#allocation4 + $0x70] sm:$0xff] %v874
      %1037 = vst [vmem:[#allocation4 + $0x78] sm:$0xff] %v876
      %1038 = vst [vmem:[#allocation4 + $0x80] sm:$0xff] %v880
      %1039 = vst [vmem:[#allocation4 + $0x88] sm:$0xff] %v882
      %1040 = vst [vmem:[#allocation4 + $0x90] sm:$0xff] %v886
      %1041 = vst [vmem:[#allocation4 + $0x98] sm:$0xff] %v888
      %1042 = vst [vmem:[#allocation4 + $0xa0] sm:$0xff] %v892
      %1043 = vst [vmem:[#allocation4 + $0xa8] sm:$0xff] %v894
      %1044 = vst [vmem:[#allocation4 + $0xb0] sm:$0xff] %v898
      %1045 = vst [vmem:[#allocation4 + $0xb8] sm:$0xff] %v900
      %1046 = vst [vmem:[#allocation4 + $0xc0] sm:$0xff] %v904
      %1047 = vst [vmem:[#allocation4 + $0xc8] sm:$0xff] %v906
      %1048 = vst [vmem:[#allocation4 + $0xd0] sm:$0xff] %v910
      %1049 = vst [vmem:[#allocation4 + $0xd8] sm:$0xff] %v912
      %1050 = vst [vmem:[#allocation4 + $0xe0] sm:$0xff] %v916
      %1051 = vst [vmem:[#allocation4 + $0xe8] sm:$0xff] %v918
      %1052 = vst [vmem:[#allocation4 + $0xf0] sm:$0xff] %v922
      %1053 = vst [vmem:[#allocation4 + $0xf8] sm:$0xff] %v924
      %1054 = vst [vmem:[#allocation4 + $0x100] sm:$0xff] %v928
      %1055 = vst [vmem:[#allocation4 + $0x108] sm:$0xff] %v930
      %1056 = vst [vmem:[#allocation4 + $0x110] sm:$0xff] %v934
      %1057 = vst [vmem:[#allocation4 + $0x118] sm:$0xff] %v936
      %1058 = vst [vmem:[#allocation4 + $0x120] sm:$0xff] %v940
      %1059 = vst [vmem:[#allocation4 + $0x128] sm:$0xff] %v942
      %1060 = vst [vmem:[#allocation4 + $0x130] sm:$0xff] %v946
      %1061 = vst [vmem:[#allocation4 + $0x138] sm:$0xff] %v948
      %1062 = vst [vmem:[#allocation4 + $0x140] sm:$0xff] %v952
      %1063 = vst [vmem:[#allocation4 + $0x148] sm:$0xff] %v954
      %1064 = vst [vmem:[#allocation4 + $0x150] sm:$0xff] %v958
      %1065 = vst [vmem:[#allocation4 + $0x158] sm:$0xff] %v960
      %1066 = vst [vmem:[#allocation4 + $0x160] sm:$0xff] %v964
      %1067 = vst [vmem:[#allocation4 + $0x168] sm:$0xff] %v966
      %1068 = vst [vmem:[#allocation4 + $0x170] sm:$0xff] %v970
      %1069 = vst [vmem:[#allocation4 + $0x178] sm:$0xff] %v972
      %1070 = vst [vmem:[#allocation4 + $0x180] sm:$0xff] %v976
      %1071 = vst [vmem:[#allocation4 + $0x188] sm:$0xff] %v978
      %1072 = vst [vmem:[#allocation4 + $0x190] sm:$0xff] %v982
      %1073 = vst [vmem:[#allocation4 + $0x198] sm:$0xff] %v984
      %1074 = vst [vmem:[#allocation4 + $0x1a0] sm:$0xff] %v988
      %1075 = vst [vmem:[#allocation4 + $0x1a8] sm:$0xff] %v990
      %1076 = vst [vmem:[#allocation4 + $0x1b0] sm:$0xff] %v994
      %1077 = vst [vmem:[#allocation4 + $0x1b8] sm:$0xff] %v996
      %1078 = vst [vmem:[#allocation4 + $0x1c0] sm:$0xff] %v1000
      %1079 = vst [vmem:[#allocation4 + $0x1c8] sm:$0xff] %v1002
      %1080 = vst [vmem:[#allocation4 + $0x1d0] sm:$0xff] %v1006
      %1081 = vst [vmem:[#allocation4 + $0x1d8] sm:$0xff] %v1008
      %1082 = vst [vmem:[#allocation4 + $0x1e0] sm:$0xff] %v1012
      %1083 = vst [vmem:[#allocation4 + $0x1e8] sm:$0xff] %v1014
      %1084 = vst [vmem:[#allocation4 + $0x1f0] sm:$0xff] %v1018
      %1085 = vst [vmem:[#allocation4 + $0x1f8] sm:$0xff] %v1020
      %v1086 = vld [vmem:[#allocation3 + $0x40] sm:$0xf]
      %v1087 = vld [vmem:[#allocation3 + $0x48] sm:$0xf]
      %vm1088 = vcmask 1043456
      %v1089 = vsel %vm1088, %v1086, 0.0
      %v1090 = vsel %vm1088, %v1087, 0.0
      %v1091 = vadd.f32 %v1089, %v1090
      %1092 = vadd.xlane.f32.xlu0 %v1091
      %v1093 = vpop.xlane.xlu0 %1092
      %v1094 = vld [vmem:[#allocation3 + $0x70] sm:$0x3]
      %v1095 = vld [vmem:[#allocation3 + $0x78] sm:$0x3]
      %v1096 = vld [vmem:[#allocation3 + $0x80] sm:$0x3]
      %v1097 = vld [vmem:[#allocation3 + $0x88] sm:$0x3]
      %1098 = vxpose.xlu0.b32.start [1/16] %v1094, 128
      %1099 = vxpose.xlu0.b32.cont [2/16] 0.0, 128
      %1100 = vxpose.xlu0.b32.cont [3/16] 0.0, 128
      %1101 = vxpose.xlu0.b32.cont [4/16] 0.0, 128
      %1102 = vxpose.xlu0.b32.cont [5/16] 0.0, 128
      %1103 = vxpose.xlu0.b32.cont [6/16] 0.0, 128
      %1104 = vxpose.xlu0.b32.cont [7/16] 0.0, 128
      %1105 = vxpose.xlu0.b32.cont [8/16] 0.0, 128
      %1106 = vxpose.xlu0.b32.cont [9/16] 0.0, 128
      %1107 = vxpose.xlu0.b32.cont [10/16] 0.0, 128
      %1108 = vxpose.xlu0.b32.cont [11/16] 0.0, 128
      %1109 = vxpose.xlu0.b32.cont [12/16] 0.0, 128
      %1110 = vxpose.xlu0.b32.cont [13/16] 0.0, 128
      %1111 = vxpose.xlu0.b32.cont [14/16] 0.0, 128
      %1112 = vxpose.xlu0.b32.cont [15/16] 0.0, 128
      %1113 = vxpose.xlu0.b32.end [16/16] 0.0, 128
      %v1114 = vpop.trf.xlu0
      %v1115 = vpop.trf.xlu0
      %v1116 = vpop.trf.xlu0
      %v1117 = vpop.trf.xlu0
      %v1118 = vpop.trf.xlu0
      %v1119 = vpop.trf.xlu0
      %v1120 = vpop.trf.xlu0
      %v1121 = vpop.trf.xlu0
      %v1122 = vpop.trf.xlu0
      %v1123 = vpop.trf.xlu0
      %v1124 = vpop.trf.xlu0
      %v1125 = vpop.trf.xlu0
      %v1126 = vpop.trf.xlu0
      %v1127 = vpop.trf.xlu0
      %v1128 = vpop.trf.xlu0
      %v1129 = vpop.trf.xlu0
      %1130 = vxpose.xlu0.b32.start [1/16] %v1095, 128
      %1131 = vxpose.xlu0.b32.cont [2/16] 0.0, 128
      %1132 = vxpose.xlu0.b32.cont [3/16] 0.0, 128
      %1133 = vxpose.xlu0.b32.cont [4/16] 0.0, 128
      %1134 = vxpose.xlu0.b32.cont [5/16] 0.0, 128
      %1135 = vxpose.xlu0.b32.cont [6/16] 0.0, 128
      %1136 = vxpose.xlu0.b32.cont [7/16] 0.0, 128
      %1137 = vxpose.xlu0.b32.cont [8/16] 0.0, 128
      %1138 = vxpose.xlu0.b32.cont [9/16] 0.0, 128
      %1139 = vxpose.xlu0.b32.cont [10/16] 0.0, 128
      %1140 = vxpose.xlu0.b32.cont [11/16] 0.0, 128
      %1141 = vxpose.xlu0.b32.cont [12/16] 0.0, 128
      %1142 = vxpose.xlu0.b32.cont [13/16] 0.0, 128
      %1143 = vxpose.xlu0.b32.cont [14/16] 0.0, 128
      %1144 = vxpose.xlu0.b32.cont [15/16] 0.0, 128
      %1145 = vxpose.xlu0.b32.end [16/16] 0.0, 128
      %v1146 = vpop.trf.xlu0
      %v1147 = vpop.trf.xlu0
      %v1148 = vpop.trf.xlu0
      %v1149 = vpop.trf.xlu0
      %v1150 = vpop.trf.xlu0
      %v1151 = vpop.trf.xlu0
      %v1152 = vpop.trf.xlu0
      %v1153 = vpop.trf.xlu0
      %v1154 = vpop.trf.xlu0
      %v1155 = vpop.trf.xlu0
      %v1156 = vpop.trf.xlu0
      %v1157 = vpop.trf.xlu0
      %v1158 = vpop.trf.xlu0
      %v1159 = vpop.trf.xlu0
      %v1160 = vpop.trf.xlu0
      %v1161 = vpop.trf.xlu0
      %v1163 = vsel %vm661, %v1114, 0
      %v1166 = vsel %vm661, %v1115, 0
      %v1169 = vsel %vm661, %v1116, 0
      %v1172 = vsel %vm661, %v1117, 0
      %v1175 = vsel %vm661, %v1118, 0
      %v1178 = vsel %vm661, %v1119, 0
      %v1181 = vsel %vm661, %v1120, 0
      %v1184 = vsel %vm661, %v1121, 0
      %v1187 = vsel %vm661, %v1122, 0
      %v1190 = vsel %vm661, %v1123, 0
      %v1193 = vsel %vm661, %v1124, 0
      %v1196 = vsel %vm661, %v1125, 0
      %v1199 = vsel %vm661, %v1126, 0
      %v1202 = vsel %vm661, %v1127, 0
      %v1205 = vsel %vm661, %v1128, 0
      %v1208 = vsel %vm661, %v1129, 0
      %v1211 = vsel %vm661, %v1146, 0
      %v1214 = vsel %vm661, %v1147, 0
      %v1217 = vsel %vm661, %v1148, 0
      %v1220 = vsel %vm661, %v1149, 0
      %v1223 = vsel %vm661, %v1150, 0
      %v1226 = vsel %vm661, %v1151, 0
      %v1229 = vsel %vm661, %v1152, 0
      %v1232 = vsel %vm661, %v1153, 0
      %v1235 = vsel %vm661, %v1154, 0
      %v1238 = vsel %vm661, %v1155, 0
      %v1241 = vsel %vm661, %v1156, 0
      %v1244 = vsel %vm661, %v1157, 0
      %v1247 = vsel %vm661, %v1158, 0
      %v1250 = vsel %vm661, %v1159, 0
      %v1253 = vsel %vm661, %v1160, 0
      %v1256 = vsel %vm661, %v1161, 0
      %v1259 = vsel %vm758, %v1096, 0
      %v1262 = vsel %vm758, %v1097, 0
      %1264 = vmatprep.subr.mxu0 %v1262
      %1265 = vmatpush1.msra.mxu0 %v1259
      %1266 = vmatprep.subr.mxu0 0.0
      %1267 = vmatpush1.msra.mxu0 0.0
      %1268 = vmatprep.subr.mxu0 0.0
      %1269 = vmatpush1.msra.mxu0 0.0
      %1270 = vmatprep.subr.mxu0 0.0
      %1271 = vmatpush1.msra.mxu0 0.0
      %1272 = vmatprep.subr.mxu0 0.0
      %1273 = vmatpush1.msra.mxu0 0.0
      %1274 = vmatprep.subr.mxu0 0.0
      %1275 = vmatpush1.msra.mxu0 0.0
      %1276 = vmatprep.subr.mxu0 0.0
      %1277 = vmatpush1.msra.mxu0 0.0
      %1278 = vmatprep.subr.mxu0 0.0
      %1279 = vmatpush1.msra.mxu0 0.0
      %1280 = vmatprep.subr.mxu0 0.0
      %1281 = vmatpush1.msra.mxu0 0.0
      %1282 = vmatprep.subr.mxu0 0.0
      %1283 = vmatpush1.msra.mxu0 0.0
      %1284 = vmatprep.subr.mxu0 0.0
      %1285 = vmatpush1.msra.mxu0 0.0
      %1286 = vmatprep.subr.mxu0 0.0
      %1287 = vmatpush1.msra.mxu0 0.0
      %1288 = vmatprep.subr.mxu0 0.0
      %1289 = vmatpush1.msra.mxu0 0.0
      %1290 = vmatprep.subr.mxu0 0.0
      %1291 = vmatpush1.msra.mxu0 0.0
      %1292 = vmatprep.subr.mxu0 0.0
      %1293 = vmatpush1.msra.mxu0 0.0
      %1294 = vmatprep.subr.mxu0 0.0
      %1295 = vmatpush1.msra.mxu0 0.0
      %1296 = vmatprep.subr.mxu0 0.0
      %1297 = vmatpush1.msra.mxu0 0.0
      %1298 = vmatprep.subr.mxu0 0.0
      %1299 = vmatpush1.msra.mxu0 0.0
      %1300 = vmatprep.subr.mxu0 0.0
      %1301 = vmatpush1.msra.mxu0 0.0
      %1302 = vmatprep.subr.mxu0 0.0
      %1303 = vmatpush1.msra.mxu0 0.0
      %1304 = vmatprep.subr.mxu0 0.0
      %1305 = vmatpush1.msra.mxu0 0.0
      %1306 = vmatprep.subr.mxu0 0.0
      %1307 = vmatpush1.msra.mxu0 0.0
      %1308 = vmatprep.subr.mxu0 0.0
      %1309 = vmatpush1.msra.mxu0 0.0
      %1310 = vmatprep.subr.mxu0 0.0
      %1311 = vmatpush1.msra.mxu0 0.0
      %1312 = vmatprep.subr.mxu0 0.0
      %1313 = vmatpush1.msra.mxu0 0.0
      %1314 = vmatprep.subr.mxu0 0.0
      %1315 = vmatpush1.msra.mxu0 0.0
      %1316 = vmatprep.subr.mxu0 0.0
      %1317 = vmatpush1.msra.mxu0 0.0
      %1318 = vmatprep.subr.mxu0 0.0
      %1319 = vmatpush1.msra.mxu0 0.0
      %1320 = vmatprep.subr.mxu0 0.0
      %1321 = vmatpush1.msra.mxu0 0.0
      %1322 = vmatprep.subr.mxu0 0.0
      %1323 = vmatpush1.msra.mxu0 0.0
      %1324 = vmatprep.subr.mxu0 0.0
      %1325 = vmatpush1.msra.mxu0 0.0
      %1326 = vmatprep.subr.mxu0 0.0
      %1327 = vmatpush1.msra.mxu0 0.0
      %1328 = vmatprep.mubr.f32.mxu0 0.0
      %1329 = vmatmul.mubr.f32.gmra.mrb[0].mxu0 %v1163
      %v1330 = vpop.f32.mrb[0].mxu0
      %v1331 = vadd.f32 0.0, %v1330
      %v1332 = vpop.f32.mrb[0].mxu0
      %v1333 = vadd.f32 0.0, %v1332
      %1334 = vmatprep.mubr.f32.mxu0 0.0
      %1335 = vmatmul.mubr.f32.gmra.mrb[0].mxu0 %v1166
      %v1336 = vpop.f32.mrb[0].mxu0
      %v1337 = vadd.f32 0.0, %v1336
      %v1338 = vpop.f32.mrb[0].mxu0
      %v1339 = vadd.f32 0.0, %v1338
      %1340 = vmatprep.mubr.f32.mxu0 0.0
      %1341 = vmatmul.mubr.f32.gmra.mrb[0].mxu0 %v1169
      %v1342 = vpop.f32.mrb[0].mxu0
      %v1343 = vadd.f32 0.0, %v1342
      %v1344 = vpop.f32.mrb[0].mxu0
      %v1345 = vadd.f32 0.0, %v1344
      %1346 = vmatprep.mubr.f32.mxu0 0.0
      %1347 = vmatmul.mubr.f32.gmra.mrb[0].mxu0 %v1172
      %v1348 = vpop.f32.mrb[0].mxu0
      %v1349 = vadd.f32 0.0, %v1348
      %v1350 = vpop.f32.mrb[0].mxu0
      %v1351 = vadd.f32 0.0, %v1350
      %1352 = vmatprep.mubr.f32.mxu0 0.0
      %1353 = vmatmul.mubr.f32.gmra.mrb[0].mxu0 %v1175
      %v1354 = vpop.f32.mrb[0].mxu0
      %v1355 = vadd.f32 0.0, %v1354
      %v1356 = vpop.f32.mrb[0].mxu0
      %v1357 = vadd.f32 0.0, %v1356
      %1358 = vmatprep.mubr.f32.mxu0 0.0
      %1359 = vmatmul.mubr.f32.gmra.mrb[0].mxu0 %v1178
      %v1360 = vpop.f32.mrb[0].mxu0
      %v1361 = vadd.f32 0.0, %v1360
      %v1362 = vpop.f32.mrb[0].mxu0
      %v1363 = vadd.f32 0.0, %v1362
      %1364 = vmatprep.mubr.f32.mxu0 0.0
      %1365 = vmatmul.mubr.f32.gmra.mrb[0].mxu0 %v1181
      %v1366 = vpop.f32.mrb[0].mxu0
      %v1367 = vadd.f32 0.0, %v1366
      %v1368 = vpop.f32.mrb[0].mxu0
      %v1369 = vadd.f32 0.0, %v1368
      %1370 = vmatprep.mubr.f32.mxu0 0.0
      %1371 = vmatmul.mubr.f32.gmra.mrb[0].mxu0 %v1184
      %v1372 = vpop.f32.mrb[0].mxu0
      %v1373 = vadd.f32 0.0, %v1372
      %v1374 = vpop.f32.mrb[0].mxu0
      %v1375 = vadd.f32 0.0, %v1374
      %1376 = vmatprep.mubr.f32.mxu0 0.0
      %1377 = vmatmul.mubr.f32.gmra.mrb[0].mxu0 %v1187
      %v1378 = vpop.f32.mrb[0].mxu0
      %v1379 = vadd.f32 0.0, %v1378
      %v1380 = vpop.f32.mrb[0].mxu0
      %v1381 = vadd.f32 0.0, %v1380
      %1382 = vmatprep.mubr.f32.mxu0 0.0
      %1383 = vmatmul.mubr.f32.gmra.mrb[0].mxu0 %v1190
      %v1384 = vpop.f32.mrb[0].mxu0
      %v1385 = vadd.f32 0.0, %v1384
      %v1386 = vpop.f32.mrb[0].mxu0
      %v1387 = vadd.f32 0.0, %v1386
      %1388 = vmatprep.mubr.f32.mxu0 0.0
      %1389 = vmatmul.mubr.f32.gmra.mrb[0].mxu0 %v1193
      %v1390 = vpop.f32.mrb[0].mxu0
      %v1391 = vadd.f32 0.0, %v1390
      %v1392 = vpop.f32.mrb[0].mxu0
      %v1393 = vadd.f32 0.0, %v1392
      %1394 = vmatprep.mubr.f32.mxu0 0.0
      %1395 = vmatmul.mubr.f32.gmra.mrb[0].mxu0 %v1196
      %v1396 = vpop.f32.mrb[0].mxu0
      %v1397 = vadd.f32 0.0, %v1396
      %v1398 = vpop.f32.mrb[0].mxu0
      %v1399 = vadd.f32 0.0, %v1398
      %1400 = vmatprep.mubr.f32.mxu0 0.0
      %1401 = vmatmul.mubr.f32.gmra.mrb[0].mxu0 %v1199
      %v1402 = vpop.f32.mrb[0].mxu0
      %v1403 = vadd.f32 0.0, %v1402
      %v1404 = vpop.f32.mrb[0].mxu0
      %v1405 = vadd.f32 0.0, %v1404
      %1406 = vmatprep.mubr.f32.mxu0 0.0
      %1407 = vmatmul.mubr.f32.gmra.mrb[0].mxu0 %v1202
      %v1408 = vpop.f32.mrb[0].mxu0
      %v1409 = vadd.f32 0.0, %v1408
      %v1410 = vpop.f32.mrb[0].mxu0
      %v1411 = vadd.f32 0.0, %v1410
      %1412 = vmatprep.mubr.f32.mxu0 0.0
      %1413 = vmatmul.mubr.f32.gmra.mrb[0].mxu0 %v1205
      %v1414 = vpop.f32.mrb[0].mxu0
      %v1415 = vadd.f32 0.0, %v1414
      %v1416 = vpop.f32.mrb[0].mxu0
      %v1417 = vadd.f32 0.0, %v1416
      %1418 = vmatprep.mubr.f32.mxu0 0.0
      %1419 = vmatmul.mubr.f32.gmra.mrb[0].mxu0 %v1208
      %v1420 = vpop.f32.mrb[0].mxu0
      %v1421 = vadd.f32 0.0, %v1420
      %v1422 = vpop.f32.mrb[0].mxu0
      %v1423 = vadd.f32 0.0, %v1422
      %1424 = vmatprep.mubr.f32.mxu0 0.0
      %1425 = vmatmul.mubr.f32.gmra.mrb[0].mxu0 %v1211
      %v1426 = vpop.f32.mrb[0].mxu0
      %v1427 = vadd.f32 0.0, %v1426
      %v1428 = vpop.f32.mrb[0].mxu0
      %v1429 = vadd.f32 0.0, %v1428
      %1430 = vmatprep.mubr.f32.mxu0 0.0
      %1431 = vmatmul.mubr.f32.gmra.mrb[0].mxu0 %v1214
      %v1432 = vpop.f32.mrb[0].mxu0
      %v1433 = vadd.f32 0.0, %v1432
      %v1434 = vpop.f32.mrb[0].mxu0
      %v1435 = vadd.f32 0.0, %v1434
      %1436 = vmatprep.mubr.f32.mxu0 0.0
      %1437 = vmatmul.mubr.f32.gmra.mrb[0].mxu0 %v1217
      %v1438 = vpop.f32.mrb[0].mxu0
      %v1439 = vadd.f32 0.0, %v1438
      %v1440 = vpop.f32.mrb[0].mxu0
      %v1441 = vadd.f32 0.0, %v1440
      %1442 = vmatprep.mubr.f32.mxu0 0.0
      %1443 = vmatmul.mubr.f32.gmra.mrb[0].mxu0 %v1220
      %v1444 = vpop.f32.mrb[0].mxu0
      %v1445 = vadd.f32 0.0, %v1444
      %v1446 = vpop.f32.mrb[0].mxu0
      %v1447 = vadd.f32 0.0, %v1446
      %1448 = vmatprep.mubr.f32.mxu0 0.0
      %1449 = vmatmul.mubr.f32.gmra.mrb[0].mxu0 %v1223
      %v1450 = vpop.f32.mrb[0].mxu0
      %v1451 = vadd.f32 0.0, %v1450
      %v1452 = vpop.f32.mrb[0].mxu0
      %v1453 = vadd.f32 0.0, %v1452
      %1454 = vmatprep.mubr.f32.mxu0 0.0
      %1455 = vmatmul.mubr.f32.gmra.mrb[0].mxu0 %v1226
      %v1456 = vpop.f32.mrb[0].mxu0
      %v1457 = vadd.f32 0.0, %v1456
      %v1458 = vpop.f32.mrb[0].mxu0
      %v1459 = vadd.f32 0.0, %v1458
      %1460 = vmatprep.mubr.f32.mxu0 0.0
      %1461 = vmatmul.mubr.f32.gmra.mrb[0].mxu0 %v1229
      %v1462 = vpop.f32.mrb[0].mxu0
      %v1463 = vadd.f32 0.0, %v1462
      %v1464 = vpop.f32.mrb[0].mxu0
      %v1465 = vadd.f32 0.0, %v1464
      %1466 = vmatprep.mubr.f32.mxu0 0.0
      %1467 = vmatmul.mubr.f32.gmra.mrb[0].mxu0 %v1232
      %v1468 = vpop.f32.mrb[0].mxu0
      %v1469 = vadd.f32 0.0, %v1468
      %v1470 = vpop.f32.mrb[0].mxu0
      %v1471 = vadd.f32 0.0, %v1470
      %1472 = vmatprep.mubr.f32.mxu0 0.0
      %1473 = vmatmul.mubr.f32.gmra.mrb[0].mxu0 %v1235
      %v1474 = vpop.f32.mrb[0].mxu0
      %v1475 = vadd.f32 0.0, %v1474
      %v1476 = vpop.f32.mrb[0].mxu0
      %v1477 = vadd.f32 0.0, %v1476
      %1478 = vmatprep.mubr.f32.mxu0 0.0
      %1479 = vmatmul.mubr.f32.gmra.mrb[0].mxu0 %v1238
      %v1480 = vpop.f32.mrb[0].mxu0
      %v1481 = vadd.f32 0.0, %v1480
      %v1482 = vpop.f32.mrb[0].mxu0
      %v1483 = vadd.f32 0.0, %v1482
      %1484 = vmatprep.mubr.f32.mxu0 0.0
      %1485 = vmatmul.mubr.f32.gmra.mrb[0].mxu0 %v1241
      %v1486 = vpop.f32.mrb[0].mxu0
      %v1487 = vadd.f32 0.0, %v1486
      %v1488 = vpop.f32.mrb[0].mxu0
      %v1489 = vadd.f32 0.0, %v1488
      %1490 = vmatprep.mubr.f32.mxu0 0.0
      %1491 = vmatmul.mubr.f32.gmra.mrb[0].mxu0 %v1244
      %v1492 = vpop.f32.mrb[0].mxu0
      %v1493 = vadd.f32 0.0, %v1492
      %v1494 = vpop.f32.mrb[0].mxu0
      %v1495 = vadd.f32 0.0, %v1494
      %1496 = vmatprep.mubr.f32.mxu0 0.0
      %1497 = vmatmul.mubr.f32.gmra.mrb[0].mxu0 %v1247
      %v1498 = vpop.f32.mrb[0].mxu0
      %v1499 = vadd.f32 0.0, %v1498
      %v1500 = vpop.f32.mrb[0].mxu0
      %v1501 = vadd.f32 0.0, %v1500
      %1502 = vmatprep.mubr.f32.mxu0 0.0
      %1503 = vmatmul.mubr.f32.gmra.mrb[0].mxu0 %v1250
      %v1504 = vpop.f32.mrb[0].mxu0
      %v1505 = vadd.f32 0.0, %v1504
      %v1506 = vpop.f32.mrb[0].mxu0
      %v1507 = vadd.f32 0.0, %v1506
      %1508 = vmatprep.mubr.f32.mxu0 0.0
      %1509 = vmatmul.mubr.f32.gmra.mrb[0].mxu0 %v1253
      %v1510 = vpop.f32.mrb[0].mxu0
      %v1511 = vadd.f32 0.0, %v1510
      %v1512 = vpop.f32.mrb[0].mxu0
      %v1513 = vadd.f32 0.0, %v1512
      %1514 = vmatprep.mubr.f32.mxu0 0.0
      %1515 = vmatmul.mubr.f32.gmra.mrb[0].mxu0 %v1256
      %v1516 = vpop.f32.mrb[0].mxu0
      %v1517 = vadd.f32 0.0, %v1516
      %v1518 = vpop.f32.mrb[0].mxu0
      %v1519 = vadd.f32 0.0, %v1518
      %1520 = vdwg.mxu0
      %s1521 = scalar_lea.vmem [#allocation4], 512
      %1522 = vst [vmem:[%s1521] sm:$0xff] %v1331
      %1523 = vst [vmem:[%s1521 + $0x8] sm:$0xff] %v1333
      %1524 = vst [vmem:[%s1521 + $0x10] sm:$0xff] %v1337
      %1525 = vst [vmem:[%s1521 + $0x18] sm:$0xff] %v1339
      %1526 = vst [vmem:[%s1521 + $0x20] sm:$0xff] %v1343
      %1527 = vst [vmem:[%s1521 + $0x28] sm:$0xff] %v1345
      %1528 = vst [vmem:[%s1521 + $0x30] sm:$0xff] %v1349
      %1529 = vst [vmem:[%s1521 + $0x38] sm:$0xff] %v1351
      %1530 = vst [vmem:[%s1521 + $0x40] sm:$0xff] %v1355
      %1531 = vst [vmem:[%s1521 + $0x48] sm:$0xff] %v1357
      %1532 = vst [vmem:[%s1521 + $0x50] sm:$0xff] %v1361
      %1533 = vst [vmem:[%s1521 + $0x58] sm:$0xff] %v1363
      %1534 = vst [vmem:[%s1521 + $0x60] sm:$0xff] %v1367
      %1535 = vst [vmem:[%s1521 + $0x68] sm:$0xff] %v1369
      %1536 = vst [vmem:[%s1521 + $0x70] sm:$0xff] %v1373
      %1537 = vst [vmem:[%s1521 + $0x78] sm:$0xff] %v1375
      %1538 = vst [vmem:[%s1521 + $0x80] sm:$0xff] %v1379
      %1539 = vst [vmem:[%s1521 + $0x88] sm:$0xff] %v1381
      %1540 = vst [vmem:[%s1521 + $0x90] sm:$0xff] %v1385
      %1541 = vst [vmem:[%s1521 + $0x98] sm:$0xff] %v1387
      %1542 = vst [vmem:[%s1521 + $0xa0] sm:$0xff] %v1391
      %1543 = vst [vmem:[%s1521 + $0xa8] sm:$0xff] %v1393
      %1544 = vst [vmem:[%s1521 + $0xb0] sm:$0xff] %v1397
      %1545 = vst [vmem:[%s1521 + $0xb8] sm:$0xff] %v1399
      %1546 = vst [vmem:[%s1521 + $0xc0] sm:$0xff] %v1403
      %1547 = vst [vmem:[%s1521 + $0xc8] sm:$0xff] %v1405
      %1548 = vst [vmem:[%s1521 + $0xd0] sm:$0xff] %v1409
      %1549 = vst [vmem:[%s1521 + $0xd8] sm:$0xff] %v1411
      %1550 = vst [vmem:[%s1521 + $0xe0] sm:$0xff] %v1415
      %1551 = vst [vmem:[%s1521 + $0xe8] sm:$0xff] %v1417
      %1552 = vst [vmem:[%s1521 + $0xf0] sm:$0xff] %v1421
      %1553 = vst [vmem:[%s1521 + $0xf8] sm:$0xff] %v1423
      %1554 = vst [vmem:[%s1521 + $0x100] sm:$0xff] %v1427
      %1555 = vst [vmem:[%s1521 + $0x108] sm:$0xff] %v1429
      %1556 = vst [vmem:[%s1521 + $0x110] sm:$0xff] %v1433
      %1557 = vst [vmem:[%s1521 + $0x118] sm:$0xff] %v1435
      %1558 = vst [vmem:[%s1521 + $0x120] sm:$0xff] %v1439
      %1559 = vst [vmem:[%s1521 + $0x128] sm:$0xff] %v1441
      %1560 = vst [vmem:[%s1521 + $0x130] sm:$0xff] %v1445
      %1561 = vst [vmem:[%s1521 + $0x138] sm:$0xff] %v1447
      %1562 = vst [vmem:[%s1521 + $0x140] sm:$0xff] %v1451
      %1563 = vst [vmem:[%s1521 + $0x148] sm:$0xff] %v1453
      %1564 = vst [vmem:[%s1521 + $0x150] sm:$0xff] %v1457
      %1565 = vst [vmem:[%s1521 + $0x158] sm:$0xff] %v1459
      %1566 = vst [vmem:[%s1521 + $0x160] sm:$0xff] %v1463
      %1567 = vst [vmem:[%s1521 + $0x168] sm:$0xff] %v1465
      %1568 = vst [vmem:[%s1521 + $0x170] sm:$0xff] %v1469
      %1569 = vst [vmem:[%s1521 + $0x178] sm:$0xff] %v1471
      %1570 = vst [vmem:[%s1521 + $0x180] sm:$0xff] %v1475
      %1571 = vst [vmem:[%s1521 + $0x188] sm:$0xff] %v1477
      %1572 = vst [vmem:[%s1521 + $0x190] sm:$0xff] %v1481
      %1573 = vst [vmem:[%s1521 + $0x198] sm:$0xff] %v1483
      %1574 = vst [vmem:[%s1521 + $0x1a0] sm:$0xff] %v1487
      %1575 = vst [vmem:[%s1521 + $0x1a8] sm:$0xff] %v1489
      %1576 = vst [vmem:[%s1521 + $0x1b0] sm:$0xff] %v1493
      %1577 = vst [vmem:[%s1521 + $0x1b8] sm:$0xff] %v1495
      %1578 = vst [vmem:[%s1521 + $0x1c0] sm:$0xff] %v1499
      %1579 = vst [vmem:[%s1521 + $0x1c8] sm:$0xff] %v1501
      %1580 = vst [vmem:[%s1521 + $0x1d0] sm:$0xff] %v1505
      %1581 = vst [vmem:[%s1521 + $0x1d8] sm:$0xff] %v1507
      %1582 = vst [vmem:[%s1521 + $0x1e0] sm:$0xff] %v1511
      %1583 = vst [vmem:[%s1521 + $0x1e8] sm:$0xff] %v1513
      %1584 = vst [vmem:[%s1521 + $0x1f0] sm:$0xff] %v1517
      %1585 = vst [vmem:[%s1521 + $0x1f8] sm:$0xff] %v1519
      %v1586 = vld [vmem:[#allocation3 + $0x90] sm:$0xf]
      %v1587 = vld [vmem:[#allocation3 + $0x98] sm:$0xf]
      %v1588 = vsel %vm1088, %v1586, 0.0
      %v1589 = vsel %vm1088, %v1587, 0.0
      %v1590 = vadd.f32 %v1588, %v1589
      %1591 = vadd.xlane.f32.xlu0 %v1590
      %v1592 = vpop.xlane.xlu0 %1591
      %v1593 = vld [vmem:[%s4] sm:$0xf]
      %v1594 = vld [vmem:[%s4 + $0x4] sm:$0xf]
      %v1595 = vld [vmem:[%s3] ss:$4 sm:$0x3]
      %s1596 = scalar_lea.vmem %s3, 1
      %v1597 = vld [vmem:[%s1596] ss:$4 sm:$0x3]
      %v1598 = vld [vmem:[#allocation3] sm:$0x3]
      %v1599 = vld [vmem:[#allocation3 + $0x8] sm:$0x3]
      %v1600 = vld [vmem:[#allocation3 + $0x10] sm:$0x3]
      %v1601 = vld [vmem:[#allocation3 + $0x18] sm:$0x3]
      %1602 = vxpose.xlu0.b32.start [1/16] %v1598, 128
      %1603 = vxpose.xlu0.b32.cont [2/16] 0.0, 128
      %1604 = vxpose.xlu0.b32.cont [3/16] 0.0, 128
      %1605 = vxpose.xlu0.b32.cont [4/16] 0.0, 128
      %1606 = vxpose.xlu0.b32.cont [5/16] 0.0, 128
      %1607 = vxpose.xlu0.b32.cont [6/16] 0.0, 128
      %1608 = vxpose.xlu0.b32.cont [7/16] 0.0, 128
      %1609 = vxpose.xlu0.b32.cont [8/16] 0.0, 128
      %1610 = vxpose.xlu0.b32.cont [9/16] 0.0, 128
      %1611 = vxpose.xlu0.b32.cont [10/16] 0.0, 128
      %1612 = vxpose.xlu0.b32.cont [11/16] 0.0, 128
      %1613 = vxpose.xlu0.b32.cont [12/16] 0.0, 128
      %1614 = vxpose.xlu0.b32.cont [13/16] 0.0, 128
      %1615 = vxpose.xlu0.b32.cont [14/16] 0.0, 128
      %1616 = vxpose.xlu0.b32.cont [15/16] 0.0, 128
      %1617 = vxpose.xlu0.b32.end [16/16] 0.0, 128
      %v1618 = vpop.trf.xlu0
      %v1619 = vpop.trf.xlu0
      %v1620 = vpop.trf.xlu0
      %v1621 = vpop.trf.xlu0
      %v1622 = vpop.trf.xlu0
      %v1623 = vpop.trf.xlu0
      %v1624 = vpop.trf.xlu0
      %v1625 = vpop.trf.xlu0
      %v1626 = vpop.trf.xlu0
      %v1627 = vpop.trf.xlu0
      %v1628 = vpop.trf.xlu0
      %v1629 = vpop.trf.xlu0
      %v1630 = vpop.trf.xlu0
      %v1631 = vpop.trf.xlu0
      %v1632 = vpop.trf.xlu0
      %v1633 = vpop.trf.xlu0
      %1634 = vxpose.xlu0.b32.start [1/16] %v1599, 128
      %1635 = vxpose.xlu0.b32.cont [2/16] 0.0, 128
      %1636 = vxpose.xlu0.b32.cont [3/16] 0.0, 128
      %1637 = vxpose.xlu0.b32.cont [4/16] 0.0, 128
      %1638 = vxpose.xlu0.b32.cont [5/16] 0.0, 128
      %1639 = vxpose.xlu0.b32.cont [6/16] 0.0, 128
      %1640 = vxpose.xlu0.b32.cont [7/16] 0.0, 128
      %1641 = vxpose.xlu0.b32.cont [8/16] 0.0, 128
      %1642 = vxpose.xlu0.b32.cont [9/16] 0.0, 128
      %1643 = vxpose.xlu0.b32.cont [10/16] 0.0, 128
      %1644 = vxpose.xlu0.b32.cont [11/16] 0.0, 128
      %1645 = vxpose.xlu0.b32.cont [12/16] 0.0, 128
      %1646 = vxpose.xlu0.b32.cont [13/16] 0.0, 128
      %1647 = vxpose.xlu0.b32.cont [14/16] 0.0, 128
      %1648 = vxpose.xlu0.b32.cont [15/16] 0.0, 128
      %1649 = vxpose.xlu0.b32.end [16/16] 0.0, 128
      %v1650 = vpop.trf.xlu0
      %v1651 = vpop.trf.xlu0
      %v1652 = vpop.trf.xlu0
      %v1653 = vpop.trf.xlu0
      %v1654 = vpop.trf.xlu0
      %v1655 = vpop.trf.xlu0
      %v1656 = vpop.trf.xlu0
      %v1657 = vpop.trf.xlu0
      %v1658 = vpop.trf.xlu0
      %v1659 = vpop.trf.xlu0
      %v1660 = vpop.trf.xlu0
      %v1661 = vpop.trf.xlu0
      %v1662 = vpop.trf.xlu0
      %v1663 = vpop.trf.xlu0
      %v1664 = vpop.trf.xlu0
      %v1665 = vpop.trf.xlu0
      %v1667 = vsel %vm661, %v1618, 0
      %v1670 = vsel %vm661, %v1619, 0
      %v1673 = vsel %vm661, %v1620, 0
      %v1676 = vsel %vm661, %v1621, 0
      %v1679 = vsel %vm661, %v1622, 0
      %v1682 = vsel %vm661, %v1623, 0
      %v1685 = vsel %vm661, %v1624, 0
      %v1688 = vsel %vm661, %v1625, 0
      %v1691 = vsel %vm661, %v1626, 0
      %v1694 = vsel %vm661, %v1627, 0
      %v1697 = vsel %vm661, %v1628, 0
      %v1700 = vsel %vm661, %v1629, 0
      %v1703 = vsel %vm661, %v1630, 0
      %v1706 = vsel %vm661, %v1631, 0
      %v1709 = vsel %vm661, %v1632, 0
      %v1712 = vsel %vm661, %v1633, 0
      %v1715 = vsel %vm661, %v1650, 0
      %v1718 = vsel %vm661, %v1651, 0
      %v1721 = vsel %vm661, %v1652, 0
      %v1724 = vsel %vm661, %v1653, 0
      %v1727 = vsel %vm661, %v1654, 0
      %v1730 = vsel %vm661, %v1655, 0
      %v1733 = vsel %vm661, %v1656, 0
      %v1736 = vsel %vm661, %v1657, 0
      %v1739 = vsel %vm661, %v1658, 0
      %v1742 = vsel %vm661, %v1659, 0
      %v1745 = vsel %vm661, %v1660, 0
      %v1748 = vsel %vm661, %v1661, 0
      %v1751 = vsel %vm661, %v1662, 0
      %v1754 = vsel %vm661, %v1663, 0
      %v1757 = vsel %vm661, %v1664, 0
      %v1760 = vsel %vm661, %v1665, 0
      %v1763 = vsel %vm758, %v1600, 0
      %v1766 = vsel %vm758, %v1601, 0
      %1768 = vmatprep.subr.mxu0 %v1766
      %1769 = vmatpush1.msra.mxu0 %v1763
      %1770 = vmatprep.subr.mxu0 0.0
      %1771 = vmatpush1.msra.mxu0 0.0
      %1772 = vmatprep.subr.mxu0 0.0
      %1773 = vmatpush1.msra.mxu0 0.0
      %1774 = vmatprep.subr.mxu0 0.0
      %1775 = vmatpush1.msra.mxu0 0.0
      %1776 = vmatprep.subr.mxu0 0.0
      %1777 = vmatpush1.msra.mxu0 0.0
      %1778 = vmatprep.subr.mxu0 0.0
      %1779 = vmatpush1.msra.mxu0 0.0
      %1780 = vmatprep.subr.mxu0 0.0
      %1781 = vmatpush1.msra.mxu0 0.0
      %1782 = vmatprep.subr.mxu0 0.0
      %1783 = vmatpush1.msra.mxu0 0.0
      %1784 = vmatprep.subr.mxu0 0.0
      %1785 = vmatpush1.msra.mxu0 0.0
      %1786 = vmatprep.subr.mxu0 0.0
      %1787 = vmatpush1.msra.mxu0 0.0
      %1788 = vmatprep.subr.mxu0 0.0
      %1789 = vmatpush1.msra.mxu0 0.0
      %1790 = vmatprep.subr.mxu0 0.0
      %1791 = vmatpush1.msra.mxu0 0.0
      %1792 = vmatprep.subr.mxu0 0.0
      %1793 = vmatpush1.msra.mxu0 0.0
      %1794 = vmatprep.subr.mxu0 0.0
      %1795 = vmatpush1.msra.mxu0 0.0
      %1796 = vmatprep.subr.mxu0 0.0
      %1797 = vmatpush1.msra.mxu0 0.0
      %1798 = vmatprep.subr.mxu0 0.0
      %1799 = vmatpush1.msra.mxu0 0.0
      %1800 = vmatprep.subr.mxu0 0.0
      %1801 = vmatpush1.msra.mxu0 0.0
      %1802 = vmatprep.subr.mxu0 0.0
      %1803 = vmatpush1.msra.mxu0 0.0
      %1804 = vmatprep.subr.mxu0 0.0
      %1805 = vmatpush1.msra.mxu0 0.0
      %1806 = vmatprep.subr.mxu0 0.0
      %1807 = vmatpush1.msra.mxu0 0.0
      %1808 = vmatprep.subr.mxu0 0.0
      %1809 = vmatpush1.msra.mxu0 0.0
      %1810 = vmatprep.subr.mxu0 0.0
      %1811 = vmatpush1.msra.mxu0 0.0
      %1812 = vmatprep.subr.mxu0 0.0
      %1813 = vmatpush1.msra.mxu0 0.0
      %1814 = vmatprep.subr.mxu0 0.0
      %1815 = vmatpush1.msra.mxu0 0.0
      %1816 = vmatprep.subr.mxu0 0.0
      %1817 = vmatpush1.msra.mxu0 0.0
      %1818 = vmatprep.subr.mxu0 0.0
      %1819 = vmatpush1.msra.mxu0 0.0
      %1820 = vmatprep.subr.mxu0 0.0
      %1821 = vmatpush1.msra.mxu0 0.0
      %1822 = vmatprep.subr.mxu0 0.0
      %1823 = vmatpush1.msra.mxu0 0.0
      %1824 = vmatprep.subr.mxu0 0.0
      %1825 = vmatpush1.msra.mxu0 0.0
      %1826 = vmatprep.subr.mxu0 0.0
      %1827 = vmatpush1.msra.mxu0 0.0
      %1828 = vmatprep.subr.mxu0 0.0
      %1829 = vmatpush1.msra.mxu0 0.0
      %1830 = vmatprep.subr.mxu0 0.0
      %1831 = vmatpush1.msra.mxu0 0.0
      %1832 = vmatprep.mubr.f32.mxu0 0.0
      %1833 = vmatmul.mubr.f32.gmra.mrb[0].mxu0 %v1667
      %v1834 = vpop.f32.mrb[0].mxu0
      %v1835 = vadd.f32 0.0, %v1834
      %v1836 = vpop.f32.mrb[0].mxu0
      %v1837 = vadd.f32 0.0, %v1836
      %1838 = vmatprep.mubr.f32.mxu0 0.0
      %1839 = vmatmul.mubr.f32.gmra.mrb[0].mxu0 %v1670
      %v1840 = vpop.f32.mrb[0].mxu0
      %v1841 = vadd.f32 0.0, %v1840
      %v1842 = vpop.f32.mrb[0].mxu0
      %v1843 = vadd.f32 0.0, %v1842
      %1844 = vmatprep.mubr.f32.mxu0 0.0
      %1845 = vmatmul.mubr.f32.gmra.mrb[0].mxu0 %v1673
      %v1846 = vpop.f32.mrb[0].mxu0
      %v1847 = vadd.f32 0.0, %v1846
      %v1848 = vpop.f32.mrb[0].mxu0
      %v1849 = vadd.f32 0.0, %v1848
      %1850 = vmatprep.mubr.f32.mxu0 0.0
      %1851 = vmatmul.mubr.f32.gmra.mrb[0].mxu0 %v1676
      %v1852 = vpop.f32.mrb[0].mxu0
      %v1853 = vadd.f32 0.0, %v1852
      %v1854 = vpop.f32.mrb[0].mxu0
      %v1855 = vadd.f32 0.0, %v1854
      %1856 = vmatprep.mubr.f32.mxu0 0.0
      %1857 = vmatmul.mubr.f32.gmra.mrb[0].mxu0 %v1679
      %v1858 = vpop.f32.mrb[0].mxu0
      %v1859 = vadd.f32 0.0, %v1858
      %v1860 = vpop.f32.mrb[0].mxu0
      %v1861 = vadd.f32 0.0, %v1860
      %1862 = vmatprep.mubr.f32.mxu0 0.0
      %1863 = vmatmul.mubr.f32.gmra.mrb[0].mxu0 %v1682
      %v1864 = vpop.f32.mrb[0].mxu0
      %v1865 = vadd.f32 0.0, %v1864
      %v1866 = vpop.f32.mrb[0].mxu0
      %v1867 = vadd.f32 0.0, %v1866
      %1868 = vmatprep.mubr.f32.mxu0 0.0
      %1869 = vmatmul.mubr.f32.gmra.mrb[0].mxu0 %v1685
      %v1870 = vpop.f32.mrb[0].mxu0
      %v1871 = vadd.f32 0.0, %v1870
      %v1872 = vpop.f32.mrb[0].mxu0
      %v1873 = vadd.f32 0.0, %v1872
      %1874 = vmatprep.mubr.f32.mxu0 0.0
      %1875 = vmatmul.mubr.f32.gmra.mrb[0].mxu0 %v1688
      %v1876 = vpop.f32.mrb[0].mxu0
      %v1877 = vadd.f32 0.0, %v1876
      %v1878 = vpop.f32.mrb[0].mxu0
      %v1879 = vadd.f32 0.0, %v1878
      %1880 = vmatprep.mubr.f32.mxu0 0.0
      %1881 = vmatmul.mubr.f32.gmra.mrb[0].mxu0 %v1691
      %v1882 = vpop.f32.mrb[0].mxu0
      %v1883 = vadd.f32 0.0, %v1882
      %v1884 = vpop.f32.mrb[0].mxu0
      %v1885 = vadd.f32 0.0, %v1884
      %1886 = vmatprep.mubr.f32.mxu0 0.0
      %1887 = vmatmul.mubr.f32.gmra.mrb[0].mxu0 %v1694
      %v1888 = vpop.f32.mrb[0].mxu0
      %v1889 = vadd.f32 0.0, %v1888
      %v1890 = vpop.f32.mrb[0].mxu0
      %v1891 = vadd.f32 0.0, %v1890
      %1892 = vmatprep.mubr.f32.mxu0 0.0
      %1893 = vmatmul.mubr.f32.gmra.mrb[0].mxu0 %v1697
      %v1894 = vpop.f32.mrb[0].mxu0
      %v1895 = vadd.f32 0.0, %v1894
      %v1896 = vpop.f32.mrb[0].mxu0
      %v1897 = vadd.f32 0.0, %v1896
      %1898 = vmatprep.mubr.f32.mxu0 0.0
      %1899 = vmatmul.mubr.f32.gmra.mrb[0].mxu0 %v1700
      %v1900 = vpop.f32.mrb[0].mxu0
      %v1901 = vadd.f32 0.0, %v1900
      %v1902 = vpop.f32.mrb[0].mxu0
      %v1903 = vadd.f32 0.0, %v1902
      %1904 = vmatprep.mubr.f32.mxu0 0.0
      %1905 = vmatmul.mubr.f32.gmra.mrb[0].mxu0 %v1703
      %v1906 = vpop.f32.mrb[0].mxu0
      %v1907 = vadd.f32 0.0, %v1906
      %v1908 = vpop.f32.mrb[0].mxu0
      %v1909 = vadd.f32 0.0, %v1908
      %1910 = vmatprep.mubr.f32.mxu0 0.0
      %1911 = vmatmul.mubr.f32.gmra.mrb[0].mxu0 %v1706
      %v1912 = vpop.f32.mrb[0].mxu0
      %v1913 = vadd.f32 0.0, %v1912
      %v1914 = vpop.f32.mrb[0].mxu0
      %v1915 = vadd.f32 0.0, %v1914
      %1916 = vmatprep.mubr.f32.mxu0 0.0
      %1917 = vmatmul.mubr.f32.gmra.mrb[0].mxu0 %v1709
      %v1918 = vpop.f32.mrb[0].mxu0
      %v1919 = vadd.f32 0.0, %v1918
      %v1920 = vpop.f32.mrb[0].mxu0
      %v1921 = vadd.f32 0.0, %v1920
      %1922 = vmatprep.mubr.f32.mxu0 0.0
      %1923 = vmatmul.mubr.f32.gmra.mrb[0].mxu0 %v1712
      %v1924 = vpop.f32.mrb[0].mxu0
      %v1925 = vadd.f32 0.0, %v1924
      %v1926 = vpop.f32.mrb[0].mxu0
      %v1927 = vadd.f32 0.0, %v1926
      %1928 = vmatprep.mubr.f32.mxu0 0.0
      %1929 = vmatmul.mubr.f32.gmra.mrb[0].mxu0 %v1715
      %v1930 = vpop.f32.mrb[0].mxu0
      %v1931 = vadd.f32 0.0, %v1930
      %v1932 = vpop.f32.mrb[0].mxu0
      %v1933 = vadd.f32 0.0, %v1932
      %1934 = vmatprep.mubr.f32.mxu0 0.0
      %1935 = vmatmul.mubr.f32.gmra.mrb[0].mxu0 %v1718
      %v1936 = vpop.f32.mrb[0].mxu0
      %v1937 = vadd.f32 0.0, %v1936
      %v1938 = vpop.f32.mrb[0].mxu0
      %v1939 = vadd.f32 0.0, %v1938
      %1940 = vmatprep.mubr.f32.mxu0 0.0
      %1941 = vmatmul.mubr.f32.gmra.mrb[0].mxu0 %v1721
      %v1942 = vpop.f32.mrb[0].mxu0
      %v1943 = vadd.f32 0.0, %v1942
      %v1944 = vpop.f32.mrb[0].mxu0
      %v1945 = vadd.f32 0.0, %v1944
      %1946 = vmatprep.mubr.f32.mxu0 0.0
      %1947 = vmatmul.mubr.f32.gmra.mrb[0].mxu0 %v1724
      %v1948 = vpop.f32.mrb[0].mxu0
      %v1949 = vadd.f32 0.0, %v1948
      %v1950 = vpop.f32.mrb[0].mxu0
      %v1951 = vadd.f32 0.0, %v1950
      %1952 = vmatprep.mubr.f32.mxu0 0.0
      %1953 = vmatmul.mubr.f32.gmra.mrb[0].mxu0 %v1727
      %v1954 = vpop.f32.mrb[0].mxu0
      %v1955 = vadd.f32 0.0, %v1954
      %v1956 = vpop.f32.mrb[0].mxu0
      %v1957 = vadd.f32 0.0, %v1956
      %1958 = vmatprep.mubr.f32.mxu0 0.0
      %1959 = vmatmul.mubr.f32.gmra.mrb[0].mxu0 %v1730
      %v1960 = vpop.f32.mrb[0].mxu0
      %v1961 = vadd.f32 0.0, %v1960
      %v1962 = vpop.f32.mrb[0].mxu0
      %v1963 = vadd.f32 0.0, %v1962
      %1964 = vmatprep.mubr.f32.mxu0 0.0
      %1965 = vmatmul.mubr.f32.gmra.mrb[0].mxu0 %v1733
      %v1966 = vpop.f32.mrb[0].mxu0
      %v1967 = vadd.f32 0.0, %v1966
      %v1968 = vpop.f32.mrb[0].mxu0
      %v1969 = vadd.f32 0.0, %v1968
      %1970 = vmatprep.mubr.f32.mxu0 0.0
      %1971 = vmatmul.mubr.f32.gmra.mrb[0].mxu0 %v1736
      %v1972 = vpop.f32.mrb[0].mxu0
      %v1973 = vadd.f32 0.0, %v1972
      %v1974 = vpop.f32.mrb[0].mxu0
      %v1975 = vadd.f32 0.0, %v1974
      %1976 = vmatprep.mubr.f32.mxu0 0.0
      %1977 = vmatmul.mubr.f32.gmra.mrb[0].mxu0 %v1739
      %v1978 = vpop.f32.mrb[0].mxu0
      %v1979 = vadd.f32 0.0, %v1978
      %v1980 = vpop.f32.mrb[0].mxu0
      %v1981 = vadd.f32 0.0, %v1980
      %1982 = vmatprep.mubr.f32.mxu0 0.0
      %1983 = vmatmul.mubr.f32.gmra.mrb[0].mxu0 %v1742
      %v1984 = vpop.f32.mrb[0].mxu0
      %v1985 = vadd.f32 0.0, %v1984
      %v1986 = vpop.f32.mrb[0].mxu0
      %v1987 = vadd.f32 0.0, %v1986
      %1988 = vmatprep.mubr.f32.mxu0 0.0
      %1989 = vmatmul.mubr.f32.gmra.mrb[0].mxu0 %v1745
      %v1990 = vpop.f32.mrb[0].mxu0
      %v1991 = vadd.f32 0.0, %v1990
      %v1992 = vpop.f32.mrb[0].mxu0
      %v1993 = vadd.f32 0.0, %v1992
      %1994 = vmatprep.mubr.f32.mxu0 0.0
      %1995 = vmatmul.mubr.f32.gmra.mrb[0].mxu0 %v1748
      %v1996 = vpop.f32.mrb[0].mxu0
      %v1997 = vadd.f32 0.0, %v1996
      %v1998 = vpop.f32.mrb[0].mxu0
      %v1999 = vadd.f32 0.0, %v1998
      %2000 = vmatprep.mubr.f32.mxu0 0.0
      %2001 = vmatmul.mubr.f32.gmra.mrb[0].mxu0 %v1751
      %v2002 = vpop.f32.mrb[0].mxu0
      %v2003 = vadd.f32 0.0, %v2002
      %v2004 = vpop.f32.mrb[0].mxu0
      %v2005 = vadd.f32 0.0, %v2004
      %2006 = vmatprep.mubr.f32.mxu0 0.0
      %2007 = vmatmul.mubr.f32.gmra.mrb[0].mxu0 %v1754
      %v2008 = vpop.f32.mrb[0].mxu0
      %v2009 = vadd.f32 0.0, %v2008
      %v2010 = vpop.f32.mrb[0].mxu0
      %v2011 = vadd.f32 0.0, %v2010
      %2012 = vmatprep.mubr.f32.mxu0 0.0
      %2013 = vmatmul.mubr.f32.gmra.mrb[0].mxu0 %v1757
      %v2014 = vpop.f32.mrb[0].mxu0
      %v2015 = vadd.f32 0.0, %v2014
      %v2016 = vpop.f32.mrb[0].mxu0
      %v2017 = vadd.f32 0.0, %v2016
      %2018 = vmatprep.mubr.f32.mxu0 0.0
      %2019 = vmatmul.mubr.f32.gmra.mrb[0].mxu0 %v1760
      %v2020 = vpop.f32.mrb[0].mxu0
      %v2021 = vadd.f32 0.0, %v2020
      %v2022 = vpop.f32.mrb[0].mxu0
      %v2023 = vadd.f32 0.0, %v2022
      %2024 = vdwg.mxu0
      %v2025 = vld [vmem:[#allocation4] sm:$0xff]
      %v2026 = vld [vmem:[#allocation4 + $0x8] sm:$0xff]
      %v2027 = vld [vmem:[#allocation4 + $0x10] sm:$0xff]
      %v2028 = vld [vmem:[#allocation4 + $0x18] sm:$0xff]
      %v2029 = vld [vmem:[#allocation4 + $0x20] sm:$0xff]
      %v2030 = vld [vmem:[#allocation4 + $0x28] sm:$0xff]
      %v2031 = vld [vmem:[#allocation4 + $0x30] sm:$0xff]
      %v2032 = vld [vmem:[#allocation4 + $0x38] sm:$0xff]
      %v2033 = vld [vmem:[#allocation4 + $0x40] sm:$0xff]
      %v2034 = vld [vmem:[#allocation4 + $0x48] sm:$0xff]
      %v2035 = vld [vmem:[#allocation4 + $0x50] sm:$0xff]
      %v2036 = vld [vmem:[#allocation4 + $0x58] sm:$0xff]
      %v2037 = vld [vmem:[#allocation4 + $0x60] sm:$0xff]
      %v2038 = vld [vmem:[#allocation4 + $0x68] sm:$0xff]
      %v2039 = vld [vmem:[#allocation4 + $0x70] sm:$0xff]
      %v2040 = vld [vmem:[#allocation4 + $0x78] sm:$0xff]
      %v2041 = vld [vmem:[#allocation4 + $0x80] sm:$0xff]
      %v2042 = vld [vmem:[#allocation4 + $0x88] sm:$0xff]
      %v2043 = vld [vmem:[#allocation4 + $0x90] sm:$0xff]
      %v2044 = vld [vmem:[#allocation4 + $0x98] sm:$0xff]
      %v2045 = vld [vmem:[#allocation4 + $0xa0] sm:$0xff]
      %v2046 = vld [vmem:[#allocation4 + $0xa8] sm:$0xff]
      %v2047 = vld [vmem:[#allocation4 + $0xb0] sm:$0xff]
      %v2048 = vld [vmem:[#allocation4 + $0xb8] sm:$0xff]
      %v2049 = vld [vmem:[#allocation4 + $0xc0] sm:$0xff]
      %v2050 = vld [vmem:[#allocation4 + $0xc8] sm:$0xff]
      %v2051 = vld [vmem:[#allocation4 + $0xd0] sm:$0xff]
      %v2052 = vld [vmem:[#allocation4 + $0xd8] sm:$0xff]
      %v2053 = vld [vmem:[#allocation4 + $0xe0] sm:$0xff]
      %v2054 = vld [vmem:[#allocation4 + $0xe8] sm:$0xff]
      %v2055 = vld [vmem:[#allocation4 + $0xf0] sm:$0xff]
      %v2056 = vld [vmem:[#allocation4 + $0xf8] sm:$0xff]
      %v2057 = vld [vmem:[#allocation4 + $0x100] sm:$0xff]
      %v2058 = vld [vmem:[#allocation4 + $0x108] sm:$0xff]
      %v2059 = vld [vmem:[#allocation4 + $0x110] sm:$0xff]
      %v2060 = vld [vmem:[#allocation4 + $0x118] sm:$0xff]
      %v2061 = vld [vmem:[#allocation4 + $0x120] sm:$0xff]
      %v2062 = vld [vmem:[#allocation4 + $0x128] sm:$0xff]
      %v2063 = vld [vmem:[#allocation4 + $0x130] sm:$0xff]
      %v2064 = vld [vmem:[#allocation4 + $0x138] sm:$0xff]
      %v2065 = vld [vmem:[#allocation4 + $0x140] sm:$0xff]
      %v2066 = vld [vmem:[#allocation4 + $0x148] sm:$0xff]
      %v2067 = vld [vmem:[#allocation4 + $0x150] sm:$0xff]
      %v2068 = vld [vmem:[#allocation4 + $0x158] sm:$0xff]
      %v2069 = vld [vmem:[#allocation4 + $0x160] sm:$0xff]
      %v2070 = vld [vmem:[#allocation4 + $0x168] sm:$0xff]
      %v2071 = vld [vmem:[#allocation4 + $0x170] sm:$0xff]
      %v2072 = vld [vmem:[#allocation4 + $0x178] sm:$0xff]
      %v2073 = vld [vmem:[#allocation4 + $0x180] sm:$0xff]
      %v2074 = vld [vmem:[#allocation4 + $0x188] sm:$0xff]
      %v2075 = vld [vmem:[#allocation4 + $0x190] sm:$0xff]
      %v2076 = vld [vmem:[#allocation4 + $0x198] sm:$0xff]
      %v2077 = vld [vmem:[#allocation4 + $0x1a0] sm:$0xff]
      %v2078 = vld [vmem:[#allocation4 + $0x1a8] sm:$0xff]
      %v2079 = vld [vmem:[#allocation4 + $0x1b0] sm:$0xff]
      %v2080 = vld [vmem:[#allocation4 + $0x1b8] sm:$0xff]
      %v2081 = vld [vmem:[#allocation4 + $0x1c0] sm:$0xff]
      %v2082 = vld [vmem:[#allocation4 + $0x1c8] sm:$0xff]
      %v2083 = vld [vmem:[#allocation4 + $0x1d0] sm:$0xff]
      %v2084 = vld [vmem:[#allocation4 + $0x1d8] sm:$0xff]
      %v2085 = vld [vmem:[#allocation4 + $0x1e0] sm:$0xff]
      %v2086 = vld [vmem:[#allocation4 + $0x1e8] sm:$0xff]
      %v2087 = vld [vmem:[#allocation4 + $0x1f0] sm:$0xff]
      %v2088 = vld [vmem:[#allocation4 + $0x1f8] sm:$0xff]
      %2089 = vmatprep.subr.mxu0 %v2026
      %2090 = vmatpush1.msra.mxu0 %v2025
      %2091 = vmatprep.subr.mxu0 %v2028
      %2092 = vmatpush1.msra.mxu0 %v2027
      %2093 = vmatprep.subr.mxu0 %v2030
      %2094 = vmatpush1.msra.mxu0 %v2029
      %2095 = vmatprep.subr.mxu0 %v2032
      %2096 = vmatpush1.msra.mxu0 %v2031
      %2097 = vmatprep.subr.mxu0 %v2034
      %2098 = vmatpush1.msra.mxu0 %v2033
      %2099 = vmatprep.subr.mxu0 %v2036
      %2100 = vmatpush1.msra.mxu0 %v2035
      %2101 = vmatprep.subr.mxu0 %v2038
      %2102 = vmatpush1.msra.mxu0 %v2037
      %2103 = vmatprep.subr.mxu0 %v2040
      %2104 = vmatpush1.msra.mxu0 %v2039
      %2105 = vmatprep.subr.mxu0 %v2042
      %2106 = vmatpush1.msra.mxu0 %v2041
      %2107 = vmatprep.subr.mxu0 %v2044
      %2108 = vmatpush1.msra.mxu0 %v2043
      %2109 = vmatprep.subr.mxu0 %v2046
      %2110 = vmatpush1.msra.mxu0 %v2045
      %2111 = vmatprep.subr.mxu0 %v2048
      %2112 = vmatpush1.msra.mxu0 %v2047
      %2113 = vmatprep.subr.mxu0 %v2050
      %2114 = vmatpush1.msra.mxu0 %v2049
      %2115 = vmatprep.subr.mxu0 %v2052
      %2116 = vmatpush1.msra.mxu0 %v2051
      %2117 = vmatprep.subr.mxu0 %v2054
      %2118 = vmatpush1.msra.mxu0 %v2053
      %2119 = vmatprep.subr.mxu0 %v2056
      %2120 = vmatpush1.msra.mxu0 %v2055
      %2121 = vmatprep.subr.mxu0 %v2058
      %2122 = vmatpush1.msra.mxu0 %v2057
      %2123 = vmatprep.subr.mxu0 %v2060
      %2124 = vmatpush1.msra.mxu0 %v2059
      %2125 = vmatprep.subr.mxu0 %v2062
      %2126 = vmatpush1.msra.mxu0 %v2061
      %2127 = vmatprep.subr.mxu0 %v2064
      %2128 = vmatpush1.msra.mxu0 %v2063
      %2129 = vmatprep.subr.mxu0 %v2066
      %2130 = vmatpush1.msra.mxu0 %v2065
      %2131 = vmatprep.subr.mxu0 %v2068
      %2132 = vmatpush1.msra.mxu0 %v2067
      %2133 = vmatprep.subr.mxu0 %v2070
      %2134 = vmatpush1.msra.mxu0 %v2069
      %2135 = vmatprep.subr.mxu0 %v2072
      %2136 = vmatpush1.msra.mxu0 %v2071
      %2137 = vmatprep.subr.mxu0 %v2074
      %2138 = vmatpush1.msra.mxu0 %v2073
      %2139 = vmatprep.subr.mxu0 %v2076
      %2140 = vmatpush1.msra.mxu0 %v2075
      %2141 = vmatprep.subr.mxu0 %v2078
      %2142 = vmatpush1.msra.mxu0 %v2077
      %2143 = vmatprep.subr.mxu0 %v2080
      %2144 = vmatpush1.msra.mxu0 %v2079
      %2145 = vmatprep.subr.mxu0 %v2082
      %2146 = vmatpush1.msra.mxu0 %v2081
      %2147 = vmatprep.subr.mxu0 %v2084
      %2148 = vmatpush1.msra.mxu0 %v2083
      %2149 = vmatprep.subr.mxu0 %v2086
      %2150 = vmatpush1.msra.mxu0 %v2085
      %2151 = vmatprep.subr.mxu0 %v2088
      %2152 = vmatpush1.msra.mxu0 %v2087
      %2153 = vmatprep.mubr.f32.mxu0 %v1837
      %2154 = vmatmul.mubr.f32.gmra.mrb[0].mxu0 %v1835
      %v2155 = vpop.f32.mrb[0].mxu0
      %v2156 = vadd.f32 0.0, %v2155
      %v2157 = vpop.f32.mrb[0].mxu0
      %v2158 = vadd.f32 0.0, %v2157
      %2159 = vmatprep.mubr.f32.mxu0 %v1843
      %2160 = vmatmul.mubr.f32.gmra.mrb[0].mxu0 %v1841
      %v2161 = vpop.f32.mrb[0].mxu0
      %v2162 = vadd.f32 0.0, %v2161
      %v2163 = vpop.f32.mrb[0].mxu0
      %v2164 = vadd.f32 0.0, %v2163
      %2165 = vmatprep.mubr.f32.mxu0 %v1849
      %2166 = vmatmul.mubr.f32.gmra.mrb[0].mxu0 %v1847
      %v2167 = vpop.f32.mrb[0].mxu0
      %v2168 = vadd.f32 0.0, %v2167
      %v2169 = vpop.f32.mrb[0].mxu0
      %v2170 = vadd.f32 0.0, %v2169
      %2171 = vmatprep.mubr.f32.mxu0 %v1855
      %2172 = vmatmul.mubr.f32.gmra.mrb[0].mxu0 %v1853
      %v2173 = vpop.f32.mrb[0].mxu0
      %v2174 = vadd.f32 0.0, %v2173
      %v2175 = vpop.f32.mrb[0].mxu0
      %v2176 = vadd.f32 0.0, %v2175
      %2177 = vmatprep.mubr.f32.mxu0 %v1861
      %2178 = vmatmul.mubr.f32.gmra.mrb[0].mxu0 %v1859
      %v2179 = vpop.f32.mrb[0].mxu0
      %v2180 = vadd.f32 0.0, %v2179
      %v2181 = vpop.f32.mrb[0].mxu0
      %v2182 = vadd.f32 0.0, %v2181
      %2183 = vmatprep.mubr.f32.mxu0 %v1867
      %2184 = vmatmul.mubr.f32.gmra.mrb[0].mxu0 %v1865
      %v2185 = vpop.f32.mrb[0].mxu0
      %v2186 = vadd.f32 0.0, %v2185
      %v2187 = vpop.f32.mrb[0].mxu0
      %v2188 = vadd.f32 0.0, %v2187
      %2189 = vmatprep.mubr.f32.mxu0 %v1873
      %2190 = vmatmul.mubr.f32.gmra.mrb[0].mxu0 %v1871
      %v2191 = vpop.f32.mrb[0].mxu0
      %v2192 = vadd.f32 0.0, %v2191
      %v2193 = vpop.f32.mrb[0].mxu0
      %v2194 = vadd.f32 0.0, %v2193
      %2195 = vmatprep.mubr.f32.mxu0 %v1879
      %2196 = vmatmul.mubr.f32.gmra.mrb[0].mxu0 %v1877
      %v2197 = vpop.f32.mrb[0].mxu0
      %v2198 = vadd.f32 0.0, %v2197
      %v2199 = vpop.f32.mrb[0].mxu0
      %v2200 = vadd.f32 0.0, %v2199
      %2201 = vmatprep.mubr.f32.mxu0 %v1885
      %2202 = vmatmul.mubr.f32.gmra.mrb[0].mxu0 %v1883
      %v2203 = vpop.f32.mrb[0].mxu0
      %v2204 = vadd.f32 0.0, %v2203
      %v2205 = vpop.f32.mrb[0].mxu0
      %v2206 = vadd.f32 0.0, %v2205
      %2207 = vmatprep.mubr.f32.mxu0 %v1891
      %2208 = vmatmul.mubr.f32.gmra.mrb[0].mxu0 %v1889
      %v2209 = vpop.f32.mrb[0].mxu0
      %v2210 = vadd.f32 0.0, %v2209
      %v2211 = vpop.f32.mrb[0].mxu0
      %v2212 = vadd.f32 0.0, %v2211
      %2213 = vmatprep.mubr.f32.mxu0 %v1897
      %2214 = vmatmul.mubr.f32.gmra.mrb[0].mxu0 %v1895
      %v2215 = vpop.f32.mrb[0].mxu0
      %v2216 = vadd.f32 0.0, %v2215
      %v2217 = vpop.f32.mrb[0].mxu0
      %v2218 = vadd.f32 0.0, %v2217
      %2219 = vmatprep.mubr.f32.mxu0 %v1903
      %2220 = vmatmul.mubr.f32.gmra.mrb[0].mxu0 %v1901
      %v2221 = vpop.f32.mrb[0].mxu0
      %v2222 = vadd.f32 0.0, %v2221
      %v2223 = vpop.f32.mrb[0].mxu0
      %v2224 = vadd.f32 0.0, %v2223
      %2225 = vmatprep.mubr.f32.mxu0 %v1909
      %2226 = vmatmul.mubr.f32.gmra.mrb[0].mxu0 %v1907
      %v2227 = vpop.f32.mrb[0].mxu0
      %v2228 = vadd.f32 0.0, %v2227
      %v2229 = vpop.f32.mrb[0].mxu0
      %v2230 = vadd.f32 0.0, %v2229
      %2231 = vmatprep.mubr.f32.mxu0 %v1915
      %2232 = vmatmul.mubr.f32.gmra.mrb[0].mxu0 %v1913
      %v2233 = vpop.f32.mrb[0].mxu0
      %v2234 = vadd.f32 0.0, %v2233
      %v2235 = vpop.f32.mrb[0].mxu0
      %v2236 = vadd.f32 0.0, %v2235
      %2237 = vmatprep.mubr.f32.mxu0 %v1921
      %2238 = vmatmul.mubr.f32.gmra.mrb[0].mxu0 %v1919
      %v2239 = vpop.f32.mrb[0].mxu0
      %v2240 = vadd.f32 0.0, %v2239
      %v2241 = vpop.f32.mrb[0].mxu0
      %v2242 = vadd.f32 0.0, %v2241
      %2243 = vmatprep.mubr.f32.mxu0 %v1927
      %2244 = vmatmul.mubr.f32.gmra.mrb[0].mxu0 %v1925
      %v2245 = vpop.f32.mrb[0].mxu0
      %v2246 = vadd.f32 0.0, %v2245
      %v2247 = vpop.f32.mrb[0].mxu0
      %v2248 = vadd.f32 0.0, %v2247
      %2249 = vmatprep.mubr.f32.mxu0 %v1933
      %2250 = vmatmul.mubr.f32.gmra.mrb[0].mxu0 %v1931
      %v2251 = vpop.f32.mrb[0].mxu0
      %v2252 = vadd.f32 0.0, %v2251
      %v2253 = vpop.f32.mrb[0].mxu0
      %v2254 = vadd.f32 0.0, %v2253
      %2255 = vmatprep.mubr.f32.mxu0 %v1939
      %2256 = vmatmul.mubr.f32.gmra.mrb[0].mxu0 %v1937
      %v2257 = vpop.f32.mrb[0].mxu0
      %v2258 = vadd.f32 0.0, %v2257
      %v2259 = vpop.f32.mrb[0].mxu0
      %v2260 = vadd.f32 0.0, %v2259
      %2261 = vmatprep.mubr.f32.mxu0 %v1945
      %2262 = vmatmul.mubr.f32.gmra.mrb[0].mxu0 %v1943
      %v2263 = vpop.f32.mrb[0].mxu0
      %v2264 = vadd.f32 0.0, %v2263
      %v2265 = vpop.f32.mrb[0].mxu0
      %v2266 = vadd.f32 0.0, %v2265
      %2267 = vmatprep.mubr.f32.mxu0 %v1951
      %2268 = vmatmul.mubr.f32.gmra.mrb[0].mxu0 %v1949
      %v2269 = vpop.f32.mrb[0].mxu0
      %v2270 = vadd.f32 0.0, %v2269
      %v2271 = vpop.f32.mrb[0].mxu0
      %v2272 = vadd.f32 0.0, %v2271
      %2273 = vmatprep.mubr.f32.mxu0 %v1957
      %2274 = vmatmul.mubr.f32.gmra.mrb[0].mxu0 %v1955
      %v2275 = vpop.f32.mrb[0].mxu0
      %v2276 = vadd.f32 0.0, %v2275
      %v2277 = vpop.f32.mrb[0].mxu0
      %v2278 = vadd.f32 0.0, %v2277
      %2279 = vmatprep.mubr.f32.mxu0 %v1963
      %2280 = vmatmul.mubr.f32.gmra.mrb[0].mxu0 %v1961
      %v2281 = vpop.f32.mrb[0].mxu0
      %v2282 = vadd.f32 0.0, %v2281
      %v2283 = vpop.f32.mrb[0].mxu0
      %v2284 = vadd.f32 0.0, %v2283
      %2285 = vmatprep.mubr.f32.mxu0 %v1969
      %2286 = vmatmul.mubr.f32.gmra.mrb[0].mxu0 %v1967
      %v2287 = vpop.f32.mrb[0].mxu0
      %v2288 = vadd.f32 0.0, %v2287
      %v2289 = vpop.f32.mrb[0].mxu0
      %v2290 = vadd.f32 0.0, %v2289
      %2291 = vmatprep.mubr.f32.mxu0 %v1975
      %2292 = vmatmul.mubr.f32.gmra.mrb[0].mxu0 %v1973
      %v2293 = vpop.f32.mrb[0].mxu0
      %v2294 = vadd.f32 0.0, %v2293
      %v2295 = vpop.f32.mrb[0].mxu0
      %v2296 = vadd.f32 0.0, %v2295
      %2297 = vmatprep.mubr.f32.mxu0 %v1981
      %2298 = vmatmul.mubr.f32.gmra.mrb[0].mxu0 %v1979
      %v2299 = vpop.f32.mrb[0].mxu0
      %v2300 = vadd.f32 0.0, %v2299
      %v2301 = vpop.f32.mrb[0].mxu0
      %v2302 = vadd.f32 0.0, %v2301
      %2303 = vmatprep.mubr.f32.mxu0 %v1987
      %2304 = vmatmul.mubr.f32.gmra.mrb[0].mxu0 %v1985
      %v2305 = vpop.f32.mrb[0].mxu0
      %v2306 = vadd.f32 0.0, %v2305
      %v2307 = vpop.f32.mrb[0].mxu0
      %v2308 = vadd.f32 0.0, %v2307
      %2309 = vmatprep.mubr.f32.mxu0 %v1993
      %2310 = vmatmul.mubr.f32.gmra.mrb[0].mxu0 %v1991
      %v2311 = vpop.f32.mrb[0].mxu0
      %v2312 = vadd.f32 0.0, %v2311
      %v2313 = vpop.f32.mrb[0].mxu0
      %v2314 = vadd.f32 0.0, %v2313
      %2315 = vmatprep.mubr.f32.mxu0 %v1999
      %2316 = vmatmul.mubr.f32.gmra.mrb[0].mxu0 %v1997
      %v2317 = vpop.f32.mrb[0].mxu0
      %v2318 = vadd.f32 0.0, %v2317
      %v2319 = vpop.f32.mrb[0].mxu0
      %v2320 = vadd.f32 0.0, %v2319
      %2321 = vmatprep.mubr.f32.mxu0 %v2005
      %2322 = vmatmul.mubr.f32.gmra.mrb[0].mxu0 %v2003
      %v2323 = vpop.f32.mrb[0].mxu0
      %v2324 = vadd.f32 0.0, %v2323
      %v2325 = vpop.f32.mrb[0].mxu0
      %v2326 = vadd.f32 0.0, %v2325
      %2327 = vmatprep.mubr.f32.mxu0 %v2011
      %2328 = vmatmul.mubr.f32.gmra.mrb[0].mxu0 %v2009
      %v2329 = vpop.f32.mrb[0].mxu0
      %v2330 = vadd.f32 0.0, %v2329
      %v2331 = vpop.f32.mrb[0].mxu0
      %v2332 = vadd.f32 0.0, %v2331
      %2333 = vmatprep.mubr.f32.mxu0 %v2017
      %2334 = vmatmul.mubr.f32.gmra.mrb[0].mxu0 %v2015
      %v2335 = vpop.f32.mrb[0].mxu0
      %v2336 = vadd.f32 0.0, %v2335
      %v2337 = vpop.f32.mrb[0].mxu0
      %v2338 = vadd.f32 0.0, %v2337
      %2339 = vmatprep.mubr.f32.mxu0 %v2023
      %2340 = vmatmul.mubr.f32.gmra.mrb[0].mxu0 %v2021
      %v2341 = vpop.f32.mrb[0].mxu0
      %v2342 = vadd.f32 0.0, %v2341
      %v2343 = vpop.f32.mrb[0].mxu0
      %v2344 = vadd.f32 0.0, %v2343
      %2345 = vdwg.mxu0
      %v2346 = vrcp.pop 120.0
      %v2347 = vmul.f32 %v2156, %v2346
      %v2348 = vmul.f32 %v2158, %v2346
      %v2349 = vmul.f32 %v2162, %v2346
      %v2350 = vmul.f32 %v2164, %v2346
      %v2351 = vmul.f32 %v2168, %v2346
      %v2352 = vmul.f32 %v2170, %v2346
      %v2353 = vmul.f32 %v2174, %v2346
      %v2354 = vmul.f32 %v2176, %v2346
      %v2355 = vmul.f32 %v2180, %v2346
      %v2356 = vmul.f32 %v2182, %v2346
      %v2357 = vmul.f32 %v2186, %v2346
      %v2358 = vmul.f32 %v2188, %v2346
      %v2359 = vmul.f32 %v2192, %v2346
      %v2360 = vmul.f32 %v2194, %v2346
      %v2361 = vmul.f32 %v2198, %v2346
      %v2362 = vmul.f32 %v2200, %v2346
      %v2363 = vmul.f32 %v2204, %v2346
      %v2364 = vmul.f32 %v2206, %v2346
      %v2365 = vmul.f32 %v2210, %v2346
      %v2366 = vmul.f32 %v2212, %v2346
      %v2367 = vmul.f32 %v2216, %v2346
      %v2368 = vmul.f32 %v2218, %v2346
      %v2369 = vmul.f32 %v2222, %v2346
      %v2370 = vmul.f32 %v2224, %v2346
      %v2371 = vmul.f32 %v2228, %v2346
      %v2372 = vmul.f32 %v2230, %v2346
      %v2373 = vmul.f32 %v2234, %v2346
      %v2374 = vmul.f32 %v2236, %v2346
      %v2375 = vmul.f32 %v2240, %v2346
      %v2376 = vmul.f32 %v2242, %v2346
      %v2377 = vmul.f32 %v2246, %v2346
      %v2378 = vmul.f32 %v2248, %v2346
      %v2379 = vmul.f32 %v2252, %v2346
      %v2380 = vmul.f32 %v2254, %v2346
      %v2381 = vmul.f32 %v2258, %v2346
      %v2382 = vmul.f32 %v2260, %v2346
      %v2383 = vmul.f32 %v2264, %v2346
      %v2384 = vmul.f32 %v2266, %v2346
      %v2385 = vmul.f32 %v2270, %v2346
      %v2386 = vmul.f32 %v2272, %v2346
      %v2387 = vmul.f32 %v2276, %v2346
      %v2388 = vmul.f32 %v2278, %v2346
      %v2389 = vmul.f32 %v2282, %v2346
      %v2390 = vmul.f32 %v2284, %v2346
      %v2391 = vmul.f32 %v2288, %v2346
      %v2392 = vmul.f32 %v2290, %v2346
      %v2393 = vmul.f32 %v2294, %v2346
      %v2394 = vmul.f32 %v2296, %v2346
      %v2395 = vmul.f32 %v2300, %v2346
      %v2396 = vmul.f32 %v2302, %v2346
      %v2397 = vmul.f32 %v2306, %v2346
      %v2398 = vmul.f32 %v2308, %v2346
      %v2399 = vmul.f32 %v2312, %v2346
      %v2400 = vmul.f32 %v2314, %v2346
      %v2401 = vmul.f32 %v2318, %v2346
      %v2402 = vmul.f32 %v2320, %v2346
      %v2403 = vmul.f32 %v2324, %v2346
      %v2404 = vmul.f32 %v2326, %v2346
      %v2405 = vmul.f32 %v2330, %v2346
      %v2406 = vmul.f32 %v2332, %v2346
      %v2407 = vmul.f32 %v2336, %v2346
      %v2408 = vmul.f32 %v2338, %v2346
      %v2409 = vmul.f32 %v2342, %v2346
      %v2410 = vmul.f32 %v2344, %v2346
      %v2411 = vfloor.f32 %v2347
      %v2412 = vfloor.f32 %v2348
      %v2413 = vfloor.f32 %v2349
      %v2414 = vfloor.f32 %v2350
      %v2415 = vfloor.f32 %v2351
      %v2416 = vfloor.f32 %v2352
      %v2417 = vfloor.f32 %v2353
      %v2418 = vfloor.f32 %v2354
      %v2419 = vfloor.f32 %v2355
      %v2420 = vfloor.f32 %v2356
      %v2421 = vfloor.f32 %v2357
      %v2422 = vfloor.f32 %v2358
      %v2423 = vfloor.f32 %v2359
      %v2424 = vfloor.f32 %v2360
      %v2425 = vfloor.f32 %v2361
      %v2426 = vfloor.f32 %v2362
      %v2427 = vfloor.f32 %v2363
      %v2428 = vfloor.f32 %v2364
      %v2429 = vfloor.f32 %v2365
      %v2430 = vfloor.f32 %v2366
      %v2431 = vfloor.f32 %v2367
      %v2432 = vfloor.f32 %v2368
      %v2433 = vfloor.f32 %v2369
      %v2434 = vfloor.f32 %v2370
      %v2435 = vfloor.f32 %v2371
      %v2436 = vfloor.f32 %v2372
      %v2437 = vfloor.f32 %v2373
      %v2438 = vfloor.f32 %v2374
      %v2439 = vfloor.f32 %v2375
      %v2440 = vfloor.f32 %v2376
      %v2441 = vfloor.f32 %v2377
      %v2442 = vfloor.f32 %v2378
      %v2443 = vfloor.f32 %v2379
      %v2444 = vfloor.f32 %v2380
      %v2445 = vfloor.f32 %v2381
      %v2446 = vfloor.f32 %v2382
      %v2447 = vfloor.f32 %v2383
      %v2448 = vfloor.f32 %v2384
      %v2449 = vfloor.f32 %v2385
      %v2450 = vfloor.f32 %v2386
      %v2451 = vfloor.f32 %v2387
      %v2452 = vfloor.f32 %v2388
      %v2453 = vfloor.f32 %v2389
      %v2454 = vfloor.f32 %v2390
      %v2455 = vfloor.f32 %v2391
      %v2456 = vfloor.f32 %v2392
      %v2457 = vfloor.f32 %v2393
      %v2458 = vfloor.f32 %v2394
      %v2459 = vfloor.f32 %v2395
      %v2460 = vfloor.f32 %v2396
      %v2461 = vfloor.f32 %v2397
      %v2462 = vfloor.f32 %v2398
      %v2463 = vfloor.f32 %v2399
      %v2464 = vfloor.f32 %v2400
      %v2465 = vfloor.f32 %v2401
      %v2466 = vfloor.f32 %v2402
      %v2467 = vfloor.f32 %v2403
      %v2468 = vfloor.f32 %v2404
      %v2469 = vfloor.f32 %v2405
      %v2470 = vfloor.f32 %v2406
      %v2471 = vfloor.f32 %v2407
      %v2472 = vfloor.f32 %v2408
      %v2473 = vfloor.f32 %v2409
      %v2474 = vfloor.f32 %v2410
      %v2475 = vld [vmem:[#allocation3 + $0x40] sm:$0xf]
      %v2476 = vld [vmem:[#allocation3 + $0x48] sm:$0xf]
      %2477 = vmatprep.subr.mxu0 %v2412
      %2478 = vmatpush1.xpose.msra.mxu0 %v2411
      %2479 = vmatprep.subr.mxu0 %v2414
      %2480 = vmatpush1.xpose.msra.mxu0 %v2413
      %2481 = vmatprep.subr.mxu0 %v2416
      %2482 = vmatpush1.xpose.msra.mxu0 %v2415
      %2483 = vmatprep.subr.mxu0 %v2418
      %2484 = vmatpush1.xpose.msra.mxu0 %v2417
      %2485 = vmatprep.subr.mxu0 %v2420
      %2486 = vmatpush1.xpose.msra.mxu0 %v2419
      %2487 = vmatprep.subr.mxu0 %v2422
      %2488 = vmatpush1.xpose.msra.mxu0 %v2421
      %2489 = vmatprep.subr.mxu0 %v2424
      %2490 = vmatpush1.xpose.msra.mxu0 %v2423
      %2491 = vmatprep.subr.mxu0 %v2426
      %2492 = vmatpush1.xpose.msra.mxu0 %v2425
      %2493 = vmatprep.subr.mxu0 %v2428
      %2494 = vmatpush1.xpose.msra.mxu0 %v2427
      %2495 = vmatprep.subr.mxu0 %v2430
      %2496 = vmatpush1.xpose.msra.mxu0 %v2429
      %2497 = vmatprep.subr.mxu0 %v2432
      %2498 = vmatpush1.xpose.msra.mxu0 %v2431
      %2499 = vmatprep.subr.mxu0 %v2434
      %2500 = vmatpush1.xpose.msra.mxu0 %v2433
      %2501 = vmatprep.subr.mxu0 %v2436
      %2502 = vmatpush1.xpose.msra.mxu0 %v2435
      %2503 = vmatprep.subr.mxu0 %v2438
      %2504 = vmatpush1.xpose.msra.mxu0 %v2437
      %2505 = vmatprep.subr.mxu0 %v2440
      %2506 = vmatpush1.xpose.msra.mxu0 %v2439
      %2507 = vmatprep.subr.mxu0 %v2442
      %2508 = vmatpush1.xpose.msra.mxu0 %v2441
      %2509 = vmatprep.subr.mxu0 %v2444
      %2510 = vmatpush1.xpose.msra.mxu0 %v2443
      %2511 = vmatprep.subr.mxu0 %v2446
      %2512 = vmatpush1.xpose.msra.mxu0 %v2445
      %2513 = vmatprep.subr.mxu0 %v2448
      %2514 = vmatpush1.xpose.msra.mxu0 %v2447
      %2515 = vmatprep.subr.mxu0 %v2450
      %2516 = vmatpush1.xpose.msra.mxu0 %v2449
      %2517 = vmatprep.subr.mxu0 %v2452
      %2518 = vmatpush1.xpose.msra.mxu0 %v2451
      %2519 = vmatprep.subr.mxu0 %v2454
      %2520 = vmatpush1.xpose.msra.mxu0 %v2453
      %2521 = vmatprep.subr.mxu0 %v2456
      %2522 = vmatpush1.xpose.msra.mxu0 %v2455
      %2523 = vmatprep.subr.mxu0 %v2458
      %2524 = vmatpush1.xpose.msra.mxu0 %v2457
      %2525 = vmatprep.subr.mxu0 %v2460
      %2526 = vmatpush1.xpose.msra.mxu0 %v2459
      %2527 = vmatprep.subr.mxu0 %v2462
      %2528 = vmatpush1.xpose.msra.mxu0 %v2461
      %2529 = vmatprep.subr.mxu0 %v2464
      %2530 = vmatpush1.xpose.msra.mxu0 %v2463
      %2531 = vmatprep.subr.mxu0 %v2466
      %2532 = vmatpush1.xpose.msra.mxu0 %v2465
      %2533 = vmatprep.subr.mxu0 %v2468
      %2534 = vmatpush1.xpose.msra.mxu0 %v2467
      %2535 = vmatprep.subr.mxu0 %v2470
      %2536 = vmatpush1.xpose.msra.mxu0 %v2469
      %2537 = vmatprep.subr.mxu0 %v2472
      %2538 = vmatpush1.xpose.msra.mxu0 %v2471
      %2539 = vmatprep.subr.mxu0 %v2474
      %2540 = vmatpush1.xpose.msra.mxu0 %v2473
      %2541 = vmatprep.mubr.f32.mxu0 %v2476
      %2542 = vmatmul.mubr.f32.gmra.mrb[0].mxu0 %v2475
      %v2543 = vpop.f32.mrb[0].mxu0
      %v2544 = vadd.f32 0.0, %v2543
      %v2545 = vpop.f32.mrb[0].mxu0
      %v2546 = vadd.f32 0.0, %v2545
      %2547 = vdwg.mxu0
      %v2549 = vlaneseq
      %v2550 = vshrl.u32 %v2549, 7
      %v2551 = vsub.s32 0, %v2550
      %v2552 = vrot.slane %v1595, %v2551
      %v2553 = vlaneseq
      %v2554 = vshrl.u32 %v2553, 7
      %v2555 = vsub.s32 1, %v2554
      %v2556 = vrot.slane %v1595, %v2555
      %v2559 = vmul.f32 %v2544, %v2552
      %v2560 = vmul.f32 %v2546, %v2556
      %v2562 = vlaneseq
      %v2563 = vshrl.u32 %v2562, 7
      %v2564 = vsub.s32 0, %v2563
      %v2565 = vrot.slane %v1597, %v2564
      %v2566 = vlaneseq
      %v2567 = vshrl.u32 %v2566, 7
      %v2568 = vsub.s32 1, %v2567
      %v2569 = vrot.slane %v1597, %v2568
      %v2572 = vmul.f32 %v1093, %v2565
      %v2573 = vmul.f32 %v1093, %v2569
      %v2574 = vadd.f32 %v2559, %v2572
      %v2575 = vadd.f32 %v2560, %v2573
      %v2576 = vld [vmem:[#allocation3 + $0x50] sm:$0x3]
      %v2577 = vld [vmem:[#allocation3 + $0x58] sm:$0x3]
      %v2578 = vld [vmem:[#allocation3 + $0x60] sm:$0x3]
      %v2579 = vld [vmem:[#allocation3 + $0x68] sm:$0x3]
      %2580 = vxpose.xlu0.b32.start [1/16] %v2576, 128
      %2581 = vxpose.xlu0.b32.cont [2/16] 0.0, 128
      %2582 = vxpose.xlu0.b32.cont [3/16] 0.0, 128
      %2583 = vxpose.xlu0.b32.cont [4/16] 0.0, 128
      %2584 = vxpose.xlu0.b32.cont [5/16] 0.0, 128
      %2585 = vxpose.xlu0.b32.cont [6/16] 0.0, 128
      %2586 = vxpose.xlu0.b32.cont [7/16] 0.0, 128
      %2587 = vxpose.xlu0.b32.cont [8/16] 0.0, 128
      %2588 = vxpose.xlu0.b32.cont [9/16] 0.0, 128
      %2589 = vxpose.xlu0.b32.cont [10/16] 0.0, 128
      %2590 = vxpose.xlu0.b32.cont [11/16] 0.0, 128
      %2591 = vxpose.xlu0.b32.cont [12/16] 0.0, 128
      %2592 = vxpose.xlu0.b32.cont [13/16] 0.0, 128
      %2593 = vxpose.xlu0.b32.cont [14/16] 0.0, 128
      %2594 = vxpose.xlu0.b32.cont [15/16] 0.0, 128
      %2595 = vxpose.xlu0.b32.end [16/16] 0.0, 128
      %v2596 = vpop.trf.xlu0
      %v2597 = vpop.trf.xlu0
      %v2598 = vpop.trf.xlu0
      %v2599 = vpop.trf.xlu0
      %v2600 = vpop.trf.xlu0
      %v2601 = vpop.trf.xlu0
      %v2602 = vpop.trf.xlu0
      %v2603 = vpop.trf.xlu0
      %v2604 = vpop.trf.xlu0
      %v2605 = vpop.trf.xlu0
      %v2606 = vpop.trf.xlu0
      %v2607 = vpop.trf.xlu0
      %v2608 = vpop.trf.xlu0
      %v2609 = vpop.trf.xlu0
      %v2610 = vpop.trf.xlu0
      %v2611 = vpop.trf.xlu0
      %2612 = vxpose.xlu0.b32.start [1/16] %v2577, 128
      %2613 = vxpose.xlu0.b32.cont [2/16] 0.0, 128
      %2614 = vxpose.xlu0.b32.cont [3/16] 0.0, 128
      %2615 = vxpose.xlu0.b32.cont [4/16] 0.0, 128
      %2616 = vxpose.xlu0.b32.cont [5/16] 0.0, 128
      %2617 = vxpose.xlu0.b32.cont [6/16] 0.0, 128
      %2618 = vxpose.xlu0.b32.cont [7/16] 0.0, 128
      %2619 = vxpose.xlu0.b32.cont [8/16] 0.0, 128
      %2620 = vxpose.xlu0.b32.cont [9/16] 0.0, 128
      %2621 = vxpose.xlu0.b32.cont [10/16] 0.0, 128
      %2622 = vxpose.xlu0.b32.cont [11/16] 0.0, 128
      %2623 = vxpose.xlu0.b32.cont [12/16] 0.0, 128
      %2624 = vxpose.xlu0.b32.cont [13/16] 0.0, 128
      %2625 = vxpose.xlu0.b32.cont [14/16] 0.0, 128
      %2626 = vxpose.xlu0.b32.cont [15/16] 0.0, 128
      %2627 = vxpose.xlu0.b32.end [16/16] 0.0, 128
      %v2628 = vpop.trf.xlu0
      %v2629 = vpop.trf.xlu0
      %v2630 = vpop.trf.xlu0
      %v2631 = vpop.trf.xlu0
      %v2632 = vpop.trf.xlu0
      %v2633 = vpop.trf.xlu0
      %v2634 = vpop.trf.xlu0
      %v2635 = vpop.trf.xlu0
      %v2636 = vpop.trf.xlu0
      %v2637 = vpop.trf.xlu0
      %v2638 = vpop.trf.xlu0
      %v2639 = vpop.trf.xlu0
      %v2640 = vpop.trf.xlu0
      %v2641 = vpop.trf.xlu0
      %v2642 = vpop.trf.xlu0
      %v2643 = vpop.trf.xlu0
      %v2645 = vsel %vm661, %v2596, 0
      %v2648 = vsel %vm661, %v2597, 0
      %v2651 = vsel %vm661, %v2598, 0
      %v2654 = vsel %vm661, %v2599, 0
      %v2657 = vsel %vm661, %v2600, 0
      %v2660 = vsel %vm661, %v2601, 0
      %v2663 = vsel %vm661, %v2602, 0
      %v2666 = vsel %vm661, %v2603, 0
      %v2669 = vsel %vm661, %v2604, 0
      %v2672 = vsel %vm661, %v2605, 0
      %v2675 = vsel %vm661, %v2606, 0
      %v2678 = vsel %vm661, %v2607, 0
      %v2681 = vsel %vm661, %v2608, 0
      %v2684 = vsel %vm661, %v2609, 0
      %v2687 = vsel %vm661, %v2610, 0
      %v2690 = vsel %vm661, %v2611, 0
      %v2693 = vsel %vm661, %v2628, 0
      %v2696 = vsel %vm661, %v2629, 0
      %v2699 = vsel %vm661, %v2630, 0
      %v2702 = vsel %vm661, %v2631, 0
      %v2705 = vsel %vm661, %v2632, 0
      %v2708 = vsel %vm661, %v2633, 0
      %v2711 = vsel %vm661, %v2634, 0
      %v2714 = vsel %vm661, %v2635, 0
      %v2717 = vsel %vm661, %v2636, 0
      %v2720 = vsel %vm661, %v2637, 0
      %v2723 = vsel %vm661, %v2638, 0
      %v2726 = vsel %vm661, %v2639, 0
      %v2729 = vsel %vm661, %v2640, 0
      %v2732 = vsel %vm661, %v2641, 0
      %v2735 = vsel %vm661, %v2642, 0
      %v2738 = vsel %vm661, %v2643, 0
      %v2741 = vsel %vm758, %v2578, 0
      %v2744 = vsel %vm758, %v2579, 0
      %2746 = vmatprep.subr.mxu0 %v2744
      %2747 = vmatpush1.msra.mxu0 %v2741
      %2748 = vmatprep.subr.mxu0 0.0
      %2749 = vmatpush1.msra.mxu0 0.0
      %2750 = vmatprep.subr.mxu0 0.0
      %2751 = vmatpush1.msra.mxu0 0.0
      %2752 = vmatprep.subr.mxu0 0.0
      %2753 = vmatpush1.msra.mxu0 0.0
      %2754 = vmatprep.subr.mxu0 0.0
      %2755 = vmatpush1.msra.mxu0 0.0
      %2756 = vmatprep.subr.mxu0 0.0
      %2757 = vmatpush1.msra.mxu0 0.0
      %2758 = vmatprep.subr.mxu0 0.0
      %2759 = vmatpush1.msra.mxu0 0.0
      %2760 = vmatprep.subr.mxu0 0.0
      %2761 = vmatpush1.msra.mxu0 0.0
      %2762 = vmatprep.subr.mxu0 0.0
      %2763 = vmatpush1.msra.mxu0 0.0
      %2764 = vmatprep.subr.mxu0 0.0
      %2765 = vmatpush1.msra.mxu0 0.0
      %2766 = vmatprep.subr.mxu0 0.0
      %2767 = vmatpush1.msra.mxu0 0.0
      %2768 = vmatprep.subr.mxu0 0.0
      %2769 = vmatpush1.msra.mxu0 0.0
      %2770 = vmatprep.subr.mxu0 0.0
      %2771 = vmatpush1.msra.mxu0 0.0
      %2772 = vmatprep.subr.mxu0 0.0
      %2773 = vmatpush1.msra.mxu0 0.0
      %2774 = vmatprep.subr.mxu0 0.0
      %2775 = vmatpush1.msra.mxu0 0.0
      %2776 = vmatprep.subr.mxu0 0.0
      %2777 = vmatpush1.msra.mxu0 0.0
      %2778 = vmatprep.subr.mxu0 0.0
      %2779 = vmatpush1.msra.mxu0 0.0
      %2780 = vmatprep.subr.mxu0 0.0
      %2781 = vmatpush1.msra.mxu0 0.0
      %2782 = vmatprep.subr.mxu0 0.0
      %2783 = vmatpush1.msra.mxu0 0.0
      %2784 = vmatprep.subr.mxu0 0.0
      %2785 = vmatpush1.msra.mxu0 0.0
      %2786 = vmatprep.subr.mxu0 0.0
      %2787 = vmatpush1.msra.mxu0 0.0
      %2788 = vmatprep.subr.mxu0 0.0
      %2789 = vmatpush1.msra.mxu0 0.0
      %2790 = vmatprep.subr.mxu0 0.0
      %2791 = vmatpush1.msra.mxu0 0.0
      %2792 = vmatprep.subr.mxu0 0.0
      %2793 = vmatpush1.msra.mxu0 0.0
      %2794 = vmatprep.subr.mxu0 0.0
      %2795 = vmatpush1.msra.mxu0 0.0
      %2796 = vmatprep.subr.mxu0 0.0
      %2797 = vmatpush1.msra.mxu0 0.0
      %2798 = vmatprep.subr.mxu0 0.0
      %2799 = vmatpush1.msra.mxu0 0.0
      %2800 = vmatprep.subr.mxu0 0.0
      %2801 = vmatpush1.msra.mxu0 0.0
      %2802 = vmatprep.subr.mxu0 0.0
      %2803 = vmatpush1.msra.mxu0 0.0
      %2804 = vmatprep.subr.mxu0 0.0
      %2805 = vmatpush1.msra.mxu0 0.0
      %2806 = vmatprep.subr.mxu0 0.0
      %2807 = vmatpush1.msra.mxu0 0.0
      %2808 = vmatprep.subr.mxu0 0.0
      %2809 = vmatpush1.msra.mxu0 0.0
      %2810 = vmatprep.mubr.f32.mxu0 0.0
      %2811 = vmatmul.mubr.f32.gmra.mrb[0].mxu0 %v2645
      %v2812 = vpop.f32.mrb[0].mxu0
      %v2813 = vadd.f32 0.0, %v2812
      %v2814 = vpop.f32.mrb[0].mxu0
      %v2815 = vadd.f32 0.0, %v2814
      %2816 = vmatprep.mubr.f32.mxu0 0.0
      %2817 = vmatmul.mubr.f32.gmra.mrb[0].mxu0 %v2648
      %v2818 = vpop.f32.mrb[0].mxu0
      %v2819 = vadd.f32 0.0, %v2818
      %v2820 = vpop.f32.mrb[0].mxu0
      %v2821 = vadd.f32 0.0, %v2820
      %2822 = vmatprep.mubr.f32.mxu0 0.0
      %2823 = vmatmul.mubr.f32.gmra.mrb[0].mxu0 %v2651
      %v2824 = vpop.f32.mrb[0].mxu0
      %v2825 = vadd.f32 0.0, %v2824
      %v2826 = vpop.f32.mrb[0].mxu0
      %v2827 = vadd.f32 0.0, %v2826
      %2828 = vmatprep.mubr.f32.mxu0 0.0
      %2829 = vmatmul.mubr.f32.gmra.mrb[0].mxu0 %v2654
      %v2830 = vpop.f32.mrb[0].mxu0
      %v2831 = vadd.f32 0.0, %v2830
      %v2832 = vpop.f32.mrb[0].mxu0
      %v2833 = vadd.f32 0.0, %v2832
      %2834 = vmatprep.mubr.f32.mxu0 0.0
      %2835 = vmatmul.mubr.f32.gmra.mrb[0].mxu0 %v2657
      %v2836 = vpop.f32.mrb[0].mxu0
      %v2837 = vadd.f32 0.0, %v2836
      %v2838 = vpop.f32.mrb[0].mxu0
      %v2839 = vadd.f32 0.0, %v2838
      %2840 = vmatprep.mubr.f32.mxu0 0.0
      %2841 = vmatmul.mubr.f32.gmra.mrb[0].mxu0 %v2660
      %v2842 = vpop.f32.mrb[0].mxu0
      %v2843 = vadd.f32 0.0, %v2842
      %v2844 = vpop.f32.mrb[0].mxu0
      %v2845 = vadd.f32 0.0, %v2844
      %2846 = vmatprep.mubr.f32.mxu0 0.0
      %2847 = vmatmul.mubr.f32.gmra.mrb[0].mxu0 %v2663
      %v2848 = vpop.f32.mrb[0].mxu0
      %v2849 = vadd.f32 0.0, %v2848
      %v2850 = vpop.f32.mrb[0].mxu0
      %v2851 = vadd.f32 0.0, %v2850
      %2852 = vmatprep.mubr.f32.mxu0 0.0
      %2853 = vmatmul.mubr.f32.gmra.mrb[0].mxu0 %v2666
      %v2854 = vpop.f32.mrb[0].mxu0
      %v2855 = vadd.f32 0.0, %v2854
      %v2856 = vpop.f32.mrb[0].mxu0
      %v2857 = vadd.f32 0.0, %v2856
      %2858 = vmatprep.mubr.f32.mxu0 0.0
      %2859 = vmatmul.mubr.f32.gmra.mrb[0].mxu0 %v2669
      %v2860 = vpop.f32.mrb[0].mxu0
      %v2861 = vadd.f32 0.0, %v2860
      %v2862 = vpop.f32.mrb[0].mxu0
      %v2863 = vadd.f32 0.0, %v2862
      %2864 = vmatprep.mubr.f32.mxu0 0.0
      %2865 = vmatmul.mubr.f32.gmra.mrb[0].mxu0 %v2672
      %v2866 = vpop.f32.mrb[0].mxu0
      %v2867 = vadd.f32 0.0, %v2866
      %v2868 = vpop.f32.mrb[0].mxu0
      %v2869 = vadd.f32 0.0, %v2868
      %2870 = vmatprep.mubr.f32.mxu0 0.0
      %2871 = vmatmul.mubr.f32.gmra.mrb[0].mxu0 %v2675
      %v2872 = vpop.f32.mrb[0].mxu0
      %v2873 = vadd.f32 0.0, %v2872
      %v2874 = vpop.f32.mrb[0].mxu0
      %v2875 = vadd.f32 0.0, %v2874
      %2876 = vmatprep.mubr.f32.mxu0 0.0
      %2877 = vmatmul.mubr.f32.gmra.mrb[0].mxu0 %v2678
      %v2878 = vpop.f32.mrb[0].mxu0
      %v2879 = vadd.f32 0.0, %v2878
      %v2880 = vpop.f32.mrb[0].mxu0
      %v2881 = vadd.f32 0.0, %v2880
      %2882 = vmatprep.mubr.f32.mxu0 0.0
      %2883 = vmatmul.mubr.f32.gmra.mrb[0].mxu0 %v2681
      %v2884 = vpop.f32.mrb[0].mxu0
      %v2885 = vadd.f32 0.0, %v2884
      %v2886 = vpop.f32.mrb[0].mxu0
      %v2887 = vadd.f32 0.0, %v2886
      %2888 = vmatprep.mubr.f32.mxu0 0.0
      %2889 = vmatmul.mubr.f32.gmra.mrb[0].mxu0 %v2684
      %v2890 = vpop.f32.mrb[0].mxu0
      %v2891 = vadd.f32 0.0, %v2890
      %v2892 = vpop.f32.mrb[0].mxu0
      %v2893 = vadd.f32 0.0, %v2892
      %2894 = vmatprep.mubr.f32.mxu0 0.0
      %2895 = vmatmul.mubr.f32.gmra.mrb[0].mxu0 %v2687
      %v2896 = vpop.f32.mrb[0].mxu0
      %v2897 = vadd.f32 0.0, %v2896
      %v2898 = vpop.f32.mrb[0].mxu0
      %v2899 = vadd.f32 0.0, %v2898
      %2900 = vmatprep.mubr.f32.mxu0 0.0
      %2901 = vmatmul.mubr.f32.gmra.mrb[0].mxu0 %v2690
      %v2902 = vpop.f32.mrb[0].mxu0
      %v2903 = vadd.f32 0.0, %v2902
      %v2904 = vpop.f32.mrb[0].mxu0
      %v2905 = vadd.f32 0.0, %v2904
      %2906 = vmatprep.mubr.f32.mxu0 0.0
      %2907 = vmatmul.mubr.f32.gmra.mrb[0].mxu0 %v2693
      %v2908 = vpop.f32.mrb[0].mxu0
      %v2909 = vadd.f32 0.0, %v2908
      %v2910 = vpop.f32.mrb[0].mxu0
      %v2911 = vadd.f32 0.0, %v2910
      %2912 = vmatprep.mubr.f32.mxu0 0.0
      %2913 = vmatmul.mubr.f32.gmra.mrb[0].mxu0 %v2696
      %v2914 = vpop.f32.mrb[0].mxu0
      %v2915 = vadd.f32 0.0, %v2914
      %v2916 = vpop.f32.mrb[0].mxu0
      %v2917 = vadd.f32 0.0, %v2916
      %2918 = vmatprep.mubr.f32.mxu0 0.0
      %2919 = vmatmul.mubr.f32.gmra.mrb[0].mxu0 %v2699
      %v2920 = vpop.f32.mrb[0].mxu0
      %v2921 = vadd.f32 0.0, %v2920
      %v2922 = vpop.f32.mrb[0].mxu0
      %v2923 = vadd.f32 0.0, %v2922
      %2924 = vmatprep.mubr.f32.mxu0 0.0
      %2925 = vmatmul.mubr.f32.gmra.mrb[0].mxu0 %v2702
      %v2926 = vpop.f32.mrb[0].mxu0
      %v2927 = vadd.f32 0.0, %v2926
      %v2928 = vpop.f32.mrb[0].mxu0
      %v2929 = vadd.f32 0.0, %v2928
      %2930 = vmatprep.mubr.f32.mxu0 0.0
      %2931 = vmatmul.mubr.f32.gmra.mrb[0].mxu0 %v2705
      %v2932 = vpop.f32.mrb[0].mxu0
      %v2933 = vadd.f32 0.0, %v2932
      %v2934 = vpop.f32.mrb[0].mxu0
      %v2935 = vadd.f32 0.0, %v2934
      %2936 = vmatprep.mubr.f32.mxu0 0.0
      %2937 = vmatmul.mubr.f32.gmra.mrb[0].mxu0 %v2708
      %v2938 = vpop.f32.mrb[0].mxu0
      %v2939 = vadd.f32 0.0, %v2938
      %v2940 = vpop.f32.mrb[0].mxu0
      %v2941 = vadd.f32 0.0, %v2940
      %2942 = vmatprep.mubr.f32.mxu0 0.0
      %2943 = vmatmul.mubr.f32.gmra.mrb[0].mxu0 %v2711
      %v2944 = vpop.f32.mrb[0].mxu0
      %v2945 = vadd.f32 0.0, %v2944
      %v2946 = vpop.f32.mrb[0].mxu0
      %v2947 = vadd.f32 0.0, %v2946
      %2948 = vmatprep.mubr.f32.mxu0 0.0
      %2949 = vmatmul.mubr.f32.gmra.mrb[0].mxu0 %v2714
      %v2950 = vpop.f32.mrb[0].mxu0
      %v2951 = vadd.f32 0.0, %v2950
      %v2952 = vpop.f32.mrb[0].mxu0
      %v2953 = vadd.f32 0.0, %v2952
      %2954 = vmatprep.mubr.f32.mxu0 0.0
      %2955 = vmatmul.mubr.f32.gmra.mrb[0].mxu0 %v2717
      %v2956 = vpop.f32.mrb[0].mxu0
      %v2957 = vadd.f32 0.0, %v2956
      %v2958 = vpop.f32.mrb[0].mxu0
      %v2959 = vadd.f32 0.0, %v2958
      %2960 = vmatprep.mubr.f32.mxu0 0.0
      %2961 = vmatmul.mubr.f32.gmra.mrb[0].mxu0 %v2720
      %v2962 = vpop.f32.mrb[0].mxu0
      %v2963 = vadd.f32 0.0, %v2962
      %v2964 = vpop.f32.mrb[0].mxu0
      %v2965 = vadd.f32 0.0, %v2964
      %2966 = vmatprep.mubr.f32.mxu0 0.0
      %2967 = vmatmul.mubr.f32.gmra.mrb[0].mxu0 %v2723
      %v2968 = vpop.f32.mrb[0].mxu0
      %v2969 = vadd.f32 0.0, %v2968
      %v2970 = vpop.f32.mrb[0].mxu0
      %v2971 = vadd.f32 0.0, %v2970
      %2972 = vmatprep.mubr.f32.mxu0 0.0
      %2973 = vmatmul.mubr.f32.gmra.mrb[0].mxu0 %v2726
      %v2974 = vpop.f32.mrb[0].mxu0
      %v2975 = vadd.f32 0.0, %v2974
      %v2976 = vpop.f32.mrb[0].mxu0
      %v2977 = vadd.f32 0.0, %v2976
      %2978 = vmatprep.mubr.f32.mxu0 0.0
      %2979 = vmatmul.mubr.f32.gmra.mrb[0].mxu0 %v2729
      %v2980 = vpop.f32.mrb[0].mxu0
      %v2981 = vadd.f32 0.0, %v2980
      %v2982 = vpop.f32.mrb[0].mxu0
      %v2983 = vadd.f32 0.0, %v2982
      %2984 = vmatprep.mubr.f32.mxu0 0.0
      %2985 = vmatmul.mubr.f32.gmra.mrb[0].mxu0 %v2732
      %v2986 = vpop.f32.mrb[0].mxu0
      %v2987 = vadd.f32 0.0, %v2986
      %v2988 = vpop.f32.mrb[0].mxu0
      %v2989 = vadd.f32 0.0, %v2988
      %2990 = vmatprep.mubr.f32.mxu0 0.0
      %2991 = vmatmul.mubr.f32.gmra.mrb[0].mxu0 %v2735
      %v2992 = vpop.f32.mrb[0].mxu0
      %v2993 = vadd.f32 0.0, %v2992
      %v2994 = vpop.f32.mrb[0].mxu0
      %v2995 = vadd.f32 0.0, %v2994
      %2996 = vmatprep.mubr.f32.mxu0 0.0
      %2997 = vmatmul.mubr.f32.gmra.mrb[0].mxu0 %v2738
      %v2998 = vpop.f32.mrb[0].mxu0
      %v2999 = vadd.f32 0.0, %v2998
      %v3000 = vpop.f32.mrb[0].mxu0
      %v3001 = vadd.f32 0.0, %v3000
      %3002 = vdwg.mxu0
      %v3003 = vld [vmem:[%s1521] sm:$0xff]
      %v3004 = vld [vmem:[%s1521 + $0x8] sm:$0xff]
      %v3005 = vld [vmem:[%s1521 + $0x10] sm:$0xff]
      %v3006 = vld [vmem:[%s1521 + $0x18] sm:$0xff]
      %v3007 = vld [vmem:[%s1521 + $0x20] sm:$0xff]
      %v3008 = vld [vmem:[%s1521 + $0x28] sm:$0xff]
      %v3009 = vld [vmem:[%s1521 + $0x30] sm:$0xff]
      %v3010 = vld [vmem:[%s1521 + $0x38] sm:$0xff]
      %v3011 = vld [vmem:[%s1521 + $0x40] sm:$0xff]
      %v3012 = vld [vmem:[%s1521 + $0x48] sm:$0xff]
      %v3013 = vld [vmem:[%s1521 + $0x50] sm:$0xff]
      %v3014 = vld [vmem:[%s1521 + $0x58] sm:$0xff]
      %v3015 = vld [vmem:[%s1521 + $0x60] sm:$0xff]
      %v3016 = vld [vmem:[%s1521 + $0x68] sm:$0xff]
      %v3017 = vld [vmem:[%s1521 + $0x70] sm:$0xff]
      %v3018 = vld [vmem:[%s1521 + $0x78] sm:$0xff]
      %v3019 = vld [vmem:[%s1521 + $0x80] sm:$0xff]
      %v3020 = vld [vmem:[%s1521 + $0x88] sm:$0xff]
      %v3021 = vld [vmem:[%s1521 + $0x90] sm:$0xff]
      %v3022 = vld [vmem:[%s1521 + $0x98] sm:$0xff]
      %v3023 = vld [vmem:[%s1521 + $0xa0] sm:$0xff]
      %v3024 = vld [vmem:[%s1521 + $0xa8] sm:$0xff]
      %v3025 = vld [vmem:[%s1521 + $0xb0] sm:$0xff]
      %v3026 = vld [vmem:[%s1521 + $0xb8] sm:$0xff]
      %v3027 = vld [vmem:[%s1521 + $0xc0] sm:$0xff]
      %v3028 = vld [vmem:[%s1521 + $0xc8] sm:$0xff]
      %v3029 = vld [vmem:[%s1521 + $0xd0] sm:$0xff]
      %v3030 = vld [vmem:[%s1521 + $0xd8] sm:$0xff]
      %v3031 = vld [vmem:[%s1521 + $0xe0] sm:$0xff]
      %v3032 = vld [vmem:[%s1521 + $0xe8] sm:$0xff]
      %v3033 = vld [vmem:[%s1521 + $0xf0] sm:$0xff]
      %v3034 = vld [vmem:[%s1521 + $0xf8] sm:$0xff]
      %v3035 = vld [vmem:[%s1521 + $0x100] sm:$0xff]
      %v3036 = vld [vmem:[%s1521 + $0x108] sm:$0xff]
      %v3037 = vld [vmem:[%s1521 + $0x110] sm:$0xff]
      %v3038 = vld [vmem:[%s1521 + $0x118] sm:$0xff]
      %v3039 = vld [vmem:[%s1521 + $0x120] sm:$0xff]
      %v3040 = vld [vmem:[%s1521 + $0x128] sm:$0xff]
      %v3041 = vld [vmem:[%s1521 + $0x130] sm:$0xff]
      %v3042 = vld [vmem:[%s1521 + $0x138] sm:$0xff]
      %v3043 = vld [vmem:[%s1521 + $0x140] sm:$0xff]
      %v3044 = vld [vmem:[%s1521 + $0x148] sm:$0xff]
      %v3045 = vld [vmem:[%s1521 + $0x150] sm:$0xff]
      %v3046 = vld [vmem:[%s1521 + $0x158] sm:$0xff]
      %v3047 = vld [vmem:[%s1521 + $0x160] sm:$0xff]
      %v3048 = vld [vmem:[%s1521 + $0x168] sm:$0xff]
      %v3049 = vld [vmem:[%s1521 + $0x170] sm:$0xff]
      %v3050 = vld [vmem:[%s1521 + $0x178] sm:$0xff]
      %v3051 = vld [vmem:[%s1521 + $0x180] sm:$0xff]
      %v3052 = vld [vmem:[%s1521 + $0x188] sm:$0xff]
      %v3053 = vld [vmem:[%s1521 + $0x190] sm:$0xff]
      %v3054 = vld [vmem:[%s1521 + $0x198] sm:$0xff]
      %v3055 = vld [vmem:[%s1521 + $0x1a0] sm:$0xff]
      %v3056 = vld [vmem:[%s1521 + $0x1a8] sm:$0xff]
      %v3057 = vld [vmem:[%s1521 + $0x1b0] sm:$0xff]
      %v3058 = vld [vmem:[%s1521 + $0x1b8] sm:$0xff]
      %v3059 = vld [vmem:[%s1521 + $0x1c0] sm:$0xff]
      %v3060 = vld [vmem:[%s1521 + $0x1c8] sm:$0xff]
      %v3061 = vld [vmem:[%s1521 + $0x1d0] sm:$0xff]
      %v3062 = vld [vmem:[%s1521 + $0x1d8] sm:$0xff]
      %v3063 = vld [vmem:[%s1521 + $0x1e0] sm:$0xff]
      %v3064 = vld [vmem:[%s1521 + $0x1e8] sm:$0xff]
      %v3065 = vld [vmem:[%s1521 + $0x1f0] sm:$0xff]
      %v3066 = vld [vmem:[%s1521 + $0x1f8] sm:$0xff]
      %3067 = vmatprep.subr.mxu0 %v3004
      %3068 = vmatpush1.msra.mxu0 %v3003
      %3069 = vmatprep.subr.mxu0 %v3006
      %3070 = vmatpush1.msra.mxu0 %v3005
      %3071 = vmatprep.subr.mxu0 %v3008
      %3072 = vmatpush1.msra.mxu0 %v3007
      %3073 = vmatprep.subr.mxu0 %v3010
      %3074 = vmatpush1.msra.mxu0 %v3009
      %3075 = vmatprep.subr.mxu0 %v3012
      %3076 = vmatpush1.msra.mxu0 %v3011
      %3077 = vmatprep.subr.mxu0 %v3014
      %3078 = vmatpush1.msra.mxu0 %v3013
      %3079 = vmatprep.subr.mxu0 %v3016
      %3080 = vmatpush1.msra.mxu0 %v3015
      %3081 = vmatprep.subr.mxu0 %v3018
      %3082 = vmatpush1.msra.mxu0 %v3017
      %3083 = vmatprep.subr.mxu0 %v3020
      %3084 = vmatpush1.msra.mxu0 %v3019
      %3085 = vmatprep.subr.mxu0 %v3022
      %3086 = vmatpush1.msra.mxu0 %v3021
      %3087 = vmatprep.subr.mxu0 %v3024
      %3088 = vmatpush1.msra.mxu0 %v3023
      %3089 = vmatprep.subr.mxu0 %v3026
      %3090 = vmatpush1.msra.mxu0 %v3025
      %3091 = vmatprep.subr.mxu0 %v3028
      %3092 = vmatpush1.msra.mxu0 %v3027
      %3093 = vmatprep.subr.mxu0 %v3030
      %3094 = vmatpush1.msra.mxu0 %v3029
      %3095 = vmatprep.subr.mxu0 %v3032
      %3096 = vmatpush1.msra.mxu0 %v3031
      %3097 = vmatprep.subr.mxu0 %v3034
      %3098 = vmatpush1.msra.mxu0 %v3033
      %3099 = vmatprep.subr.mxu0 %v3036
      %3100 = vmatpush1.msra.mxu0 %v3035
      %3101 = vmatprep.subr.mxu0 %v3038
      %3102 = vmatpush1.msra.mxu0 %v3037
      %3103 = vmatprep.subr.mxu0 %v3040
      %3104 = vmatpush1.msra.mxu0 %v3039
      %3105 = vmatprep.subr.mxu0 %v3042
      %3106 = vmatpush1.msra.mxu0 %v3041
      %3107 = vmatprep.subr.mxu0 %v3044
      %3108 = vmatpush1.msra.mxu0 %v3043
      %3109 = vmatprep.subr.mxu0 %v3046
      %3110 = vmatpush1.msra.mxu0 %v3045
      %3111 = vmatprep.subr.mxu0 %v3048
      %3112 = vmatpush1.msra.mxu0 %v3047
      %3113 = vmatprep.subr.mxu0 %v3050
      %3114 = vmatpush1.msra.mxu0 %v3049
      %3115 = vmatprep.subr.mxu0 %v3052
      %3116 = vmatpush1.msra.mxu0 %v3051
      %3117 = vmatprep.subr.mxu0 %v3054
      %3118 = vmatpush1.msra.mxu0 %v3053
      %3119 = vmatprep.subr.mxu0 %v3056
      %3120 = vmatpush1.msra.mxu0 %v3055
      %3121 = vmatprep.subr.mxu0 %v3058
      %3122 = vmatpush1.msra.mxu0 %v3057
      %3123 = vmatprep.subr.mxu0 %v3060
      %3124 = vmatpush1.msra.mxu0 %v3059
      %3125 = vmatprep.subr.mxu0 %v3062
      %3126 = vmatpush1.msra.mxu0 %v3061
      %3127 = vmatprep.subr.mxu0 %v3064
      %3128 = vmatpush1.msra.mxu0 %v3063
      %3129 = vmatprep.subr.mxu0 %v3066
      %3130 = vmatpush1.msra.mxu0 %v3065
      %3131 = vmatprep.mubr.f32.mxu0 %v2815
      %3132 = vmatmul.mubr.f32.gmra.mrb[0].mxu0 %v2813
      %v3133 = vpop.f32.mrb[0].mxu0
      %v3134 = vadd.f32 0.0, %v3133
      %v3135 = vpop.f32.mrb[0].mxu0
      %v3136 = vadd.f32 0.0, %v3135
      %3137 = vmatprep.mubr.f32.mxu0 %v2821
      %3138 = vmatmul.mubr.f32.gmra.mrb[0].mxu0 %v2819
      %v3139 = vpop.f32.mrb[0].mxu0
      %v3140 = vadd.f32 0.0, %v3139
      %v3141 = vpop.f32.mrb[0].mxu0
      %v3142 = vadd.f32 0.0, %v3141
      %3143 = vmatprep.mubr.f32.mxu0 %v2827
      %3144 = vmatmul.mubr.f32.gmra.mrb[0].mxu0 %v2825
      %v3145 = vpop.f32.mrb[0].mxu0
      %v3146 = vadd.f32 0.0, %v3145
      %v3147 = vpop.f32.mrb[0].mxu0
      %v3148 = vadd.f32 0.0, %v3147
      %3149 = vmatprep.mubr.f32.mxu0 %v2833
      %3150 = vmatmul.mubr.f32.gmra.mrb[0].mxu0 %v2831
      %v3151 = vpop.f32.mrb[0].mxu0
      %v3152 = vadd.f32 0.0, %v3151
      %v3153 = vpop.f32.mrb[0].mxu0
      %v3154 = vadd.f32 0.0, %v3153
      %3155 = vmatprep.mubr.f32.mxu0 %v2839
      %3156 = vmatmul.mubr.f32.gmra.mrb[0].mxu0 %v2837
      %v3157 = vpop.f32.mrb[0].mxu0
      %v3158 = vadd.f32 0.0, %v3157
      %v3159 = vpop.f32.mrb[0].mxu0
      %v3160 = vadd.f32 0.0, %v3159
      %3161 = vmatprep.mubr.f32.mxu0 %v2845
      %3162 = vmatmul.mubr.f32.gmra.mrb[0].mxu0 %v2843
      %v3163 = vpop.f32.mrb[0].mxu0
      %v3164 = vadd.f32 0.0, %v3163
      %v3165 = vpop.f32.mrb[0].mxu0
      %v3166 = vadd.f32 0.0, %v3165
      %3167 = vmatprep.mubr.f32.mxu0 %v2851
      %3168 = vmatmul.mubr.f32.gmra.mrb[0].mxu0 %v2849
      %v3169 = vpop.f32.mrb[0].mxu0
      %v3170 = vadd.f32 0.0, %v3169
      %v3171 = vpop.f32.mrb[0].mxu0
      %v3172 = vadd.f32 0.0, %v3171
      %3173 = vmatprep.mubr.f32.mxu0 %v2857
      %3174 = vmatmul.mubr.f32.gmra.mrb[0].mxu0 %v2855
      %v3175 = vpop.f32.mrb[0].mxu0
      %v3176 = vadd.f32 0.0, %v3175
      %v3177 = vpop.f32.mrb[0].mxu0
      %v3178 = vadd.f32 0.0, %v3177
      %3179 = vmatprep.mubr.f32.mxu0 %v2863
      %3180 = vmatmul.mubr.f32.gmra.mrb[0].mxu0 %v2861
      %v3181 = vpop.f32.mrb[0].mxu0
      %v3182 = vadd.f32 0.0, %v3181
      %v3183 = vpop.f32.mrb[0].mxu0
      %v3184 = vadd.f32 0.0, %v3183
      %3185 = vmatprep.mubr.f32.mxu0 %v2869
      %3186 = vmatmul.mubr.f32.gmra.mrb[0].mxu0 %v2867
      %v3187 = vpop.f32.mrb[0].mxu0
      %v3188 = vadd.f32 0.0, %v3187
      %v3189 = vpop.f32.mrb[0].mxu0
      %v3190 = vadd.f32 0.0, %v3189
      %3191 = vmatprep.mubr.f32.mxu0 %v2875
      %3192 = vmatmul.mubr.f32.gmra.mrb[0].mxu0 %v2873
      %v3193 = vpop.f32.mrb[0].mxu0
      %v3194 = vadd.f32 0.0, %v3193
      %v3195 = vpop.f32.mrb[0].mxu0
      %v3196 = vadd.f32 0.0, %v3195
      %3197 = vmatprep.mubr.f32.mxu0 %v2881
      %3198 = vmatmul.mubr.f32.gmra.mrb[0].mxu0 %v2879
      %v3199 = vpop.f32.mrb[0].mxu0
      %v3200 = vadd.f32 0.0, %v3199
      %v3201 = vpop.f32.mrb[0].mxu0
      %v3202 = vadd.f32 0.0, %v3201
      %3203 = vmatprep.mubr.f32.mxu0 %v2887
      %3204 = vmatmul.mubr.f32.gmra.mrb[0].mxu0 %v2885
      %v3205 = vpop.f32.mrb[0].mxu0
      %v3206 = vadd.f32 0.0, %v3205
      %v3207 = vpop.f32.mrb[0].mxu0
      %v3208 = vadd.f32 0.0, %v3207
      %3209 = vmatprep.mubr.f32.mxu0 %v2893
      %3210 = vmatmul.mubr.f32.gmra.mrb[0].mxu0 %v2891
      %v3211 = vpop.f32.mrb[0].mxu0
      %v3212 = vadd.f32 0.0, %v3211
      %v3213 = vpop.f32.mrb[0].mxu0
      %v3214 = vadd.f32 0.0, %v3213
      %3215 = vmatprep.mubr.f32.mxu0 %v2899
      %3216 = vmatmul.mubr.f32.gmra.mrb[0].mxu0 %v2897
      %v3217 = vpop.f32.mrb[0].mxu0
      %v3218 = vadd.f32 0.0, %v3217
      %v3219 = vpop.f32.mrb[0].mxu0
      %v3220 = vadd.f32 0.0, %v3219
      %3221 = vmatprep.mubr.f32.mxu0 %v2905
      %3222 = vmatmul.mubr.f32.gmra.mrb[0].mxu0 %v2903
      %v3223 = vpop.f32.mrb[0].mxu0
      %v3224 = vadd.f32 0.0, %v3223
      %v3225 = vpop.f32.mrb[0].mxu0
      %v3226 = vadd.f32 0.0, %v3225
      %3227 = vmatprep.mubr.f32.mxu0 %v2911
      %3228 = vmatmul.mubr.f32.gmra.mrb[0].mxu0 %v2909
      %v3229 = vpop.f32.mrb[0].mxu0
      %v3230 = vadd.f32 0.0, %v3229
      %v3231 = vpop.f32.mrb[0].mxu0
      %v3232 = vadd.f32 0.0, %v3231
      %3233 = vmatprep.mubr.f32.mxu0 %v2917
      %3234 = vmatmul.mubr.f32.gmra.mrb[0].mxu0 %v2915
      %v3235 = vpop.f32.mrb[0].mxu0
      %v3236 = vadd.f32 0.0, %v3235
      %v3237 = vpop.f32.mrb[0].mxu0
      %v3238 = vadd.f32 0.0, %v3237
      %3239 = vmatprep.mubr.f32.mxu0 %v2923
      %3240 = vmatmul.mubr.f32.gmra.mrb[0].mxu0 %v2921
      %v3241 = vpop.f32.mrb[0].mxu0
      %v3242 = vadd.f32 0.0, %v3241
      %v3243 = vpop.f32.mrb[0].mxu0
      %v3244 = vadd.f32 0.0, %v3243
      %3245 = vmatprep.mubr.f32.mxu0 %v2929
      %3246 = vmatmul.mubr.f32.gmra.mrb[0].mxu0 %v2927
      %v3247 = vpop.f32.mrb[0].mxu0
      %v3248 = vadd.f32 0.0, %v3247
      %v3249 = vpop.f32.mrb[0].mxu0
      %v3250 = vadd.f32 0.0, %v3249
      %3251 = vmatprep.mubr.f32.mxu0 %v2935
      %3252 = vmatmul.mubr.f32.gmra.mrb[0].mxu0 %v2933
      %v3253 = vpop.f32.mrb[0].mxu0
      %v3254 = vadd.f32 0.0, %v3253
      %v3255 = vpop.f32.mrb[0].mxu0
      %v3256 = vadd.f32 0.0, %v3255
      %3257 = vmatprep.mubr.f32.mxu0 %v2941
      %3258 = vmatmul.mubr.f32.gmra.mrb[0].mxu0 %v2939
      %v3259 = vpop.f32.mrb[0].mxu0
      %v3260 = vadd.f32 0.0, %v3259
      %v3261 = vpop.f32.mrb[0].mxu0
      %v3262 = vadd.f32 0.0, %v3261
      %3263 = vmatprep.mubr.f32.mxu0 %v2947
      %3264 = vmatmul.mubr.f32.gmra.mrb[0].mxu0 %v2945
      %v3265 = vpop.f32.mrb[0].mxu0
      %v3266 = vadd.f32 0.0, %v3265
      %v3267 = vpop.f32.mrb[0].mxu0
      %v3268 = vadd.f32 0.0, %v3267
      %3269 = vmatprep.mubr.f32.mxu0 %v2953
      %3270 = vmatmul.mubr.f32.gmra.mrb[0].mxu0 %v2951
      %v3271 = vpop.f32.mrb[0].mxu0
      %v3272 = vadd.f32 0.0, %v3271
      %v3273 = vpop.f32.mrb[0].mxu0
      %v3274 = vadd.f32 0.0, %v3273
      %3275 = vmatprep.mubr.f32.mxu0 %v2959
      %3276 = vmatmul.mubr.f32.gmra.mrb[0].mxu0 %v2957
      %v3277 = vpop.f32.mrb[0].mxu0
      %v3278 = vadd.f32 0.0, %v3277
      %v3279 = vpop.f32.mrb[0].mxu0
      %v3280 = vadd.f32 0.0, %v3279
      %3281 = vmatprep.mubr.f32.mxu0 %v2965
      %3282 = vmatmul.mubr.f32.gmra.mrb[0].mxu0 %v2963
      %v3283 = vpop.f32.mrb[0].mxu0
      %v3284 = vadd.f32 0.0, %v3283
      %v3285 = vpop.f32.mrb[0].mxu0
      %v3286 = vadd.f32 0.0, %v3285
      %3287 = vmatprep.mubr.f32.mxu0 %v2971
      %3288 = vmatmul.mubr.f32.gmra.mrb[0].mxu0 %v2969
      %v3289 = vpop.f32.mrb[0].mxu0
      %v3290 = vadd.f32 0.0, %v3289
      %v3291 = vpop.f32.mrb[0].mxu0
      %v3292 = vadd.f32 0.0, %v3291
      %3293 = vmatprep.mubr.f32.mxu0 %v2977
      %3294 = vmatmul.mubr.f32.gmra.mrb[0].mxu0 %v2975
      %v3295 = vpop.f32.mrb[0].mxu0
      %v3296 = vadd.f32 0.0, %v3295
      %v3297 = vpop.f32.mrb[0].mxu0
      %v3298 = vadd.f32 0.0, %v3297
      %3299 = vmatprep.mubr.f32.mxu0 %v2983
      %3300 = vmatmul.mubr.f32.gmra.mrb[0].mxu0 %v2981
      %v3301 = vpop.f32.mrb[0].mxu0
      %v3302 = vadd.f32 0.0, %v3301
      %v3303 = vpop.f32.mrb[0].mxu0
      %v3304 = vadd.f32 0.0, %v3303
      %3305 = vmatprep.mubr.f32.mxu0 %v2989
      %3306 = vmatmul.mubr.f32.gmra.mrb[0].mxu0 %v2987
      %v3307 = vpop.f32.mrb[0].mxu0
      %v3308 = vadd.f32 0.0, %v3307
      %v3309 = vpop.f32.mrb[0].mxu0
      %v3310 = vadd.f32 0.0, %v3309
      %3311 = vmatprep.mubr.f32.mxu0 %v2995
      %3312 = vmatmul.mubr.f32.gmra.mrb[0].mxu0 %v2993
      %v3313 = vpop.f32.mrb[0].mxu0
      %v3314 = vadd.f32 0.0, %v3313
      %v3315 = vpop.f32.mrb[0].mxu0
      %v3316 = vadd.f32 0.0, %v3315
      %3317 = vmatprep.mubr.f32.mxu0 %v3001
      %3318 = vmatmul.mubr.f32.gmra.mrb[0].mxu0 %v2999
      %v3319 = vpop.f32.mrb[0].mxu0
      %v3320 = vadd.f32 0.0, %v3319
      %v3321 = vpop.f32.mrb[0].mxu0
      %v3322 = vadd.f32 0.0, %v3321
      %3323 = vdwg.mxu0
      %v3324 = vmul.f32 %v3134, %v2346
      %v3325 = vmul.f32 %v3136, %v2346
      %v3326 = vmul.f32 %v3140, %v2346
      %v3327 = vmul.f32 %v3142, %v2346
      %v3328 = vmul.f32 %v3146, %v2346
      %v3329 = vmul.f32 %v3148, %v2346
      %v3330 = vmul.f32 %v3152, %v2346
      %v3331 = vmul.f32 %v3154, %v2346
      %v3332 = vmul.f32 %v3158, %v2346
      %v3333 = vmul.f32 %v3160, %v2346
      %v3334 = vmul.f32 %v3164, %v2346
      %v3335 = vmul.f32 %v3166, %v2346
      %v3336 = vmul.f32 %v3170, %v2346
      %v3337 = vmul.f32 %v3172, %v2346
      %v3338 = vmul.f32 %v3176, %v2346
      %v3339 = vmul.f32 %v3178, %v2346
      %v3340 = vmul.f32 %v3182, %v2346
      %v3341 = vmul.f32 %v3184, %v2346
      %v3342 = vmul.f32 %v3188, %v2346
      %v3343 = vmul.f32 %v3190, %v2346
      %v3344 = vmul.f32 %v3194, %v2346
      %v3345 = vmul.f32 %v3196, %v2346
      %v3346 = vmul.f32 %v3200, %v2346
      %v3347 = vmul.f32 %v3202, %v2346
      %v3348 = vmul.f32 %v3206, %v2346
      %v3349 = vmul.f32 %v3208, %v2346
      %v3350 = vmul.f32 %v3212, %v2346
      %v3351 = vmul.f32 %v3214, %v2346
      %v3352 = vmul.f32 %v3218, %v2346
      %v3353 = vmul.f32 %v3220, %v2346
      %v3354 = vmul.f32 %v3224, %v2346
      %v3355 = vmul.f32 %v3226, %v2346
      %v3356 = vmul.f32 %v3230, %v2346
      %v3357 = vmul.f32 %v3232, %v2346
      %v3358 = vmul.f32 %v3236, %v2346
      %v3359 = vmul.f32 %v3238, %v2346
      %v3360 = vmul.f32 %v3242, %v2346
      %v3361 = vmul.f32 %v3244, %v2346
      %v3362 = vmul.f32 %v3248, %v2346
      %v3363 = vmul.f32 %v3250, %v2346
      %v3364 = vmul.f32 %v3254, %v2346
      %v3365 = vmul.f32 %v3256, %v2346
      %v3366 = vmul.f32 %v3260, %v2346
      %v3367 = vmul.f32 %v3262, %v2346
      %v3368 = vmul.f32 %v3266, %v2346
      %v3369 = vmul.f32 %v3268, %v2346
      %v3370 = vmul.f32 %v3272, %v2346
      %v3371 = vmul.f32 %v3274, %v2346
      %v3372 = vmul.f32 %v3278, %v2346
      %v3373 = vmul.f32 %v3280, %v2346
      %v3374 = vmul.f32 %v3284, %v2346
      %v3375 = vmul.f32 %v3286, %v2346
      %v3376 = vmul.f32 %v3290, %v2346
      %v3377 = vmul.f32 %v3292, %v2346
      %v3378 = vmul.f32 %v3296, %v2346
      %v3379 = vmul.f32 %v3298, %v2346
      %v3380 = vmul.f32 %v3302, %v2346
      %v3381 = vmul.f32 %v3304, %v2346
      %v3382 = vmul.f32 %v3308, %v2346
      %v3383 = vmul.f32 %v3310, %v2346
      %v3384 = vmul.f32 %v3314, %v2346
      %v3385 = vmul.f32 %v3316, %v2346
      %v3386 = vmul.f32 %v3320, %v2346
      %v3387 = vmul.f32 %v3322, %v2346
      %v3388 = vfloor.f32 %v3324
      %v3389 = vfloor.f32 %v3325
      %v3390 = vfloor.f32 %v3326
      %v3391 = vfloor.f32 %v3327
      %v3392 = vfloor.f32 %v3328
      %v3393 = vfloor.f32 %v3329
      %v3394 = vfloor.f32 %v3330
      %v3395 = vfloor.f32 %v3331
      %v3396 = vfloor.f32 %v3332
      %v3397 = vfloor.f32 %v3333
      %v3398 = vfloor.f32 %v3334
      %v3399 = vfloor.f32 %v3335
      %v3400 = vfloor.f32 %v3336
      %v3401 = vfloor.f32 %v3337
      %v3402 = vfloor.f32 %v3338
      %v3403 = vfloor.f32 %v3339
      %v3404 = vfloor.f32 %v3340
      %v3405 = vfloor.f32 %v3341
      %v3406 = vfloor.f32 %v3342
      %v3407 = vfloor.f32 %v3343
      %v3408 = vfloor.f32 %v3344
      %v3409 = vfloor.f32 %v3345
      %v3410 = vfloor.f32 %v3346
      %v3411 = vfloor.f32 %v3347
      %v3412 = vfloor.f32 %v3348
      %v3413 = vfloor.f32 %v3349
      %v3414 = vfloor.f32 %v3350
      %v3415 = vfloor.f32 %v3351
      %v3416 = vfloor.f32 %v3352
      %v3417 = vfloor.f32 %v3353
      %v3418 = vfloor.f32 %v3354
      %v3419 = vfloor.f32 %v3355
      %v3420 = vfloor.f32 %v3356
      %v3421 = vfloor.f32 %v3357
      %v3422 = vfloor.f32 %v3358
      %v3423 = vfloor.f32 %v3359
      %v3424 = vfloor.f32 %v3360
      %v3425 = vfloor.f32 %v3361
      %v3426 = vfloor.f32 %v3362
      %v3427 = vfloor.f32 %v3363
      %v3428 = vfloor.f32 %v3364
      %v3429 = vfloor.f32 %v3365
      %v3430 = vfloor.f32 %v3366
      %v3431 = vfloor.f32 %v3367
      %v3432 = vfloor.f32 %v3368
      %v3433 = vfloor.f32 %v3369
      %v3434 = vfloor.f32 %v3370
      %v3435 = vfloor.f32 %v3371
      %v3436 = vfloor.f32 %v3372
      %v3437 = vfloor.f32 %v3373
      %v3438 = vfloor.f32 %v3374
      %v3439 = vfloor.f32 %v3375
      %v3440 = vfloor.f32 %v3376
      %v3441 = vfloor.f32 %v3377
      %v3442 = vfloor.f32 %v3378
      %v3443 = vfloor.f32 %v3379
      %v3444 = vfloor.f32 %v3380
      %v3445 = vfloor.f32 %v3381
      %v3446 = vfloor.f32 %v3382
      %v3447 = vfloor.f32 %v3383
      %v3448 = vfloor.f32 %v3384
      %v3449 = vfloor.f32 %v3385
      %v3450 = vfloor.f32 %v3386
      %v3451 = vfloor.f32 %v3387
      %3452 = vmatprep.subr.mxu0 %v3389
      %3453 = vmatpush1.xpose.msra.mxu0 %v3388
      %3454 = vmatprep.subr.mxu0 %v3391
      %3455 = vmatpush1.xpose.msra.mxu0 %v3390
      %3456 = vmatprep.subr.mxu0 %v3393
      %3457 = vmatpush1.xpose.msra.mxu0 %v3392
      %3458 = vmatprep.subr.mxu0 %v3395
      %3459 = vmatpush1.xpose.msra.mxu0 %v3394
      %3460 = vmatprep.subr.mxu0 %v3397
      %3461 = vmatpush1.xpose.msra.mxu0 %v3396
      %3462 = vmatprep.subr.mxu0 %v3399
      %3463 = vmatpush1.xpose.msra.mxu0 %v3398
      %3464 = vmatprep.subr.mxu0 %v3401
      %3465 = vmatpush1.xpose.msra.mxu0 %v3400
      %3466 = vmatprep.subr.mxu0 %v3403
      %3467 = vmatpush1.xpose.msra.mxu0 %v3402
      %3468 = vmatprep.subr.mxu0 %v3405
      %3469 = vmatpush1.xpose.msra.mxu0 %v3404
      %3470 = vmatprep.subr.mxu0 %v3407
      %3471 = vmatpush1.xpose.msra.mxu0 %v3406
      %3472 = vmatprep.subr.mxu0 %v3409
      %3473 = vmatpush1.xpose.msra.mxu0 %v3408
      %3474 = vmatprep.subr.mxu0 %v3411
      %3475 = vmatpush1.xpose.msra.mxu0 %v3410
      %3476 = vmatprep.subr.mxu0 %v3413
      %3477 = vmatpush1.xpose.msra.mxu0 %v3412
      %3478 = vmatprep.subr.mxu0 %v3415
      %3479 = vmatpush1.xpose.msra.mxu0 %v3414
      %3480 = vmatprep.subr.mxu0 %v3417
      %3481 = vmatpush1.xpose.msra.mxu0 %v3416
      %3482 = vmatprep.subr.mxu0 %v3419
      %3483 = vmatpush1.xpose.msra.mxu0 %v3418
      %3484 = vmatprep.subr.mxu0 %v3421
      %3485 = vmatpush1.xpose.msra.mxu0 %v3420
      %3486 = vmatprep.subr.mxu0 %v3423
      %3487 = vmatpush1.xpose.msra.mxu0 %v3422
      %3488 = vmatprep.subr.mxu0 %v3425
      %3489 = vmatpush1.xpose.msra.mxu0 %v3424
      %3490 = vmatprep.subr.mxu0 %v3427
      %3491 = vmatpush1.xpose.msra.mxu0 %v3426
      %3492 = vmatprep.subr.mxu0 %v3429
      %3493 = vmatpush1.xpose.msra.mxu0 %v3428
      %3494 = vmatprep.subr.mxu0 %v3431
      %3495 = vmatpush1.xpose.msra.mxu0 %v3430
      %3496 = vmatprep.subr.mxu0 %v3433
      %3497 = vmatpush1.xpose.msra.mxu0 %v3432
      %3498 = vmatprep.subr.mxu0 %v3435
      %3499 = vmatpush1.xpose.msra.mxu0 %v3434
      %3500 = vmatprep.subr.mxu0 %v3437
      %3501 = vmatpush1.xpose.msra.mxu0 %v3436
      %3502 = vmatprep.subr.mxu0 %v3439
      %3503 = vmatpush1.xpose.msra.mxu0 %v3438
      %3504 = vmatprep.subr.mxu0 %v3441
      %3505 = vmatpush1.xpose.msra.mxu0 %v3440
      %3506 = vmatprep.subr.mxu0 %v3443
      %3507 = vmatpush1.xpose.msra.mxu0 %v3442
      %3508 = vmatprep.subr.mxu0 %v3445
      %3509 = vmatpush1.xpose.msra.mxu0 %v3444
      %3510 = vmatprep.subr.mxu0 %v3447
      %3511 = vmatpush1.xpose.msra.mxu0 %v3446
      %3512 = vmatprep.subr.mxu0 %v3449
      %3513 = vmatpush1.xpose.msra.mxu0 %v3448
      %3514 = vmatprep.subr.mxu0 %v3451
      %3515 = vmatpush1.xpose.msra.mxu0 %v3450
      %3516 = vmatprep.mubr.f32.mxu0 %v1587
      %3517 = vmatmul.mubr.f32.gmra.mrb[0].mxu0 %v1586
      %v3518 = vpop.f32.mrb[0].mxu0
      %v3519 = vadd.f32 0.0, %v3518
      %v3520 = vpop.f32.mrb[0].mxu0
      %v3521 = vadd.f32 0.0, %v3520
      %3522 = vdwg.mxu0
      %v3523 = vmul.f32 %v3519, %v2552
      %v3524 = vmul.f32 %v3521, %v2556
      %v3525 = vmul.f32 %v1592, %v2565
      %v3526 = vmul.f32 %v1592, %v2569
      %v3527 = vadd.f32 %v3523, %v3525
      %v3528 = vadd.f32 %v3524, %v3526
      %v3529 = vmul.f32 %v3527, %v2574
      %v3530 = vmul.f32 %v3528, %v2575
      %vm3531 = vcmp.ge.f32.partialorder %v3529, 0.0
      %vm3532 = vcmp.ge.f32.partialorder %v3530, 0.0
      %v3533 = vmul.f32 %v3529, 0.01
      %v3534 = vmul.f32 %v3530, 0.01
      %v3535 = vsel %vm3531, %v3529, %v3533
      %v3536 = vsel %vm3532, %v3530, %v3534
      %3538 = vset.pattern.permute.xlu0 0
      %3539 = vperm.xlu0 %3538, %v1593
      %v3540 = vpop.permute.xlu0 %3539
      %v3542 = vmul.f32 %v3535, %v3540
      %v3543 = vmul.f32 %v3536, %v3540
      %3545 = vset.pattern.permute.xlu0 0
      %3546 = vperm.xlu0 %3545, %v1594
      %v3547 = vpop.permute.xlu0 %3546
      %v3549 = vadd.f32 %v3542, %v3547
      %v3550 = vadd.f32 %v3543, %v3547
      %v3553 = vcombine.low %v3549, %v3550
      %3555 = vst [vmem:[#allocation5] sm:$0xff] %v3553
      %v3556 = vld [vmem:[#allocation5] sm:$0xff]
      %v3558 = vcombine.high %v3556, %v3556
      %3560 = vrot.lane.b32.xlu0 %v3556, 17
      %v3561 = vpop.permute.xlu0 %3560
      %3562 = vrot.lane.b32.xlu0 %v3558, 17
      %v3563 = vpop.permute.xlu0 %3562
      %v3564 = vsel %vm262, %v3561, %v3563
      %v3565 = vsel %vm262, %v3563, %v3561
      %v3566 = vld [vmem:[%s1] sm:$0xff]
      %v3568 = vcombine.high %v3566, %v3566
      %v3570 = vmul.f32 %v3565, %v3566
      %v3571 = vmul.f32 %v3564, %v3568
      %3572 = vst [vmem:[#allocation2] sm:$0xf] %v3570
      %3573 = vst [vmem:[#allocation2 + $0x8] sm:$0xf] %v3571
      %3574 = vrot.lane.b32.xlu0 %v3556, 16
      %v3575 = vpop.permute.xlu0 %3574
      %3576 = vrot.lane.b32.xlu0 %v3558, 16
      %v3577 = vpop.permute.xlu0 %3576
      %v3578 = vsel %vm277, %v3575, %v3577
      %v3579 = vsel %vm277, %v3577, %v3575
      %v3580 = vld [vmem:[%s280] sm:$0xff]
      %v3582 = vcombine.high %v3580, %v3580
      %v3584 = vmul.f32 %v3579, %v3580
      %v3585 = vmul.f32 %v3578, %v3582
      %3586 = vst [vmem:[#allocation2 + $0x10] sm:$0xf] %v3584
      %3587 = vst [vmem:[#allocation2 + $0x18] sm:$0xf] %v3585
      %3588 = vrot.lane.b32.xlu0 %v3556, 15
      %v3589 = vpop.permute.xlu0 %3588
      %3590 = vrot.lane.b32.xlu0 %v3558, 15
      %v3591 = vpop.permute.xlu0 %3590
      %v3592 = vsel %vm293, %v3589, %v3591
      %v3593 = vsel %vm293, %v3591, %v3589
      %v3594 = vld [vmem:[%s296] sm:$0xff]
      %v3596 = vcombine.high %v3594, %v3594
      %v3598 = vmul.f32 %v3593, %v3594
      %v3599 = vmul.f32 %v3592, %v3596
      %3600 = vst [vmem:[#allocation2 + $0x20] sm:$0xf] %v3598
      %3601 = vst [vmem:[#allocation2 + $0x28] sm:$0xf] %v3599
      %3602 = vrot.lane.b32.xlu0 %v3556, 1
      %v3603 = vpop.permute.xlu0 %3602
      %3604 = vrot.lane.b32.xlu0 %v3558, 1
      %v3605 = vpop.permute.xlu0 %3604
      %v3606 = vsel %vm309, %v3603, %v3605
      %v3607 = vsel %vm309, %v3605, %v3603
      %v3608 = vld [vmem:[%s312] sm:$0xff]
      %v3610 = vcombine.high %v3608, %v3608
      %v3612 = vmul.f32 %v3607, %v3608
      %v3613 = vmul.f32 %v3606, %v3610
      %3614 = vst [vmem:[#allocation2 + $0x30] sm:$0xf] %v3612
      %3615 = vst [vmem:[#allocation2 + $0x38] sm:$0xf] %v3613
      %3616 = vst [vmem:[#allocation2 + $0x40] sm:$0xf] %v3556
      %3617 = vst [vmem:[#allocation2 + $0x48] sm:$0xf] %v3558
      %3618 = vrot.lane.b32.xlu0 %v3556, 127
      %v3619 = vpop.permute.xlu0 %3618
      %3620 = vrot.lane.b32.xlu0 %v3558, 127
      %v3621 = vpop.permute.xlu0 %3620
      %v3622 = vsel %vm327, %v3619, %v3621
      %v3623 = vsel %vm327, %v3621, %v3619
      %v3624 = vld [vmem:[%s330] sm:$0xff]
      %v3626 = vcombine.high %v3624, %v3624
      %v3628 = vmul.f32 %v3622, %v3624
      %v3629 = vmul.f32 %v3623, %v3626
      %3630 = vst [vmem:[#allocation2 + $0x50] sm:$0xf] %v3628
      %3631 = vst [vmem:[#allocation2 + $0x58] sm:$0xf] %v3629
      %3632 = vrot.lane.b32.xlu0 %v3556, 113
      %v3633 = vpop.permute.xlu0 %3632
      %3634 = vrot.lane.b32.xlu0 %v3558, 113
      %v3635 = vpop.permute.xlu0 %3634
      %v3636 = vsel %vm343, %v3633, %v3635
      %v3637 = vsel %vm343, %v3635, %v3633
      %v3638 = vld [vmem:[%s346] sm:$0xff]
      %v3640 = vcombine.high %v3638, %v3638
      %v3642 = vmul.f32 %v3636, %v3638
      %v3643 = vmul.f32 %v3637, %v3640
      %3644 = vst [vmem:[#allocation2 + $0x60] sm:$0xf] %v3642
      %3645 = vst [vmem:[#allocation2 + $0x68] sm:$0xf] %v3643
      %3646 = vrot.lane.b32.xlu0 %v3556, 112
      %v3647 = vpop.permute.xlu0 %3646
      %3648 = vrot.lane.b32.xlu0 %v3558, 112
      %v3649 = vpop.permute.xlu0 %3648
      %v3650 = vsel %vm359, %v3647, %v3649
      %v3651 = vsel %vm359, %v3649, %v3647
      %v3652 = vld [vmem:[%s362] sm:$0xff]
      %v3654 = vcombine.high %v3652, %v3652
      %v3656 = vmul.f32 %v3650, %v3652
      %v3657 = vmul.f32 %v3651, %v3654
      %3658 = vst [vmem:[#allocation2 + $0x70] sm:$0xf] %v3656
      %3659 = vst [vmem:[#allocation2 + $0x78] sm:$0xf] %v3657
      %3660 = vrot.lane.b32.xlu0 %v3556, 111
      %v3661 = vpop.permute.xlu0 %3660
      %3662 = vrot.lane.b32.xlu0 %v3558, 111
      %v3663 = vpop.permute.xlu0 %3662
      %v3664 = vsel %vm375, %v3661, %v3663
      %v3665 = vsel %vm375, %v3663, %v3661
      %v3666 = vld [vmem:[%s378] sm:$0xff]
      %v3668 = vcombine.high %v3666, %v3666
      %v3670 = vmul.f32 %v3664, %v3666
      %v3671 = vmul.f32 %v3665, %v3668
      %3672 = vst [vmem:[#allocation2 + $0x80] sm:$0xf] %v3670
      %3673 = vst [vmem:[#allocation2 + $0x88] sm:$0xf] %v3671
      %s3674 = scalar_lea.vmem %s2, 80
      %v3675 = vld [vmem:[%s3674] sm:$0xff]
      %v3676 = vld [vmem:[%s3674 + $0x8] sm:$0xff]
      %v3677 = vld [vmem:[%s3674 + $0x10] sm:$0xff]
      %v3678 = vld [vmem:[%s3674 + $0x18] sm:$0xff]
      %v3679 = vld [vmem:[%s3674 + $0x20] sm:$0xff]
      %v3680 = vld [vmem:[%s3674 + $0x28] sm:$0xff]
      %v3681 = vld [vmem:[%s3674 + $0x30] sm:$0xff]
      %v3682 = vld [vmem:[%s3674 + $0x38] sm:$0xff]
      %v3683 = vld [vmem:[%s3674 + $0x40] sm:$0xff]
      %v3684 = vld [vmem:[%s3674 + $0x48] sm:$0xff]
      %v3685 = vld [vmem:[#allocation2] sm:$0xff]
      %v3686 = vld [vmem:[#allocation2 + $0x8] sm:$0xff]
      %v3687 = vld [vmem:[#allocation2 + $0x10] sm:$0xff]
      %v3688 = vld [vmem:[#allocation2 + $0x18] sm:$0xff]
      %v3689 = vld [vmem:[#allocation2 + $0x20] sm:$0xff]
      %v3690 = vld [vmem:[#allocation2 + $0x28] sm:$0xff]
      %v3691 = vld [vmem:[#allocation2 + $0x30] sm:$0xff]
      %v3692 = vld [vmem:[#allocation2 + $0x38] sm:$0xff]
      %v3693 = vld [vmem:[#allocation2 + $0x40] sm:$0xff]
      %v3694 = vld [vmem:[#allocation2 + $0x48] sm:$0xff]
      %v3695 = vld [vmem:[#allocation2 + $0x50] sm:$0xff]
      %v3696 = vld [vmem:[#allocation2 + $0x58] sm:$0xff]
      %v3697 = vld [vmem:[#allocation2 + $0x60] sm:$0xff]
      %v3698 = vld [vmem:[#allocation2 + $0x68] sm:$0xff]
      %v3699 = vld [vmem:[#allocation2 + $0x70] sm:$0xff]
      %v3700 = vld [vmem:[#allocation2 + $0x78] sm:$0xff]
      %v3701 = vld [vmem:[#allocation2 + $0x80] sm:$0xff]
      %v3702 = vld [vmem:[#allocation2 + $0x88] sm:$0xff]
      %v3703 = vld [vmem:[#allocation2 + $0x90] sm:$0xff]
      %v3704 = vld [vmem:[#allocation2 + $0x98] sm:$0xff]
      %v3706 = vsel %vm417, %v3675, 0
      %v3709 = vsel %vm417, %v3676, 0
      %v3712 = vsel %vm417, %v3677, 0
      %v3715 = vsel %vm417, %v3678, 0
      %v3718 = vsel %vm417, %v3679, 0
      %v3721 = vsel %vm417, %v3680, 0
      %v3724 = vsel %vm417, %v3681, 0
      %v3727 = vsel %vm417, %v3682, 0
      %v3730 = vsel %vm417, %v3683, 0
      %v3733 = vsel %vm417, %v3684, 0
      %3735 = vmatprep.subr.mxu0 %v3686
      %3736 = vmatpush1.msra.mxu0 %v3685
      %3737 = vmatprep.subr.mxu0 %v3688
      %3738 = vmatpush1.msra.mxu0 %v3687
      %3739 = vmatprep.subr.mxu0 %v3690
      %3740 = vmatpush1.msra.mxu0 %v3689
      %3741 = vmatprep.subr.mxu0 %v3692
      %3742 = vmatpush1.msra.mxu0 %v3691
      %3743 = vmatprep.subr.mxu0 %v3694
      %3744 = vmatpush1.msra.mxu0 %v3693
      %3745 = vmatprep.subr.mxu0 %v3696
      %3746 = vmatpush1.msra.mxu0 %v3695
      %3747 = vmatprep.subr.mxu0 %v3698
      %3748 = vmatpush1.msra.mxu0 %v3697
      %3749 = vmatprep.subr.mxu0 %v3700
      %3750 = vmatpush1.msra.mxu0 %v3699
      %3751 = vmatprep.subr.mxu0 %v3702
      %3752 = vmatpush1.msra.mxu0 %v3701
      %3753 = vmatprep.subr.mxu0 %v3704
      %3754 = vmatpush1.msra.mxu0 %v3703
      %3755 = vmatprep.subr.mxu0 0.0
      %3756 = vmatpush1.msra.mxu0 0.0
      %3757 = vmatprep.subr.mxu0 0.0
      %3758 = vmatpush1.msra.mxu0 0.0
      %3759 = vmatprep.subr.mxu0 0.0
      %3760 = vmatpush1.msra.mxu0 0.0
      %3761 = vmatprep.subr.mxu0 0.0
      %3762 = vmatpush1.msra.mxu0 0.0
      %3763 = vmatprep.subr.mxu0 0.0
      %3764 = vmatpush1.msra.mxu0 0.0
      %3765 = vmatprep.subr.mxu0 0.0
      %3766 = vmatpush1.msra.mxu0 0.0
      %3767 = vmatprep.subr.mxu0 0.0
      %3768 = vmatpush1.msra.mxu0 0.0
      %3769 = vmatprep.subr.mxu0 0.0
      %3770 = vmatpush1.msra.mxu0 0.0
      %3771 = vmatprep.subr.mxu0 0.0
      %3772 = vmatpush1.msra.mxu0 0.0
      %3773 = vmatprep.subr.mxu0 0.0
      %3774 = vmatpush1.msra.mxu0 0.0
      %3775 = vmatprep.subr.mxu0 0.0
      %3776 = vmatpush1.msra.mxu0 0.0
      %3777 = vmatprep.subr.mxu0 0.0
      %3778 = vmatpush1.msra.mxu0 0.0
      %3779 = vmatprep.subr.mxu0 0.0
      %3780 = vmatpush1.msra.mxu0 0.0
      %3781 = vmatprep.subr.mxu0 0.0
      %3782 = vmatpush1.msra.mxu0 0.0
      %3783 = vmatprep.subr.mxu0 0.0
      %3784 = vmatpush1.msra.mxu0 0.0
      %3785 = vmatprep.subr.mxu0 0.0
      %3786 = vmatpush1.msra.mxu0 0.0
      %3787 = vmatprep.subr.mxu0 0.0
      %3788 = vmatpush1.msra.mxu0 0.0
      %3789 = vmatprep.subr.mxu0 0.0
      %3790 = vmatpush1.msra.mxu0 0.0
      %3791 = vmatprep.subr.mxu0 0.0
      %3792 = vmatpush1.msra.mxu0 0.0
      %3793 = vmatprep.subr.mxu0 0.0
      %3794 = vmatpush1.msra.mxu0 0.0
      %3795 = vmatprep.subr.mxu0 0.0
      %3796 = vmatpush1.msra.mxu0 0.0
      %3797 = vmatprep.subr.mxu0 0.0
      %3798 = vmatpush1.msra.mxu0 0.0
      %3799 = vmatprep.mubr.f32.mxu0 0.0
      %3800 = vmatmul.mubr.f32.gmra.mrb[0].mxu0 %v3706
      %v3801 = vpop.f32.mrb[0].mxu0
      %v3802 = vadd.f32 0.0, %v3801
      %v3803 = vpop.f32.mrb[0].mxu0
      %v3804 = vadd.f32 0.0, %v3803
      %3805 = vmatprep.mubr.f32.mxu0 0.0
      %3806 = vmatmul.mubr.f32.gmra.mrb[0].mxu0 %v3709
      %v3807 = vpop.f32.mrb[0].mxu0
      %v3808 = vadd.f32 0.0, %v3807
      %v3809 = vpop.f32.mrb[0].mxu0
      %v3810 = vadd.f32 0.0, %v3809
      %3811 = vmatprep.mubr.f32.mxu0 0.0
      %3812 = vmatmul.mubr.f32.gmra.mrb[0].mxu0 %v3712
      %v3813 = vpop.f32.mrb[0].mxu0
      %v3814 = vadd.f32 0.0, %v3813
      %v3815 = vpop.f32.mrb[0].mxu0
      %v3816 = vadd.f32 0.0, %v3815
      %3817 = vmatprep.mubr.f32.mxu0 0.0
      %3818 = vmatmul.mubr.f32.gmra.mrb[0].mxu0 %v3715
      %v3819 = vpop.f32.mrb[0].mxu0
      %v3820 = vadd.f32 0.0, %v3819
      %v3821 = vpop.f32.mrb[0].mxu0
      %v3822 = vadd.f32 0.0, %v3821
      %3823 = vmatprep.mubr.f32.mxu0 0.0
      %3824 = vmatmul.mubr.f32.gmra.mrb[0].mxu0 %v3718
      %v3825 = vpop.f32.mrb[0].mxu0
      %v3826 = vadd.f32 0.0, %v3825
      %v3827 = vpop.f32.mrb[0].mxu0
      %v3828 = vadd.f32 0.0, %v3827
      %3829 = vmatprep.mubr.f32.mxu0 0.0
      %3830 = vmatmul.mubr.f32.gmra.mrb[0].mxu0 %v3721
      %v3831 = vpop.f32.mrb[0].mxu0
      %v3832 = vadd.f32 0.0, %v3831
      %v3833 = vpop.f32.mrb[0].mxu0
      %v3834 = vadd.f32 0.0, %v3833
      %3835 = vmatprep.mubr.f32.mxu0 0.0
      %3836 = vmatmul.mubr.f32.gmra.mrb[0].mxu0 %v3724
      %v3837 = vpop.f32.mrb[0].mxu0
      %v3838 = vadd.f32 0.0, %v3837
      %v3839 = vpop.f32.mrb[0].mxu0
      %v3840 = vadd.f32 0.0, %v3839
      %3841 = vmatprep.mubr.f32.mxu0 0.0
      %3842 = vmatmul.mubr.f32.gmra.mrb[0].mxu0 %v3727
      %v3843 = vpop.f32.mrb[0].mxu0
      %v3844 = vadd.f32 0.0, %v3843
      %v3845 = vpop.f32.mrb[0].mxu0
      %v3846 = vadd.f32 0.0, %v3845
      %3847 = vmatprep.mubr.f32.mxu0 0.0
      %3848 = vmatmul.mubr.f32.gmra.mrb[0].mxu0 %v3730
      %v3849 = vpop.f32.mrb[0].mxu0
      %v3850 = vadd.f32 0.0, %v3849
      %v3851 = vpop.f32.mrb[0].mxu0
      %v3852 = vadd.f32 0.0, %v3851
      %3853 = vmatprep.mubr.f32.mxu0 0.0
      %3854 = vmatmul.mubr.f32.gmra.mrb[0].mxu0 %v3733
      %v3855 = vpop.f32.mrb[0].mxu0
      %v3856 = vadd.f32 0.0, %v3855
      %v3857 = vpop.f32.mrb[0].mxu0
      %v3858 = vadd.f32 0.0, %v3857
      %3859 = vdwg.mxu0
      %3860 = vst [vmem:[#allocation3] sm:$0xff] %v3802
      %3861 = vst [vmem:[#allocation3 + $0x8] sm:$0xff] %v3804
      %3862 = vst [vmem:[#allocation3 + $0x10] sm:$0xff] %v3808
      %3863 = vst [vmem:[#allocation3 + $0x18] sm:$0xff] %v3810
      %3864 = vst [vmem:[#allocation3 + $0x20] sm:$0xff] %v3814
      %3865 = vst [vmem:[#allocation3 + $0x28] sm:$0xff] %v3816
      %3866 = vst [vmem:[#allocation3 + $0x30] sm:$0xff] %v3820
      %3867 = vst [vmem:[#allocation3 + $0x38] sm:$0xff] %v3822
      %3868 = vst [vmem:[#allocation3 + $0x40] sm:$0xff] %v3826
      %3869 = vst [vmem:[#allocation3 + $0x48] sm:$0xff] %v3828
      %3870 = vst [vmem:[#allocation3 + $0x50] sm:$0xff] %v3832
      %3871 = vst [vmem:[#allocation3 + $0x58] sm:$0xff] %v3834
      %3872 = vst [vmem:[#allocation3 + $0x60] sm:$0xff] %v3838
      %3873 = vst [vmem:[#allocation3 + $0x68] sm:$0xff] %v3840
      %3874 = vst [vmem:[#allocation3 + $0x70] sm:$0xff] %v3844
      %3875 = vst [vmem:[#allocation3 + $0x78] sm:$0xff] %v3846
      %3876 = vst [vmem:[#allocation3 + $0x80] sm:$0xff] %v3850
      %3877 = vst [vmem:[#allocation3 + $0x88] sm:$0xff] %v3852
      %3878 = vst [vmem:[#allocation3 + $0x90] sm:$0xff] %v3856
      %3879 = vst [vmem:[#allocation3 + $0x98] sm:$0xff] %v3858
      %v3880 = vld [vmem:[#allocation3 + $0x20] sm:$0x3]
      %v3881 = vld [vmem:[#allocation3 + $0x28] sm:$0x3]
      %v3882 = vld [vmem:[#allocation3 + $0x30] sm:$0x3]
      %v3883 = vld [vmem:[#allocation3 + $0x38] sm:$0x3]
      %3884 = vxpose.xlu0.b32.start [1/16] %v3880, 128
      %3885 = vxpose.xlu0.b32.cont [2/16] 0.0, 128
      %3886 = vxpose.xlu0.b32.cont [3/16] 0.0, 128
      %3887 = vxpose.xlu0.b32.cont [4/16] 0.0, 128
      %3888 = vxpose.xlu0.b32.cont [5/16] 0.0, 128
      %3889 = vxpose.xlu0.b32.cont [6/16] 0.0, 128
      %3890 = vxpose.xlu0.b32.cont [7/16] 0.0, 128
      %3891 = vxpose.xlu0.b32.cont [8/16] 0.0, 128
      %3892 = vxpose.xlu0.b32.cont [9/16] 0.0, 128
      %3893 = vxpose.xlu0.b32.cont [10/16] 0.0, 128
      %3894 = vxpose.xlu0.b32.cont [11/16] 0.0, 128
      %3895 = vxpose.xlu0.b32.cont [12/16] 0.0, 128
      %3896 = vxpose.xlu0.b32.cont [13/16] 0.0, 128
      %3897 = vxpose.xlu0.b32.cont [14/16] 0.0, 128
      %3898 = vxpose.xlu0.b32.cont [15/16] 0.0, 128
      %3899 = vxpose.xlu0.b32.end [16/16] 0.0, 128
      %v3900 = vpop.trf.xlu0
      %v3901 = vpop.trf.xlu0
      %v3902 = vpop.trf.xlu0
      %v3903 = vpop.trf.xlu0
      %v3904 = vpop.trf.xlu0
      %v3905 = vpop.trf.xlu0
      %v3906 = vpop.trf.xlu0
      %v3907 = vpop.trf.xlu0
      %v3908 = vpop.trf.xlu0
      %v3909 = vpop.trf.xlu0
      %v3910 = vpop.trf.xlu0
      %v3911 = vpop.trf.xlu0
      %v3912 = vpop.trf.xlu0
      %v3913 = vpop.trf.xlu0
      %v3914 = vpop.trf.xlu0
      %v3915 = vpop.trf.xlu0
      %3916 = vxpose.xlu0.b32.start [1/16] %v3881, 128
      %3917 = vxpose.xlu0.b32.cont [2/16] 0.0, 128
      %3918 = vxpose.xlu0.b32.cont [3/16] 0.0, 128
      %3919 = vxpose.xlu0.b32.cont [4/16] 0.0, 128
      %3920 = vxpose.xlu0.b32.cont [5/16] 0.0, 128
      %3921 = vxpose.xlu0.b32.cont [6/16] 0.0, 128
      %3922 = vxpose.xlu0.b32.cont [7/16] 0.0, 128
      %3923 = vxpose.xlu0.b32.cont [8/16] 0.0, 128
      %3924 = vxpose.xlu0.b32.cont [9/16] 0.0, 128
      %3925 = vxpose.xlu0.b32.cont [10/16] 0.0, 128
      %3926 = vxpose.xlu0.b32.cont [11/16] 0.0, 128
      %3927 = vxpose.xlu0.b32.cont [12/16] 0.0, 128
      %3928 = vxpose.xlu0.b32.cont [13/16] 0.0, 128
      %3929 = vxpose.xlu0.b32.cont [14/16] 0.0, 128
      %3930 = vxpose.xlu0.b32.cont [15/16] 0.0, 128
      %3931 = vxpose.xlu0.b32.end [16/16] 0.0, 128
      %v3932 = vpop.trf.xlu0
      %v3933 = vpop.trf.xlu0
      %v3934 = vpop.trf.xlu0
      %v3935 = vpop.trf.xlu0
      %v3936 = vpop.trf.xlu0
      %v3937 = vpop.trf.xlu0
      %v3938 = vpop.trf.xlu0
      %v3939 = vpop.trf.xlu0
      %v3940 = vpop.trf.xlu0
      %v3941 = vpop.trf.xlu0
      %v3942 = vpop.trf.xlu0
      %v3943 = vpop.trf.xlu0
      %v3944 = vpop.trf.xlu0
      %v3945 = vpop.trf.xlu0
      %v3946 = vpop.trf.xlu0
      %v3947 = vpop.trf.xlu0
      %v3949 = vsel %vm661, %v3900, 0
      %v3952 = vsel %vm661, %v3901, 0
      %v3955 = vsel %vm661, %v3902, 0
      %v3958 = vsel %vm661, %v3903, 0
      %v3961 = vsel %vm661, %v3904, 0
      %v3964 = vsel %vm661, %v3905, 0
      %v3967 = vsel %vm661, %v3906, 0
      %v3970 = vsel %vm661, %v3907, 0
      %v3973 = vsel %vm661, %v3908, 0
      %v3976 = vsel %vm661, %v3909, 0
      %v3979 = vsel %vm661, %v3910, 0
      %v3982 = vsel %vm661, %v3911, 0
      %v3985 = vsel %vm661, %v3912, 0
      %v3988 = vsel %vm661, %v3913, 0
      %v3991 = vsel %vm661, %v3914, 0
      %v3994 = vsel %vm661, %v3915, 0
      %v3997 = vsel %vm661, %v3932, 0
      %v4000 = vsel %vm661, %v3933, 0
      %v4003 = vsel %vm661, %v3934, 0
      %v4006 = vsel %vm661, %v3935, 0
      %v4009 = vsel %vm661, %v3936, 0
      %v4012 = vsel %vm661, %v3937, 0
      %v4015 = vsel %vm661, %v3938, 0
      %v4018 = vsel %vm661, %v3939, 0
      %v4021 = vsel %vm661, %v3940, 0
      %v4024 = vsel %vm661, %v3941, 0
      %v4027 = vsel %vm661, %v3942, 0
      %v4030 = vsel %vm661, %v3943, 0
      %v4033 = vsel %vm661, %v3944, 0
      %v4036 = vsel %vm661, %v3945, 0
      %v4039 = vsel %vm661, %v3946, 0
      %v4042 = vsel %vm661, %v3947, 0
      %v4045 = vsel %vm758, %v3882, 0
      %v4048 = vsel %vm758, %v3883, 0
      %4050 = vmatprep.subr.mxu0 %v4048
      %4051 = vmatpush1.msra.mxu0 %v4045
      %4052 = vmatprep.subr.mxu0 0.0
      %4053 = vmatpush1.msra.mxu0 0.0
      %4054 = vmatprep.subr.mxu0 0.0
      %4055 = vmatpush1.msra.mxu0 0.0
      %4056 = vmatprep.subr.mxu0 0.0
      %4057 = vmatpush1.msra.mxu0 0.0
      %4058 = vmatprep.subr.mxu0 0.0
      %4059 = vmatpush1.msra.mxu0 0.0
      %4060 = vmatprep.subr.mxu0 0.0
      %4061 = vmatpush1.msra.mxu0 0.0
      %4062 = vmatprep.subr.mxu0 0.0
      %4063 = vmatpush1.msra.mxu0 0.0
      %4064 = vmatprep.subr.mxu0 0.0
      %4065 = vmatpush1.msra.mxu0 0.0
      %4066 = vmatprep.subr.mxu0 0.0
      %4067 = vmatpush1.msra.mxu0 0.0
      %4068 = vmatprep.subr.mxu0 0.0
      %4069 = vmatpush1.msra.mxu0 0.0
      %4070 = vmatprep.subr.mxu0 0.0
      %4071 = vmatpush1.msra.mxu0 0.0
      %4072 = vmatprep.subr.mxu0 0.0
      %4073 = vmatpush1.msra.mxu0 0.0
      %4074 = vmatprep.subr.mxu0 0.0
      %4075 = vmatpush1.msra.mxu0 0.0
      %4076 = vmatprep.subr.mxu0 0.0
      %4077 = vmatpush1.msra.mxu0 0.0
      %4078 = vmatprep.subr.mxu0 0.0
      %4079 = vmatpush1.msra.mxu0 0.0
      %4080 = vmatprep.subr.mxu0 0.0
      %4081 = vmatpush1.msra.mxu0 0.0
      %4082 = vmatprep.subr.mxu0 0.0
      %4083 = vmatpush1.msra.mxu0 0.0
      %4084 = vmatprep.subr.mxu0 0.0
      %4085 = vmatpush1.msra.mxu0 0.0
      %4086 = vmatprep.subr.mxu0 0.0
      %4087 = vmatpush1.msra.mxu0 0.0
      %4088 = vmatprep.subr.mxu0 0.0
      %4089 = vmatpush1.msra.mxu0 0.0
      %4090 = vmatprep.subr.mxu0 0.0
      %4091 = vmatpush1.msra.mxu0 0.0
      %4092 = vmatprep.subr.mxu0 0.0
      %4093 = vmatpush1.msra.mxu0 0.0
      %4094 = vmatprep.subr.mxu0 0.0
      %4095 = vmatpush1.msra.mxu0 0.0
      %4096 = vmatprep.subr.mxu0 0.0
      %4097 = vmatpush1.msra.mxu0 0.0
      %4098 = vmatprep.subr.mxu0 0.0
      %4099 = vmatpush1.msra.mxu0 0.0
      %4100 = vmatprep.subr.mxu0 0.0
      %4101 = vmatpush1.msra.mxu0 0.0
      %4102 = vmatprep.subr.mxu0 0.0
      %4103 = vmatpush1.msra.mxu0 0.0
      %4104 = vmatprep.subr.mxu0 0.0
      %4105 = vmatpush1.msra.mxu0 0.0
      %4106 = vmatprep.subr.mxu0 0.0
      %4107 = vmatpush1.msra.mxu0 0.0
      %4108 = vmatprep.subr.mxu0 0.0
      %4109 = vmatpush1.msra.mxu0 0.0
      %4110 = vmatprep.subr.mxu0 0.0
      %4111 = vmatpush1.msra.mxu0 0.0
      %4112 = vmatprep.subr.mxu0 0.0
      %4113 = vmatpush1.msra.mxu0 0.0
      %4114 = vmatprep.mubr.f32.mxu0 0.0
      %4115 = vmatmul.mubr.f32.gmra.mrb[0].mxu0 %v3949
      %v4116 = vpop.f32.mrb[0].mxu0
      %v4117 = vadd.f32 0.0, %v4116
      %v4118 = vpop.f32.mrb[0].mxu0
      %v4119 = vadd.f32 0.0, %v4118
      %4120 = vmatprep.mubr.f32.mxu0 0.0
      %4121 = vmatmul.mubr.f32.gmra.mrb[0].mxu0 %v3952
      %v4122 = vpop.f32.mrb[0].mxu0
      %v4123 = vadd.f32 0.0, %v4122
      %v4124 = vpop.f32.mrb[0].mxu0
      %v4125 = vadd.f32 0.0, %v4124
      %4126 = vmatprep.mubr.f32.mxu0 0.0
      %4127 = vmatmul.mubr.f32.gmra.mrb[0].mxu0 %v3955
      %v4128 = vpop.f32.mrb[0].mxu0
      %v4129 = vadd.f32 0.0, %v4128
      %v4130 = vpop.f32.mrb[0].mxu0
      %v4131 = vadd.f32 0.0, %v4130
      %4132 = vmatprep.mubr.f32.mxu0 0.0
      %4133 = vmatmul.mubr.f32.gmra.mrb[0].mxu0 %v3958
      %v4134 = vpop.f32.mrb[0].mxu0
      %v4135 = vadd.f32 0.0, %v4134
      %v4136 = vpop.f32.mrb[0].mxu0
      %v4137 = vadd.f32 0.0, %v4136
      %4138 = vmatprep.mubr.f32.mxu0 0.0
      %4139 = vmatmul.mubr.f32.gmra.mrb[0].mxu0 %v3961
      %v4140 = vpop.f32.mrb[0].mxu0
      %v4141 = vadd.f32 0.0, %v4140
      %v4142 = vpop.f32.mrb[0].mxu0
      %v4143 = vadd.f32 0.0, %v4142
      %4144 = vmatprep.mubr.f32.mxu0 0.0
      %4145 = vmatmul.mubr.f32.gmra.mrb[0].mxu0 %v3964
      %v4146 = vpop.f32.mrb[0].mxu0
      %v4147 = vadd.f32 0.0, %v4146
      %v4148 = vpop.f32.mrb[0].mxu0
      %v4149 = vadd.f32 0.0, %v4148
      %4150 = vmatprep.mubr.f32.mxu0 0.0
      %4151 = vmatmul.mubr.f32.gmra.mrb[0].mxu0 %v3967
      %v4152 = vpop.f32.mrb[0].mxu0
      %v4153 = vadd.f32 0.0, %v4152
      %v4154 = vpop.f32.mrb[0].mxu0
      %v4155 = vadd.f32 0.0, %v4154
      %4156 = vmatprep.mubr.f32.mxu0 0.0
      %4157 = vmatmul.mubr.f32.gmra.mrb[0].mxu0 %v3970
      %v4158 = vpop.f32.mrb[0].mxu0
      %v4159 = vadd.f32 0.0, %v4158
      %v4160 = vpop.f32.mrb[0].mxu0
      %v4161 = vadd.f32 0.0, %v4160
      %4162 = vmatprep.mubr.f32.mxu0 0.0
      %4163 = vmatmul.mubr.f32.gmra.mrb[0].mxu0 %v3973
      %v4164 = vpop.f32.mrb[0].mxu0
      %v4165 = vadd.f32 0.0, %v4164
      %v4166 = vpop.f32.mrb[0].mxu0
      %v4167 = vadd.f32 0.0, %v4166
      %4168 = vmatprep.mubr.f32.mxu0 0.0
      %4169 = vmatmul.mubr.f32.gmra.mrb[0].mxu0 %v3976
      %v4170 = vpop.f32.mrb[0].mxu0
      %v4171 = vadd.f32 0.0, %v4170
      %v4172 = vpop.f32.mrb[0].mxu0
      %v4173 = vadd.f32 0.0, %v4172
      %4174 = vmatprep.mubr.f32.mxu0 0.0
      %4175 = vmatmul.mubr.f32.gmra.mrb[0].mxu0 %v3979
      %v4176 = vpop.f32.mrb[0].mxu0
      %v4177 = vadd.f32 0.0, %v4176
      %v4178 = vpop.f32.mrb[0].mxu0
      %v4179 = vadd.f32 0.0, %v4178
      %4180 = vmatprep.mubr.f32.mxu0 0.0
      %4181 = vmatmul.mubr.f32.gmra.mrb[0].mxu0 %v3982
      %v4182 = vpop.f32.mrb[0].mxu0
      %v4183 = vadd.f32 0.0, %v4182
      %v4184 = vpop.f32.mrb[0].mxu0
      %v4185 = vadd.f32 0.0, %v4184
      %4186 = vmatprep.mubr.f32.mxu0 0.0
      %4187 = vmatmul.mubr.f32.gmra.mrb[0].mxu0 %v3985
      %v4188 = vpop.f32.mrb[0].mxu0
      %v4189 = vadd.f32 0.0, %v4188
      %v4190 = vpop.f32.mrb[0].mxu0
      %v4191 = vadd.f32 0.0, %v4190
      %4192 = vmatprep.mubr.f32.mxu0 0.0
      %4193 = vmatmul.mubr.f32.gmra.mrb[0].mxu0 %v3988
      %v4194 = vpop.f32.mrb[0].mxu0
      %v4195 = vadd.f32 0.0, %v4194
      %v4196 = vpop.f32.mrb[0].mxu0
      %v4197 = vadd.f32 0.0, %v4196
      %4198 = vmatprep.mubr.f32.mxu0 0.0
      %4199 = vmatmul.mubr.f32.gmra.mrb[0].mxu0 %v3991
      %v4200 = vpop.f32.mrb[0].mxu0
      %v4201 = vadd.f32 0.0, %v4200
      %v4202 = vpop.f32.mrb[0].mxu0
      %v4203 = vadd.f32 0.0, %v4202
      %4204 = vmatprep.mubr.f32.mxu0 0.0
      %4205 = vmatmul.mubr.f32.gmra.mrb[0].mxu0 %v3994
      %v4206 = vpop.f32.mrb[0].mxu0
      %v4207 = vadd.f32 0.0, %v4206
      %v4208 = vpop.f32.mrb[0].mxu0
      %v4209 = vadd.f32 0.0, %v4208
      %4210 = vmatprep.mubr.f32.mxu0 0.0
      %4211 = vmatmul.mubr.f32.gmra.mrb[0].mxu0 %v3997
      %v4212 = vpop.f32.mrb[0].mxu0
      %v4213 = vadd.f32 0.0, %v4212
      %v4214 = vpop.f32.mrb[0].mxu0
      %v4215 = vadd.f32 0.0, %v4214
      %4216 = vmatprep.mubr.f32.mxu0 0.0
      %4217 = vmatmul.mubr.f32.gmra.mrb[0].mxu0 %v4000
      %v4218 = vpop.f32.mrb[0].mxu0
      %v4219 = vadd.f32 0.0, %v4218
      %v4220 = vpop.f32.mrb[0].mxu0
      %v4221 = vadd.f32 0.0, %v4220
      %4222 = vmatprep.mubr.f32.mxu0 0.0
      %4223 = vmatmul.mubr.f32.gmra.mrb[0].mxu0 %v4003
      %v4224 = vpop.f32.mrb[0].mxu0
      %v4225 = vadd.f32 0.0, %v4224
      %v4226 = vpop.f32.mrb[0].mxu0
      %v4227 = vadd.f32 0.0, %v4226
      %4228 = vmatprep.mubr.f32.mxu0 0.0
      %4229 = vmatmul.mubr.f32.gmra.mrb[0].mxu0 %v4006
      %v4230 = vpop.f32.mrb[0].mxu0
      %v4231 = vadd.f32 0.0, %v4230
      %v4232 = vpop.f32.mrb[0].mxu0
      %v4233 = vadd.f32 0.0, %v4232
      %4234 = vmatprep.mubr.f32.mxu0 0.0
      %4235 = vmatmul.mubr.f32.gmra.mrb[0].mxu0 %v4009
      %v4236 = vpop.f32.mrb[0].mxu0
      %v4237 = vadd.f32 0.0, %v4236
      %v4238 = vpop.f32.mrb[0].mxu0
      %v4239 = vadd.f32 0.0, %v4238
      %4240 = vmatprep.mubr.f32.mxu0 0.0
      %4241 = vmatmul.mubr.f32.gmra.mrb[0].mxu0 %v4012
      %v4242 = vpop.f32.mrb[0].mxu0
      %v4243 = vadd.f32 0.0, %v4242
      %v4244 = vpop.f32.mrb[0].mxu0
      %v4245 = vadd.f32 0.0, %v4244
      %4246 = vmatprep.mubr.f32.mxu0 0.0
      %4247 = vmatmul.mubr.f32.gmra.mrb[0].mxu0 %v4015
      %v4248 = vpop.f32.mrb[0].mxu0
      %v4249 = vadd.f32 0.0, %v4248
      %v4250 = vpop.f32.mrb[0].mxu0
      %v4251 = vadd.f32 0.0, %v4250
      %4252 = vmatprep.mubr.f32.mxu0 0.0
      %4253 = vmatmul.mubr.f32.gmra.mrb[0].mxu0 %v4018
      %v4254 = vpop.f32.mrb[0].mxu0
      %v4255 = vadd.f32 0.0, %v4254
      %v4256 = vpop.f32.mrb[0].mxu0
      %v4257 = vadd.f32 0.0, %v4256
      %4258 = vmatprep.mubr.f32.mxu0 0.0
      %4259 = vmatmul.mubr.f32.gmra.mrb[0].mxu0 %v4021
      %v4260 = vpop.f32.mrb[0].mxu0
      %v4261 = vadd.f32 0.0, %v4260
      %v4262 = vpop.f32.mrb[0].mxu0
      %v4263 = vadd.f32 0.0, %v4262
      %4264 = vmatprep.mubr.f32.mxu0 0.0
      %4265 = vmatmul.mubr.f32.gmra.mrb[0].mxu0 %v4024
      %v4266 = vpop.f32.mrb[0].mxu0
      %v4267 = vadd.f32 0.0, %v4266
      %v4268 = vpop.f32.mrb[0].mxu0
      %v4269 = vadd.f32 0.0, %v4268
      %4270 = vmatprep.mubr.f32.mxu0 0.0
      %4271 = vmatmul.mubr.f32.gmra.mrb[0].mxu0 %v4027
      %v4272 = vpop.f32.mrb[0].mxu0
      %v4273 = vadd.f32 0.0, %v4272
      %v4274 = vpop.f32.mrb[0].mxu0
      %v4275 = vadd.f32 0.0, %v4274
      %4276 = vmatprep.mubr.f32.mxu0 0.0
      %4277 = vmatmul.mubr.f32.gmra.mrb[0].mxu0 %v4030
      %v4278 = vpop.f32.mrb[0].mxu0
      %v4279 = vadd.f32 0.0, %v4278
      %v4280 = vpop.f32.mrb[0].mxu0
      %v4281 = vadd.f32 0.0, %v4280
      %4282 = vmatprep.mubr.f32.mxu0 0.0
      %4283 = vmatmul.mubr.f32.gmra.mrb[0].mxu0 %v4033
      %v4284 = vpop.f32.mrb[0].mxu0
      %v4285 = vadd.f32 0.0, %v4284
      %v4286 = vpop.f32.mrb[0].mxu0
      %v4287 = vadd.f32 0.0, %v4286
      %4288 = vmatprep.mubr.f32.mxu0 0.0
      %4289 = vmatmul.mubr.f32.gmra.mrb[0].mxu0 %v4036
      %v4290 = vpop.f32.mrb[0].mxu0
      %v4291 = vadd.f32 0.0, %v4290
      %v4292 = vpop.f32.mrb[0].mxu0
      %v4293 = vadd.f32 0.0, %v4292
      %4294 = vmatprep.mubr.f32.mxu0 0.0
      %4295 = vmatmul.mubr.f32.gmra.mrb[0].mxu0 %v4039
      %v4296 = vpop.f32.mrb[0].mxu0
      %v4297 = vadd.f32 0.0, %v4296
      %v4298 = vpop.f32.mrb[0].mxu0
      %v4299 = vadd.f32 0.0, %v4298
      %4300 = vmatprep.mubr.f32.mxu0 0.0
      %4301 = vmatmul.mubr.f32.gmra.mrb[0].mxu0 %v4042
      %v4302 = vpop.f32.mrb[0].mxu0
      %v4303 = vadd.f32 0.0, %v4302
      %v4304 = vpop.f32.mrb[0].mxu0
      %v4305 = vadd.f32 0.0, %v4304
      %4306 = vdwg.mxu0
      %4307 = vst [vmem:[#allocation4] sm:$0xff] %v4117
      %4308 = vst [vmem:[#allocation4 + $0x8] sm:$0xff] %v4119
      %4309 = vst [vmem:[#allocation4 + $0x10] sm:$0xff] %v4123
      %4310 = vst [vmem:[#allocation4 + $0x18] sm:$0xff] %v4125
      %4311 = vst [vmem:[#allocation4 + $0x20] sm:$0xff] %v4129
      %4312 = vst [vmem:[#allocation4 + $0x28] sm:$0xff] %v4131
      %4313 = vst [vmem:[#allocation4 + $0x30] sm:$0xff] %v4135
      %4314 = vst [vmem:[#allocation4 + $0x38] sm:$0xff] %v4137
      %4315 = vst [vmem:[#allocation4 + $0x40] sm:$0xff] %v4141
      %4316 = vst [vmem:[#allocation4 + $0x48] sm:$0xff] %v4143
      %4317 = vst [vmem:[#allocation4 + $0x50] sm:$0xff] %v4147
      %4318 = vst [vmem:[#allocation4 + $0x58] sm:$0xff] %v4149
      %4319 = vst [vmem:[#allocation4 + $0x60] sm:$0xff] %v4153
      %4320 = vst [vmem:[#allocation4 + $0x68] sm:$0xff] %v4155
      %4321 = vst [vmem:[#allocation4 + $0x70] sm:$0xff] %v4159
      %4322 = vst [vmem:[#allocation4 + $0x78] sm:$0xff] %v4161
      %4323 = vst [vmem:[#allocation4 + $0x80] sm:$0xff] %v4165
      %4324 = vst [vmem:[#allocation4 + $0x88] sm:$0xff] %v4167
      %4325 = vst [vmem:[#allocation4 + $0x90] sm:$0xff] %v4171
      %4326 = vst [vmem:[#allocation4 + $0x98] sm:$0xff] %v4173
      %4327 = vst [vmem:[#allocation4 + $0xa0] sm:$0xff] %v4177
      %4328 = vst [vmem:[#allocation4 + $0xa8] sm:$0xff] %v4179
      %4329 = vst [vmem:[#allocation4 + $0xb0] sm:$0xff] %v4183
      %4330 = vst [vmem:[#allocation4 + $0xb8] sm:$0xff] %v4185
      %4331 = vst [vmem:[#allocation4 + $0xc0] sm:$0xff] %v4189
      %4332 = vst [vmem:[#allocation4 + $0xc8] sm:$0xff] %v4191
      %4333 = vst [vmem:[#allocation4 + $0xd0] sm:$0xff] %v4195
      %4334 = vst [vmem:[#allocation4 + $0xd8] sm:$0xff] %v4197
      %4335 = vst [vmem:[#allocation4 + $0xe0] sm:$0xff] %v4201
      %4336 = vst [vmem:[#allocation4 + $0xe8] sm:$0xff] %v4203
      %4337 = vst [vmem:[#allocation4 + $0xf0] sm:$0xff] %v4207
      %4338 = vst [vmem:[#allocation4 + $0xf8] sm:$0xff] %v4209
      %4339 = vst [vmem:[#allocation4 + $0x100] sm:$0xff] %v4213
      %4340 = vst [vmem:[#allocation4 + $0x108] sm:$0xff] %v4215
      %4341 = vst [vmem:[#allocation4 + $0x110] sm:$0xff] %v4219
      %4342 = vst [vmem:[#allocation4 + $0x118] sm:$0xff] %v4221
      %4343 = vst [vmem:[#allocation4 + $0x120] sm:$0xff] %v4225
      %4344 = vst [vmem:[#allocation4 + $0x128] sm:$0xff] %v4227
      %4345 = vst [vmem:[#allocation4 + $0x130] sm:$0xff] %v4231
      %4346 = vst [vmem:[#allocation4 + $0x138] sm:$0xff] %v4233
      %4347 = vst [vmem:[#allocation4 + $0x140] sm:$0xff] %v4237
      %4348 = vst [vmem:[#allocation4 + $0x148] sm:$0xff] %v4239
      %4349 = vst [vmem:[#allocation4 + $0x150] sm:$0xff] %v4243
      %4350 = vst [vmem:[#allocation4 + $0x158] sm:$0xff] %v4245
      %4351 = vst [vmem:[#allocation4 + $0x160] sm:$0xff] %v4249
      %4352 = vst [vmem:[#allocation4 + $0x168] sm:$0xff] %v4251
      %4353 = vst [vmem:[#allocation4 + $0x170] sm:$0xff] %v4255
      %4354 = vst [vmem:[#allocation4 + $0x178] sm:$0xff] %v4257
      %4355 = vst [vmem:[#allocation4 + $0x180] sm:$0xff] %v4261
      %4356 = vst [vmem:[#allocation4 + $0x188] sm:$0xff] %v4263
      %4357 = vst [vmem:[#allocation4 + $0x190] sm:$0xff] %v4267
      %4358 = vst [vmem:[#allocation4 + $0x198] sm:$0xff] %v4269
      %4359 = vst [vmem:[#allocation4 + $0x1a0] sm:$0xff] %v4273
      %4360 = vst [vmem:[#allocation4 + $0x1a8] sm:$0xff] %v4275
      %4361 = vst [vmem:[#allocation4 + $0x1b0] sm:$0xff] %v4279
      %4362 = vst [vmem:[#allocation4 + $0x1b8] sm:$0xff] %v4281
      %4363 = vst [vmem:[#allocation4 + $0x1c0] sm:$0xff] %v4285
      %4364 = vst [vmem:[#allocation4 + $0x1c8] sm:$0xff] %v4287
      %4365 = vst [vmem:[#allocation4 + $0x1d0] sm:$0xff] %v4291
      %4366 = vst [vmem:[#allocation4 + $0x1d8] sm:$0xff] %v4293
      %4367 = vst [vmem:[#allocation4 + $0x1e0] sm:$0xff] %v4297
      %4368 = vst [vmem:[#allocation4 + $0x1e8] sm:$0xff] %v4299
      %4369 = vst [vmem:[#allocation4 + $0x1f0] sm:$0xff] %v4303
      %4370 = vst [vmem:[#allocation4 + $0x1f8] sm:$0xff] %v4305
      %v4371 = vld [vmem:[#allocation3 + $0x40] sm:$0xf]
      %v4372 = vld [vmem:[#allocation3 + $0x48] sm:$0xf]
      %v4373 = vsel %vm1088, %v4371, 0.0
      %v4374 = vsel %vm1088, %v4372, 0.0
      %v4375 = vadd.f32 %v4373, %v4374
      %4376 = vadd.xlane.f32.xlu0 %v4375
      %v4377 = vpop.xlane.xlu0 %4376
      %v4378 = vld [vmem:[#allocation3 + $0x70] sm:$0x3]
      %v4379 = vld [vmem:[#allocation3 + $0x78] sm:$0x3]
      %v4380 = vld [vmem:[#allocation3 + $0x80] sm:$0x3]
      %v4381 = vld [vmem:[#allocation3 + $0x88] sm:$0x3]
      %4382 = vxpose.xlu0.b32.start [1/16] %v4378, 128
      %4383 = vxpose.xlu0.b32.cont [2/16] 0.0, 128
      %4384 = vxpose.xlu0.b32.cont [3/16] 0.0, 128
      %4385 = vxpose.xlu0.b32.cont [4/16] 0.0, 128
      %4386 = vxpose.xlu0.b32.cont [5/16] 0.0, 128
      %4387 = vxpose.xlu0.b32.cont [6/16] 0.0, 128
      %4388 = vxpose.xlu0.b32.cont [7/16] 0.0, 128
      %4389 = vxpose.xlu0.b32.cont [8/16] 0.0, 128
      %4390 = vxpose.xlu0.b32.cont [9/16] 0.0, 128
      %4391 = vxpose.xlu0.b32.cont [10/16] 0.0, 128
      %4392 = vxpose.xlu0.b32.cont [11/16] 0.0, 128
      %4393 = vxpose.xlu0.b32.cont [12/16] 0.0, 128
      %4394 = vxpose.xlu0.b32.cont [13/16] 0.0, 128
      %4395 = vxpose.xlu0.b32.cont [14/16] 0.0, 128
      %4396 = vxpose.xlu0.b32.cont [15/16] 0.0, 128
      %4397 = vxpose.xlu0.b32.end [16/16] 0.0, 128
      %v4398 = vpop.trf.xlu0
      %v4399 = vpop.trf.xlu0
      %v4400 = vpop.trf.xlu0
      %v4401 = vpop.trf.xlu0
      %v4402 = vpop.trf.xlu0
      %v4403 = vpop.trf.xlu0
      %v4404 = vpop.trf.xlu0
      %v4405 = vpop.trf.xlu0
      %v4406 = vpop.trf.xlu0
      %v4407 = vpop.trf.xlu0
      %v4408 = vpop.trf.xlu0
      %v4409 = vpop.trf.xlu0
      %v4410 = vpop.trf.xlu0
      %v4411 = vpop.trf.xlu0
      %v4412 = vpop.trf.xlu0
      %v4413 = vpop.trf.xlu0
      %4414 = vxpose.xlu0.b32.start [1/16] %v4379, 128
      %4415 = vxpose.xlu0.b32.cont [2/16] 0.0, 128
      %4416 = vxpose.xlu0.b32.cont [3/16] 0.0, 128
      %4417 = vxpose.xlu0.b32.cont [4/16] 0.0, 128
      %4418 = vxpose.xlu0.b32.cont [5/16] 0.0, 128
      %4419 = vxpose.xlu0.b32.cont [6/16] 0.0, 128
      %4420 = vxpose.xlu0.b32.cont [7/16] 0.0, 128
      %4421 = vxpose.xlu0.b32.cont [8/16] 0.0, 128
      %4422 = vxpose.xlu0.b32.cont [9/16] 0.0, 128
      %4423 = vxpose.xlu0.b32.cont [10/16] 0.0, 128
      %4424 = vxpose.xlu0.b32.cont [11/16] 0.0, 128
      %4425 = vxpose.xlu0.b32.cont [12/16] 0.0, 128
      %4426 = vxpose.xlu0.b32.cont [13/16] 0.0, 128
      %4427 = vxpose.xlu0.b32.cont [14/16] 0.0, 128
      %4428 = vxpose.xlu0.b32.cont [15/16] 0.0, 128
      %4429 = vxpose.xlu0.b32.end [16/16] 0.0, 128
      %v4430 = vpop.trf.xlu0
      %v4431 = vpop.trf.xlu0
      %v4432 = vpop.trf.xlu0
      %v4433 = vpop.trf.xlu0
      %v4434 = vpop.trf.xlu0
      %v4435 = vpop.trf.xlu0
      %v4436 = vpop.trf.xlu0
      %v4437 = vpop.trf.xlu0
      %v4438 = vpop.trf.xlu0
      %v4439 = vpop.trf.xlu0
      %v4440 = vpop.trf.xlu0
      %v4441 = vpop.trf.xlu0
      %v4442 = vpop.trf.xlu0
      %v4443 = vpop.trf.xlu0
      %v4444 = vpop.trf.xlu0
      %v4445 = vpop.trf.xlu0
      %v4447 = vsel %vm661, %v4398, 0
      %v4450 = vsel %vm661, %v4399, 0
      %v4453 = vsel %vm661, %v4400, 0
      %v4456 = vsel %vm661, %v4401, 0
      %v4459 = vsel %vm661, %v4402, 0
      %v4462 = vsel %vm661, %v4403, 0
      %v4465 = vsel %vm661, %v4404, 0
      %v4468 = vsel %vm661, %v4405, 0
      %v4471 = vsel %vm661, %v4406, 0
      %v4474 = vsel %vm661, %v4407, 0
      %v4477 = vsel %vm661, %v4408, 0
      %v4480 = vsel %vm661, %v4409, 0
      %v4483 = vsel %vm661, %v4410, 0
      %v4486 = vsel %vm661, %v4411, 0
      %v4489 = vsel %vm661, %v4412, 0
      %v4492 = vsel %vm661, %v4413, 0
      %v4495 = vsel %vm661, %v4430, 0
      %v4498 = vsel %vm661, %v4431, 0
      %v4501 = vsel %vm661, %v4432, 0
      %v4504 = vsel %vm661, %v4433, 0
      %v4507 = vsel %vm661, %v4434, 0
      %v4510 = vsel %vm661, %v4435, 0
      %v4513 = vsel %vm661, %v4436, 0
      %v4516 = vsel %vm661, %v4437, 0
      %v4519 = vsel %vm661, %v4438, 0
      %v4522 = vsel %vm661, %v4439, 0
      %v4525 = vsel %vm661, %v4440, 0
      %v4528 = vsel %vm661, %v4441, 0
      %v4531 = vsel %vm661, %v4442, 0
      %v4534 = vsel %vm661, %v4443, 0
      %v4537 = vsel %vm661, %v4444, 0
      %v4540 = vsel %vm661, %v4445, 0
      %v4543 = vsel %vm758, %v4380, 0
      %v4546 = vsel %vm758, %v4381, 0
      %4548 = vmatprep.subr.mxu0 %v4546
      %4549 = vmatpush1.msra.mxu0 %v4543
      %4550 = vmatprep.subr.mxu0 0.0
      %4551 = vmatpush1.msra.mxu0 0.0
      %4552 = vmatprep.subr.mxu0 0.0
      %4553 = vmatpush1.msra.mxu0 0.0
      %4554 = vmatprep.subr.mxu0 0.0
      %4555 = vmatpush1.msra.mxu0 0.0
      %4556 = vmatprep.subr.mxu0 0.0
      %4557 = vmatpush1.msra.mxu0 0.0
      %4558 = vmatprep.subr.mxu0 0.0
      %4559 = vmatpush1.msra.mxu0 0.0
      %4560 = vmatprep.subr.mxu0 0.0
      %4561 = vmatpush1.msra.mxu0 0.0
      %4562 = vmatprep.subr.mxu0 0.0
      %4563 = vmatpush1.msra.mxu0 0.0
      %4564 = vmatprep.subr.mxu0 0.0
      %4565 = vmatpush1.msra.mxu0 0.0
      %4566 = vmatprep.subr.mxu0 0.0
      %4567 = vmatpush1.msra.mxu0 0.0
      %4568 = vmatprep.subr.mxu0 0.0
      %4569 = vmatpush1.msra.mxu0 0.0
      %4570 = vmatprep.subr.mxu0 0.0
      %4571 = vmatpush1.msra.mxu0 0.0
      %4572 = vmatprep.subr.mxu0 0.0
      %4573 = vmatpush1.msra.mxu0 0.0
      %4574 = vmatprep.subr.mxu0 0.0
      %4575 = vmatpush1.msra.mxu0 0.0
      %4576 = vmatprep.subr.mxu0 0.0
      %4577 = vmatpush1.msra.mxu0 0.0
      %4578 = vmatprep.subr.mxu0 0.0
      %4579 = vmatpush1.msra.mxu0 0.0
      %4580 = vmatprep.subr.mxu0 0.0
      %4581 = vmatpush1.msra.mxu0 0.0
      %4582 = vmatprep.subr.mxu0 0.0
      %4583 = vmatpush1.msra.mxu0 0.0
      %4584 = vmatprep.subr.mxu0 0.0
      %4585 = vmatpush1.msra.mxu0 0.0
      %4586 = vmatprep.subr.mxu0 0.0
      %4587 = vmatpush1.msra.mxu0 0.0
      %4588 = vmatprep.subr.mxu0 0.0
      %4589 = vmatpush1.msra.mxu0 0.0
      %4590 = vmatprep.subr.mxu0 0.0
      %4591 = vmatpush1.msra.mxu0 0.0
      %4592 = vmatprep.subr.mxu0 0.0
      %4593 = vmatpush1.msra.mxu0 0.0
      %4594 = vmatprep.subr.mxu0 0.0
      %4595 = vmatpush1.msra.mxu0 0.0
      %4596 = vmatprep.subr.mxu0 0.0
      %4597 = vmatpush1.msra.mxu0 0.0
      %4598 = vmatprep.subr.mxu0 0.0
      %4599 = vmatpush1.msra.mxu0 0.0
      %4600 = vmatprep.subr.mxu0 0.0
      %4601 = vmatpush1.msra.mxu0 0.0
      %4602 = vmatprep.subr.mxu0 0.0
      %4603 = vmatpush1.msra.mxu0 0.0
      %4604 = vmatprep.subr.mxu0 0.0
      %4605 = vmatpush1.msra.mxu0 0.0
      %4606 = vmatprep.subr.mxu0 0.0
      %4607 = vmatpush1.msra.mxu0 0.0
      %4608 = vmatprep.subr.mxu0 0.0
      %4609 = vmatpush1.msra.mxu0 0.0
      %4610 = vmatprep.subr.mxu0 0.0
      %4611 = vmatpush1.msra.mxu0 0.0
      %4612 = vmatprep.mubr.f32.mxu0 0.0
      %4613 = vmatmul.mubr.f32.gmra.mrb[0].mxu0 %v4447
      %v4614 = vpop.f32.mrb[0].mxu0
      %v4615 = vadd.f32 0.0, %v4614
      %v4616 = vpop.f32.mrb[0].mxu0
      %v4617 = vadd.f32 0.0, %v4616
      %4618 = vmatprep.mubr.f32.mxu0 0.0
      %4619 = vmatmul.mubr.f32.gmra.mrb[0].mxu0 %v4450
      %v4620 = vpop.f32.mrb[0].mxu0
      %v4621 = vadd.f32 0.0, %v4620
      %v4622 = vpop.f32.mrb[0].mxu0
      %v4623 = vadd.f32 0.0, %v4622
      %4624 = vmatprep.mubr.f32.mxu0 0.0
      %4625 = vmatmul.mubr.f32.gmra.mrb[0].mxu0 %v4453
      %v4626 = vpop.f32.mrb[0].mxu0
      %v4627 = vadd.f32 0.0, %v4626
      %v4628 = vpop.f32.mrb[0].mxu0
      %v4629 = vadd.f32 0.0, %v4628
      %4630 = vmatprep.mubr.f32.mxu0 0.0
      %4631 = vmatmul.mubr.f32.gmra.mrb[0].mxu0 %v4456
      %v4632 = vpop.f32.mrb[0].mxu0
      %v4633 = vadd.f32 0.0, %v4632
      %v4634 = vpop.f32.mrb[0].mxu0
      %v4635 = vadd.f32 0.0, %v4634
      %4636 = vmatprep.mubr.f32.mxu0 0.0
      %4637 = vmatmul.mubr.f32.gmra.mrb[0].mxu0 %v4459
      %v4638 = vpop.f32.mrb[0].mxu0
      %v4639 = vadd.f32 0.0, %v4638
      %v4640 = vpop.f32.mrb[0].mxu0
      %v4641 = vadd.f32 0.0, %v4640
      %4642 = vmatprep.mubr.f32.mxu0 0.0
      %4643 = vmatmul.mubr.f32.gmra.mrb[0].mxu0 %v4462
      %v4644 = vpop.f32.mrb[0].mxu0
      %v4645 = vadd.f32 0.0, %v4644
      %v4646 = vpop.f32.mrb[0].mxu0
      %v4647 = vadd.f32 0.0, %v4646
      %4648 = vmatprep.mubr.f32.mxu0 0.0
      %4649 = vmatmul.mubr.f32.gmra.mrb[0].mxu0 %v4465
      %v4650 = vpop.f32.mrb[0].mxu0
      %v4651 = vadd.f32 0.0, %v4650
      %v4652 = vpop.f32.mrb[0].mxu0
      %v4653 = vadd.f32 0.0, %v4652
      %4654 = vmatprep.mubr.f32.mxu0 0.0
      %4655 = vmatmul.mubr.f32.gmra.mrb[0].mxu0 %v4468
      %v4656 = vpop.f32.mrb[0].mxu0
      %v4657 = vadd.f32 0.0, %v4656
      %v4658 = vpop.f32.mrb[0].mxu0
      %v4659 = vadd.f32 0.0, %v4658
      %4660 = vmatprep.mubr.f32.mxu0 0.0
      %4661 = vmatmul.mubr.f32.gmra.mrb[0].mxu0 %v4471
      %v4662 = vpop.f32.mrb[0].mxu0
      %v4663 = vadd.f32 0.0, %v4662
      %v4664 = vpop.f32.mrb[0].mxu0
      %v4665 = vadd.f32 0.0, %v4664
      %4666 = vmatprep.mubr.f32.mxu0 0.0
      %4667 = vmatmul.mubr.f32.gmra.mrb[0].mxu0 %v4474
      %v4668 = vpop.f32.mrb[0].mxu0
      %v4669 = vadd.f32 0.0, %v4668
      %v4670 = vpop.f32.mrb[0].mxu0
      %v4671 = vadd.f32 0.0, %v4670
      %4672 = vmatprep.mubr.f32.mxu0 0.0
      %4673 = vmatmul.mubr.f32.gmra.mrb[0].mxu0 %v4477
      %v4674 = vpop.f32.mrb[0].mxu0
      %v4675 = vadd.f32 0.0, %v4674
      %v4676 = vpop.f32.mrb[0].mxu0
      %v4677 = vadd.f32 0.0, %v4676
      %4678 = vmatprep.mubr.f32.mxu0 0.0
      %4679 = vmatmul.mubr.f32.gmra.mrb[0].mxu0 %v4480
      %v4680 = vpop.f32.mrb[0].mxu0
      %v4681 = vadd.f32 0.0, %v4680
      %v4682 = vpop.f32.mrb[0].mxu0
      %v4683 = vadd.f32 0.0, %v4682
      %4684 = vmatprep.mubr.f32.mxu0 0.0
      %4685 = vmatmul.mubr.f32.gmra.mrb[0].mxu0 %v4483
      %v4686 = vpop.f32.mrb[0].mxu0
      %v4687 = vadd.f32 0.0, %v4686
      %v4688 = vpop.f32.mrb[0].mxu0
      %v4689 = vadd.f32 0.0, %v4688
      %4690 = vmatprep.mubr.f32.mxu0 0.0
      %4691 = vmatmul.mubr.f32.gmra.mrb[0].mxu0 %v4486
      %v4692 = vpop.f32.mrb[0].mxu0
      %v4693 = vadd.f32 0.0, %v4692
      %v4694 = vpop.f32.mrb[0].mxu0
      %v4695 = vadd.f32 0.0, %v4694
      %4696 = vmatprep.mubr.f32.mxu0 0.0
      %4697 = vmatmul.mubr.f32.gmra.mrb[0].mxu0 %v4489
      %v4698 = vpop.f32.mrb[0].mxu0
      %v4699 = vadd.f32 0.0, %v4698
      %v4700 = vpop.f32.mrb[0].mxu0
      %v4701 = vadd.f32 0.0, %v4700
      %4702 = vmatprep.mubr.f32.mxu0 0.0
      %4703 = vmatmul.mubr.f32.gmra.mrb[0].mxu0 %v4492
      %v4704 = vpop.f32.mrb[0].mxu0
      %v4705 = vadd.f32 0.0, %v4704
      %v4706 = vpop.f32.mrb[0].mxu0
      %v4707 = vadd.f32 0.0, %v4706
      %4708 = vmatprep.mubr.f32.mxu0 0.0
      %4709 = vmatmul.mubr.f32.gmra.mrb[0].mxu0 %v4495
      %v4710 = vpop.f32.mrb[0].mxu0
      %v4711 = vadd.f32 0.0, %v4710
      %v4712 = vpop.f32.mrb[0].mxu0
      %v4713 = vadd.f32 0.0, %v4712
      %4714 = vmatprep.mubr.f32.mxu0 0.0
      %4715 = vmatmul.mubr.f32.gmra.mrb[0].mxu0 %v4498
      %v4716 = vpop.f32.mrb[0].mxu0
      %v4717 = vadd.f32 0.0, %v4716
      %v4718 = vpop.f32.mrb[0].mxu0
      %v4719 = vadd.f32 0.0, %v4718
      %4720 = vmatprep.mubr.f32.mxu0 0.0
      %4721 = vmatmul.mubr.f32.gmra.mrb[0].mxu0 %v4501
      %v4722 = vpop.f32.mrb[0].mxu0
      %v4723 = vadd.f32 0.0, %v4722
      %v4724 = vpop.f32.mrb[0].mxu0
      %v4725 = vadd.f32 0.0, %v4724
      %4726 = vmatprep.mubr.f32.mxu0 0.0
      %4727 = vmatmul.mubr.f32.gmra.mrb[0].mxu0 %v4504
      %v4728 = vpop.f32.mrb[0].mxu0
      %v4729 = vadd.f32 0.0, %v4728
      %v4730 = vpop.f32.mrb[0].mxu0
      %v4731 = vadd.f32 0.0, %v4730
      %4732 = vmatprep.mubr.f32.mxu0 0.0
      %4733 = vmatmul.mubr.f32.gmra.mrb[0].mxu0 %v4507
      %v4734 = vpop.f32.mrb[0].mxu0
      %v4735 = vadd.f32 0.0, %v4734
      %v4736 = vpop.f32.mrb[0].mxu0
      %v4737 = vadd.f32 0.0, %v4736
      %4738 = vmatprep.mubr.f32.mxu0 0.0
      %4739 = vmatmul.mubr.f32.gmra.mrb[0].mxu0 %v4510
      %v4740 = vpop.f32.mrb[0].mxu0
      %v4741 = vadd.f32 0.0, %v4740
      %v4742 = vpop.f32.mrb[0].mxu0
      %v4743 = vadd.f32 0.0, %v4742
      %4744 = vmatprep.mubr.f32.mxu0 0.0
      %4745 = vmatmul.mubr.f32.gmra.mrb[0].mxu0 %v4513
      %v4746 = vpop.f32.mrb[0].mxu0
      %v4747 = vadd.f32 0.0, %v4746
      %v4748 = vpop.f32.mrb[0].mxu0
      %v4749 = vadd.f32 0.0, %v4748
      %4750 = vmatprep.mubr.f32.mxu0 0.0
      %4751 = vmatmul.mubr.f32.gmra.mrb[0].mxu0 %v4516
      %v4752 = vpop.f32.mrb[0].mxu0
      %v4753 = vadd.f32 0.0, %v4752
      %v4754 = vpop.f32.mrb[0].mxu0
      %v4755 = vadd.f32 0.0, %v4754
      %4756 = vmatprep.mubr.f32.mxu0 0.0
      %4757 = vmatmul.mubr.f32.gmra.mrb[0].mxu0 %v4519
      %v4758 = vpop.f32.mrb[0].mxu0
      %v4759 = vadd.f32 0.0, %v4758
      %v4760 = vpop.f32.mrb[0].mxu0
      %v4761 = vadd.f32 0.0, %v4760
      %4762 = vmatprep.mubr.f32.mxu0 0.0
      %4763 = vmatmul.mubr.f32.gmra.mrb[0].mxu0 %v4522
      %v4764 = vpop.f32.mrb[0].mxu0
      %v4765 = vadd.f32 0.0, %v4764
      %v4766 = vpop.f32.mrb[0].mxu0
      %v4767 = vadd.f32 0.0, %v4766
      %4768 = vmatprep.mubr.f32.mxu0 0.0
      %4769 = vmatmul.mubr.f32.gmra.mrb[0].mxu0 %v4525
      %v4770 = vpop.f32.mrb[0].mxu0
      %v4771 = vadd.f32 0.0, %v4770
      %v4772 = vpop.f32.mrb[0].mxu0
      %v4773 = vadd.f32 0.0, %v4772
      %4774 = vmatprep.mubr.f32.mxu0 0.0
      %4775 = vmatmul.mubr.f32.gmra.mrb[0].mxu0 %v4528
      %v4776 = vpop.f32.mrb[0].mxu0
      %v4777 = vadd.f32 0.0, %v4776
      %v4778 = vpop.f32.mrb[0].mxu0
      %v4779 = vadd.f32 0.0, %v4778
      %4780 = vmatprep.mubr.f32.mxu0 0.0
      %4781 = vmatmul.mubr.f32.gmra.mrb[0].mxu0 %v4531
      %v4782 = vpop.f32.mrb[0].mxu0
      %v4783 = vadd.f32 0.0, %v4782
      %v4784 = vpop.f32.mrb[0].mxu0
      %v4785 = vadd.f32 0.0, %v4784
      %4786 = vmatprep.mubr.f32.mxu0 0.0
      %4787 = vmatmul.mubr.f32.gmra.mrb[0].mxu0 %v4534
      %v4788 = vpop.f32.mrb[0].mxu0
      %v4789 = vadd.f32 0.0, %v4788
      %v4790 = vpop.f32.mrb[0].mxu0
      %v4791 = vadd.f32 0.0, %v4790
      %4792 = vmatprep.mubr.f32.mxu0 0.0
      %4793 = vmatmul.mubr.f32.gmra.mrb[0].mxu0 %v4537
      %v4794 = vpop.f32.mrb[0].mxu0
      %v4795 = vadd.f32 0.0, %v4794
      %v4796 = vpop.f32.mrb[0].mxu0
      %v4797 = vadd.f32 0.0, %v4796
      %4798 = vmatprep.mubr.f32.mxu0 0.0
      %4799 = vmatmul.mubr.f32.gmra.mrb[0].mxu0 %v4540
      %v4800 = vpop.f32.mrb[0].mxu0
      %v4801 = vadd.f32 0.0, %v4800
      %v4802 = vpop.f32.mrb[0].mxu0
      %v4803 = vadd.f32 0.0, %v4802
      %4804 = vdwg.mxu0
      %4805 = vst [vmem:[%s1521] sm:$0xff] %v4615
      %4806 = vst [vmem:[%s1521 + $0x8] sm:$0xff] %v4617
      %4807 = vst [vmem:[%s1521 + $0x10] sm:$0xff] %v4621
      %4808 = vst [vmem:[%s1521 + $0x18] sm:$0xff] %v4623
      %4809 = vst [vmem:[%s1521 + $0x20] sm:$0xff] %v4627
      %4810 = vst [vmem:[%s1521 + $0x28] sm:$0xff] %v4629
      %4811 = vst [vmem:[%s1521 + $0x30] sm:$0xff] %v4633
      %4812 = vst [vmem:[%s1521 + $0x38] sm:$0xff] %v4635
      %4813 = vst [vmem:[%s1521 + $0x40] sm:$0xff] %v4639
      %4814 = vst [vmem:[%s1521 + $0x48] sm:$0xff] %v4641
      %4815 = vst [vmem:[%s1521 + $0x50] sm:$0xff] %v4645
      %4816 = vst [vmem:[%s1521 + $0x58] sm:$0xff] %v4647
      %4817 = vst [vmem:[%s1521 + $0x60] sm:$0xff] %v4651
      %4818 = vst [vmem:[%s1521 + $0x68] sm:$0xff] %v4653
      %4819 = vst [vmem:[%s1521 + $0x70] sm:$0xff] %v4657
      %4820 = vst [vmem:[%s1521 + $0x78] sm:$0xff] %v4659
      %4821 = vst [vmem:[%s1521 + $0x80] sm:$0xff] %v4663
      %4822 = vst [vmem:[%s1521 + $0x88] sm:$0xff] %v4665
      %4823 = vst [vmem:[%s1521 + $0x90] sm:$0xff] %v4669
      %4824 = vst [vmem:[%s1521 + $0x98] sm:$0xff] %v4671
      %4825 = vst [vmem:[%s1521 + $0xa0] sm:$0xff] %v4675
      %4826 = vst [vmem:[%s1521 + $0xa8] sm:$0xff] %v4677
      %4827 = vst [vmem:[%s1521 + $0xb0] sm:$0xff] %v4681
      %4828 = vst [vmem:[%s1521 + $0xb8] sm:$0xff] %v4683
      %4829 = vst [vmem:[%s1521 + $0xc0] sm:$0xff] %v4687
      %4830 = vst [vmem:[%s1521 + $0xc8] sm:$0xff] %v4689
      %4831 = vst [vmem:[%s1521 + $0xd0] sm:$0xff] %v4693
      %4832 = vst [vmem:[%s1521 + $0xd8] sm:$0xff] %v4695
      %4833 = vst [vmem:[%s1521 + $0xe0] sm:$0xff] %v4699
      %4834 = vst [vmem:[%s1521 + $0xe8] sm:$0xff] %v4701
      %4835 = vst [vmem:[%s1521 + $0xf0] sm:$0xff] %v4705
      %4836 = vst [vmem:[%s1521 + $0xf8] sm:$0xff] %v4707
      %4837 = vst [vmem:[%s1521 + $0x100] sm:$0xff] %v4711
      %4838 = vst [vmem:[%s1521 + $0x108] sm:$0xff] %v4713
      %4839 = vst [vmem:[%s1521 + $0x110] sm:$0xff] %v4717
      %4840 = vst [vmem:[%s1521 + $0x118] sm:$0xff] %v4719
      %4841 = vst [vmem:[%s1521 + $0x120] sm:$0xff] %v4723
      %4842 = vst [vmem:[%s1521 + $0x128] sm:$0xff] %v4725
      %4843 = vst [vmem:[%s1521 + $0x130] sm:$0xff] %v4729
      %4844 = vst [vmem:[%s1521 + $0x138] sm:$0xff] %v4731
      %4845 = vst [vmem:[%s1521 + $0x140] sm:$0xff] %v4735
      %4846 = vst [vmem:[%s1521 + $0x148] sm:$0xff] %v4737
      %4847 = vst [vmem:[%s1521 + $0x150] sm:$0xff] %v4741
      %4848 = vst [vmem:[%s1521 + $0x158] sm:$0xff] %v4743
      %4849 = vst [vmem:[%s1521 + $0x160] sm:$0xff] %v4747
      %4850 = vst [vmem:[%s1521 + $0x168] sm:$0xff] %v4749
      %4851 = vst [vmem:[%s1521 + $0x170] sm:$0xff] %v4753
      %4852 = vst [vmem:[%s1521 + $0x178] sm:$0xff] %v4755
      %4853 = vst [vmem:[%s1521 + $0x180] sm:$0xff] %v4759
      %4854 = vst [vmem:[%s1521 + $0x188] sm:$0xff] %v4761
      %4855 = vst [vmem:[%s1521 + $0x190] sm:$0xff] %v4765
      %4856 = vst [vmem:[%s1521 + $0x198] sm:$0xff] %v4767
      %4857 = vst [vmem:[%s1521 + $0x1a0] sm:$0xff] %v4771
      %4858 = vst [vmem:[%s1521 + $0x1a8] sm:$0xff] %v4773
      %4859 = vst [vmem:[%s1521 + $0x1b0] sm:$0xff] %v4777
      %4860 = vst [vmem:[%s1521 + $0x1b8] sm:$0xff] %v4779
      %4861 = vst [vmem:[%s1521 + $0x1c0] sm:$0xff] %v4783
      %4862 = vst [vmem:[%s1521 + $0x1c8] sm:$0xff] %v4785
      %4863 = vst [vmem:[%s1521 + $0x1d0] sm:$0xff] %v4789
      %4864 = vst [vmem:[%s1521 + $0x1d8] sm:$0xff] %v4791
      %4865 = vst [vmem:[%s1521 + $0x1e0] sm:$0xff] %v4795
      %4866 = vst [vmem:[%s1521 + $0x1e8] sm:$0xff] %v4797
      %4867 = vst [vmem:[%s1521 + $0x1f0] sm:$0xff] %v4801
      %4868 = vst [vmem:[%s1521 + $0x1f8] sm:$0xff] %v4803
      %v4869 = vld [vmem:[#allocation3 + $0x90] sm:$0xf]
      %v4870 = vld [vmem:[#allocation3 + $0x98] sm:$0xf]
      %v4871 = vsel %vm1088, %v4869, 0.0
      %v4872 = vsel %vm1088, %v4870, 0.0
      %v4873 = vadd.f32 %v4871, %v4872
      %4874 = vadd.xlane.f32.xlu0 %v4873
      %v4875 = vpop.xlane.xlu0 %4874
      %v4876 = vld [vmem:[%s4 + $0x8] sm:$0xf]
      %v4877 = vld [vmem:[%s4 + $0xc] sm:$0xf]
      %s4878 = scalar_lea.vmem %s3, 2
      %v4879 = vld [vmem:[%s4878] ss:$4 sm:$0x3]
      %s4880 = scalar_lea.vmem %s3, 3
      %v4881 = vld [vmem:[%s4880] ss:$4 sm:$0x3]
      %v4882 = vld [vmem:[#allocation3] sm:$0x3]
      %v4883 = vld [vmem:[#allocation3 + $0x8] sm:$0x3]
      %v4884 = vld [vmem:[#allocation3 + $0x10] sm:$0x3]
      %v4885 = vld [vmem:[#allocation3 + $0x18] sm:$0x3]
      %4886 = vxpose.xlu0.b32.start [1/16] %v4882, 128
      %4887 = vxpose.xlu0.b32.cont [2/16] 0.0, 128
      %4888 = vxpose.xlu0.b32.cont [3/16] 0.0, 128
      %4889 = vxpose.xlu0.b32.cont [4/16] 0.0, 128
      %4890 = vxpose.xlu0.b32.cont [5/16] 0.0, 128
      %4891 = vxpose.xlu0.b32.cont [6/16] 0.0, 128
      %4892 = vxpose.xlu0.b32.cont [7/16] 0.0, 128
      %4893 = vxpose.xlu0.b32.cont [8/16] 0.0, 128
      %4894 = vxpose.xlu0.b32.cont [9/16] 0.0, 128
      %4895 = vxpose.xlu0.b32.cont [10/16] 0.0, 128
      %4896 = vxpose.xlu0.b32.cont [11/16] 0.0, 128
      %4897 = vxpose.xlu0.b32.cont [12/16] 0.0, 128
      %4898 = vxpose.xlu0.b32.cont [13/16] 0.0, 128
      %4899 = vxpose.xlu0.b32.cont [14/16] 0.0, 128
      %4900 = vxpose.xlu0.b32.cont [15/16] 0.0, 128
      %4901 = vxpose.xlu0.b32.end [16/16] 0.0, 128
      %v4902 = vpop.trf.xlu0
      %v4903 = vpop.trf.xlu0
      %v4904 = vpop.trf.xlu0
      %v4905 = vpop.trf.xlu0
      %v4906 = vpop.trf.xlu0
      %v4907 = vpop.trf.xlu0
      %v4908 = vpop.trf.xlu0
      %v4909 = vpop.trf.xlu0
      %v4910 = vpop.trf.xlu0
      %v4911 = vpop.trf.xlu0
      %v4912 = vpop.trf.xlu0
      %v4913 = vpop.trf.xlu0
      %v4914 = vpop.trf.xlu0
      %v4915 = vpop.trf.xlu0
      %v4916 = vpop.trf.xlu0
      %v4917 = vpop.trf.xlu0
      %4918 = vxpose.xlu0.b32.start [1/16] %v4883, 128
      %4919 = vxpose.xlu0.b32.cont [2/16] 0.0, 128
      %4920 = vxpose.xlu0.b32.cont [3/16] 0.0, 128
      %4921 = vxpose.xlu0.b32.cont [4/16] 0.0, 128
      %4922 = vxpose.xlu0.b32.cont [5/16] 0.0, 128
      %4923 = vxpose.xlu0.b32.cont [6/16] 0.0, 128
      %4924 = vxpose.xlu0.b32.cont [7/16] 0.0, 128
      %4925 = vxpose.xlu0.b32.cont [8/16] 0.0, 128
      %4926 = vxpose.xlu0.b32.cont [9/16] 0.0, 128
      %4927 = vxpose.xlu0.b32.cont [10/16] 0.0, 128
      %4928 = vxpose.xlu0.b32.cont [11/16] 0.0, 128
      %4929 = vxpose.xlu0.b32.cont [12/16] 0.0, 128
      %4930 = vxpose.xlu0.b32.cont [13/16] 0.0, 128
      %4931 = vxpose.xlu0.b32.cont [14/16] 0.0, 128
      %4932 = vxpose.xlu0.b32.cont [15/16] 0.0, 128
      %4933 = vxpose.xlu0.b32.end [16/16] 0.0, 128
      %v4934 = vpop.trf.xlu0
      %v4935 = vpop.trf.xlu0
      %v4936 = vpop.trf.xlu0
      %v4937 = vpop.trf.xlu0
      %v4938 = vpop.trf.xlu0
      %v4939 = vpop.trf.xlu0
      %v4940 = vpop.trf.xlu0
      %v4941 = vpop.trf.xlu0
      %v4942 = vpop.trf.xlu0
      %v4943 = vpop.trf.xlu0
      %v4944 = vpop.trf.xlu0
      %v4945 = vpop.trf.xlu0
      %v4946 = vpop.trf.xlu0
      %v4947 = vpop.trf.xlu0
      %v4948 = vpop.trf.xlu0
      %v4949 = vpop.trf.xlu0
      %v4951 = vsel %vm661, %v4902, 0
      %v4954 = vsel %vm661, %v4903, 0
      %v4957 = vsel %vm661, %v4904, 0
      %v4960 = vsel %vm661, %v4905, 0
      %v4963 = vsel %vm661, %v4906, 0
      %v4966 = vsel %vm661, %v4907, 0
      %v4969 = vsel %vm661, %v4908, 0
      %v4972 = vsel %vm661, %v4909, 0
      %v4975 = vsel %vm661, %v4910, 0
      %v4978 = vsel %vm661, %v4911, 0
      %v4981 = vsel %vm661, %v4912, 0
      %v4984 = vsel %vm661, %v4913, 0
      %v4987 = vsel %vm661, %v4914, 0
      %v4990 = vsel %vm661, %v4915, 0
      %v4993 = vsel %vm661, %v4916, 0
      %v4996 = vsel %vm661, %v4917, 0
      %v4999 = vsel %vm661, %v4934, 0
      %v5002 = vsel %vm661, %v4935, 0
      %v5005 = vsel %vm661, %v4936, 0
      %v5008 = vsel %vm661, %v4937, 0
      %v5011 = vsel %vm661, %v4938, 0
      %v5014 = vsel %vm661, %v4939, 0
      %v5017 = vsel %vm661, %v4940, 0
      %v5020 = vsel %vm661, %v4941, 0
      %v5023 = vsel %vm661, %v4942, 0
      %v5026 = vsel %vm661, %v4943, 0
      %v5029 = vsel %vm661, %v4944, 0
      %v5032 = vsel %vm661, %v4945, 0
      %v5035 = vsel %vm661, %v4946, 0
      %v5038 = vsel %vm661, %v4947, 0
      %v5041 = vsel %vm661, %v4948, 0
      %v5044 = vsel %vm661, %v4949, 0
      %v5047 = vsel %vm758, %v4884, 0
      %v5050 = vsel %vm758, %v4885, 0
      %5052 = vmatprep.subr.mxu0 %v5050
      %5053 = vmatpush1.msra.mxu0 %v5047
      %5054 = vmatprep.subr.mxu0 0.0
      %5055 = vmatpush1.msra.mxu0 0.0
      %5056 = vmatprep.subr.mxu0 0.0
      %5057 = vmatpush1.msra.mxu0 0.0
      %5058 = vmatprep.subr.mxu0 0.0
      %5059 = vmatpush1.msra.mxu0 0.0
      %5060 = vmatprep.subr.mxu0 0.0
      %5061 = vmatpush1.msra.mxu0 0.0
      %5062 = vmatprep.subr.mxu0 0.0
      %5063 = vmatpush1.msra.mxu0 0.0
      %5064 = vmatprep.subr.mxu0 0.0
      %5065 = vmatpush1.msra.mxu0 0.0
      %5066 = vmatprep.subr.mxu0 0.0
      %5067 = vmatpush1.msra.mxu0 0.0
      %5068 = vmatprep.subr.mxu0 0.0
      %5069 = vmatpush1.msra.mxu0 0.0
      %5070 = vmatprep.subr.mxu0 0.0
      %5071 = vmatpush1.msra.mxu0 0.0
      %5072 = vmatprep.subr.mxu0 0.0
      %5073 = vmatpush1.msra.mxu0 0.0
      %5074 = vmatprep.subr.mxu0 0.0
      %5075 = vmatpush1.msra.mxu0 0.0
      %5076 = vmatprep.subr.mxu0 0.0
      %5077 = vmatpush1.msra.mxu0 0.0
      %5078 = vmatprep.subr.mxu0 0.0
      %5079 = vmatpush1.msra.mxu0 0.0
      %5080 = vmatprep.subr.mxu0 0.0
      %5081 = vmatpush1.msra.mxu0 0.0
      %5082 = vmatprep.subr.mxu0 0.0
      %5083 = vmatpush1.msra.mxu0 0.0
      %5084 = vmatprep.subr.mxu0 0.0
      %5085 = vmatpush1.msra.mxu0 0.0
      %5086 = vmatprep.subr.mxu0 0.0
      %5087 = vmatpush1.msra.mxu0 0.0
      %5088 = vmatprep.subr.mxu0 0.0
      %5089 = vmatpush1.msra.mxu0 0.0
      %5090 = vmatprep.subr.mxu0 0.0
      %5091 = vmatpush1.msra.mxu0 0.0
      %5092 = vmatprep.subr.mxu0 0.0
      %5093 = vmatpush1.msra.mxu0 0.0
      %5094 = vmatprep.subr.mxu0 0.0
      %5095 = vmatpush1.msra.mxu0 0.0
      %5096 = vmatprep.subr.mxu0 0.0
      %5097 = vmatpush1.msra.mxu0 0.0
      %5098 = vmatprep.subr.mxu0 0.0
      %5099 = vmatpush1.msra.mxu0 0.0
      %5100 = vmatprep.subr.mxu0 0.0
      %5101 = vmatpush1.msra.mxu0 0.0
      %5102 = vmatprep.subr.mxu0 0.0
      %5103 = vmatpush1.msra.mxu0 0.0
      %5104 = vmatprep.subr.mxu0 0.0
      %5105 = vmatpush1.msra.mxu0 0.0
      %5106 = vmatprep.subr.mxu0 0.0
      %5107 = vmatpush1.msra.mxu0 0.0
      %5108 = vmatprep.subr.mxu0 0.0
      %5109 = vmatpush1.msra.mxu0 0.0
      %5110 = vmatprep.subr.mxu0 0.0
      %5111 = vmatpush1.msra.mxu0 0.0
      %5112 = vmatprep.subr.mxu0 0.0
      %5113 = vmatpush1.msra.mxu0 0.0
      %5114 = vmatprep.subr.mxu0 0.0
      %5115 = vmatpush1.msra.mxu0 0.0
      %5116 = vmatprep.mubr.f32.mxu0 0.0
      %5117 = vmatmul.mubr.f32.gmra.mrb[0].mxu0 %v4951
      %v5118 = vpop.f32.mrb[0].mxu0
      %v5119 = vadd.f32 0.0, %v5118
      %v5120 = vpop.f32.mrb[0].mxu0
      %v5121 = vadd.f32 0.0, %v5120
      %5122 = vmatprep.mubr.f32.mxu0 0.0
      %5123 = vmatmul.mubr.f32.gmra.mrb[0].mxu0 %v4954
      %v5124 = vpop.f32.mrb[0].mxu0
      %v5125 = vadd.f32 0.0, %v5124
      %v5126 = vpop.f32.mrb[0].mxu0
      %v5127 = vadd.f32 0.0, %v5126
      %5128 = vmatprep.mubr.f32.mxu0 0.0
      %5129 = vmatmul.mubr.f32.gmra.mrb[0].mxu0 %v4957
      %v5130 = vpop.f32.mrb[0].mxu0
      %v5131 = vadd.f32 0.0, %v5130
      %v5132 = vpop.f32.mrb[0].mxu0
      %v5133 = vadd.f32 0.0, %v5132
      %5134 = vmatprep.mubr.f32.mxu0 0.0
      %5135 = vmatmul.mubr.f32.gmra.mrb[0].mxu0 %v4960
      %v5136 = vpop.f32.mrb[0].mxu0
      %v5137 = vadd.f32 0.0, %v5136
      %v5138 = vpop.f32.mrb[0].mxu0
      %v5139 = vadd.f32 0.0, %v5138
      %5140 = vmatprep.mubr.f32.mxu0 0.0
      %5141 = vmatmul.mubr.f32.gmra.mrb[0].mxu0 %v4963
      %v5142 = vpop.f32.mrb[0].mxu0
      %v5143 = vadd.f32 0.0, %v5142
      %v5144 = vpop.f32.mrb[0].mxu0
      %v5145 = vadd.f32 0.0, %v5144
      %5146 = vmatprep.mubr.f32.mxu0 0.0
      %5147 = vmatmul.mubr.f32.gmra.mrb[0].mxu0 %v4966
      %v5148 = vpop.f32.mrb[0].mxu0
      %v5149 = vadd.f32 0.0, %v5148
      %v5150 = vpop.f32.mrb[0].mxu0
      %v5151 = vadd.f32 0.0, %v5150
      %5152 = vmatprep.mubr.f32.mxu0 0.0
      %5153 = vmatmul.mubr.f32.gmra.mrb[0].mxu0 %v4969
      %v5154 = vpop.f32.mrb[0].mxu0
      %v5155 = vadd.f32 0.0, %v5154
      %v5156 = vpop.f32.mrb[0].mxu0
      %v5157 = vadd.f32 0.0, %v5156
      %5158 = vmatprep.mubr.f32.mxu0 0.0
      %5159 = vmatmul.mubr.f32.gmra.mrb[0].mxu0 %v4972
      %v5160 = vpop.f32.mrb[0].mxu0
      %v5161 = vadd.f32 0.0, %v5160
      %v5162 = vpop.f32.mrb[0].mxu0
      %v5163 = vadd.f32 0.0, %v5162
      %5164 = vmatprep.mubr.f32.mxu0 0.0
      %5165 = vmatmul.mubr.f32.gmra.mrb[0].mxu0 %v4975
      %v5166 = vpop.f32.mrb[0].mxu0
      %v5167 = vadd.f32 0.0, %v5166
      %v5168 = vpop.f32.mrb[0].mxu0
      %v5169 = vadd.f32 0.0, %v5168
      %5170 = vmatprep.mubr.f32.mxu0 0.0
      %5171 = vmatmul.mubr.f32.gmra.mrb[0].mxu0 %v4978
      %v5172 = vpop.f32.mrb[0].mxu0
      %v5173 = vadd.f32 0.0, %v5172
      %v5174 = vpop.f32.mrb[0].mxu0
      %v5175 = vadd.f32 0.0, %v5174
      %5176 = vmatprep.mubr.f32.mxu0 0.0
      %5177 = vmatmul.mubr.f32.gmra.mrb[0].mxu0 %v4981
      %v5178 = vpop.f32.mrb[0].mxu0
      %v5179 = vadd.f32 0.0, %v5178
      %v5180 = vpop.f32.mrb[0].mxu0
      %v5181 = vadd.f32 0.0, %v5180
      %5182 = vmatprep.mubr.f32.mxu0 0.0
      %5183 = vmatmul.mubr.f32.gmra.mrb[0].mxu0 %v4984
      %v5184 = vpop.f32.mrb[0].mxu0
      %v5185 = vadd.f32 0.0, %v5184
      %v5186 = vpop.f32.mrb[0].mxu0
      %v5187 = vadd.f32 0.0, %v5186
      %5188 = vmatprep.mubr.f32.mxu0 0.0
      %5189 = vmatmul.mubr.f32.gmra.mrb[0].mxu0 %v4987
      %v5190 = vpop.f32.mrb[0].mxu0
      %v5191 = vadd.f32 0.0, %v5190
      %v5192 = vpop.f32.mrb[0].mxu0
      %v5193 = vadd.f32 0.0, %v5192
      %5194 = vmatprep.mubr.f32.mxu0 0.0
      %5195 = vmatmul.mubr.f32.gmra.mrb[0].mxu0 %v4990
      %v5196 = vpop.f32.mrb[0].mxu0
      %v5197 = vadd.f32 0.0, %v5196
      %v5198 = vpop.f32.mrb[0].mxu0
      %v5199 = vadd.f32 0.0, %v5198
      %5200 = vmatprep.mubr.f32.mxu0 0.0
      %5201 = vmatmul.mubr.f32.gmra.mrb[0].mxu0 %v4993
      %v5202 = vpop.f32.mrb[0].mxu0
      %v5203 = vadd.f32 0.0, %v5202
      %v5204 = vpop.f32.mrb[0].mxu0
      %v5205 = vadd.f32 0.0, %v5204
      %5206 = vmatprep.mubr.f32.mxu0 0.0
      %5207 = vmatmul.mubr.f32.gmra.mrb[0].mxu0 %v4996
      %v5208 = vpop.f32.mrb[0].mxu0
      %v5209 = vadd.f32 0.0, %v5208
      %v5210 = vpop.f32.mrb[0].mxu0
      %v5211 = vadd.f32 0.0, %v5210
      %5212 = vmatprep.mubr.f32.mxu0 0.0
      %5213 = vmatmul.mubr.f32.gmra.mrb[0].mxu0 %v4999
      %v5214 = vpop.f32.mrb[0].mxu0
      %v5215 = vadd.f32 0.0, %v5214
      %v5216 = vpop.f32.mrb[0].mxu0
      %v5217 = vadd.f32 0.0, %v5216
      %5218 = vmatprep.mubr.f32.mxu0 0.0
      %5219 = vmatmul.mubr.f32.gmra.mrb[0].mxu0 %v5002
      %v5220 = vpop.f32.mrb[0].mxu0
      %v5221 = vadd.f32 0.0, %v5220
      %v5222 = vpop.f32.mrb[0].mxu0
      %v5223 = vadd.f32 0.0, %v5222
      %5224 = vmatprep.mubr.f32.mxu0 0.0
      %5225 = vmatmul.mubr.f32.gmra.mrb[0].mxu0 %v5005
      %v5226 = vpop.f32.mrb[0].mxu0
      %v5227 = vadd.f32 0.0, %v5226
      %v5228 = vpop.f32.mrb[0].mxu0
      %v5229 = vadd.f32 0.0, %v5228
      %5230 = vmatprep.mubr.f32.mxu0 0.0
      %5231 = vmatmul.mubr.f32.gmra.mrb[0].mxu0 %v5008
      %v5232 = vpop.f32.mrb[0].mxu0
      %v5233 = vadd.f32 0.0, %v5232
      %v5234 = vpop.f32.mrb[0].mxu0
      %v5235 = vadd.f32 0.0, %v5234
      %5236 = vmatprep.mubr.f32.mxu0 0.0
      %5237 = vmatmul.mubr.f32.gmra.mrb[0].mxu0 %v5011
      %v5238 = vpop.f32.mrb[0].mxu0
      %v5239 = vadd.f32 0.0, %v5238
      %v5240 = vpop.f32.mrb[0].mxu0
      %v5241 = vadd.f32 0.0, %v5240
      %5242 = vmatprep.mubr.f32.mxu0 0.0
      %5243 = vmatmul.mubr.f32.gmra.mrb[0].mxu0 %v5014
      %v5244 = vpop.f32.mrb[0].mxu0
      %v5245 = vadd.f32 0.0, %v5244
      %v5246 = vpop.f32.mrb[0].mxu0
      %v5247 = vadd.f32 0.0, %v5246
      %5248 = vmatprep.mubr.f32.mxu0 0.0
      %5249 = vmatmul.mubr.f32.gmra.mrb[0].mxu0 %v5017
      %v5250 = vpop.f32.mrb[0].mxu0
      %v5251 = vadd.f32 0.0, %v5250
      %v5252 = vpop.f32.mrb[0].mxu0
      %v5253 = vadd.f32 0.0, %v5252
      %5254 = vmatprep.mubr.f32.mxu0 0.0
      %5255 = vmatmul.mubr.f32.gmra.mrb[0].mxu0 %v5020
      %v5256 = vpop.f32.mrb[0].mxu0
      %v5257 = vadd.f32 0.0, %v5256
      %v5258 = vpop.f32.mrb[0].mxu0
      %v5259 = vadd.f32 0.0, %v5258
      %5260 = vmatprep.mubr.f32.mxu0 0.0
      %5261 = vmatmul.mubr.f32.gmra.mrb[0].mxu0 %v5023
      %v5262 = vpop.f32.mrb[0].mxu0
      %v5263 = vadd.f32 0.0, %v5262
      %v5264 = vpop.f32.mrb[0].mxu0
      %v5265 = vadd.f32 0.0, %v5264
      %5266 = vmatprep.mubr.f32.mxu0 0.0
      %5267 = vmatmul.mubr.f32.gmra.mrb[0].mxu0 %v5026
      %v5268 = vpop.f32.mrb[0].mxu0
      %v5269 = vadd.f32 0.0, %v5268
      %v5270 = vpop.f32.mrb[0].mxu0
      %v5271 = vadd.f32 0.0, %v5270
      %5272 = vmatprep.mubr.f32.mxu0 0.0
      %5273 = vmatmul.mubr.f32.gmra.mrb[0].mxu0 %v5029
      %v5274 = vpop.f32.mrb[0].mxu0
      %v5275 = vadd.f32 0.0, %v5274
      %v5276 = vpop.f32.mrb[0].mxu0
      %v5277 = vadd.f32 0.0, %v5276
      %5278 = vmatprep.mubr.f32.mxu0 0.0
      %5279 = vmatmul.mubr.f32.gmra.mrb[0].mxu0 %v5032
      %v5280 = vpop.f32.mrb[0].mxu0
      %v5281 = vadd.f32 0.0, %v5280
      %v5282 = vpop.f32.mrb[0].mxu0
      %v5283 = vadd.f32 0.0, %v5282
      %5284 = vmatprep.mubr.f32.mxu0 0.0
      %5285 = vmatmul.mubr.f32.gmra.mrb[0].mxu0 %v5035
      %v5286 = vpop.f32.mrb[0].mxu0
      %v5287 = vadd.f32 0.0, %v5286
      %v5288 = vpop.f32.mrb[0].mxu0
      %v5289 = vadd.f32 0.0, %v5288
      %5290 = vmatprep.mubr.f32.mxu0 0.0
      %5291 = vmatmul.mubr.f32.gmra.mrb[0].mxu0 %v5038
      %v5292 = vpop.f32.mrb[0].mxu0
      %v5293 = vadd.f32 0.0, %v5292
      %v5294 = vpop.f32.mrb[0].mxu0
      %v5295 = vadd.f32 0.0, %v5294
      %5296 = vmatprep.mubr.f32.mxu0 0.0
      %5297 = vmatmul.mubr.f32.gmra.mrb[0].mxu0 %v5041
      %v5298 = vpop.f32.mrb[0].mxu0
      %v5299 = vadd.f32 0.0, %v5298
      %v5300 = vpop.f32.mrb[0].mxu0
      %v5301 = vadd.f32 0.0, %v5300
      %5302 = vmatprep.mubr.f32.mxu0 0.0
      %5303 = vmatmul.mubr.f32.gmra.mrb[0].mxu0 %v5044
      %v5304 = vpop.f32.mrb[0].mxu0
      %v5305 = vadd.f32 0.0, %v5304
      %v5306 = vpop.f32.mrb[0].mxu0
      %v5307 = vadd.f32 0.0, %v5306
      %5308 = vdwg.mxu0
      %v5309 = vld [vmem:[#allocation4] sm:$0xff]
      %v5310 = vld [vmem:[#allocation4 + $0x8] sm:$0xff]
      %v5311 = vld [vmem:[#allocation4 + $0x10] sm:$0xff]
      %v5312 = vld [vmem:[#allocation4 + $0x18] sm:$0xff]
      %v5313 = vld [vmem:[#allocation4 + $0x20] sm:$0xff]
      %v5314 = vld [vmem:[#allocation4 + $0x28] sm:$0xff]
      %v5315 = vld [vmem:[#allocation4 + $0x30] sm:$0xff]
      %v5316 = vld [vmem:[#allocation4 + $0x38] sm:$0xff]
      %v5317 = vld [vmem:[#allocation4 + $0x40] sm:$0xff]
      %v5318 = vld [vmem:[#allocation4 + $0x48] sm:$0xff]
      %v5319 = vld [vmem:[#allocation4 + $0x50] sm:$0xff]
      %v5320 = vld [vmem:[#allocation4 + $0x58] sm:$0xff]
      %v5321 = vld [vmem:[#allocation4 + $0x60] sm:$0xff]
      %v5322 = vld [vmem:[#allocation4 + $0x68] sm:$0xff]
      %v5323 = vld [vmem:[#allocation4 + $0x70] sm:$0xff]
      %v5324 = vld [vmem:[#allocation4 + $0x78] sm:$0xff]
      %v5325 = vld [vmem:[#allocation4 + $0x80] sm:$0xff]
      %v5326 = vld [vmem:[#allocation4 + $0x88] sm:$0xff]
      %v5327 = vld [vmem:[#allocation4 + $0x90] sm:$0xff]
      %v5328 = vld [vmem:[#allocation4 + $0x98] sm:$0xff]
      %v5329 = vld [vmem:[#allocation4 + $0xa0] sm:$0xff]
      %v5330 = vld [vmem:[#allocation4 + $0xa8] sm:$0xff]
      %v5331 = vld [vmem:[#allocation4 + $0xb0] sm:$0xff]
      %v5332 = vld [vmem:[#allocation4 + $0xb8] sm:$0xff]
      %v5333 = vld [vmem:[#allocation4 + $0xc0] sm:$0xff]
      %v5334 = vld [vmem:[#allocation4 + $0xc8] sm:$0xff]
      %v5335 = vld [vmem:[#allocation4 + $0xd0] sm:$0xff]
      %v5336 = vld [vmem:[#allocation4 + $0xd8] sm:$0xff]
      %v5337 = vld [vmem:[#allocation4 + $0xe0] sm:$0xff]
      %v5338 = vld [vmem:[#allocation4 + $0xe8] sm:$0xff]
      %v5339 = vld [vmem:[#allocation4 + $0xf0] sm:$0xff]
      %v5340 = vld [vmem:[#allocation4 + $0xf8] sm:$0xff]
      %v5341 = vld [vmem:[#allocation4 + $0x100] sm:$0xff]
      %v5342 = vld [vmem:[#allocation4 + $0x108] sm:$0xff]
      %v5343 = vld [vmem:[#allocation4 + $0x110] sm:$0xff]
      %v5344 = vld [vmem:[#allocation4 + $0x118] sm:$0xff]
      %v5345 = vld [vmem:[#allocation4 + $0x120] sm:$0xff]
      %v5346 = vld [vmem:[#allocation4 + $0x128] sm:$0xff]
      %v5347 = vld [vmem:[#allocation4 + $0x130] sm:$0xff]
      %v5348 = vld [vmem:[#allocation4 + $0x138] sm:$0xff]
      %v5349 = vld [vmem:[#allocation4 + $0x140] sm:$0xff]
      %v5350 = vld [vmem:[#allocation4 + $0x148] sm:$0xff]
      %v5351 = vld [vmem:[#allocation4 + $0x150] sm:$0xff]
      %v5352 = vld [vmem:[#allocation4 + $0x158] sm:$0xff]
      %v5353 = vld [vmem:[#allocation4 + $0x160] sm:$0xff]
      %v5354 = vld [vmem:[#allocation4 + $0x168] sm:$0xff]
      %v5355 = vld [vmem:[#allocation4 + $0x170] sm:$0xff]
      %v5356 = vld [vmem:[#allocation4 + $0x178] sm:$0xff]
      %v5357 = vld [vmem:[#allocation4 + $0x180] sm:$0xff]
      %v5358 = vld [vmem:[#allocation4 + $0x188] sm:$0xff]
      %v5359 = vld [vmem:[#allocation4 + $0x190] sm:$0xff]
      %v5360 = vld [vmem:[#allocation4 + $0x198] sm:$0xff]
      %v5361 = vld [vmem:[#allocation4 + $0x1a0] sm:$0xff]
      %v5362 = vld [vmem:[#allocation4 + $0x1a8] sm:$0xff]
      %v5363 = vld [vmem:[#allocation4 + $0x1b0] sm:$0xff]
      %v5364 = vld [vmem:[#allocation4 + $0x1b8] sm:$0xff]
      %v5365 = vld [vmem:[#allocation4 + $0x1c0] sm:$0xff]
      %v5366 = vld [vmem:[#allocation4 + $0x1c8] sm:$0xff]
      %v5367 = vld [vmem:[#allocation4 + $0x1d0] sm:$0xff]
      %v5368 = vld [vmem:[#allocation4 + $0x1d8] sm:$0xff]
      %v5369 = vld [vmem:[#allocation4 + $0x1e0] sm:$0xff]
      %v5370 = vld [vmem:[#allocation4 + $0x1e8] sm:$0xff]
      %v5371 = vld [vmem:[#allocation4 + $0x1f0] sm:$0xff]
      %v5372 = vld [vmem:[#allocation4 + $0x1f8] sm:$0xff]
      %5373 = vmatprep.subr.mxu0 %v5310
      %5374 = vmatpush1.msra.mxu0 %v5309
      %5375 = vmatprep.subr.mxu0 %v5312
      %5376 = vmatpush1.msra.mxu0 %v5311
      %5377 = vmatprep.subr.mxu0 %v5314
      %5378 = vmatpush1.msra.mxu0 %v5313
      %5379 = vmatprep.subr.mxu0 %v5316
      %5380 = vmatpush1.msra.mxu0 %v5315
      %5381 = vmatprep.subr.mxu0 %v5318
      %5382 = vmatpush1.msra.mxu0 %v5317
      %5383 = vmatprep.subr.mxu0 %v5320
      %5384 = vmatpush1.msra.mxu0 %v5319
      %5385 = vmatprep.subr.mxu0 %v5322
      %5386 = vmatpush1.msra.mxu0 %v5321
      %5387 = vmatprep.subr.mxu0 %v5324
      %5388 = vmatpush1.msra.mxu0 %v5323
      %5389 = vmatprep.subr.mxu0 %v5326
      %5390 = vmatpush1.msra.mxu0 %v5325
      %5391 = vmatprep.subr.mxu0 %v5328
      %5392 = vmatpush1.msra.mxu0 %v5327
      %5393 = vmatprep.subr.mxu0 %v5330
      %5394 = vmatpush1.msra.mxu0 %v5329
      %5395 = vmatprep.subr.mxu0 %v5332
      %5396 = vmatpush1.msra.mxu0 %v5331
      %5397 = vmatprep.subr.mxu0 %v5334
      %5398 = vmatpush1.msra.mxu0 %v5333
      %5399 = vmatprep.subr.mxu0 %v5336
      %5400 = vmatpush1.msra.mxu0 %v5335
      %5401 = vmatprep.subr.mxu0 %v5338
      %5402 = vmatpush1.msra.mxu0 %v5337
      %5403 = vmatprep.subr.mxu0 %v5340
      %5404 = vmatpush1.msra.mxu0 %v5339
      %5405 = vmatprep.subr.mxu0 %v5342
      %5406 = vmatpush1.msra.mxu0 %v5341
      %5407 = vmatprep.subr.mxu0 %v5344
      %5408 = vmatpush1.msra.mxu0 %v5343
      %5409 = vmatprep.subr.mxu0 %v5346
      %5410 = vmatpush1.msra.mxu0 %v5345
      %5411 = vmatprep.subr.mxu0 %v5348
      %5412 = vmatpush1.msra.mxu0 %v5347
      %5413 = vmatprep.subr.mxu0 %v5350
      %5414 = vmatpush1.msra.mxu0 %v5349
      %5415 = vmatprep.subr.mxu0 %v5352
      %5416 = vmatpush1.msra.mxu0 %v5351
      %5417 = vmatprep.subr.mxu0 %v5354
      %5418 = vmatpush1.msra.mxu0 %v5353
      %5419 = vmatprep.subr.mxu0 %v5356
      %5420 = vmatpush1.msra.mxu0 %v5355
      %5421 = vmatprep.subr.mxu0 %v5358
      %5422 = vmatpush1.msra.mxu0 %v5357
      %5423 = vmatprep.subr.mxu0 %v5360
      %5424 = vmatpush1.msra.mxu0 %v5359
      %5425 = vmatprep.subr.mxu0 %v5362
      %5426 = vmatpush1.msra.mxu0 %v5361
      %5427 = vmatprep.subr.mxu0 %v5364
      %5428 = vmatpush1.msra.mxu0 %v5363
      %5429 = vmatprep.subr.mxu0 %v5366
      %5430 = vmatpush1.msra.mxu0 %v5365
      %5431 = vmatprep.subr.mxu0 %v5368
      %5432 = vmatpush1.msra.mxu0 %v5367
      %5433 = vmatprep.subr.mxu0 %v5370
      %5434 = vmatpush1.msra.mxu0 %v5369
      %5435 = vmatprep.subr.mxu0 %v5372
      %5436 = vmatpush1.msra.mxu0 %v5371
      %5437 = vmatprep.mubr.f32.mxu0 %v5121
      %5438 = vmatmul.mubr.f32.gmra.mrb[0].mxu0 %v5119
      %v5439 = vpop.f32.mrb[0].mxu0
      %v5440 = vadd.f32 0.0, %v5439
      %v5441 = vpop.f32.mrb[0].mxu0
      %v5442 = vadd.f32 0.0, %v5441
      %5443 = vmatprep.mubr.f32.mxu0 %v5127
      %5444 = vmatmul.mubr.f32.gmra.mrb[0].mxu0 %v5125
      %v5445 = vpop.f32.mrb[0].mxu0
      %v5446 = vadd.f32 0.0, %v5445
      %v5447 = vpop.f32.mrb[0].mxu0
      %v5448 = vadd.f32 0.0, %v5447
      %5449 = vmatprep.mubr.f32.mxu0 %v5133
      %5450 = vmatmul.mubr.f32.gmra.mrb[0].mxu0 %v5131
      %v5451 = vpop.f32.mrb[0].mxu0
      %v5452 = vadd.f32 0.0, %v5451
      %v5453 = vpop.f32.mrb[0].mxu0
      %v5454 = vadd.f32 0.0, %v5453
      %5455 = vmatprep.mubr.f32.mxu0 %v5139
      %5456 = vmatmul.mubr.f32.gmra.mrb[0].mxu0 %v5137
      %v5457 = vpop.f32.mrb[0].mxu0
      %v5458 = vadd.f32 0.0, %v5457
      %v5459 = vpop.f32.mrb[0].mxu0
      %v5460 = vadd.f32 0.0, %v5459
      %5461 = vmatprep.mubr.f32.mxu0 %v5145
      %5462 = vmatmul.mubr.f32.gmra.mrb[0].mxu0 %v5143
      %v5463 = vpop.f32.mrb[0].mxu0
      %v5464 = vadd.f32 0.0, %v5463
      %v5465 = vpop.f32.mrb[0].mxu0
      %v5466 = vadd.f32 0.0, %v5465
      %5467 = vmatprep.mubr.f32.mxu0 %v5151
      %5468 = vmatmul.mubr.f32.gmra.mrb[0].mxu0 %v5149
      %v5469 = vpop.f32.mrb[0].mxu0
      %v5470 = vadd.f32 0.0, %v5469
      %v5471 = vpop.f32.mrb[0].mxu0
      %v5472 = vadd.f32 0.0, %v5471
      %5473 = vmatprep.mubr.f32.mxu0 %v5157
      %5474 = vmatmul.mubr.f32.gmra.mrb[0].mxu0 %v5155
      %v5475 = vpop.f32.mrb[0].mxu0
      %v5476 = vadd.f32 0.0, %v5475
      %v5477 = vpop.f32.mrb[0].mxu0
      %v5478 = vadd.f32 0.0, %v5477
      %5479 = vmatprep.mubr.f32.mxu0 %v5163
      %5480 = vmatmul.mubr.f32.gmra.mrb[0].mxu0 %v5161
      %v5481 = vpop.f32.mrb[0].mxu0
      %v5482 = vadd.f32 0.0, %v5481
      %v5483 = vpop.f32.mrb[0].mxu0
      %v5484 = vadd.f32 0.0, %v5483
      %5485 = vmatprep.mubr.f32.mxu0 %v5169
      %5486 = vmatmul.mubr.f32.gmra.mrb[0].mxu0 %v5167
      %v5487 = vpop.f32.mrb[0].mxu0
      %v5488 = vadd.f32 0.0, %v5487
      %v5489 = vpop.f32.mrb[0].mxu0
      %v5490 = vadd.f32 0.0, %v5489
      %5491 = vmatprep.mubr.f32.mxu0 %v5175
      %5492 = vmatmul.mubr.f32.gmra.mrb[0].mxu0 %v5173
      %v5493 = vpop.f32.mrb[0].mxu0
      %v5494 = vadd.f32 0.0, %v5493
      %v5495 = vpop.f32.mrb[0].mxu0
      %v5496 = vadd.f32 0.0, %v5495
      %5497 = vmatprep.mubr.f32.mxu0 %v5181
      %5498 = vmatmul.mubr.f32.gmra.mrb[0].mxu0 %v5179
      %v5499 = vpop.f32.mrb[0].mxu0
      %v5500 = vadd.f32 0.0, %v5499
      %v5501 = vpop.f32.mrb[0].mxu0
      %v5502 = vadd.f32 0.0, %v5501
      %5503 = vmatprep.mubr.f32.mxu0 %v5187
      %5504 = vmatmul.mubr.f32.gmra.mrb[0].mxu0 %v5185
      %v5505 = vpop.f32.mrb[0].mxu0
      %v5506 = vadd.f32 0.0, %v5505
      %v5507 = vpop.f32.mrb[0].mxu0
      %v5508 = vadd.f32 0.0, %v5507
      %5509 = vmatprep.mubr.f32.mxu0 %v5193
      %5510 = vmatmul.mubr.f32.gmra.mrb[0].mxu0 %v5191
      %v5511 = vpop.f32.mrb[0].mxu0
      %v5512 = vadd.f32 0.0, %v5511
      %v5513 = vpop.f32.mrb[0].mxu0
      %v5514 = vadd.f32 0.0, %v5513
      %5515 = vmatprep.mubr.f32.mxu0 %v5199
      %5516 = vmatmul.mubr.f32.gmra.mrb[0].mxu0 %v5197
      %v5517 = vpop.f32.mrb[0].mxu0
      %v5518 = vadd.f32 0.0, %v5517
      %v5519 = vpop.f32.mrb[0].mxu0
      %v5520 = vadd.f32 0.0, %v5519
      %5521 = vmatprep.mubr.f32.mxu0 %v5205
      %5522 = vmatmul.mubr.f32.gmra.mrb[0].mxu0 %v5203
      %v5523 = vpop.f32.mrb[0].mxu0
      %v5524 = vadd.f32 0.0, %v5523
      %v5525 = vpop.f32.mrb[0].mxu0
      %v5526 = vadd.f32 0.0, %v5525
      %5527 = vmatprep.mubr.f32.mxu0 %v5211
      %5528 = vmatmul.mubr.f32.gmra.mrb[0].mxu0 %v5209
      %v5529 = vpop.f32.mrb[0].mxu0
      %v5530 = vadd.f32 0.0, %v5529
      %v5531 = vpop.f32.mrb[0].mxu0
      %v5532 = vadd.f32 0.0, %v5531
      %5533 = vmatprep.mubr.f32.mxu0 %v5217
      %5534 = vmatmul.mubr.f32.gmra.mrb[0].mxu0 %v5215
      %v5535 = vpop.f32.mrb[0].mxu0
      %v5536 = vadd.f32 0.0, %v5535
      %v5537 = vpop.f32.mrb[0].mxu0
      %v5538 = vadd.f32 0.0, %v5537
      %5539 = vmatprep.mubr.f32.mxu0 %v5223
      %5540 = vmatmul.mubr.f32.gmra.mrb[0].mxu0 %v5221
      %v5541 = vpop.f32.mrb[0].mxu0
      %v5542 = vadd.f32 0.0, %v5541
      %v5543 = vpop.f32.mrb[0].mxu0
      %v5544 = vadd.f32 0.0, %v5543
      %5545 = vmatprep.mubr.f32.mxu0 %v5229
      %5546 = vmatmul.mubr.f32.gmra.mrb[0].mxu0 %v5227
      %v5547 = vpop.f32.mrb[0].mxu0
      %v5548 = vadd.f32 0.0, %v5547
      %v5549 = vpop.f32.mrb[0].mxu0
      %v5550 = vadd.f32 0.0, %v5549
      %5551 = vmatprep.mubr.f32.mxu0 %v5235
      %5552 = vmatmul.mubr.f32.gmra.mrb[0].mxu0 %v5233
      %v5553 = vpop.f32.mrb[0].mxu0
      %v5554 = vadd.f32 0.0, %v5553
      %v5555 = vpop.f32.mrb[0].mxu0
      %v5556 = vadd.f32 0.0, %v5555
      %5557 = vmatprep.mubr.f32.mxu0 %v5241
      %5558 = vmatmul.mubr.f32.gmra.mrb[0].mxu0 %v5239
      %v5559 = vpop.f32.mrb[0].mxu0
      %v5560 = vadd.f32 0.0, %v5559
      %v5561 = vpop.f32.mrb[0].mxu0
      %v5562 = vadd.f32 0.0, %v5561
      %5563 = vmatprep.mubr.f32.mxu0 %v5247
      %5564 = vmatmul.mubr.f32.gmra.mrb[0].mxu0 %v5245
      %v5565 = vpop.f32.mrb[0].mxu0
      %v5566 = vadd.f32 0.0, %v5565
      %v5567 = vpop.f32.mrb[0].mxu0
      %v5568 = vadd.f32 0.0, %v5567
      %5569 = vmatprep.mubr.f32.mxu0 %v5253
      %5570 = vmatmul.mubr.f32.gmra.mrb[0].mxu0 %v5251
      %v5571 = vpop.f32.mrb[0].mxu0
      %v5572 = vadd.f32 0.0, %v5571
      %v5573 = vpop.f32.mrb[0].mxu0
      %v5574 = vadd.f32 0.0, %v5573
      %5575 = vmatprep.mubr.f32.mxu0 %v5259
      %5576 = vmatmul.mubr.f32.gmra.mrb[0].mxu0 %v5257
      %v5577 = vpop.f32.mrb[0].mxu0
      %v5578 = vadd.f32 0.0, %v5577
      %v5579 = vpop.f32.mrb[0].mxu0
      %v5580 = vadd.f32 0.0, %v5579
      %5581 = vmatprep.mubr.f32.mxu0 %v5265
      %5582 = vmatmul.mubr.f32.gmra.mrb[0].mxu0 %v5263
      %v5583 = vpop.f32.mrb[0].mxu0
      %v5584 = vadd.f32 0.0, %v5583
      %v5585 = vpop.f32.mrb[0].mxu0
      %v5586 = vadd.f32 0.0, %v5585
      %5587 = vmatprep.mubr.f32.mxu0 %v5271
      %5588 = vmatmul.mubr.f32.gmra.mrb[0].mxu0 %v5269
      %v5589 = vpop.f32.mrb[0].mxu0
      %v5590 = vadd.f32 0.0, %v5589
      %v5591 = vpop.f32.mrb[0].mxu0
      %v5592 = vadd.f32 0.0, %v5591
      %5593 = vmatprep.mubr.f32.mxu0 %v5277
      %5594 = vmatmul.mubr.f32.gmra.mrb[0].mxu0 %v5275
      %v5595 = vpop.f32.mrb[0].mxu0
      %v5596 = vadd.f32 0.0, %v5595
      %v5597 = vpop.f32.mrb[0].mxu0
      %v5598 = vadd.f32 0.0, %v5597
      %5599 = vmatprep.mubr.f32.mxu0 %v5283
      %5600 = vmatmul.mubr.f32.gmra.mrb[0].mxu0 %v5281
      %v5601 = vpop.f32.mrb[0].mxu0
      %v5602 = vadd.f32 0.0, %v5601
      %v5603 = vpop.f32.mrb[0].mxu0
      %v5604 = vadd.f32 0.0, %v5603
      %5605 = vmatprep.mubr.f32.mxu0 %v5289
      %5606 = vmatmul.mubr.f32.gmra.mrb[0].mxu0 %v5287
      %v5607 = vpop.f32.mrb[0].mxu0
      %v5608 = vadd.f32 0.0, %v5607
      %v5609 = vpop.f32.mrb[0].mxu0
      %v5610 = vadd.f32 0.0, %v5609
      %5611 = vmatprep.mubr.f32.mxu0 %v5295
      %5612 = vmatmul.mubr.f32.gmra.mrb[0].mxu0 %v5293
      %v5613 = vpop.f32.mrb[0].mxu0
      %v5614 = vadd.f32 0.0, %v5613
      %v5615 = vpop.f32.mrb[0].mxu0
      %v5616 = vadd.f32 0.0, %v5615
      %5617 = vmatprep.mubr.f32.mxu0 %v5301
      %5618 = vmatmul.mubr.f32.gmra.mrb[0].mxu0 %v5299
      %v5619 = vpop.f32.mrb[0].mxu0
      %v5620 = vadd.f32 0.0, %v5619
      %v5621 = vpop.f32.mrb[0].mxu0
      %v5622 = vadd.f32 0.0, %v5621
      %5623 = vmatprep.mubr.f32.mxu0 %v5307
      %5624 = vmatmul.mubr.f32.gmra.mrb[0].mxu0 %v5305
      %v5625 = vpop.f32.mrb[0].mxu0
      %v5626 = vadd.f32 0.0, %v5625
      %v5627 = vpop.f32.mrb[0].mxu0
      %v5628 = vadd.f32 0.0, %v5627
      %5629 = vdwg.mxu0
      %v5630 = vmul.f32 %v5440, %v2346
      %v5631 = vmul.f32 %v5442, %v2346
      %v5632 = vmul.f32 %v5446, %v2346
      %v5633 = vmul.f32 %v5448, %v2346
      %v5634 = vmul.f32 %v5452, %v2346
      %v5635 = vmul.f32 %v5454, %v2346
      %v5636 = vmul.f32 %v5458, %v2346
      %v5637 = vmul.f32 %v5460, %v2346
      %v5638 = vmul.f32 %v5464, %v2346
      %v5639 = vmul.f32 %v5466, %v2346
      %v5640 = vmul.f32 %v5470, %v2346
      %v5641 = vmul.f32 %v5472, %v2346
      %v5642 = vmul.f32 %v5476, %v2346
      %v5643 = vmul.f32 %v5478, %v2346
      %v5644 = vmul.f32 %v5482, %v2346
      %v5645 = vmul.f32 %v5484, %v2346
      %v5646 = vmul.f32 %v5488, %v2346
      %v5647 = vmul.f32 %v5490, %v2346
      %v5648 = vmul.f32 %v5494, %v2346
      %v5649 = vmul.f32 %v5496, %v2346
      %v5650 = vmul.f32 %v5500, %v2346
      %v5651 = vmul.f32 %v5502, %v2346
      %v5652 = vmul.f32 %v5506, %v2346
      %v5653 = vmul.f32 %v5508, %v2346
      %v5654 = vmul.f32 %v5512, %v2346
      %v5655 = vmul.f32 %v5514, %v2346
      %v5656 = vmul.f32 %v5518, %v2346
      %v5657 = vmul.f32 %v5520, %v2346
      %v5658 = vmul.f32 %v5524, %v2346
      %v5659 = vmul.f32 %v5526, %v2346
      %v5660 = vmul.f32 %v5530, %v2346
      %v5661 = vmul.f32 %v5532, %v2346
      %v5662 = vmul.f32 %v5536, %v2346
      %v5663 = vmul.f32 %v5538, %v2346
      %v5664 = vmul.f32 %v5542, %v2346
      %v5665 = vmul.f32 %v5544, %v2346
      %v5666 = vmul.f32 %v5548, %v2346
      %v5667 = vmul.f32 %v5550, %v2346
      %v5668 = vmul.f32 %v5554, %v2346
      %v5669 = vmul.f32 %v5556, %v2346
      %v5670 = vmul.f32 %v5560, %v2346
      %v5671 = vmul.f32 %v5562, %v2346
      %v5672 = vmul.f32 %v5566, %v2346
      %v5673 = vmul.f32 %v5568, %v2346
      %v5674 = vmul.f32 %v5572, %v2346
      %v5675 = vmul.f32 %v5574, %v2346
      %v5676 = vmul.f32 %v5578, %v2346
      %v5677 = vmul.f32 %v5580, %v2346
      %v5678 = vmul.f32 %v5584, %v2346
      %v5679 = vmul.f32 %v5586, %v2346
      %v5680 = vmul.f32 %v5590, %v2346
      %v5681 = vmul.f32 %v5592, %v2346
      %v5682 = vmul.f32 %v5596, %v2346
      %v5683 = vmul.f32 %v5598, %v2346
      %v5684 = vmul.f32 %v5602, %v2346
      %v5685 = vmul.f32 %v5604, %v2346
      %v5686 = vmul.f32 %v5608, %v2346
      %v5687 = vmul.f32 %v5610, %v2346
      %v5688 = vmul.f32 %v5614, %v2346
      %v5689 = vmul.f32 %v5616, %v2346
      %v5690 = vmul.f32 %v5620, %v2346
      %v5691 = vmul.f32 %v5622, %v2346
      %v5692 = vmul.f32 %v5626, %v2346
      %v5693 = vmul.f32 %v5628, %v2346
      %v5694 = vfloor.f32 %v5630
      %v5695 = vfloor.f32 %v5631
      %v5696 = vfloor.f32 %v5632
      %v5697 = vfloor.f32 %v5633
      %v5698 = vfloor.f32 %v5634
      %v5699 = vfloor.f32 %v5635
      %v5700 = vfloor.f32 %v5636
      %v5701 = vfloor.f32 %v5637
      %v5702 = vfloor.f32 %v5638
      %v5703 = vfloor.f32 %v5639
      %v5704 = vfloor.f32 %v5640
      %v5705 = vfloor.f32 %v5641
      %v5706 = vfloor.f32 %v5642
      %v5707 = vfloor.f32 %v5643
      %v5708 = vfloor.f32 %v5644
      %v5709 = vfloor.f32 %v5645
      %v5710 = vfloor.f32 %v5646
      %v5711 = vfloor.f32 %v5647
      %v5712 = vfloor.f32 %v5648
      %v5713 = vfloor.f32 %v5649
      %v5714 = vfloor.f32 %v5650
      %v5715 = vfloor.f32 %v5651
      %v5716 = vfloor.f32 %v5652
      %v5717 = vfloor.f32 %v5653
      %v5718 = vfloor.f32 %v5654
      %v5719 = vfloor.f32 %v5655
      %v5720 = vfloor.f32 %v5656
      %v5721 = vfloor.f32 %v5657
      %v5722 = vfloor.f32 %v5658
      %v5723 = vfloor.f32 %v5659
      %v5724 = vfloor.f32 %v5660
      %v5725 = vfloor.f32 %v5661
      %v5726 = vfloor.f32 %v5662
      %v5727 = vfloor.f32 %v5663
      %v5728 = vfloor.f32 %v5664
      %v5729 = vfloor.f32 %v5665
      %v5730 = vfloor.f32 %v5666
      %v5731 = vfloor.f32 %v5667
      %v5732 = vfloor.f32 %v5668
      %v5733 = vfloor.f32 %v5669
      %v5734 = vfloor.f32 %v5670
      %v5735 = vfloor.f32 %v5671
      %v5736 = vfloor.f32 %v5672
      %v5737 = vfloor.f32 %v5673
      %v5738 = vfloor.f32 %v5674
      %v5739 = vfloor.f32 %v5675
      %v5740 = vfloor.f32 %v5676
      %v5741 = vfloor.f32 %v5677
      %v5742 = vfloor.f32 %v5678
      %v5743 = vfloor.f32 %v5679
      %v5744 = vfloor.f32 %v5680
      %v5745 = vfloor.f32 %v5681
      %v5746 = vfloor.f32 %v5682
      %v5747 = vfloor.f32 %v5683
      %v5748 = vfloor.f32 %v5684
      %v5749 = vfloor.f32 %v5685
      %v5750 = vfloor.f32 %v5686
      %v5751 = vfloor.f32 %v5687
      %v5752 = vfloor.f32 %v5688
      %v5753 = vfloor.f32 %v5689
      %v5754 = vfloor.f32 %v5690
      %v5755 = vfloor.f32 %v5691
      %v5756 = vfloor.f32 %v5692
      %v5757 = vfloor.f32 %v5693
      %v5758 = vld [vmem:[#allocation3 + $0x40] sm:$0xf]
      %v5759 = vld [vmem:[#allocation3 + $0x48] sm:$0xf]
      %5760 = vmatprep.subr.mxu0 %v5695
      %5761 = vmatpush1.xpose.msra.mxu0 %v5694
      %5762 = vmatprep.subr.mxu0 %v5697
      %5763 = vmatpush1.xpose.msra.mxu0 %v5696
      %5764 = vmatprep.subr.mxu0 %v5699
      %5765 = vmatpush1.xpose.msra.mxu0 %v5698
      %5766 = vmatprep.subr.mxu0 %v5701
      %5767 = vmatpush1.xpose.msra.mxu0 %v5700
      %5768 = vmatprep.subr.mxu0 %v5703
      %5769 = vmatpush1.xpose.msra.mxu0 %v5702
      %5770 = vmatprep.subr.mxu0 %v5705
      %5771 = vmatpush1.xpose.msra.mxu0 %v5704
      %5772 = vmatprep.subr.mxu0 %v5707
      %5773 = vmatpush1.xpose.msra.mxu0 %v5706
      %5774 = vmatprep.subr.mxu0 %v5709
      %5775 = vmatpush1.xpose.msra.mxu0 %v5708
      %5776 = vmatprep.subr.mxu0 %v5711
      %5777 = vmatpush1.xpose.msra.mxu0 %v5710
      %5778 = vmatprep.subr.mxu0 %v5713
      %5779 = vmatpush1.xpose.msra.mxu0 %v5712
      %5780 = vmatprep.subr.mxu0 %v5715
      %5781 = vmatpush1.xpose.msra.mxu0 %v5714
      %5782 = vmatprep.subr.mxu0 %v5717
      %5783 = vmatpush1.xpose.msra.mxu0 %v5716
      %5784 = vmatprep.subr.mxu0 %v5719
      %5785 = vmatpush1.xpose.msra.mxu0 %v5718
      %5786 = vmatprep.subr.mxu0 %v5721
      %5787 = vmatpush1.xpose.msra.mxu0 %v5720
      %5788 = vmatprep.subr.mxu0 %v5723
      %5789 = vmatpush1.xpose.msra.mxu0 %v5722
      %5790 = vmatprep.subr.mxu0 %v5725
      %5791 = vmatpush1.xpose.msra.mxu0 %v5724
      %5792 = vmatprep.subr.mxu0 %v5727
      %5793 = vmatpush1.xpose.msra.mxu0 %v5726
      %5794 = vmatprep.subr.mxu0 %v5729
      %5795 = vmatpush1.xpose.msra.mxu0 %v5728
      %5796 = vmatprep.subr.mxu0 %v5731
      %5797 = vmatpush1.xpose.msra.mxu0 %v5730
      %5798 = vmatprep.subr.mxu0 %v5733
      %5799 = vmatpush1.xpose.msra.mxu0 %v5732
      %5800 = vmatprep.subr.mxu0 %v5735
      %5801 = vmatpush1.xpose.msra.mxu0 %v5734
      %5802 = vmatprep.subr.mxu0 %v5737
      %5803 = vmatpush1.xpose.msra.mxu0 %v5736
      %5804 = vmatprep.subr.mxu0 %v5739
      %5805 = vmatpush1.xpose.msra.mxu0 %v5738
      %5806 = vmatprep.subr.mxu0 %v5741
      %5807 = vmatpush1.xpose.msra.mxu0 %v5740
      %5808 = vmatprep.subr.mxu0 %v5743
      %5809 = vmatpush1.xpose.msra.mxu0 %v5742
      %5810 = vmatprep.subr.mxu0 %v5745
      %5811 = vmatpush1.xpose.msra.mxu0 %v5744
      %5812 = vmatprep.subr.mxu0 %v5747
      %5813 = vmatpush1.xpose.msra.mxu0 %v5746
      %5814 = vmatprep.subr.mxu0 %v5749
      %5815 = vmatpush1.xpose.msra.mxu0 %v5748
      %5816 = vmatprep.subr.mxu0 %v5751
      %5817 = vmatpush1.xpose.msra.mxu0 %v5750
      %5818 = vmatprep.subr.mxu0 %v5753
      %5819 = vmatpush1.xpose.msra.mxu0 %v5752
      %5820 = vmatprep.subr.mxu0 %v5755
      %5821 = vmatpush1.xpose.msra.mxu0 %v5754
      %5822 = vmatprep.subr.mxu0 %v5757
      %5823 = vmatpush1.xpose.msra.mxu0 %v5756
      %5824 = vmatprep.mubr.f32.mxu0 %v5759
      %5825 = vmatmul.mubr.f32.gmra.mrb[0].mxu0 %v5758
      %v5826 = vpop.f32.mrb[0].mxu0
      %v5827 = vadd.f32 0.0, %v5826
      %v5828 = vpop.f32.mrb[0].mxu0
      %v5829 = vadd.f32 0.0, %v5828
      %5830 = vdwg.mxu0
      %v5832 = vlaneseq
      %v5833 = vshrl.u32 %v5832, 7
      %v5834 = vsub.s32 0, %v5833
      %v5835 = vrot.slane %v4879, %v5834
      %v5836 = vlaneseq
      %v5837 = vshrl.u32 %v5836, 7
      %v5838 = vsub.s32 1, %v5837
      %v5839 = vrot.slane %v4879, %v5838
      %v5842 = vmul.f32 %v5827, %v5835
      %v5843 = vmul.f32 %v5829, %v5839
      %v5845 = vlaneseq
      %v5846 = vshrl.u32 %v5845, 7
      %v5847 = vsub.s32 0, %v5846
      %v5848 = vrot.slane %v4881, %v5847
      %v5849 = vlaneseq
      %v5850 = vshrl.u32 %v5849, 7
      %v5851 = vsub.s32 1, %v5850
      %v5852 = vrot.slane %v4881, %v5851
      %v5855 = vmul.f32 %v4377, %v5848
      %v5856 = vmul.f32 %v4377, %v5852
      %v5857 = vadd.f32 %v5842, %v5855
      %v5858 = vadd.f32 %v5843, %v5856
      %v5859 = vld [vmem:[#allocation3 + $0x50] sm:$0x3]
      %v5860 = vld [vmem:[#allocation3 + $0x58] sm:$0x3]
      %v5861 = vld [vmem:[#allocation3 + $0x60] sm:$0x3]
      %v5862 = vld [vmem:[#allocation3 + $0x68] sm:$0x3]
      %5863 = vxpose.xlu0.b32.start [1/16] %v5859, 128
      %5864 = vxpose.xlu0.b32.cont [2/16] 0.0, 128
      %5865 = vxpose.xlu0.b32.cont [3/16] 0.0, 128
      %5866 = vxpose.xlu0.b32.cont [4/16] 0.0, 128
      %5867 = vxpose.xlu0.b32.cont [5/16] 0.0, 128
      %5868 = vxpose.xlu0.b32.cont [6/16] 0.0, 128
      %5869 = vxpose.xlu0.b32.cont [7/16] 0.0, 128
      %5870 = vxpose.xlu0.b32.cont [8/16] 0.0, 128
      %5871 = vxpose.xlu0.b32.cont [9/16] 0.0, 128
      %5872 = vxpose.xlu0.b32.cont [10/16] 0.0, 128
      %5873 = vxpose.xlu0.b32.cont [11/16] 0.0, 128
      %5874 = vxpose.xlu0.b32.cont [12/16] 0.0, 128
      %5875 = vxpose.xlu0.b32.cont [13/16] 0.0, 128
      %5876 = vxpose.xlu0.b32.cont [14/16] 0.0, 128
      %5877 = vxpose.xlu0.b32.cont [15/16] 0.0, 128
      %5878 = vxpose.xlu0.b32.end [16/16] 0.0, 128
      %v5879 = vpop.trf.xlu0
      %v5880 = vpop.trf.xlu0
      %v5881 = vpop.trf.xlu0
      %v5882 = vpop.trf.xlu0
      %v5883 = vpop.trf.xlu0
      %v5884 = vpop.trf.xlu0
      %v5885 = vpop.trf.xlu0
      %v5886 = vpop.trf.xlu0
      %v5887 = vpop.trf.xlu0
      %v5888 = vpop.trf.xlu0
      %v5889 = vpop.trf.xlu0
      %v5890 = vpop.trf.xlu0
      %v5891 = vpop.trf.xlu0
      %v5892 = vpop.trf.xlu0
      %v5893 = vpop.trf.xlu0
      %v5894 = vpop.trf.xlu0
      %5895 = vxpose.xlu0.b32.start [1/16] %v5860, 128
      %5896 = vxpose.xlu0.b32.cont [2/16] 0.0, 128
      %5897 = vxpose.xlu0.b32.cont [3/16] 0.0, 128
      %5898 = vxpose.xlu0.b32.cont [4/16] 0.0, 128
      %5899 = vxpose.xlu0.b32.cont [5/16] 0.0, 128
      %5900 = vxpose.xlu0.b32.cont [6/16] 0.0, 128
      %5901 = vxpose.xlu0.b32.cont [7/16] 0.0, 128
      %5902 = vxpose.xlu0.b32.cont [8/16] 0.0, 128
      %5903 = vxpose.xlu0.b32.cont [9/16] 0.0, 128
      %5904 = vxpose.xlu0.b32.cont [10/16] 0.0, 128
      %5905 = vxpose.xlu0.b32.cont [11/16] 0.0, 128
      %5906 = vxpose.xlu0.b32.cont [12/16] 0.0, 128
      %5907 = vxpose.xlu0.b32.cont [13/16] 0.0, 128
      %5908 = vxpose.xlu0.b32.cont [14/16] 0.0, 128
      %5909 = vxpose.xlu0.b32.cont [15/16] 0.0, 128
      %5910 = vxpose.xlu0.b32.end [16/16] 0.0, 128
      %v5911 = vpop.trf.xlu0
      %v5912 = vpop.trf.xlu0
      %v5913 = vpop.trf.xlu0
      %v5914 = vpop.trf.xlu0
      %v5915 = vpop.trf.xlu0
      %v5916 = vpop.trf.xlu0
      %v5917 = vpop.trf.xlu0
      %v5918 = vpop.trf.xlu0
      %v5919 = vpop.trf.xlu0
      %v5920 = vpop.trf.xlu0
      %v5921 = vpop.trf.xlu0
      %v5922 = vpop.trf.xlu0
      %v5923 = vpop.trf.xlu0
      %v5924 = vpop.trf.xlu0
      %v5925 = vpop.trf.xlu0
      %v5926 = vpop.trf.xlu0
      %v5928 = vsel %vm661, %v5879, 0
      %v5931 = vsel %vm661, %v5880, 0
      %v5934 = vsel %vm661, %v5881, 0
      %v5937 = vsel %vm661, %v5882, 0
      %v5940 = vsel %vm661, %v5883, 0
      %v5943 = vsel %vm661, %v5884, 0
      %v5946 = vsel %vm661, %v5885, 0
      %v5949 = vsel %vm661, %v5886, 0
      %v5952 = vsel %vm661, %v5887, 0
      %v5955 = vsel %vm661, %v5888, 0
      %v5958 = vsel %vm661, %v5889, 0
      %v5961 = vsel %vm661, %v5890, 0
      %v5964 = vsel %vm661, %v5891, 0
      %v5967 = vsel %vm661, %v5892, 0
      %v5970 = vsel %vm661, %v5893, 0
      %v5973 = vsel %vm661, %v5894, 0
      %v5976 = vsel %vm661, %v5911, 0
      %v5979 = vsel %vm661, %v5912, 0
      %v5982 = vsel %vm661, %v5913, 0
      %v5985 = vsel %vm661, %v5914, 0
      %v5988 = vsel %vm661, %v5915, 0
      %v5991 = vsel %vm661, %v5916, 0
      %v5994 = vsel %vm661, %v5917, 0
      %v5997 = vsel %vm661, %v5918, 0
      %v6000 = vsel %vm661, %v5919, 0
      %v6003 = vsel %vm661, %v5920, 0
      %v6006 = vsel %vm661, %v5921, 0
      %v6009 = vsel %vm661, %v5922, 0
      %v6012 = vsel %vm661, %v5923, 0
      %v6015 = vsel %vm661, %v5924, 0
      %v6018 = vsel %vm661, %v5925, 0
      %v6021 = vsel %vm661, %v5926, 0
      %v6024 = vsel %vm758, %v5861, 0
      %v6027 = vsel %vm758, %v5862, 0
      %6029 = vmatprep.subr.mxu0 %v6027
      %6030 = vmatpush1.msra.mxu0 %v6024
      %6031 = vmatprep.subr.mxu0 0.0
      %6032 = vmatpush1.msra.mxu0 0.0
      %6033 = vmatprep.subr.mxu0 0.0
      %6034 = vmatpush1.msra.mxu0 0.0
      %6035 = vmatprep.subr.mxu0 0.0
      %6036 = vmatpush1.msra.mxu0 0.0
      %6037 = vmatprep.subr.mxu0 0.0
      %6038 = vmatpush1.msra.mxu0 0.0
      %6039 = vmatprep.subr.mxu0 0.0
      %6040 = vmatpush1.msra.mxu0 0.0
      %6041 = vmatprep.subr.mxu0 0.0
      %6042 = vmatpush1.msra.mxu0 0.0
      %6043 = vmatprep.subr.mxu0 0.0
      %6044 = vmatpush1.msra.mxu0 0.0
      %6045 = vmatprep.subr.mxu0 0.0
      %6046 = vmatpush1.msra.mxu0 0.0
      %6047 = vmatprep.subr.mxu0 0.0
      %6048 = vmatpush1.msra.mxu0 0.0
      %6049 = vmatprep.subr.mxu0 0.0
      %6050 = vmatpush1.msra.mxu0 0.0
      %6051 = vmatprep.subr.mxu0 0.0
      %6052 = vmatpush1.msra.mxu0 0.0
      %6053 = vmatprep.subr.mxu0 0.0
      %6054 = vmatpush1.msra.mxu0 0.0
      %6055 = vmatprep.subr.mxu0 0.0
      %6056 = vmatpush1.msra.mxu0 0.0
      %6057 = vmatprep.subr.mxu0 0.0
      %6058 = vmatpush1.msra.mxu0 0.0
      %6059 = vmatprep.subr.mxu0 0.0
      %6060 = vmatpush1.msra.mxu0 0.0
      %6061 = vmatprep.subr.mxu0 0.0
      %6062 = vmatpush1.msra.mxu0 0.0
      %6063 = vmatprep.subr.mxu0 0.0
      %6064 = vmatpush1.msra.mxu0 0.0
      %6065 = vmatprep.subr.mxu0 0.0
      %6066 = vmatpush1.msra.mxu0 0.0
      %6067 = vmatprep.subr.mxu0 0.0
      %6068 = vmatpush1.msra.mxu0 0.0
      %6069 = vmatprep.subr.mxu0 0.0
      %6070 = vmatpush1.msra.mxu0 0.0
      %6071 = vmatprep.subr.mxu0 0.0
      %6072 = vmatpush1.msra.mxu0 0.0
      %6073 = vmatprep.subr.mxu0 0.0
      %6074 = vmatpush1.msra.mxu0 0.0
      %6075 = vmatprep.subr.mxu0 0.0
      %6076 = vmatpush1.msra.mxu0 0.0
      %6077 = vmatprep.subr.mxu0 0.0
      %6078 = vmatpush1.msra.mxu0 0.0
      %6079 = vmatprep.subr.mxu0 0.0
      %6080 = vmatpush1.msra.mxu0 0.0
      %6081 = vmatprep.subr.mxu0 0.0
      %6082 = vmatpush1.msra.mxu0 0.0
      %6083 = vmatprep.subr.mxu0 0.0
      %6084 = vmatpush1.msra.mxu0 0.0
      %6085 = vmatprep.subr.mxu0 0.0
      %6086 = vmatpush1.msra.mxu0 0.0
      %6087 = vmatprep.subr.mxu0 0.0
      %6088 = vmatpush1.msra.mxu0 0.0
      %6089 = vmatprep.subr.mxu0 0.0
      %6090 = vmatpush1.msra.mxu0 0.0
      %6091 = vmatprep.subr.mxu0 0.0
      %6092 = vmatpush1.msra.mxu0 0.0
      %6093 = vmatprep.mubr.f32.mxu0 0.0
      %6094 = vmatmul.mubr.f32.gmra.mrb[0].mxu0 %v5928
      %v6095 = vpop.f32.mrb[0].mxu0
      %v6096 = vadd.f32 0.0, %v6095
      %v6097 = vpop.f32.mrb[0].mxu0
      %v6098 = vadd.f32 0.0, %v6097
      %6099 = vmatprep.mubr.f32.mxu0 0.0
      %6100 = vmatmul.mubr.f32.gmra.mrb[0].mxu0 %v5931
      %v6101 = vpop.f32.mrb[0].mxu0
      %v6102 = vadd.f32 0.0, %v6101
      %v6103 = vpop.f32.mrb[0].mxu0
      %v6104 = vadd.f32 0.0, %v6103
      %6105 = vmatprep.mubr.f32.mxu0 0.0
      %6106 = vmatmul.mubr.f32.gmra.mrb[0].mxu0 %v5934
      %v6107 = vpop.f32.mrb[0].mxu0
      %v6108 = vadd.f32 0.0, %v6107
      %v6109 = vpop.f32.mrb[0].mxu0
      %v6110 = vadd.f32 0.0, %v6109
      %6111 = vmatprep.mubr.f32.mxu0 0.0
      %6112 = vmatmul.mubr.f32.gmra.mrb[0].mxu0 %v5937
      %v6113 = vpop.f32.mrb[0].mxu0
      %v6114 = vadd.f32 0.0, %v6113
      %v6115 = vpop.f32.mrb[0].mxu0
      %v6116 = vadd.f32 0.0, %v6115
      %6117 = vmatprep.mubr.f32.mxu0 0.0
      %6118 = vmatmul.mubr.f32.gmra.mrb[0].mxu0 %v5940
      %v6119 = vpop.f32.mrb[0].mxu0
      %v6120 = vadd.f32 0.0, %v6119
      %v6121 = vpop.f32.mrb[0].mxu0
      %v6122 = vadd.f32 0.0, %v6121
      %6123 = vmatprep.mubr.f32.mxu0 0.0
      %6124 = vmatmul.mubr.f32.gmra.mrb[0].mxu0 %v5943
      %v6125 = vpop.f32.mrb[0].mxu0
      %v6126 = vadd.f32 0.0, %v6125
      %v6127 = vpop.f32.mrb[0].mxu0
      %v6128 = vadd.f32 0.0, %v6127
      %6129 = vmatprep.mubr.f32.mxu0 0.0
      %6130 = vmatmul.mubr.f32.gmra.mrb[0].mxu0 %v5946
      %v6131 = vpop.f32.mrb[0].mxu0
      %v6132 = vadd.f32 0.0, %v6131
      %v6133 = vpop.f32.mrb[0].mxu0
      %v6134 = vadd.f32 0.0, %v6133
      %6135 = vmatprep.mubr.f32.mxu0 0.0
      %6136 = vmatmul.mubr.f32.gmra.mrb[0].mxu0 %v5949
      %v6137 = vpop.f32.mrb[0].mxu0
      %v6138 = vadd.f32 0.0, %v6137
      %v6139 = vpop.f32.mrb[0].mxu0
      %v6140 = vadd.f32 0.0, %v6139
      %6141 = vmatprep.mubr.f32.mxu0 0.0
      %6142 = vmatmul.mubr.f32.gmra.mrb[0].mxu0 %v5952
      %v6143 = vpop.f32.mrb[0].mxu0
      %v6144 = vadd.f32 0.0, %v6143
      %v6145 = vpop.f32.mrb[0].mxu0
      %v6146 = vadd.f32 0.0, %v6145
      %6147 = vmatprep.mubr.f32.mxu0 0.0
      %6148 = vmatmul.mubr.f32.gmra.mrb[0].mxu0 %v5955
      %v6149 = vpop.f32.mrb[0].mxu0
      %v6150 = vadd.f32 0.0, %v6149
      %v6151 = vpop.f32.mrb[0].mxu0
      %v6152 = vadd.f32 0.0, %v6151
      %6153 = vmatprep.mubr.f32.mxu0 0.0
      %6154 = vmatmul.mubr.f32.gmra.mrb[0].mxu0 %v5958
      %v6155 = vpop.f32.mrb[0].mxu0
      %v6156 = vadd.f32 0.0, %v6155
      %v6157 = vpop.f32.mrb[0].mxu0
      %v6158 = vadd.f32 0.0, %v6157
      %6159 = vmatprep.mubr.f32.mxu0 0.0
      %6160 = vmatmul.mubr.f32.gmra.mrb[0].mxu0 %v5961
      %v6161 = vpop.f32.mrb[0].mxu0
      %v6162 = vadd.f32 0.0, %v6161
      %v6163 = vpop.f32.mrb[0].mxu0
      %v6164 = vadd.f32 0.0, %v6163
      %6165 = vmatprep.mubr.f32.mxu0 0.0
      %6166 = vmatmul.mubr.f32.gmra.mrb[0].mxu0 %v5964
      %v6167 = vpop.f32.mrb[0].mxu0
      %v6168 = vadd.f32 0.0, %v6167
      %v6169 = vpop.f32.mrb[0].mxu0
      %v6170 = vadd.f32 0.0, %v6169
      %6171 = vmatprep.mubr.f32.mxu0 0.0
      %6172 = vmatmul.mubr.f32.gmra.mrb[0].mxu0 %v5967
      %v6173 = vpop.f32.mrb[0].mxu0
      %v6174 = vadd.f32 0.0, %v6173
      %v6175 = vpop.f32.mrb[0].mxu0
      %v6176 = vadd.f32 0.0, %v6175
      %6177 = vmatprep.mubr.f32.mxu0 0.0
      %6178 = vmatmul.mubr.f32.gmra.mrb[0].mxu0 %v5970
      %v6179 = vpop.f32.mrb[0].mxu0
      %v6180 = vadd.f32 0.0, %v6179
      %v6181 = vpop.f32.mrb[0].mxu0
      %v6182 = vadd.f32 0.0, %v6181
      %6183 = vmatprep.mubr.f32.mxu0 0.0
      %6184 = vmatmul.mubr.f32.gmra.mrb[0].mxu0 %v5973
      %v6185 = vpop.f32.mrb[0].mxu0
      %v6186 = vadd.f32 0.0, %v6185
      %v6187 = vpop.f32.mrb[0].mxu0
      %v6188 = vadd.f32 0.0, %v6187
      %6189 = vmatprep.mubr.f32.mxu0 0.0
      %6190 = vmatmul.mubr.f32.gmra.mrb[0].mxu0 %v5976
      %v6191 = vpop.f32.mrb[0].mxu0
      %v6192 = vadd.f32 0.0, %v6191
      %v6193 = vpop.f32.mrb[0].mxu0
      %v6194 = vadd.f32 0.0, %v6193
      %6195 = vmatprep.mubr.f32.mxu0 0.0
      %6196 = vmatmul.mubr.f32.gmra.mrb[0].mxu0 %v5979
      %v6197 = vpop.f32.mrb[0].mxu0
      %v6198 = vadd.f32 0.0, %v6197
      %v6199 = vpop.f32.mrb[0].mxu0
      %v6200 = vadd.f32 0.0, %v6199
      %6201 = vmatprep.mubr.f32.mxu0 0.0
      %6202 = vmatmul.mubr.f32.gmra.mrb[0].mxu0 %v5982
      %v6203 = vpop.f32.mrb[0].mxu0
      %v6204 = vadd.f32 0.0, %v6203
      %v6205 = vpop.f32.mrb[0].mxu0
      %v6206 = vadd.f32 0.0, %v6205
      %6207 = vmatprep.mubr.f32.mxu0 0.0
      %6208 = vmatmul.mubr.f32.gmra.mrb[0].mxu0 %v5985
      %v6209 = vpop.f32.mrb[0].mxu0
      %v6210 = vadd.f32 0.0, %v6209
      %v6211 = vpop.f32.mrb[0].mxu0
      %v6212 = vadd.f32 0.0, %v6211
      %6213 = vmatprep.mubr.f32.mxu0 0.0
      %6214 = vmatmul.mubr.f32.gmra.mrb[0].mxu0 %v5988
      %v6215 = vpop.f32.mrb[0].mxu0
      %v6216 = vadd.f32 0.0, %v6215
      %v6217 = vpop.f32.mrb[0].mxu0
      %v6218 = vadd.f32 0.0, %v6217
      %6219 = vmatprep.mubr.f32.mxu0 0.0
      %6220 = vmatmul.mubr.f32.gmra.mrb[0].mxu0 %v5991
      %v6221 = vpop.f32.mrb[0].mxu0
      %v6222 = vadd.f32 0.0, %v6221
      %v6223 = vpop.f32.mrb[0].mxu0
      %v6224 = vadd.f32 0.0, %v6223
      %6225 = vmatprep.mubr.f32.mxu0 0.0
      %6226 = vmatmul.mubr.f32.gmra.mrb[0].mxu0 %v5994
      %v6227 = vpop.f32.mrb[0].mxu0
      %v6228 = vadd.f32 0.0, %v6227
      %v6229 = vpop.f32.mrb[0].mxu0
      %v6230 = vadd.f32 0.0, %v6229
      %6231 = vmatprep.mubr.f32.mxu0 0.0
      %6232 = vmatmul.mubr.f32.gmra.mrb[0].mxu0 %v5997
      %v6233 = vpop.f32.mrb[0].mxu0
      %v6234 = vadd.f32 0.0, %v6233
      %v6235 = vpop.f32.mrb[0].mxu0
      %v6236 = vadd.f32 0.0, %v6235
      %6237 = vmatprep.mubr.f32.mxu0 0.0
      %6238 = vmatmul.mubr.f32.gmra.mrb[0].mxu0 %v6000
      %v6239 = vpop.f32.mrb[0].mxu0
      %v6240 = vadd.f32 0.0, %v6239
      %v6241 = vpop.f32.mrb[0].mxu0
      %v6242 = vadd.f32 0.0, %v6241
      %6243 = vmatprep.mubr.f32.mxu0 0.0
      %6244 = vmatmul.mubr.f32.gmra.mrb[0].mxu0 %v6003
      %v6245 = vpop.f32.mrb[0].mxu0
      %v6246 = vadd.f32 0.0, %v6245
      %v6247 = vpop.f32.mrb[0].mxu0
      %v6248 = vadd.f32 0.0, %v6247
      %6249 = vmatprep.mubr.f32.mxu0 0.0
      %6250 = vmatmul.mubr.f32.gmra.mrb[0].mxu0 %v6006
      %v6251 = vpop.f32.mrb[0].mxu0
      %v6252 = vadd.f32 0.0, %v6251
      %v6253 = vpop.f32.mrb[0].mxu0
      %v6254 = vadd.f32 0.0, %v6253
      %6255 = vmatprep.mubr.f32.mxu0 0.0
      %6256 = vmatmul.mubr.f32.gmra.mrb[0].mxu0 %v6009
      %v6257 = vpop.f32.mrb[0].mxu0
      %v6258 = vadd.f32 0.0, %v6257
      %v6259 = vpop.f32.mrb[0].mxu0
      %v6260 = vadd.f32 0.0, %v6259
      %6261 = vmatprep.mubr.f32.mxu0 0.0
      %6262 = vmatmul.mubr.f32.gmra.mrb[0].mxu0 %v6012
      %v6263 = vpop.f32.mrb[0].mxu0
      %v6264 = vadd.f32 0.0, %v6263
      %v6265 = vpop.f32.mrb[0].mxu0
      %v6266 = vadd.f32 0.0, %v6265
      %6267 = vmatprep.mubr.f32.mxu0 0.0
      %6268 = vmatmul.mubr.f32.gmra.mrb[0].mxu0 %v6015
      %v6269 = vpop.f32.mrb[0].mxu0
      %v6270 = vadd.f32 0.0, %v6269
      %v6271 = vpop.f32.mrb[0].mxu0
      %v6272 = vadd.f32 0.0, %v6271
      %6273 = vmatprep.mubr.f32.mxu0 0.0
      %6274 = vmatmul.mubr.f32.gmra.mrb[0].mxu0 %v6018
      %v6275 = vpop.f32.mrb[0].mxu0
      %v6276 = vadd.f32 0.0, %v6275
      %v6277 = vpop.f32.mrb[0].mxu0
      %v6278 = vadd.f32 0.0, %v6277
      %6279 = vmatprep.mubr.f32.mxu0 0.0
      %6280 = vmatmul.mubr.f32.gmra.mrb[0].mxu0 %v6021
      %v6281 = vpop.f32.mrb[0].mxu0
      %v6282 = vadd.f32 0.0, %v6281
      %v6283 = vpop.f32.mrb[0].mxu0
      %v6284 = vadd.f32 0.0, %v6283
      %6285 = vdwg.mxu0
      %v6286 = vld [vmem:[%s1521] sm:$0xff]
      %v6287 = vld [vmem:[%s1521 + $0x8] sm:$0xff]
      %v6288 = vld [vmem:[%s1521 + $0x10] sm:$0xff]
      %v6289 = vld [vmem:[%s1521 + $0x18] sm:$0xff]
      %v6290 = vld [vmem:[%s1521 + $0x20] sm:$0xff]
      %v6291 = vld [vmem:[%s1521 + $0x28] sm:$0xff]
      %v6292 = vld [vmem:[%s1521 + $0x30] sm:$0xff]
      %v6293 = vld [vmem:[%s1521 + $0x38] sm:$0xff]
      %v6294 = vld [vmem:[%s1521 + $0x40] sm:$0xff]
      %v6295 = vld [vmem:[%s1521 + $0x48] sm:$0xff]
      %v6296 = vld [vmem:[%s1521 + $0x50] sm:$0xff]
      %v6297 = vld [vmem:[%s1521 + $0x58] sm:$0xff]
      %v6298 = vld [vmem:[%s1521 + $0x60] sm:$0xff]
      %v6299 = vld [vmem:[%s1521 + $0x68] sm:$0xff]
      %v6300 = vld [vmem:[%s1521 + $0x70] sm:$0xff]
      %v6301 = vld [vmem:[%s1521 + $0x78] sm:$0xff]
      %v6302 = vld [vmem:[%s1521 + $0x80] sm:$0xff]
      %v6303 = vld [vmem:[%s1521 + $0x88] sm:$0xff]
      %v6304 = vld [vmem:[%s1521 + $0x90] sm:$0xff]
      %v6305 = vld [vmem:[%s1521 + $0x98] sm:$0xff]
      %v6306 = vld [vmem:[%s1521 + $0xa0] sm:$0xff]
      %v6307 = vld [vmem:[%s1521 + $0xa8] sm:$0xff]
      %v6308 = vld [vmem:[%s1521 + $0xb0] sm:$0xff]
      %v6309 = vld [vmem:[%s1521 + $0xb8] sm:$0xff]
      %v6310 = vld [vmem:[%s1521 + $0xc0] sm:$0xff]
      %v6311 = vld [vmem:[%s1521 + $0xc8] sm:$0xff]
      %v6312 = vld [vmem:[%s1521 + $0xd0] sm:$0xff]
      %v6313 = vld [vmem:[%s1521 + $0xd8] sm:$0xff]
      %v6314 = vld [vmem:[%s1521 + $0xe0] sm:$0xff]
      %v6315 = vld [vmem:[%s1521 + $0xe8] sm:$0xff]
      %v6316 = vld [vmem:[%s1521 + $0xf0] sm:$0xff]
      %v6317 = vld [vmem:[%s1521 + $0xf8] sm:$0xff]
      %v6318 = vld [vmem:[%s1521 + $0x100] sm:$0xff]
      %v6319 = vld [vmem:[%s1521 + $0x108] sm:$0xff]
      %v6320 = vld [vmem:[%s1521 + $0x110] sm:$0xff]
      %v6321 = vld [vmem:[%s1521 + $0x118] sm:$0xff]
      %v6322 = vld [vmem:[%s1521 + $0x120] sm:$0xff]
      %v6323 = vld [vmem:[%s1521 + $0x128] sm:$0xff]
      %v6324 = vld [vmem:[%s1521 + $0x130] sm:$0xff]
      %v6325 = vld [vmem:[%s1521 + $0x138] sm:$0xff]
      %v6326 = vld [vmem:[%s1521 + $0x140] sm:$0xff]
      %v6327 = vld [vmem:[%s1521 + $0x148] sm:$0xff]
      %v6328 = vld [vmem:[%s1521 + $0x150] sm:$0xff]
      %v6329 = vld [vmem:[%s1521 + $0x158] sm:$0xff]
      %v6330 = vld [vmem:[%s1521 + $0x160] sm:$0xff]
      %v6331 = vld [vmem:[%s1521 + $0x168] sm:$0xff]
      %v6332 = vld [vmem:[%s1521 + $0x170] sm:$0xff]
      %v6333 = vld [vmem:[%s1521 + $0x178] sm:$0xff]
      %v6334 = vld [vmem:[%s1521 + $0x180] sm:$0xff]
      %v6335 = vld [vmem:[%s1521 + $0x188] sm:$0xff]
      %v6336 = vld [vmem:[%s1521 + $0x190] sm:$0xff]
      %v6337 = vld [vmem:[%s1521 + $0x198] sm:$0xff]
      %v6338 = vld [vmem:[%s1521 + $0x1a0] sm:$0xff]
      %v6339 = vld [vmem:[%s1521 + $0x1a8] sm:$0xff]
      %v6340 = vld [vmem:[%s1521 + $0x1b0] sm:$0xff]
      %v6341 = vld [vmem:[%s1521 + $0x1b8] sm:$0xff]
      %v6342 = vld [vmem:[%s1521 + $0x1c0] sm:$0xff]
      %v6343 = vld [vmem:[%s1521 + $0x1c8] sm:$0xff]
      %v6344 = vld [vmem:[%s1521 + $0x1d0] sm:$0xff]
      %v6345 = vld [vmem:[%s1521 + $0x1d8] sm:$0xff]
      %v6346 = vld [vmem:[%s1521 + $0x1e0] sm:$0xff]
      %v6347 = vld [vmem:[%s1521 + $0x1e8] sm:$0xff]
      %v6348 = vld [vmem:[%s1521 + $0x1f0] sm:$0xff]
      %v6349 = vld [vmem:[%s1521 + $0x1f8] sm:$0xff]
      %6350 = vmatprep.subr.mxu0 %v6287
      %6351 = vmatpush1.msra.mxu0 %v6286
      %6352 = vmatprep.subr.mxu0 %v6289
      %6353 = vmatpush1.msra.mxu0 %v6288
      %6354 = vmatprep.subr.mxu0 %v6291
      %6355 = vmatpush1.msra.mxu0 %v6290
      %6356 = vmatprep.subr.mxu0 %v6293
      %6357 = vmatpush1.msra.mxu0 %v6292
      %6358 = vmatprep.subr.mxu0 %v6295
      %6359 = vmatpush1.msra.mxu0 %v6294
      %6360 = vmatprep.subr.mxu0 %v6297
      %6361 = vmatpush1.msra.mxu0 %v6296
      %6362 = vmatprep.subr.mxu0 %v6299
      %6363 = vmatpush1.msra.mxu0 %v6298
      %6364 = vmatprep.subr.mxu0 %v6301
      %6365 = vmatpush1.msra.mxu0 %v6300
      %6366 = vmatprep.subr.mxu0 %v6303
      %6367 = vmatpush1.msra.mxu0 %v6302
      %6368 = vmatprep.subr.mxu0 %v6305
      %6369 = vmatpush1.msra.mxu0 %v6304
      %6370 = vmatprep.subr.mxu0 %v6307
      %6371 = vmatpush1.msra.mxu0 %v6306
      %6372 = vmatprep.subr.mxu0 %v6309
      %6373 = vmatpush1.msra.mxu0 %v6308
      %6374 = vmatprep.subr.mxu0 %v6311
      %6375 = vmatpush1.msra.mxu0 %v6310
      %6376 = vmatprep.subr.mxu0 %v6313
      %6377 = vmatpush1.msra.mxu0 %v6312
      %6378 = vmatprep.subr.mxu0 %v6315
      %6379 = vmatpush1.msra.mxu0 %v6314
      %6380 = vmatprep.subr.mxu0 %v6317
      %6381 = vmatpush1.msra.mxu0 %v6316
      %6382 = vmatprep.subr.mxu0 %v6319
      %6383 = vmatpush1.msra.mxu0 %v6318
      %6384 = vmatprep.subr.mxu0 %v6321
      %6385 = vmatpush1.msra.mxu0 %v6320
      %6386 = vmatprep.subr.mxu0 %v6323
      %6387 = vmatpush1.msra.mxu0 %v6322
      %6388 = vmatprep.subr.mxu0 %v6325
      %6389 = vmatpush1.msra.mxu0 %v6324
      %6390 = vmatprep.subr.mxu0 %v6327
      %6391 = vmatpush1.msra.mxu0 %v6326
      %6392 = vmatprep.subr.mxu0 %v6329
      %6393 = vmatpush1.msra.mxu0 %v6328
      %6394 = vmatprep.subr.mxu0 %v6331
      %6395 = vmatpush1.msra.mxu0 %v6330
      %6396 = vmatprep.subr.mxu0 %v6333
      %6397 = vmatpush1.msra.mxu0 %v6332
      %6398 = vmatprep.subr.mxu0 %v6335
      %6399 = vmatpush1.msra.mxu0 %v6334
      %6400 = vmatprep.subr.mxu0 %v6337
      %6401 = vmatpush1.msra.mxu0 %v6336
      %6402 = vmatprep.subr.mxu0 %v6339
      %6403 = vmatpush1.msra.mxu0 %v6338
      %6404 = vmatprep.subr.mxu0 %v6341
      %6405 = vmatpush1.msra.mxu0 %v6340
      %6406 = vmatprep.subr.mxu0 %v6343
      %6407 = vmatpush1.msra.mxu0 %v6342
      %6408 = vmatprep.subr.mxu0 %v6345
      %6409 = vmatpush1.msra.mxu0 %v6344
      %6410 = vmatprep.subr.mxu0 %v6347
      %6411 = vmatpush1.msra.mxu0 %v6346
      %6412 = vmatprep.subr.mxu0 %v6349
      %6413 = vmatpush1.msra.mxu0 %v6348
      %6414 = vmatprep.mubr.f32.mxu0 %v6098
      %6415 = vmatmul.mubr.f32.gmra.mrb[0].mxu0 %v6096
      %v6416 = vpop.f32.mrb[0].mxu0
      %v6417 = vadd.f32 0.0, %v6416
      %v6418 = vpop.f32.mrb[0].mxu0
      %v6419 = vadd.f32 0.0, %v6418
      %6420 = vmatprep.mubr.f32.mxu0 %v6104
      %6421 = vmatmul.mubr.f32.gmra.mrb[0].mxu0 %v6102
      %v6422 = vpop.f32.mrb[0].mxu0
      %v6423 = vadd.f32 0.0, %v6422
      %v6424 = vpop.f32.mrb[0].mxu0
      %v6425 = vadd.f32 0.0, %v6424
      %6426 = vmatprep.mubr.f32.mxu0 %v6110
      %6427 = vmatmul.mubr.f32.gmra.mrb[0].mxu0 %v6108
      %v6428 = vpop.f32.mrb[0].mxu0
      %v6429 = vadd.f32 0.0, %v6428
      %v6430 = vpop.f32.mrb[0].mxu0
      %v6431 = vadd.f32 0.0, %v6430
      %6432 = vmatprep.mubr.f32.mxu0 %v6116
      %6433 = vmatmul.mubr.f32.gmra.mrb[0].mxu0 %v6114
      %v6434 = vpop.f32.mrb[0].mxu0
      %v6435 = vadd.f32 0.0, %v6434
      %v6436 = vpop.f32.mrb[0].mxu0
      %v6437 = vadd.f32 0.0, %v6436
      %6438 = vmatprep.mubr.f32.mxu0 %v6122
      %6439 = vmatmul.mubr.f32.gmra.mrb[0].mxu0 %v6120
      %v6440 = vpop.f32.mrb[0].mxu0
      %v6441 = vadd.f32 0.0, %v6440
      %v6442 = vpop.f32.mrb[0].mxu0
      %v6443 = vadd.f32 0.0, %v6442
      %6444 = vmatprep.mubr.f32.mxu0 %v6128
      %6445 = vmatmul.mubr.f32.gmra.mrb[0].mxu0 %v6126
      %v6446 = vpop.f32.mrb[0].mxu0
      %v6447 = vadd.f32 0.0, %v6446
      %v6448 = vpop.f32.mrb[0].mxu0
      %v6449 = vadd.f32 0.0, %v6448
      %6450 = vmatprep.mubr.f32.mxu0 %v6134
      %6451 = vmatmul.mubr.f32.gmra.mrb[0].mxu0 %v6132
      %v6452 = vpop.f32.mrb[0].mxu0
      %v6453 = vadd.f32 0.0, %v6452
      %v6454 = vpop.f32.mrb[0].mxu0
      %v6455 = vadd.f32 0.0, %v6454
      %6456 = vmatprep.mubr.f32.mxu0 %v6140
      %6457 = vmatmul.mubr.f32.gmra.mrb[0].mxu0 %v6138
      %v6458 = vpop.f32.mrb[0].mxu0
      %v6459 = vadd.f32 0.0, %v6458
      %v6460 = vpop.f32.mrb[0].mxu0
      %v6461 = vadd.f32 0.0, %v6460
      %6462 = vmatprep.mubr.f32.mxu0 %v6146
      %6463 = vmatmul.mubr.f32.gmra.mrb[0].mxu0 %v6144
      %v6464 = vpop.f32.mrb[0].mxu0
      %v6465 = vadd.f32 0.0, %v6464
      %v6466 = vpop.f32.mrb[0].mxu0
      %v6467 = vadd.f32 0.0, %v6466
      %6468 = vmatprep.mubr.f32.mxu0 %v6152
      %6469 = vmatmul.mubr.f32.gmra.mrb[0].mxu0 %v6150
      %v6470 = vpop.f32.mrb[0].mxu0
      %v6471 = vadd.f32 0.0, %v6470
      %v6472 = vpop.f32.mrb[0].mxu0
      %v6473 = vadd.f32 0.0, %v6472
      %6474 = vmatprep.mubr.f32.mxu0 %v6158
      %6475 = vmatmul.mubr.f32.gmra.mrb[0].mxu0 %v6156
      %v6476 = vpop.f32.mrb[0].mxu0
      %v6477 = vadd.f32 0.0, %v6476
      %v6478 = vpop.f32.mrb[0].mxu0
      %v6479 = vadd.f32 0.0, %v6478
      %6480 = vmatprep.mubr.f32.mxu0 %v6164
      %6481 = vmatmul.mubr.f32.gmra.mrb[0].mxu0 %v6162
      %v6482 = vpop.f32.mrb[0].mxu0
      %v6483 = vadd.f32 0.0, %v6482
      %v6484 = vpop.f32.mrb[0].mxu0
      %v6485 = vadd.f32 0.0, %v6484
      %6486 = vmatprep.mubr.f32.mxu0 %v6170
      %6487 = vmatmul.mubr.f32.gmra.mrb[0].mxu0 %v6168
      %v6488 = vpop.f32.mrb[0].mxu0
      %v6489 = vadd.f32 0.0, %v6488
      %v6490 = vpop.f32.mrb[0].mxu0
      %v6491 = vadd.f32 0.0, %v6490
      %6492 = vmatprep.mubr.f32.mxu0 %v6176
      %6493 = vmatmul.mubr.f32.gmra.mrb[0].mxu0 %v6174
      %v6494 = vpop.f32.mrb[0].mxu0
      %v6495 = vadd.f32 0.0, %v6494
      %v6496 = vpop.f32.mrb[0].mxu0
      %v6497 = vadd.f32 0.0, %v6496
      %6498 = vmatprep.mubr.f32.mxu0 %v6182
      %6499 = vmatmul.mubr.f32.gmra.mrb[0].mxu0 %v6180
      %v6500 = vpop.f32.mrb[0].mxu0
      %v6501 = vadd.f32 0.0, %v6500
      %v6502 = vpop.f32.mrb[0].mxu0
      %v6503 = vadd.f32 0.0, %v6502
      %6504 = vmatprep.mubr.f32.mxu0 %v6188
      %6505 = vmatmul.mubr.f32.gmra.mrb[0].mxu0 %v6186
      %v6506 = vpop.f32.mrb[0].mxu0
      %v6507 = vadd.f32 0.0, %v6506
      %v6508 = vpop.f32.mrb[0].mxu0
      %v6509 = vadd.f32 0.0, %v6508
      %6510 = vmatprep.mubr.f32.mxu0 %v6194
      %6511 = vmatmul.mubr.f32.gmra.mrb[0].mxu0 %v6192
      %v6512 = vpop.f32.mrb[0].mxu0
      %v6513 = vadd.f32 0.0, %v6512
      %v6514 = vpop.f32.mrb[0].mxu0
      %v6515 = vadd.f32 0.0, %v6514
      %6516 = vmatprep.mubr.f32.mxu0 %v6200
      %6517 = vmatmul.mubr.f32.gmra.mrb[0].mxu0 %v6198
      %v6518 = vpop.f32.mrb[0].mxu0
      %v6519 = vadd.f32 0.0, %v6518
      %v6520 = vpop.f32.mrb[0].mxu0
      %v6521 = vadd.f32 0.0, %v6520
      %6522 = vmatprep.mubr.f32.mxu0 %v6206
      %6523 = vmatmul.mubr.f32.gmra.mrb[0].mxu0 %v6204
      %v6524 = vpop.f32.mrb[0].mxu0
      %v6525 = vadd.f32 0.0, %v6524
      %v6526 = vpop.f32.mrb[0].mxu0
      %v6527 = vadd.f32 0.0, %v6526
      %6528 = vmatprep.mubr.f32.mxu0 %v6212
      %6529 = vmatmul.mubr.f32.gmra.mrb[0].mxu0 %v6210
      %v6530 = vpop.f32.mrb[0].mxu0
      %v6531 = vadd.f32 0.0, %v6530
      %v6532 = vpop.f32.mrb[0].mxu0
      %v6533 = vadd.f32 0.0, %v6532
      %6534 = vmatprep.mubr.f32.mxu0 %v6218
      %6535 = vmatmul.mubr.f32.gmra.mrb[0].mxu0 %v6216
      %v6536 = vpop.f32.mrb[0].mxu0
      %v6537 = vadd.f32 0.0, %v6536
      %v6538 = vpop.f32.mrb[0].mxu0
      %v6539 = vadd.f32 0.0, %v6538
      %6540 = vmatprep.mubr.f32.mxu0 %v6224
      %6541 = vmatmul.mubr.f32.gmra.mrb[0].mxu0 %v6222
      %v6542 = vpop.f32.mrb[0].mxu0
      %v6543 = vadd.f32 0.0, %v6542
      %v6544 = vpop.f32.mrb[0].mxu0
      %v6545 = vadd.f32 0.0, %v6544
      %6546 = vmatprep.mubr.f32.mxu0 %v6230
      %6547 = vmatmul.mubr.f32.gmra.mrb[0].mxu0 %v6228
      %v6548 = vpop.f32.mrb[0].mxu0
      %v6549 = vadd.f32 0.0, %v6548
      %v6550 = vpop.f32.mrb[0].mxu0
      %v6551 = vadd.f32 0.0, %v6550
      %6552 = vmatprep.mubr.f32.mxu0 %v6236
      %6553 = vmatmul.mubr.f32.gmra.mrb[0].mxu0 %v6234
      %v6554 = vpop.f32.mrb[0].mxu0
      %v6555 = vadd.f32 0.0, %v6554
      %v6556 = vpop.f32.mrb[0].mxu0
      %v6557 = vadd.f32 0.0, %v6556
      %6558 = vmatprep.mubr.f32.mxu0 %v6242
      %6559 = vmatmul.mubr.f32.gmra.mrb[0].mxu0 %v6240
      %v6560 = vpop.f32.mrb[0].mxu0
      %v6561 = vadd.f32 0.0, %v6560
      %v6562 = vpop.f32.mrb[0].mxu0
      %v6563 = vadd.f32 0.0, %v6562
      %6564 = vmatprep.mubr.f32.mxu0 %v6248
      %6565 = vmatmul.mubr.f32.gmra.mrb[0].mxu0 %v6246
      %v6566 = vpop.f32.mrb[0].mxu0
      %v6567 = vadd.f32 0.0, %v6566
      %v6568 = vpop.f32.mrb[0].mxu0
      %v6569 = vadd.f32 0.0, %v6568
      %6570 = vmatprep.mubr.f32.mxu0 %v6254
      %6571 = vmatmul.mubr.f32.gmra.mrb[0].mxu0 %v6252
      %v6572 = vpop.f32.mrb[0].mxu0
      %v6573 = vadd.f32 0.0, %v6572
      %v6574 = vpop.f32.mrb[0].mxu0
      %v6575 = vadd.f32 0.0, %v6574
      %6576 = vmatprep.mubr.f32.mxu0 %v6260
      %6577 = vmatmul.mubr.f32.gmra.mrb[0].mxu0 %v6258
      %v6578 = vpop.f32.mrb[0].mxu0
      %v6579 = vadd.f32 0.0, %v6578
      %v6580 = vpop.f32.mrb[0].mxu0
      %v6581 = vadd.f32 0.0, %v6580
      %6582 = vmatprep.mubr.f32.mxu0 %v6266
      %6583 = vmatmul.mubr.f32.gmra.mrb[0].mxu0 %v6264
      %v6584 = vpop.f32.mrb[0].mxu0
      %v6585 = vadd.f32 0.0, %v6584
      %v6586 = vpop.f32.mrb[0].mxu0
      %v6587 = vadd.f32 0.0, %v6586
      %6588 = vmatprep.mubr.f32.mxu0 %v6272
      %6589 = vmatmul.mubr.f32.gmra.mrb[0].mxu0 %v6270
      %v6590 = vpop.f32.mrb[0].mxu0
      %v6591 = vadd.f32 0.0, %v6590
      %v6592 = vpop.f32.mrb[0].mxu0
      %v6593 = vadd.f32 0.0, %v6592
      %6594 = vmatprep.mubr.f32.mxu0 %v6278
      %6595 = vmatmul.mubr.f32.gmra.mrb[0].mxu0 %v6276
      %v6596 = vpop.f32.mrb[0].mxu0
      %v6597 = vadd.f32 0.0, %v6596
      %v6598 = vpop.f32.mrb[0].mxu0
      %v6599 = vadd.f32 0.0, %v6598
      %6600 = vmatprep.mubr.f32.mxu0 %v6284
      %6601 = vmatmul.mubr.f32.gmra.mrb[0].mxu0 %v6282
      %v6602 = vpop.f32.mrb[0].mxu0
      %v6603 = vadd.f32 0.0, %v6602
      %v6604 = vpop.f32.mrb[0].mxu0
      %v6605 = vadd.f32 0.0, %v6604
      %6606 = vdwg.mxu0
      %v6607 = vmul.f32 %v6417, %v2346
      %v6608 = vmul.f32 %v6419, %v2346
      %v6609 = vmul.f32 %v6423, %v2346
      %v6610 = vmul.f32 %v6425, %v2346
      %v6611 = vmul.f32 %v6429, %v2346
      %v6612 = vmul.f32 %v6431, %v2346
      %v6613 = vmul.f32 %v6435, %v2346
      %v6614 = vmul.f32 %v6437, %v2346
      %v6615 = vmul.f32 %v6441, %v2346
      %v6616 = vmul.f32 %v6443, %v2346
      %v6617 = vmul.f32 %v6447, %v2346
      %v6618 = vmul.f32 %v6449, %v2346
      %v6619 = vmul.f32 %v6453, %v2346
      %v6620 = vmul.f32 %v6455, %v2346
      %v6621 = vmul.f32 %v6459, %v2346
      %v6622 = vmul.f32 %v6461, %v2346
      %v6623 = vmul.f32 %v6465, %v2346
      %v6624 = vmul.f32 %v6467, %v2346
      %v6625 = vmul.f32 %v6471, %v2346
      %v6626 = vmul.f32 %v6473, %v2346
      %v6627 = vmul.f32 %v6477, %v2346
      %v6628 = vmul.f32 %v6479, %v2346
      %v6629 = vmul.f32 %v6483, %v2346
      %v6630 = vmul.f32 %v6485, %v2346
      %v6631 = vmul.f32 %v6489, %v2346
      %v6632 = vmul.f32 %v6491, %v2346
      %v6633 = vmul.f32 %v6495, %v2346
      %v6634 = vmul.f32 %v6497, %v2346
      %v6635 = vmul.f32 %v6501, %v2346
      %v6636 = vmul.f32 %v6503, %v2346
      %v6637 = vmul.f32 %v6507, %v2346
      %v6638 = vmul.f32 %v6509, %v2346
      %v6639 = vmul.f32 %v6513, %v2346
      %v6640 = vmul.f32 %v6515, %v2346
      %v6641 = vmul.f32 %v6519, %v2346
      %v6642 = vmul.f32 %v6521, %v2346
      %v6643 = vmul.f32 %v6525, %v2346
      %v6644 = vmul.f32 %v6527, %v2346
      %v6645 = vmul.f32 %v6531, %v2346
      %v6646 = vmul.f32 %v6533, %v2346
      %v6647 = vmul.f32 %v6537, %v2346
      %v6648 = vmul.f32 %v6539, %v2346
      %v6649 = vmul.f32 %v6543, %v2346
      %v6650 = vmul.f32 %v6545, %v2346
      %v6651 = vmul.f32 %v6549, %v2346
      %v6652 = vmul.f32 %v6551, %v2346
      %v6653 = vmul.f32 %v6555, %v2346
      %v6654 = vmul.f32 %v6557, %v2346
      %v6655 = vmul.f32 %v6561, %v2346
      %v6656 = vmul.f32 %v6563, %v2346
      %v6657 = vmul.f32 %v6567, %v2346
      %v6658 = vmul.f32 %v6569, %v2346
      %v6659 = vmul.f32 %v6573, %v2346
      %v6660 = vmul.f32 %v6575, %v2346
      %v6661 = vmul.f32 %v6579, %v2346
      %v6662 = vmul.f32 %v6581, %v2346
      %v6663 = vmul.f32 %v6585, %v2346
      %v6664 = vmul.f32 %v6587, %v2346
      %v6665 = vmul.f32 %v6591, %v2346
      %v6666 = vmul.f32 %v6593, %v2346
      %v6667 = vmul.f32 %v6597, %v2346
      %v6668 = vmul.f32 %v6599, %v2346
      %v6669 = vmul.f32 %v6603, %v2346
      %v6670 = vmul.f32 %v6605, %v2346
      %v6671 = vfloor.f32 %v6607
      %v6672 = vfloor.f32 %v6608
      %v6673 = vfloor.f32 %v6609
      %v6674 = vfloor.f32 %v6610
      %v6675 = vfloor.f32 %v6611
      %v6676 = vfloor.f32 %v6612
      %v6677 = vfloor.f32 %v6613
      %v6678 = vfloor.f32 %v6614
      %v6679 = vfloor.f32 %v6615
      %v6680 = vfloor.f32 %v6616
      %v6681 = vfloor.f32 %v6617
      %v6682 = vfloor.f32 %v6618
      %v6683 = vfloor.f32 %v6619
      %v6684 = vfloor.f32 %v6620
      %v6685 = vfloor.f32 %v6621
      %v6686 = vfloor.f32 %v6622
      %v6687 = vfloor.f32 %v6623
      %v6688 = vfloor.f32 %v6624
      %v6689 = vfloor.f32 %v6625
      %v6690 = vfloor.f32 %v6626
      %v6691 = vfloor.f32 %v6627
      %v6692 = vfloor.f32 %v6628
      %v6693 = vfloor.f32 %v6629
      %v6694 = vfloor.f32 %v6630
      %v6695 = vfloor.f32 %v6631
      %v6696 = vfloor.f32 %v6632
      %v6697 = vfloor.f32 %v6633
      %v6698 = vfloor.f32 %v6634
      %v6699 = vfloor.f32 %v6635
      %v6700 = vfloor.f32 %v6636
      %v6701 = vfloor.f32 %v6637
      %v6702 = vfloor.f32 %v6638
      %v6703 = vfloor.f32 %v6639
      %v6704 = vfloor.f32 %v6640
      %v6705 = vfloor.f32 %v6641
      %v6706 = vfloor.f32 %v6642
      %v6707 = vfloor.f32 %v6643
      %v6708 = vfloor.f32 %v6644
      %v6709 = vfloor.f32 %v6645
      %v6710 = vfloor.f32 %v6646
      %v6711 = vfloor.f32 %v6647
      %v6712 = vfloor.f32 %v6648
      %v6713 = vfloor.f32 %v6649
      %v6714 = vfloor.f32 %v6650
      %v6715 = vfloor.f32 %v6651
      %v6716 = vfloor.f32 %v6652
      %v6717 = vfloor.f32 %v6653
      %v6718 = vfloor.f32 %v6654
      %v6719 = vfloor.f32 %v6655
      %v6720 = vfloor.f32 %v6656
      %v6721 = vfloor.f32 %v6657
      %v6722 = vfloor.f32 %v6658
      %v6723 = vfloor.f32 %v6659
      %v6724 = vfloor.f32 %v6660
      %v6725 = vfloor.f32 %v6661
      %v6726 = vfloor.f32 %v6662
      %v6727 = vfloor.f32 %v6663
      %v6728 = vfloor.f32 %v6664
      %v6729 = vfloor.f32 %v6665
      %v6730 = vfloor.f32 %v6666
      %v6731 = vfloor.f32 %v6667
      %v6732 = vfloor.f32 %v6668
      %v6733 = vfloor.f32 %v6669
      %v6734 = vfloor.f32 %v6670
      %6735 = vmatprep.subr.mxu0 %v6672
      %6736 = vmatpush1.xpose.msra.mxu0 %v6671
      %6737 = vmatprep.subr.mxu0 %v6674
      %6738 = vmatpush1.xpose.msra.mxu0 %v6673
      %6739 = vmatprep.subr.mxu0 %v6676
      %6740 = vmatpush1.xpose.msra.mxu0 %v6675
      %6741 = vmatprep.subr.mxu0 %v6678
      %6742 = vmatpush1.xpose.msra.mxu0 %v6677
      %6743 = vmatprep.subr.mxu0 %v6680
      %6744 = vmatpush1.xpose.msra.mxu0 %v6679
      %6745 = vmatprep.subr.mxu0 %v6682
      %6746 = vmatpush1.xpose.msra.mxu0 %v6681
      %6747 = vmatprep.subr.mxu0 %v6684
      %6748 = vmatpush1.xpose.msra.mxu0 %v6683
      %6749 = vmatprep.subr.mxu0 %v6686
      %6750 = vmatpush1.xpose.msra.mxu0 %v6685
      %6751 = vmatprep.subr.mxu0 %v6688
      %6752 = vmatpush1.xpose.msra.mxu0 %v6687
      %6753 = vmatprep.subr.mxu0 %v6690
      %6754 = vmatpush1.xpose.msra.mxu0 %v6689
      %6755 = vmatprep.subr.mxu0 %v6692
      %6756 = vmatpush1.xpose.msra.mxu0 %v6691
      %6757 = vmatprep.subr.mxu0 %v6694
      %6758 = vmatpush1.xpose.msra.mxu0 %v6693
      %6759 = vmatprep.subr.mxu0 %v6696
      %6760 = vmatpush1.xpose.msra.mxu0 %v6695
      %6761 = vmatprep.subr.mxu0 %v6698
      %6762 = vmatpush1.xpose.msra.mxu0 %v6697
      %6763 = vmatprep.subr.mxu0 %v6700
      %6764 = vmatpush1.xpose.msra.mxu0 %v6699
      %6765 = vmatprep.subr.mxu0 %v6702
      %6766 = vmatpush1.xpose.msra.mxu0 %v6701
      %6767 = vmatprep.subr.mxu0 %v6704
      %6768 = vmatpush1.xpose.msra.mxu0 %v6703
      %6769 = vmatprep.subr.mxu0 %v6706
      %6770 = vmatpush1.xpose.msra.mxu0 %v6705
      %6771 = vmatprep.subr.mxu0 %v6708
      %6772 = vmatpush1.xpose.msra.mxu0 %v6707
      %6773 = vmatprep.subr.mxu0 %v6710
      %6774 = vmatpush1.xpose.msra.mxu0 %v6709
      %6775 = vmatprep.subr.mxu0 %v6712
      %6776 = vmatpush1.xpose.msra.mxu0 %v6711
      %6777 = vmatprep.subr.mxu0 %v6714
      %6778 = vmatpush1.xpose.msra.mxu0 %v6713
      %6779 = vmatprep.subr.mxu0 %v6716
      %6780 = vmatpush1.xpose.msra.mxu0 %v6715
      %6781 = vmatprep.subr.mxu0 %v6718
      %6782 = vmatpush1.xpose.msra.mxu0 %v6717
      %6783 = vmatprep.subr.mxu0 %v6720
      %6784 = vmatpush1.xpose.msra.mxu0 %v6719
      %6785 = vmatprep.subr.mxu0 %v6722
      %6786 = vmatpush1.xpose.msra.mxu0 %v6721
      %6787 = vmatprep.subr.mxu0 %v6724
      %6788 = vmatpush1.xpose.msra.mxu0 %v6723
      %6789 = vmatprep.subr.mxu0 %v6726
      %6790 = vmatpush1.xpose.msra.mxu0 %v6725
      %6791 = vmatprep.subr.mxu0 %v6728
      %6792 = vmatpush1.xpose.msra.mxu0 %v6727
      %6793 = vmatprep.subr.mxu0 %v6730
      %6794 = vmatpush1.xpose.msra.mxu0 %v6729
      %6795 = vmatprep.subr.mxu0 %v6732
      %6796 = vmatpush1.xpose.msra.mxu0 %v6731
      %6797 = vmatprep.subr.mxu0 %v6734
      %6798 = vmatpush1.xpose.msra.mxu0 %v6733
      %6799 = vmatprep.mubr.f32.mxu0 %v4870
      %6800 = vmatmul.mubr.f32.gmra.mrb[0].mxu0 %v4869
      %v6801 = vpop.f32.mrb[0].mxu0
      %v6802 = vadd.f32 0.0, %v6801
      %v6803 = vpop.f32.mrb[0].mxu0
      %v6804 = vadd.f32 0.0, %v6803
      %6805 = vdwg.mxu0
      %v6806 = vmul.f32 %v6802, %v5835
      %v6807 = vmul.f32 %v6804, %v5839
      %v6808 = vmul.f32 %v4875, %v5848
      %v6809 = vmul.f32 %v4875, %v5852
      %v6810 = vadd.f32 %v6806, %v6808
      %v6811 = vadd.f32 %v6807, %v6809
      %v6812 = vmul.f32 %v6810, %v5857
      %v6813 = vmul.f32 %v6811, %v5858
      %vm6814 = vcmp.ge.f32.partialorder %v6812, 0.0
      %vm6815 = vcmp.ge.f32.partialorder %v6813, 0.0
      %v6816 = vmul.f32 %v6812, 0.01
      %v6817 = vmul.f32 %v6813, 0.01
      %v6818 = vsel %vm6814, %v6812, %v6816
      %v6819 = vsel %vm6815, %v6813, %v6817
      %6821 = vset.pattern.permute.xlu0 0
      %6822 = vperm.xlu0 %6821, %v4876
      %v6823 = vpop.permute.xlu0 %6822
      %v6825 = vmul.f32 %v6818, %v6823
      %v6826 = vmul.f32 %v6819, %v6823
      %6828 = vset.pattern.permute.xlu0 0
      %6829 = vperm.xlu0 %6828, %v4877
      %v6830 = vpop.permute.xlu0 %6829
      %v6832 = vadd.f32 %v6825, %v6830
      %v6833 = vadd.f32 %v6826, %v6830
      %v6834 = vld [vmem:[%s219] sm:$0xff]
      %v6836 = vcombine.high %v6834, %v6834
      %v6838 = vadd.f32 %v6832, %v6834
      %v6839 = vadd.f32 %v6833, %v6836
      %vm6840 = vcmp.ge.f32.partialorder %v6838, 0.0
      %vm6841 = vcmp.ge.f32.partialorder %v6839, 0.0
      %v6842 = vmul.f32 %v6838, 0.01
      %v6843 = vmul.f32 %v6839, 0.01
      %v6844 = vsel %vm6840, %v6838, %v6842
      %v6845 = vsel %vm6841, %v6839, %v6843
      %v6848 = vcombine.low %v6844, %v6845
      %6850 = vst [vmem:[%s224] sm:$0xff] %v6848
      %p6851 = scmp.lt.s32.totalorder %s16, 1
      %s6852 = scalar_select %p6851, %s16, 1
      %s6853 = smul.addr %s6852, 2
      %s6854 = smul.addr %s6853, 4
      %s6855 = scalar_lea.vmem %s5, %s6854
      // Predicated region
      $region41: #{sares_forward.1} parent=39 // pred_check
        %p6856 = pneg %p144
      $region42: #{sares_forward.1} parent=39 // pred_check_branch
        %6858 = sbr.rel (%p6856) target = $region44
      $region43: #{sares_forward.1} parent=39 // pred_region
        _
      $region44: #{sares_forward.1} parent=39 // pred_fallthru
        _
    $region40: #{sares_forward.1} parent=5 // pred_fallthru
      _
    %p6859 = scmp.le.s32.totalorder 2, %s11
    // Predicated region
    $region45: #{sares_forward.1} parent=5 // pred_check
      %p6860 = pneg %p6859
    $region46: #{sares_forward.1} parent=5 // pred_check_branch
      %6862 = sbr.rel (%p6860) target = $region48
    $region47: #{sares_forward.1} parent=5 // pred_region
      %s6863 = ssub.s32 %s11, 2
      // Predicated region
      $region49: #{sares_forward.1} parent=47 // pred_check
        %p6864 = pneg %p150
      $region50: #{sares_forward.1} parent=47 // pred_check_branch
        %6866 = sbr.rel (%p6864) target = $region52
      $region51: #{sares_forward.1} parent=47 // pred_region
        %p6867 = scmp.lt.s32.totalorder %s17, 1
        %s6868 = scalar_select %p6867, %s17, 1
        %s6869 = smul.addr %s6868, 2
        %s6870 = smul.addr %s6869, 4
        %s6871 = scalar_lea.vmem %s5, %s6870
      $region52: #{sares_forward.1} parent=47 // pred_fallthru
        _
    $region48: #{sares_forward.1} parent=5 // pred_fallthru
      _
  $region6: #{sares_forward.1} parent=0 // loop_footer
    %s15 = sadd.s32 1, %s11
  $region7: #{sares_forward.1} parent=0 // loop_footer_branch
    %10 = sbr.rel target = $region3
  $region8: #{sares_forward.1} parent=0 // loop_exit
    _

</llo_original>
